<compile_context>
chip_gen: v5e
topology: v5e:2x2
jax: 0.10.0
libtpu: 0.0.40
codegen_flags: <defaults>
</compile_context>

<pallas_src>
import functools
import math

import jax
import jax.numpy as jnp
from jax.experimental import pallas as pl
from jax.experimental.pallas import tpu as pltpu  # noqa: F401  (TPU backend)

EPS_IN = 1e-5          # nn.InstanceNorm2d default eps (affine=False)
EPS_LN = 1e-5          # nn.LayerNorm default eps
LRELU_SLOPE = 0.2


# ----------------------------------------------------------------------------
# Pallas kernels
# ----------------------------------------------------------------------------
def _dist_kernel(ct_ref, c2_ref, o_ref):
    """square_distance on 2-D coords, VPU-only (no MXU for a depth-2 contraction)."""
    ct = ct_ref[...]                                # (N, 2)
    c2 = c2_ref[...]                                # (2, N)
    dx = ct[:, 0:1] - c2[0:1, :]                    # (N, N)
    dy = ct[:, 1:2] - c2[1:2, :]                    # (N, N)
    o_ref[...] = jnp.maximum(dx * dx + dy * dy, 1e-12)


def _make_fused_kernel(num_heads: int):
    """Fused graph-conv chain + relative-position multi-head attention + LayerNorm.

    Inputs (all whole-array VMEM blocks, tokens-first layout):
      x0   : (N, C)      input point features
      t    : (K, N, N)   one-hot neighbor selection, t[k,i,j]=1 iff j is i's k-th NN
      p3   : (N, N, C)   fully projected relative positional embedding
                         (= proj_p(proj1(mean_k sinusoidal(angles))), composed on host)
      conv weights (transposed for tokens-first matmuls), attention weights, LN params.
    Output:
      o    : (N, C)
    """
    def kernel(x0_ref, t_ref, p_ref,
               w1d_ref, w1b_ref, w2d_ref, w2b_ref,
               w3a_ref, w3b_ref, w3c_ref,
               wq_ref, bq_ref, wk_ref, bk_ref, wv_ref, bv_ref,
               wo_ref, bo_ref, g_ref, beta_ref,
               o_ref):
        f32 = jnp.float32
        bf16 = jnp.bfloat16

        x0 = x0_ref[...]                            # (N, C)
        n, c = x0.shape
        n_k = t_ref.shape[0]                        # K neighbors

        def mm(a, b):
            # bf16 operands, f32 accumulate on the MXU
            return jnp.dot(a.astype(bf16), b.astype(bf16),
                           preferred_element_type=f32)

        # ---- 1x1 graph conv + InstanceNorm2d(affine=False) + LeakyReLU + max over K
        def graph_conv(x_in, wd_ref, wb_ref):
            base = mm(x_in, wd_ref[...])            # x @ (Wa - Wb)^T     (N, Cout)
            u = mm(x_in, wb_ref[...])               # x @ Wb^T            (N, Cout)
            cout = base.shape[1]
            ys = []
            s = jnp.zeros((1, cout), f32)
            ss = jnp.zeros((1, cout), f32)
            for kk in range(n_k):
                # neighbor gather as an exact 0/1 matmul on the MXU
                yk = base + jnp.dot(t_ref[kk], u, preferred_element_type=f32)
                ys.append(yk)
                s = s + jnp.sum(yk, axis=0, keepdims=True)
                ss = ss + jnp.sum(yk * yk, axis=0, keepdims=True)
            inv_cnt = 1.0 / float(n_k * n)
            mean = s * inv_cnt
            var = jnp.maximum(ss * inv_cnt - mean * mean, 0.0)
            inv = jax.lax.rsqrt(var + EPS_IN)
            out = None
            for yk in ys:
                z = (yk - mean) * inv
                z = jnp.where(z >= 0, z, LRELU_SLOPE * z)
                out = z if out is None else jnp.maximum(out, z)
            return out

        x1 = graph_conv(x0, w1d_ref, w1b_ref)       # (N, C)
        x2 = graph_conv(x1, w2d_ref, w2b_ref)       # (N, 2C)

        # ---- conv3 on cat(x0, x1, x2) (k = 1) + InstanceNorm over N + LeakyReLU
        y3 = (mm(x0, w3a_ref[...]) + mm(x1, w3b_ref[...]) + mm(x2, w3c_ref[...]))
        m3 = jnp.mean(y3, axis=0, keepdims=True)
        v3 = jnp.maximum(jnp.mean(y3 * y3, axis=0, keepdims=True) - m3 * m3, 0.0)
        z3 = (y3 - m3) * jax.lax.rsqrt(v3 + EPS_IN)
        x3 = jnp.where(z3 >= 0, z3, LRELU_SLOPE * z3)     # (N, C) tokens-first

        # ---- multi-head attention with pre-computed relative positional embedding
        dh = c // num_heads
        scale = 1.0 / math.sqrt(dh)

        q = mm(x3, wq_ref[...]) + bq_ref[...]       # (N, C)
        k = mm(x3, wk_ref[...]) + bk_ref[...]
        v = mm(x3, wv_ref[...]) + bv_ref[...]

        # positional scores: p3 already holds proj_p(proj1(embed)); read it ONCE,
        # multiply at full lane width, then per-head segmented reductions.
        p3 = p_ref[...]                             # (N, M, C)
        prod = q[:, None, :] * p3                   # (N, M, C)

        wo = wo_ref[...]                            # (C, C) in x out
        x4 = jnp.zeros((n, c), f32)
        for h in range(num_heads):
            lo, hi = h * dh, (h + 1) * dh
            qh, kh, vh = q[:, lo:hi], k[:, lo:hi], v[:, lo:hi]
            # e-scores on the MXU
            se = jax.lax.dot_general(qh.astype(bf16), kh.astype(bf16),
                                     (((1,), (1,)), ((), ())),
                                     preferred_element_type=f32)        # (N, M)
            # p-scores: segmented sum over this head's channels of the shared product
            sp = jnp.sum(prod[:, :, lo:hi], axis=-1)                    # (N, M)
            s_sc = (se + sp) * scale
            s_sc = s_sc - jnp.max(s_sc, axis=-1, keepdims=True)
            e = jnp.exp(s_sc)
            a = e * pl.reciprocal(jnp.sum(e, axis=-1, keepdims=True), approx=True)
            av = mm(a, vh)                                              # (N, dh)
            # accumulate straight through proj2 (no head concat)
            x4 = x4 + mm(av, wo[lo:hi, :])
        x4 = x4 + bo_ref[...]

        # ---- residual + LayerNorm
        y = x3 + x4
        mu = jnp.mean(y, axis=-1, keepdims=True)
        var = jnp.mean((y - mu) * (y - mu), axis=-1, keepdims=True)
        yn = (y - mu) * jax.lax.rsqrt(var + EPS_LN)
        o_ref[...] = yn * g_ref[...] + beta_ref[...]

    return kernel


# ----------------------------------------------------------------------------
# pallas_call wrappers (whole-array blocks; shapes are small so no grid needed)
# ----------------------------------------------------------------------------
def pairwise_dist(coords_n2):
    n = coords_n2.shape[0]
    ct = coords_n2.astype(jnp.float32)
    return pl.pallas_call(
        _dist_kernel,
        out_shape=jax.ShapeDtypeStruct((n, n), jnp.float32),
    )(ct, ct.T)


def fused_self_attention(x0_nc, t_knn, p_nnc, dp, num_heads):
    n, c = x0_nc.shape
    kern = _make_fused_kernel(num_heads)
    return pl.pallas_call(
        kern,
        out_shape=jax.ShapeDtypeStruct((n, c), jnp.float32),
    )(x0_nc, t_knn, p_nnc,
      dp['w1d_t'], dp['w1b_t'], dp['w2d_t'], dp['w2b_t'],
      dp['w3a_t'], dp['w3b_t'], dp['w3c_t'],
      dp['wq_t'], dp['bq'], dp['wk_t'], dp['bk'], dp['wv_t'], dp['bv'],
      dp['wo_t'], dp['bo'], dp['ln_g'], dp['ln_b'])


# ----------------------------------------------------------------------------
# JAX glue (top-k / index setup / sinusoidal embedding / weight re-layout)
# ----------------------------------------------------------------------------
# TODO(synk): dynamic top-k neighbor selection has no clean Pallas TPU equivalent
#             at these shapes; it (and the one-hot / angle setup) stays in plain JAX.
def angular_indices(coords_n2, idx, factor):
    """get_embedding_angular for B=1; coords (N,2), idx (N,k) -> (N, N, k)."""
    knn_coords = coords_n2[idx]                                   # (N, k, 2)
    ref = knn_coords - coords_n2[:, None, :]                      # (N, k, 2)
    anc = coords_n2[None, :, :] - coords_n2[:, None, :]           # (N, N, 2)
    dot = jnp.sum(ref[:, None, :, :] * anc[:, :, None, :], axis=-1)   # (N, N, k)
    mag_ref = jnp.linalg.norm(ref, axis=-1)[:, None, :]           # (N, 1, k)
    mag_anc = jnp.linalg.norm(anc, axis=-1)[:, :, None]           # (N, N, 1)
    angles = jnp.arctan2(dot, mag_ref * mag_anc)
    return angles * factor


def sinusoidal_embedding(a, d_model):
    """GeoTransformer-style SinusoidalPositionalEmbedding (interleaved sin/cos)."""
    # TODO(synk): could be fused into the Pallas kernel (EUP sin/cos) to shrink the
    #             N^2 input by a factor of C; kept in XLA for lowering robustness.
    div_term = jnp.exp(jnp.arange(0, d_model, 2, dtype=jnp.float32)
                       * (-math.log(10000.0) / d_model))          # (d/2,)
    omegas = a[..., None] * div_term                              # (..., d/2)
    emb = jnp.stack([jnp.sin(omegas), jnp.cos(omegas)], axis=-1)  # (..., d/2, 2)
    return emb.reshape(*a.shape, d_model)


def _derive_kernel_params(prm):
    """Re-layout PyTorch-style weights into the forms the fused kernel consumes."""
    f32 = jnp.float32
    c = prm['conv1_w'].shape[0]
    w1 = prm['conv1_w'].astype(f32)
    w2 = prm['conv2_w'].astype(f32)
    w3 = prm['conv3_w'].astype(f32)
    w1a, w1b = w1[:, :c], w1[:, c:]                               # (C, C) each
    w2a, w2b = w2[:, :c], w2[:, c:]                               # (2C, C) each
    # composed proj_p( proj1( . ) ): p = emb @ (Wp W1)^T + (Wp b1 + bp)
    wc = prm['p_w'].astype(f32) @ prm['proj1_w'].astype(f32)      # (C, C)
    bc = prm['p_w'].astype(f32) @ prm['proj1_b'].astype(f32) + prm['p_b'].astype(f32)
    return {
        'w1d_t': (w1a - w1b).T, 'w1b_t': w1b.T,                   # (C, C)
        'w2d_t': (w2a - w2b).T, 'w2b_t': w2b.T,                   # (C, 2C)
        'w3a_t': w3[:, :c].T, 'w3b_t': w3[:, c:2 * c].T, 'w3c_t': w3[:, 2 * c:].T,
        'wq_t': prm['q_w'].astype(f32).T, 'bq': prm['q_b'].astype(f32)[None, :],
        'wk_t': prm['k_w'].astype(f32).T, 'bk': prm['k_b'].astype(f32)[None, :],
        'wv_t': prm['v_w'].astype(f32).T, 'bv': prm['v_b'].astype(f32)[None, :],
        'wc_t': wc.T, 'bc': bc[None, :],
        'wo_t': prm['proj2_w'].astype(f32).T, 'bo': prm['proj2_b'].astype(f32)[None, :],
        'ln_g': prm['ln_w'].astype(f32)[None, :], 'ln_b': prm['ln_b'].astype(f32)[None, :],
    }


# ----------------------------------------------------------------------------
# SelfAttention / Coarse_gcn_encoding forward
# ----------------------------------------------------------------------------
def self_attention_forward(dp, coords_n2, feats_nc, *, k, num_heads):
    n, c = feats_nc.shape
    kk = min(k, n - 1)
    coords = coords_n2.astype(jnp.float32)
    feats = feats_nc.astype(jnp.float32)

    # kNN indices from pairwise square distances (Pallas dist kernel + JAX top-k)
    dist = pairwise_dist(coords)                                  # (N, N)
    _, idx_full = jax.lax.top_k(-dist, kk + 1)                    # smallest distances
    idx = idx_full[:, 1:]                                         # drop self, (N, k)

    # one-hot neighbor selection matrices: T[k, i, j] = 1 iff idx[i, k] == j
    t_knn = jnp.transpose(jax.nn.one_hot(idx, n, dtype=jnp.float32), (1, 0, 2))

    # relative positional embedding: mean over k BEFORE the (affine) projections,
    # then the composed proj_p(proj1(.)) as a single dense matmul.
    ang = angular_indices(coords, idx, 0.5)                       # (N, N, k)
    emb_mean = jnp.mean(sinusoidal_embedding(ang, c), axis=2)     # (N, N, C)
    p3 = jnp.dot(emb_mean, dp['wc_t']) + dp['bc']                 # (N, N, C)

    return fused_self_attention(feats, t_knn, p3, dp, num_heads)  # (N, C)


def coarse_gcn_encoding_forward(prm, desc0, desc1, coords0, coords1, *, k=4, num_heads=4):
    dp = _derive_kernel_params(prm)
    d0 = self_attention_forward(dp, coords0, desc0, k=k, num_heads=num_heads)
    d1 = self_attention_forward(dp, coords1, desc1, k=k, num_heads=num_heads)
    return d0, d1


def init_params(key, feature_dim=32):
    c = feature_dim
    ks = jax.random.split(key, 16)

    def w(i, shape, scale=0.1):
        return (scale * jax.random.normal(ks[i], shape)).astype(jnp.float32)

    return {
        'conv1_w': w(0, (c, 2 * c)),           # Conv2d(2C->C, 1x1, bias=False)
        'conv2_w': w(1, (2 * c, 2 * c)),       # Conv2d(2C->2C)
        'conv3_w': w(2, (c, 4 * c)),           # Conv2d(4C->C)
        'proj1_w': w(3, (c, c)), 'proj1_b': w(4, (c,)),
        'q_w': w(5, (c, c)), 'q_b': w(6, (c,)),
        'k_w': w(7, (c, c)), 'k_b': w(8, (c,)),
        'v_w': w(9, (c, c)), 'v_b': w(10, (c,)),
        'p_w': w(11, (c, c)), 'p_b': w(12, (c,)),
        'proj2_w': w(13, (c, c)), 'proj2_b': w(14, (c,)),
        'ln_w': jnp.ones((c,), jnp.float32), 'ln_b': jnp.zeros((c,), jnp.float32),
    }


if __name__ == "__main__":
    key = jax.random.PRNGKey(0)
    k_param, k_d0, k_d1, k_c0, k_c1 = jax.random.split(key, 5)
    C = 32                     # feature_dim (divisible by num_heads=4)
    N0, N1 = 16, 24            # number of points per descriptor set
    params = init_params(k_param, feature_dim=C)

    desc0 = jax.random.normal(k_d0, (N0, C), jnp.float32)
    desc1 = jax.random.normal(k_d1, (N1, C), jnp.float32)
    coords0 = jax.random.normal(k_c0, (N0, 2), jnp.float32)
    coords1 = jax.random.normal(k_c1, (N1, 2), jnp.float32)

    fwd = jax.jit(functools.partial(coarse_gcn_encoding_forward, k=4, num_heads=4))
    out0, out1 = fwd(params, desc0, desc1, coords0, coords1)
    jax.block_until_ready((out0, out1))
    assert out0.shape == (N0, C) and out1.shape == (N1, C)
    assert bool(jnp.all(jnp.isfinite(out0))) and bool(jnp.all(jnp.isfinite(out1)))
    print("KERNEL_OK")
</pallas_src>

<mosaic_0001>
module attributes {stable_mosaic.version = 11 : i64} {
  func.func @_dist_kernel(%arg0: memref<24x2xf32, #tpu.memory_space<vmem>>, %arg1: memref<2x24xf32, #tpu.memory_space<vmem>>, %arg2: memref<24x24xf32, #tpu.memory_space<vmem>>) attributes {dimension_semantics = [], scalar_prefetch = 0 : i64, scratch_operands = 0 : i64, tpu.core_type = #tpu.core_type<tc>} {
    %c0 = arith.constant 0 : index
    %c0_0 = arith.constant 0 : index
    %0 = vector.load %arg0[%c0, %c0_0] : memref<24x2xf32, #tpu.memory_space<vmem>>, vector<24x2xf32>
    %c0_1 = arith.constant 0 : index
    %c0_2 = arith.constant 0 : index
    %1 = vector.load %arg1[%c0_1, %c0_2] : memref<2x24xf32, #tpu.memory_space<vmem>>, vector<2x24xf32>
    %2 = vector.extract_strided_slice %0 {offsets = [0, 0], sizes = [24, 1], strides = [1, 1]} : vector<24x2xf32> to vector<24x1xf32>
    %3 = vector.extract_strided_slice %1 {offsets = [0, 0], sizes = [1, 24], strides = [1, 1]} : vector<2x24xf32> to vector<1x24xf32>
    %4 = vector.broadcast %2 : vector<24x1xf32> to vector<24x24xf32>
    %5 = vector.broadcast %3 : vector<1x24xf32> to vector<24x24xf32>
    %6 = arith.subf %4, %5 : vector<24x24xf32>
    %7 = vector.extract_strided_slice %0 {offsets = [0, 1], sizes = [24, 1], strides = [1, 1]} : vector<24x2xf32> to vector<24x1xf32>
    %8 = vector.extract_strided_slice %1 {offsets = [1, 0], sizes = [1, 24], strides = [1, 1]} : vector<2x24xf32> to vector<1x24xf32>
    %9 = vector.broadcast %7 : vector<24x1xf32> to vector<24x24xf32>
    %10 = vector.broadcast %8 : vector<1x24xf32> to vector<24x24xf32>
    %11 = arith.subf %9, %10 : vector<24x24xf32>
    %12 = arith.mulf %6, %6 : vector<24x24xf32>
    %13 = arith.mulf %11, %11 : vector<24x24xf32>
    %14 = arith.addf %12, %13 : vector<24x24xf32>
    %cst = arith.constant 9.99999996E-13 : f32
    %15 = vector.broadcast %cst : f32 to vector<24x24xf32>
    %16 = arith.maximumf %14, %15 : vector<24x24xf32>
    %c0_3 = arith.constant 0 : index
    %c0_4 = arith.constant 0 : index
    %17 = vector.load %arg2[%c0_3, %c0_4] : memref<24x24xf32, #tpu.memory_space<vmem>>, vector<24x24xf32>
    tpu.vector_store %arg2[%c0_3, %c0_4], %16 {strides = array<i32>} : memref<24x24xf32, #tpu.memory_space<vmem>>, vector<24x24xf32>,
    return
  }
}

module attributes {stable_mosaic.version = 11 : i64} {
  func.func @_dist_kernel(%arg0: memref<16x2xf32, #tpu.memory_space<vmem>>, %arg1: memref<2x16xf32, #tpu.memory_space<vmem>>, %arg2: memref<16x16xf32, #tpu.memory_space<vmem>>) attributes {dimension_semantics = [], scalar_prefetch = 0 : i64, scratch_operands = 0 : i64, tpu.core_type = #tpu.core_type<tc>} {
    %c0 = arith.constant 0 : index
    %c0_0 = arith.constant 0 : index
    %0 = vector.load %arg0[%c0, %c0_0] : memref<16x2xf32, #tpu.memory_space<vmem>>, vector<16x2xf32>
    %c0_1 = arith.constant 0 : index
    %c0_2 = arith.constant 0 : index
    %1 = vector.load %arg1[%c0_1, %c0_2] : memref<2x16xf32, #tpu.memory_space<vmem>>, vector<2x16xf32>
    %2 = vector.extract_strided_slice %0 {offsets = [0, 0], sizes = [16, 1], strides = [1, 1]} : vector<16x2xf32> to vector<16x1xf32>
    %3 = vector.extract_strided_slice %1 {offsets = [0, 0], sizes = [1, 16], strides = [1, 1]} : vector<2x16xf32> to vector<1x16xf32>
    %4 = vector.broadcast %2 : vector<16x1xf32> to vector<16x16xf32>
    %5 = vector.broadcast %3 : vector<1x16xf32> to vector<16x16xf32>
    %6 = arith.subf %4, %5 : vector<16x16xf32>
    %7 = vector.extract_strided_slice %0 {offsets = [0, 1], sizes = [16, 1], strides = [1, 1]} : vector<16x2xf32> to vector<16x1xf32>
    %8 = vector.extract_strided_slice %1 {offsets = [1, 0], sizes = [1, 16], strides = [1, 1]} : vector<2x16xf32> to vector<1x16xf32>
    %9 = vector.broadcast %7 : vector<16x1xf32> to vector<16x16xf32>
    %10 = vector.broadcast %8 : vector<1x16xf32> to vector<16x16xf32>
    %11 = arith.subf %9, %10 : vector<16x16xf32>
    %12 = arith.mulf %6, %6 : vector<16x16xf32>
    %13 = arith.mulf %11, %11 : vector<16x16xf32>
    %14 = arith.addf %12, %13 : vector<16x16xf32>
    %cst = arith.constant 9.99999996E-13 : f32
    %15 = vector.broadcast %cst : f32 to vector<16x16xf32>
    %16 = arith.maximumf %14, %15 : vector<16x16xf32>
    %c0_3 = arith.constant 0 : index
    %c0_4 = arith.constant 0 : index
    %17 = vector.load %arg2[%c0_3, %c0_4] : memref<16x16xf32, #tpu.memory_space<vmem>>, vector<16x16xf32>
    tpu.vector_store %arg2[%c0_3, %c0_4], %16 {strides = array<i32>} : memref<16x16xf32, #tpu.memory_space<vmem>>, vector<16x16xf32>,
    return
  }
}

module attributes {stable_mosaic.version = 11 : i64} {
  func.func @kernel(%arg0: memref<24x32xf32, #tpu.memory_space<vmem>>, %arg1: memref<4x24x24xf32, #tpu.memory_space<vmem>>, %arg2: memref<24x24x32xf32, #tpu.memory_space<vmem>>, %arg3: memref<32x32xf32, #tpu.memory_space<vmem>>, %arg4: memref<32x32xf32, #tpu.memory_space<vmem>>, %arg5: memref<32x64xf32, #tpu.memory_space<vmem>>, %arg6: memref<32x64xf32, #tpu.memory_space<vmem>>, %arg7: memref<32x32xf32, #tpu.memory_space<vmem>>, %arg8: memref<32x32xf32, #tpu.memory_space<vmem>>, %arg9: memref<64x32xf32, #tpu.memory_space<vmem>>, %arg10: memref<32x32xf32, #tpu.memory_space<vmem>>, %arg11: memref<1x32xf32, #tpu.memory_space<vmem>>, %arg12: memref<32x32xf32, #tpu.memory_space<vmem>>, %arg13: memref<1x32xf32, #tpu.memory_space<vmem>>, %arg14: memref<32x32xf32, #tpu.memory_space<vmem>>, %arg15: memref<1x32xf32, #tpu.memory_space<vmem>>, %arg16: memref<32x32xf32, #tpu.memory_space<vmem>>, %arg17: memref<1x32xf32, #tpu.memory_space<vmem>>, %arg18: memref<1x32xf32, #tpu.memory_space<vmem>>, %arg19: memref<1x32xf32, #tpu.memory_space<vmem>>, %arg20: memref<24x32xf32, #tpu.memory_space<vmem>>) attributes {dimension_semantics = [], scalar_prefetch = 0 : i64, scratch_operands = 0 : i64, tpu.core_type = #tpu.core_type<tc>} {
    %c0 = arith.constant 0 : index
    %c0_0 = arith.constant 0 : index
    %0 = vector.load %arg0[%c0, %c0_0] : memref<24x32xf32, #tpu.memory_space<vmem>>, vector<24x32xf32>
    %c0_1 = arith.constant 0 : index
    %c0_2 = arith.constant 0 : index
    %1 = vector.load %arg3[%c0_1, %c0_2] : memref<32x32xf32, #tpu.memory_space<vmem>>, vector<32x32xf32>
    %2 = arith.truncf %0 : vector<24x32xf32> to vector<24x32xbf16>
    %3 = arith.truncf %1 : vector<32x32xf32> to vector<32x32xbf16>
    %cst = arith.constant dense<0.000000e+00> : vector<24x32xf32>
    %4 = tpu.matmul %2, %3, %cst {dimension_numbers = #tpu.dot_dimension_numbers<[1], [0], [0], [1], [0, 0, 1, 1], [], []>} : vector<24x32xbf16>, vector<32x32xbf16>, vector<24x32xf32> -> vector<24x32xf32>
    %c0_3 = arith.constant 0 : index
    %c0_4 = arith.constant 0 : index
    %5 = vector.load %arg4[%c0_3, %c0_4] : memref<32x32xf32, #tpu.memory_space<vmem>>, vector<32x32xf32>
    %6 = arith.truncf %0 : vector<24x32xf32> to vector<24x32xbf16>
    %7 = arith.truncf %5 : vector<32x32xf32> to vector<32x32xbf16>
    %cst_5 = arith.constant dense<0.000000e+00> : vector<24x32xf32>
    %8 = tpu.matmul %6, %7, %cst_5 {dimension_numbers = #tpu.dot_dimension_numbers<[1], [0], [0], [1], [0, 0, 1, 1], [], []>} : vector<24x32xbf16>, vector<32x32xbf16>, vector<24x32xf32> -> vector<24x32xf32>
    %cst_6 = arith.constant 0.000000e+00 : f32
    %9 = vector.broadcast %cst_6 : f32 to vector<1x32xf32>
    %cst_7 = arith.constant 0.000000e+00 : f32
    %10 = vector.broadcast %cst_7 : f32 to vector<1x32xf32>
    %c0_8 = arith.constant 0 : index
    %c0_9 = arith.constant 0 : index
    %c0_10 = arith.constant 0 : index
    %11 = vector.load %arg1[%c0_8, %c0_9, %c0_10] : memref<4x24x24xf32, #tpu.memory_space<vmem>>, vector<1x24x24xf32>
    %12 = vector.shape_cast %11 : vector<1x24x24xf32> to vector<24x24xf32>
    %cst_11 = arith.constant dense<0.000000e+00> : vector<24x32xf32>
    %13 = tpu.matmul %12, %8, %cst_11 {dimension_numbers = #tpu.dot_dimension_numbers<[1], [0], [0], [1], [0, 0, 1, 1], [], []>} : vector<24x24xf32>, vector<24x32xf32>, vector<24x32xf32> -> vector<24x32xf32>
    %14 = arith.addf %4, %13 : vector<24x32xf32>
    %cst_12 = arith.constant dense<0.000000e+00> : vector<32xf32>
    %15 = vector.multi_reduction <add>, %14, %cst_12 [0] : vector<24x32xf32> to vector<32xf32>
    %16 = vector.shape_cast %15 : vector<32xf32> to vector<1x32xf32>
    %17 = arith.addf %9, %16 : vector<1x32xf32>
    %18 = arith.mulf %14, %14 : vector<24x32xf32>
    %cst_13 = arith.constant dense<0.000000e+00> : vector<32xf32>
    %19 = vector.multi_reduction <add>, %18, %cst_13 [0] : vector<24x32xf32> to vector<32xf32>
    %20 = vector.shape_cast %19 : vector<32xf32> to vector<1x32xf32>
    %21 = arith.addf %10, %20 : vector<1x32xf32>
    %c1 = arith.constant 1 : index
    %c0_14 = arith.constant 0 : index
    %c0_15 = arith.constant 0 : index
    %22 = vector.load %arg1[%c1, %c0_14, %c0_15] : memref<4x24x24xf32, #tpu.memory_space<vmem>>, vector<1x24x24xf32>
    %23 = vector.shape_cast %22 : vector<1x24x24xf32> to vector<24x24xf32>
    %cst_16 = arith.constant dense<0.000000e+00> : vector<24x32xf32>
    %24 = tpu.matmul %23, %8, %cst_16 {dimension_numbers = #tpu.dot_dimension_numbers<[1], [0], [0], [1], [0, 0, 1, 1], [], []>} : vector<24x24xf32>, vector<24x32xf32>, vector<24x32xf32> -> vector<24x32xf32>
    %25 = arith.addf %4, %24 : vector<24x32xf32>
    %cst_17 = arith.constant dense<0.000000e+00> : vector<32xf32>
    %26 = vector.multi_reduction <add>, %25, %cst_17 [0] : vector<24x32xf32> to vector<32xf32>
    %27 = vector.shape_cast %26 : vector<32xf32> to vector<1x32xf32>
    %28 = arith.addf %17, %27 : vector<1x32xf32>
    %29 = arith.mulf %25, %25 : vector<24x32xf32>
    %cst_18 = arith.constant dense<0.000000e+00> : vector<32xf32>
    %30 = vector.multi_reduction <add>, %29, %cst_18 [0] : vector<24x32xf32> to vector<32xf32>
    %31 = vector.shape_cast %30 : vector<32xf32> to vector<1x32xf32>
    %32 = arith.addf %21, %31 : vector<1x32xf32>
    %c2 = arith.constant 2 : index
    %c0_19 = arith.constant 0 : index
    %c0_20 = arith.constant 0 : index
    %33 = vector.load %arg1[%c2, %c0_19, %c0_20] : memref<4x24x24xf32, #tpu.memory_space<vmem>>, vector<1x24x24xf32>
    %34 = vector.shape_cast %33 : vector<1x24x24xf32> to vector<24x24xf32>
    %cst_21 = arith.constant dense<0.000000e+00> : vector<24x32xf32>
    %35 = tpu.matmul %34, %8, %cst_21 {dimension_numbers = #tpu.dot_dimension_numbers<[1], [0], [0], [1], [0, 0, 1, 1], [], []>} : vector<24x24xf32>, vector<24x32xf32>, vector<24x32xf32> -> vector<24x32xf32>
    %36 = arith.addf %4, %35 : vector<24x32xf32>
    %cst_22 = arith.constant dense<0.000000e+00> : vector<32xf32>
    %37 = vector.multi_reduction <add>, %36, %cst_22 [0] : vector<24x32xf32> to vector<32xf32>
    %38 = vector.shape_cast %37 : vector<32xf32> to vector<1x32xf32>
    %39 = arith.addf %28, %38 : vector<1x32xf32>
    %40 = arith.mulf %36, %36 : vector<24x32xf32>
    %cst_23 = arith.constant dense<0.000000e+00> : vector<32xf32>
    %41 = vector.multi_reduction <add>, %40, %cst_23 [0] : vector<24x32xf32> to vector<32xf32>
    %42 = vector.shape_cast %41 : vector<32xf32> to vector<1x32xf32>
    %43 = arith.addf %32, %42 : vector<1x32xf32>
    %c3 = arith.constant 3 : index
    %c0_24 = arith.constant 0 : index
    %c0_25 = arith.constant 0 : index
    %44 = vector.load %arg1[%c3, %c0_24, %c0_25] : memref<4x24x24xf32, #tpu.memory_space<vmem>>, vector<1x24x24xf32>
    %45 = vector.shape_cast %44 : vector<1x24x24xf32> to vector<24x24xf32>
    %cst_26 = arith.constant dense<0.000000e+00> : vector<24x32xf32>
    %46 = tpu.matmul %45, %8, %cst_26 {dimension_numbers = #tpu.dot_dimension_numbers<[1], [0], [0], [1], [0, 0, 1, 1], [], []>} : vector<24x24xf32>, vector<24x32xf32>, vector<24x32xf32> -> vector<24x32xf32>
    %47 = arith.addf %4, %46 : vector<24x32xf32>
    %cst_27 = arith.constant dense<0.000000e+00> : vector<32xf32>
    %48 = vector.multi_reduction <add>, %47, %cst_27 [0] : vector<24x32xf32> to vector<32xf32>
    %49 = vector.shape_cast %48 : vector<32xf32> to vector<1x32xf32>
    %50 = arith.addf %39, %49 : vector<1x32xf32>
    %51 = arith.mulf %47, %47 : vector<24x32xf32>
    %cst_28 = arith.constant dense<0.000000e+00> : vector<32xf32>
    %52 = vector.multi_reduction <add>, %51, %cst_28 [0] : vector<24x32xf32> to vector<32xf32>
    %53 = vector.shape_cast %52 : vector<32xf32> to vector<1x32xf32>
    %54 = arith.addf %43, %53 : vector<1x32xf32>
    %cst_29 = arith.constant 0.010416667 : f32
    %55 = vector.broadcast %cst_29 : f32 to vector<1x32xf32>
    %56 = arith.mulf %50, %55 : vector<1x32xf32>
    %cst_30 = arith.constant 0.010416667 : f32
    %57 = vector.broadcast %cst_30 : f32 to vector<1x32xf32>
    %58 = arith.mulf %54, %57 : vector<1x32xf32>
    %59 = arith.mulf %56, %56 : vector<1x32xf32>
    %60 = arith.subf %58, %59 : vector<1x32xf32>
    %cst_31 = arith.constant 0.000000e+00 : f32
    %61 = vector.broadcast %cst_31 : f32 to vector<1x32xf32>
    %62 = arith.maximumf %60, %61 : vector<1x32xf32>
    %cst_32 = arith.constant 9.99999974E-6 : f32
    %63 = vector.broadcast %cst_32 : f32 to vector<1x32xf32>
    %64 = arith.addf %62, %63 : vector<1x32xf32>
    %65 = math.rsqrt %64 : vector<1x32xf32>
    %66 = vector.broadcast %56 : vector<1x32xf32> to vector<24x32xf32>
    %67 = arith.subf %14, %66 : vector<24x32xf32>
    %68 = vector.broadcast %65 : vector<1x32xf32> to vector<24x32xf32>
    %69 = arith.mulf %67, %68 : vector<24x32xf32>
    %cst_33 = arith.constant 0.000000e+00 : f32
    %70 = vector.broadcast %cst_33 : f32 to vector<24x32xf32>
    %71 = arith.cmpf oge, %69, %70 : vector<24x32xf32>
    %cst_34 = arith.constant 2.000000e-01 : f32
    %72 = vector.broadcast %cst_34 : f32 to vector<24x32xf32>
    %73 = arith.mulf %72, %69 : vector<24x32xf32>
    %74 = arith.select %71, %69, %73 : vector<24x32xi1>, vector<24x32xf32>
    %75 = vector.broadcast %56 : vector<1x32xf32> to vector<24x32xf32>
    %76 = arith.subf %25, %75 : vector<24x32xf32>
    %77 = vector.broadcast %65 : vector<1x32xf32> to vector<24x32xf32>
    %78 = arith.mulf %76, %77 : vector<24x32xf32>
    %cst_35 = arith.constant 0.000000e+00 : f32
    %79 = vector.broadcast %cst_35 : f32 to vector<24x32xf32>
    %80 = arith.cmpf oge, %78, %79 : vector<24x32xf32>
    %cst_36 = arith.constant 2.000000e-01 : f32
    %81 = vector.broadcast %cst_36 : f32 to vector<24x32xf32>
    %82 = arith.mulf %81, %78 : vector<24x32xf32>
    %83 = arith.select %80, %78, %82 : vector<24x32xi1>, vector<24x32xf32>
    %84 = arith.maximumf %74, %83 : vector<24x32xf32>
    %85 = vector.broadcast %56 : vector<1x32xf32> to vector<24x32xf32>
    %86 = arith.subf %36, %85 : vector<24x32xf32>
    %87 = vector.broadcast %65 : vector<1x32xf32> to vector<24x32xf32>
    %88 = arith.mulf %86, %87 : vector<24x32xf32>
    %cst_37 = arith.constant 0.000000e+00 : f32
    %89 = vector.broadcast %cst_37 : f32 to vector<24x32xf32>
    %90 = arith.cmpf oge, %88, %89 : vector<24x32xf32>
    %cst_38 = arith.constant 2.000000e-01 : f32
    %91 = vector.broadcast %cst_38 : f32 to vector<24x32xf32>
    %92 = arith.mulf %91, %88 : vector<24x32xf32>
    %93 = arith.select %90, %88, %92 : vector<24x32xi1>, vector<24x32xf32>
    %94 = arith.maximumf %84, %93 : vector<24x32xf32>
    %95 = vector.broadcast %56 : vector<1x32xf32> to vector<24x32xf32>
    %96 = arith.subf %47, %95 : vector<24x32xf32>
    %97 = vector.broadcast %65 : vector<1x32xf32> to vector<24x32xf32>
    %98 = arith.mulf %96, %97 : vector<24x32xf32>
    %cst_39 = arith.constant 0.000000e+00 : f32
    %99 = vector.broadcast %cst_39 : f32 to vector<24x32xf32>
    %100 = arith.cmpf oge, %98, %99 : vector<24x32xf32>
    %cst_40 = arith.constant 2.000000e-01 : f32
    %101 = vector.broadcast %cst_40 : f32 to vector<24x32xf32>
    %102 = arith.mulf %101, %98 : vector<24x32xf32>
    %103 = arith.select %100, %98, %102 : vector<24x32xi1>, vector<24x32xf32>
    %104 = arith.maximumf %94, %103 : vector<24x32xf32>
    %c0_41 = arith.constant 0 : index
    %c0_42 = arith.constant 0 : index
    %105 = vector.load %arg5[%c0_41, %c0_42] : memref<32x64xf32, #tpu.memory_space<vmem>>, vector<32x64xf32>
    %106 = arith.truncf %104 : vector<24x32xf32> to vector<24x32xbf16>
    %107 = arith.truncf %105 : vector<32x64xf32> to vector<32x64xbf16>
    %cst_43 = arith.constant dense<0.000000e+00> : vector<24x64xf32>
    %108 = tpu.matmul %106, %107, %cst_43 {dimension_numbers = #tpu.dot_dimension_numbers<[1], [0], [0], [1], [0, 0, 1, 1], [], []>} : vector<24x32xbf16>, vector<32x64xbf16>, vector<24x64xf32> -> vector<24x64xf32>
    %c0_44 = arith.constant 0 : index
    %c0_45 = arith.constant 0 : index
    %109 = vector.load %arg6[%c0_44, %c0_45] : memref<32x64xf32, #tpu.memory_space<vmem>>, vector<32x64xf32>
    %110 = arith.truncf %104 : vector<24x32xf32> to vector<24x32xbf16>
    %111 = arith.truncf %109 : vector<32x64xf32> to vector<32x64xbf16>
    %cst_46 = arith.constant dense<0.000000e+00> : vector<24x64xf32>
    %112 = tpu.matmul %110, %111, %cst_46 {dimension_numbers = #tpu.dot_dimension_numbers<[1], [0], [0], [1], [0, 0, 1, 1], [], []>} : vector<24x32xbf16>, vector<32x64xbf16>, vector<24x64xf32> -> vector<24x64xf32>
    %cst_47 = arith.constant 0.000000e+00 : f32
    %113 = vector.broadcast %cst_47 : f32 to vector<1x64xf32>
    %cst_48 = arith.constant 0.000000e+00 : f32
    %114 = vector.broadcast %cst_48 : f32 to vector<1x64xf32>
    %c0_49 = arith.constant 0 : index
    %c0_50 = arith.constant 0 : index
    %c0_51 = arith.constant 0 : index
    %115 = vector.load %arg1[%c0_49, %c0_50, %c0_51] : memref<4x24x24xf32, #tpu.memory_space<vmem>>, vector<1x24x24xf32>
    %116 = vector.shape_cast %115 : vector<1x24x24xf32> to vector<24x24xf32>
    %cst_52 = arith.constant dense<0.000000e+00> : vector<24x64xf32>
    %117 = tpu.matmul %116, %112, %cst_52 {dimension_numbers = #tpu.dot_dimension_numbers<[1], [0], [0], [1], [0, 0, 1, 1], [], []>} : vector<24x24xf32>, vector<24x64xf32>, vector<24x64xf32> -> vector<24x64xf32>
    %118 = arith.addf %108, %117 : vector<24x64xf32>
    %cst_53 = arith.constant dense<0.000000e+00> : vector<64xf32>
    %119 = vector.multi_reduction <add>, %118, %cst_53 [0] : vector<24x64xf32> to vector<64xf32>
    %120 = vector.shape_cast %119 : vector<64xf32> to vector<1x64xf32>
    %121 = arith.addf %113, %120 : vector<1x64xf32>
    %122 = arith.mulf %118, %118 : vector<24x64xf32>
    %cst_54 = arith.constant dense<0.000000e+00> : vector<64xf32>
    %123 = vector.multi_reduction <add>, %122, %cst_54 [0] : vector<24x64xf32> to vector<64xf32>
    %124 = vector.shape_cast %123 : vector<64xf32> to vector<1x64xf32>
    %125 = arith.addf %114, %124 : vector<1x64xf32>
    %c1_55 = arith.constant 1 : index
    %c0_56 = arith.constant 0 : index
    %c0_57 = arith.constant 0 : index
    %126 = vector.load %arg1[%c1_55, %c0_56, %c0_57] : memref<4x24x24xf32, #tpu.memory_space<vmem>>, vector<1x24x24xf32>
    %127 = vector.shape_cast %126 : vector<1x24x24xf32> to vector<24x24xf32>
    %cst_58 = arith.constant dense<0.000000e+00> : vector<24x64xf32>
    %128 = tpu.matmul %127, %112, %cst_58 {dimension_numbers = #tpu.dot_dimension_numbers<[1], [0], [0], [1], [0, 0, 1, 1], [], []>} : vector<24x24xf32>, vector<24x64xf32>, vector<24x64xf32> -> vector<24x64xf32>
    %129 = arith.addf %108, %128 : vector<24x64xf32>
    %cst_59 = arith.constant dense<0.000000e+00> : vector<64xf32>
    %130 = vector.multi_reduction <add>, %129, %cst_59 [0] : vector<24x64xf32> to vector<64xf32>
    %131 = vector.shape_cast %130 : vector<64xf32> to vector<1x64xf32>
    %132 = arith.addf %121, %131 : vector<1x64xf32>
    %133 = arith.mulf %129, %129 : vector<24x64xf32>
    %cst_60 = arith.constant dense<0.000000e+00> : vector<64xf32>
    %134 = vector.multi_reduction <add>, %133, %cst_60 [0] : vector<24x64xf32> to vector<64xf32>
    %135 = vector.shape_cast %134 : vector<64xf32> to vector<1x64xf32>
    %136 = arith.addf %125, %135 : vector<1x64xf32>
    %c2_61 = arith.constant 2 : index
    %c0_62 = arith.constant 0 : index
    %c0_63 = arith.constant 0 : index
    %137 = vector.load %arg1[%c2_61, %c0_62, %c0_63] : memref<4x24x24xf32, #tpu.memory_space<vmem>>, vector<1x24x24xf32>
    %138 = vector.shape_cast %137 : vector<1x24x24xf32> to vector<24x24xf32>
    %cst_64 = arith.constant dense<0.000000e+00> : vector<24x64xf32>
    %139 = tpu.matmul %138, %112, %cst_64 {dimension_numbers = #tpu.dot_dimension_numbers<[1], [0], [0], [1], [0, 0, 1, 1], [], []>} : vector<24x24xf32>, vector<24x64xf32>, vector<24x64xf32> -> vector<24x64xf32>
    %140 = arith.addf %108, %139 : vector<24x64xf32>
    %cst_65 = arith.constant dense<0.000000e+00> : vector<64xf32>
    %141 = vector.multi_reduction <add>, %140, %cst_65 [0] : vector<24x64xf32> to vector<64xf32>
    %142 = vector.shape_cast %141 : vector<64xf32> to vector<1x64xf32>
    %143 = arith.addf %132, %142 : vector<1x64xf32>
    %144 = arith.mulf %140, %140 : vector<24x64xf32>
    %cst_66 = arith.constant dense<0.000000e+00> : vector<64xf32>
    %145 = vector.multi_reduction <add>, %144, %cst_66 [0] : vector<24x64xf32> to vector<64xf32>
    %146 = vector.shape_cast %145 : vector<64xf32> to vector<1x64xf32>
    %147 = arith.addf %136, %146 : vector<1x64xf32>
    %c3_67 = arith.constant 3 : index
    %c0_68 = arith.constant 0 : index
    %c0_69 = arith.constant 0 : index
    %148 = vector.load %arg1[%c3_67, %c0_68, %c0_69] : memref<4x24x24xf32, #tpu.memory_space<vmem>>, vector<1x24x24xf32>
    %149 = vector.shape_cast %148 : vector<1x24x24xf32> to vector<24x24xf32>
    %cst_70 = arith.constant dense<0.000000e+00> : vector<24x64xf32>
    %150 = tpu.matmul %149, %112, %cst_70 {dimension_numbers = #tpu.dot_dimension_numbers<[1], [0], [0], [1], [0, 0, 1, 1], [], []>} : vector<24x24xf32>, vector<24x64xf32>, vector<24x64xf32> -> vector<24x64xf32>
    %151 = arith.addf %108, %150 : vector<24x64xf32>
    %cst_71 = arith.constant dense<0.000000e+00> : vector<64xf32>
    %152 = vector.multi_reduction <add>, %151, %cst_71 [0] : vector<24x64xf32> to vector<64xf32>
    %153 = vector.shape_cast %152 : vector<64xf32> to vector<1x64xf32>
    %154 = arith.addf %143, %153 : vector<1x64xf32>
    %155 = arith.mulf %151, %151 : vector<24x64xf32>
    %cst_72 = arith.constant dense<0.000000e+00> : vector<64xf32>
    %156 = vector.multi_reduction <add>, %155, %cst_72 [0] : vector<24x64xf32> to vector<64xf32>
    %157 = vector.shape_cast %156 : vector<64xf32> to vector<1x64xf32>
    %158 = arith.addf %147, %157 : vector<1x64xf32>
    %cst_73 = arith.constant 0.010416667 : f32
    %159 = vector.broadcast %cst_73 : f32 to vector<1x64xf32>
    %160 = arith.mulf %154, %159 : vector<1x64xf32>
    %cst_74 = arith.constant 0.010416667 : f32
    %161 = vector.broadcast %cst_74 : f32 to vector<1x64xf32>
    %162 = arith.mulf %158, %161 : vector<1x64xf32>
    %163 = arith.mulf %160, %160 : vector<1x64xf32>
    %164 = arith.subf %162, %163 : vector<1x64xf32>
    %cst_75 = arith.constant 0.000000e+00 : f32
    %165 = vector.broadcast %cst_75 : f32 to vector<1x64xf32>
    %166 = arith.maximumf %164, %165 : vector<1x64xf32>
    %cst_76 = arith.constant 9.99999974E-6 : f32
    %167 = vector.broadcast %cst_76 : f32 to vector<1x64xf32>
    %168 = arith.addf %166, %167 : vector<1x64xf32>
    %169 = math.rsqrt %168 : vector<1x64xf32>
    %170 = vector.broadcast %160 : vector<1x64xf32> to vector<24x64xf32>
    %171 = arith.subf %118, %170 : vector<24x64xf32>
    %172 = vector.broadcast %169 : vector<1x64xf32> to vector<24x64xf32>
    %173 = arith.mulf %171, %172 : vector<24x64xf32>
    %cst_77 = arith.constant 0.000000e+00 : f32
    %174 = vector.broadcast %cst_77 : f32 to vector<24x64xf32>
    %175 = arith.cmpf oge, %173, %174 : vector<24x64xf32>
    %cst_78 = arith.constant 2.000000e-01 : f32
    %176 = vector.broadcast %cst_78 : f32 to vector<24x64xf32>
    %177 = arith.mulf %176, %173 : vector<24x64xf32>
    %178 = arith.select %175, %173, %177 : vector<24x64xi1>, vector<24x64xf32>
    %179 = vector.broadcast %160 : vector<1x64xf32> to vector<24x64xf32>
    %180 = arith.subf %129, %179 : vector<24x64xf32>
    %181 = vector.broadcast %169 : vector<1x64xf32> to vector<24x64xf32>
    %182 = arith.mulf %180, %181 : vector<24x64xf32>
    %cst_79 = arith.constant 0.000000e+00 : f32
    %183 = vector.broadcast %cst_79 : f32 to vector<24x64xf32>
    %184 = arith.cmpf oge, %182, %183 : vector<24x64xf32>
    %cst_80 = arith.constant 2.000000e-01 : f32
    %185 = vector.broadcast %cst_80 : f32 to vector<24x64xf32>
    %186 = arith.mulf %185, %182 : vector<24x64xf32>
    %187 = arith.select %184, %182, %186 : vector<24x64xi1>, vector<24x64xf32>
    %188 = arith.maximumf %178, %187 : vector<24x64xf32>
    %189 = vector.broadcast %160 : vector<1x64xf32> to vector<24x64xf32>
    %190 = arith.subf %140, %189 : vector<24x64xf32>
    %191 = vector.broadcast %169 : vector<1x64xf32> to vector<24x64xf32>
    %192 = arith.mulf %190, %191 : vector<24x64xf32>
    %cst_81 = arith.constant 0.000000e+00 : f32
    %193 = vector.broadcast %cst_81 : f32 to vector<24x64xf32>
    %194 = arith.cmpf oge, %192, %193 : vector<24x64xf32>
    %cst_82 = arith.constant 2.000000e-01 : f32
    %195 = vector.broadcast %cst_82 : f32 to vector<24x64xf32>
    %196 = arith.mulf %195, %192 : vector<24x64xf32>
    %197 = arith.select %194, %192, %196 : vector<24x64xi1>, vector<24x64xf32>
    %198 = arith.maximumf %188, %197 : vector<24x64xf32>
    %199 = vector.broadcast %160 : vector<1x64xf32> to vector<24x64xf32>
    %200 = arith.subf %151, %199 : vector<24x64xf32>
    %201 = vector.broadcast %169 : vector<1x64xf32> to vector<24x64xf32>
    %202 = arith.mulf %200, %201 : vector<24x64xf32>
    %cst_83 = arith.constant 0.000000e+00 : f32
    %203 = vector.broadcast %cst_83 : f32 to vector<24x64xf32>
    %204 = arith.cmpf oge, %202, %203 : vector<24x64xf32>
    %cst_84 = arith.constant 2.000000e-01 : f32
    %205 = vector.broadcast %cst_84 : f32 to vector<24x64xf32>
    %206 = arith.mulf %205, %202 : vector<24x64xf32>
    %207 = arith.select %204, %202, %206 : vector<24x64xi1>, vector<24x64xf32>
    %208 = arith.maximumf %198, %207 : vector<24x64xf32>
    %c0_85 = arith.constant 0 : index
    %c0_86 = arith.constant 0 : index
    %209 = vector.load %arg7[%c0_85, %c0_86] : memref<32x32xf32, #tpu.memory_space<vmem>>, vector<32x32xf32>
    %210 = arith.truncf %0 : vector<24x32xf32> to vector<24x32xbf16>
    %211 = arith.truncf %209 : vector<32x32xf32> to vector<32x32xbf16>
    %cst_87 = arith.constant dense<0.000000e+00> : vector<24x32xf32>
    %212 = tpu.matmul %210, %211, %cst_87 {dimension_numbers = #tpu.dot_dimension_numbers<[1], [0], [0], [1], [0, 0, 1, 1], [], []>} : vector<24x32xbf16>, vector<32x32xbf16>, vector<24x32xf32> -> vector<24x32xf32>
    %c0_88 = arith.constant 0 : index
    %c0_89 = arith.constant 0 : index
    %213 = vector.load %arg8[%c0_88, %c0_89] : memref<32x32xf32, #tpu.memory_space<vmem>>, vector<32x32xf32>
    %214 = arith.truncf %104 : vector<24x32xf32> to vector<24x32xbf16>
    %215 = arith.truncf %213 : vector<32x32xf32> to vector<32x32xbf16>
    %cst_90 = arith.constant dense<0.000000e+00> : vector<24x32xf32>
    %216 = tpu.matmul %214, %215, %cst_90 {dimension_numbers = #tpu.dot_dimension_numbers<[1], [0], [0], [1], [0, 0, 1, 1], [], []>} : vector<24x32xbf16>, vector<32x32xbf16>, vector<24x32xf32> -> vector<24x32xf32>
    %217 = arith.addf %212, %216 : vector<24x32xf32>
    %c0_91 = arith.constant 0 : index
    %c0_92 = arith.constant 0 : index
    %218 = vector.load %arg9[%c0_91, %c0_92] : memref<64x32xf32, #tpu.memory_space<vmem>>, vector<64x32xf32>
    %219 = arith.truncf %208 : vector<24x64xf32> to vector<24x64xbf16>
    %220 = arith.truncf %218 : vector<64x32xf32> to vector<64x32xbf16>
    %cst_93 = arith.constant dense<0.000000e+00> : vector<24x32xf32>
    %221 = tpu.matmul %219, %220, %cst_93 {dimension_numbers = #tpu.dot_dimension_numbers<[1], [0], [0], [1], [0, 0, 1, 1], [], []>} : vector<24x64xbf16>, vector<64x32xbf16>, vector<24x32xf32> -> vector<24x32xf32>
    %222 = arith.addf %217, %221 : vector<24x32xf32>
    %cst_94 = arith.constant dense<0.000000e+00> : vector<32xf32>
    %223 = vector.multi_reduction <add>, %222, %cst_94 [0] : vector<24x32xf32> to vector<32xf32>
    %224 = vector.shape_cast %223 : vector<32xf32> to vector<1x32xf32>
    %cst_95 = arith.constant 2.400000e+01 : f32
    %225 = vector.broadcast %cst_95 : f32 to vector<1x32xf32>
    %226 = arith.divf %224, %225 : vector<1x32xf32>
    %227 = arith.mulf %222, %222 : vector<24x32xf32>
    %cst_96 = arith.constant dense<0.000000e+00> : vector<32xf32>
    %228 = vector.multi_reduction <add>, %227, %cst_96 [0] : vector<24x32xf32> to vector<32xf32>
    %229 = vector.shape_cast %228 : vector<32xf32> to vector<1x32xf32>
    %cst_97 = arith.constant 2.400000e+01 : f32
    %230 = vector.broadcast %cst_97 : f32 to vector<1x32xf32>
    %231 = arith.divf %229, %230 : vector<1x32xf32>
    %232 = arith.mulf %226, %226 : vector<1x32xf32>
    %233 = arith.subf %231, %232 : vector<1x32xf32>
    %cst_98 = arith.constant 0.000000e+00 : f32
    %234 = vector.broadcast %cst_98 : f32 to vector<1x32xf32>
    %235 = arith.maximumf %233, %234 : vector<1x32xf32>
    %236 = vector.broadcast %226 : vector<1x32xf32> to vector<24x32xf32>
    %237 = arith.subf %222, %236 : vector<24x32xf32>
    %cst_99 = arith.constant 9.99999974E-6 : f32
    %238 = vector.broadcast %cst_99 : f32 to vector<1x32xf32>
    %239 = arith.addf %235, %238 : vector<1x32xf32>
    %240 = math.rsqrt %239 : vector<1x32xf32>
    %241 = vector.broadcast %240 : vector<1x32xf32> to vector<24x32xf32>
    %242 = arith.mulf %237, %241 : vector<24x32xf32>
    %cst_100 = arith.constant 0.000000e+00 : f32
    %243 = vector.broadcast %cst_100 : f32 to vector<24x32xf32>
    %244 = arith.cmpf oge, %242, %243 : vector<24x32xf32>
    %cst_101 = arith.constant 2.000000e-01 : f32
    %245 = vector.broadcast %cst_101 : f32 to vector<24x32xf32>
    %246 = arith.mulf %245, %242 : vector<24x32xf32>
    %247 = arith.select %244, %242, %246 : vector<24x32xi1>, vector<24x32xf32>
    %c0_102 = arith.constant 0 : index
    %c0_103 = arith.constant 0 : index
    %248 = vector.load %arg10[%c0_102, %c0_103] : memref<32x32xf32, #tpu.memory_space<vmem>>, vector<32x32xf32>
    %249 = arith.truncf %247 : vector<24x32xf32> to vector<24x32xbf16>
    %250 = arith.truncf %248 : vector<32x32xf32> to vector<32x32xbf16>
    %cst_104 = arith.constant dense<0.000000e+00> : vector<24x32xf32>
    %251 = tpu.matmul %249, %250, %cst_104 {dimension_numbers = #tpu.dot_dimension_numbers<[1], [0], [0], [1], [0, 0, 1, 1], [], []>} : vector<24x32xbf16>, vector<32x32xbf16>, vector<24x32xf32> -> vector<24x32xf32>
    %c0_105 = arith.constant 0 : index
    %c0_106 = arith.constant 0 : index
    %252 = vector.load %arg11[%c0_105, %c0_106] : memref<1x32xf32, #tpu.memory_space<vmem>>, vector<1x32xf32>
    %253 = vector.broadcast %252 : vector<1x32xf32> to vector<24x32xf32>
    %254 = arith.addf %251, %253 : vector<24x32xf32>
    %c0_107 = arith.constant 0 : index
    %c0_108 = arith.constant 0 : index
    %255 = vector.load %arg12[%c0_107, %c0_108] : memref<32x32xf32, #tpu.memory_space<vmem>>, vector<32x32xf32>
    %256 = arith.truncf %247 : vector<24x32xf32> to vector<24x32xbf16>
    %257 = arith.truncf %255 : vector<32x32xf32> to vector<32x32xbf16>
    %cst_109 = arith.constant dense<0.000000e+00> : vector<24x32xf32>
    %258 = tpu.matmul %256, %257, %cst_109 {dimension_numbers = #tpu.dot_dimension_numbers<[1], [0], [0], [1], [0, 0, 1, 1], [], []>} : vector<24x32xbf16>, vector<32x32xbf16>, vector<24x32xf32> -> vector<24x32xf32>
    %c0_110 = arith.constant 0 : index
    %c0_111 = arith.constant 0 : index
    %259 = vector.load %arg13[%c0_110, %c0_111] : memref<1x32xf32, #tpu.memory_space<vmem>>, vector<1x32xf32>
    %260 = vector.broadcast %259 : vector<1x32xf32> to vector<24x32xf32>
    %261 = arith.addf %258, %260 : vector<24x32xf32>
    %c0_112 = arith.constant 0 : index
    %c0_113 = arith.constant 0 : index
    %262 = vector.load %arg14[%c0_112, %c0_113] : memref<32x32xf32, #tpu.memory_space<vmem>>, vector<32x32xf32>
    %263 = arith.truncf %247 : vector<24x32xf32> to vector<24x32xbf16>
    %264 = arith.truncf %262 : vector<32x32xf32> to vector<32x32xbf16>
    %cst_114 = arith.constant dense<0.000000e+00> : vector<24x32xf32>
    %265 = tpu.matmul %263, %264, %cst_114 {dimension_numbers = #tpu.dot_dimension_numbers<[1], [0], [0], [1], [0, 0, 1, 1], [], []>} : vector<24x32xbf16>, vector<32x32xbf16>, vector<24x32xf32> -> vector<24x32xf32>
    %c0_115 = arith.constant 0 : index
    %c0_116 = arith.constant 0 : index
    %266 = vector.load %arg15[%c0_115, %c0_116] : memref<1x32xf32, #tpu.memory_space<vmem>>, vector<1x32xf32>
    %267 = vector.broadcast %266 : vector<1x32xf32> to vector<24x32xf32>
    %268 = arith.addf %265, %267 : vector<24x32xf32>
    %c0_117 = arith.constant 0 : index
    %c0_118 = arith.constant 0 : index
    %c0_119 = arith.constant 0 : index
    %269 = vector.load %arg2[%c0_117, %c0_118, %c0_119] : memref<24x24x32xf32, #tpu.memory_space<vmem>>, vector<24x24x32xf32>
    %270 = vector.shape_cast %254 : vector<24x32xf32> to vector<24x1x32xf32>
    %271 = vector.broadcast %270 : vector<24x1x32xf32> to vector<24x24x32xf32>
    %272 = arith.mulf %271, %269 : vector<24x24x32xf32>
    %c0_120 = arith.constant 0 : index
    %c0_121 = arith.constant 0 : index
    %273 = vector.load %arg16[%c0_120, %c0_121] : memref<32x32xf32, #tpu.memory_space<vmem>>, vector<32x32xf32>
    %cst_122 = arith.constant 0.000000e+00 : f32
    %274 = vector.broadcast %cst_122 : f32 to vector<24x32xf32>
    %275 = vector.extract_strided_slice %254 {offsets = [0, 0], sizes = [24, 8], strides = [1, 1]} : vector<24x32xf32> to vector<24x8xf32>
    %276 = vector.extract_strided_slice %261 {offsets = [0, 0], sizes = [24, 8], strides = [1, 1]} : vector<24x32xf32> to vector<24x8xf32>
    %277 = vector.extract_strided_slice %268 {offsets = [0, 0], sizes = [24, 8], strides = [1, 1]} : vector<24x32xf32> to vector<24x8xf32>
    %278 = arith.truncf %275 : vector<24x8xf32> to vector<24x8xbf16>
    %279 = arith.truncf %276 : vector<24x8xf32> to vector<24x8xbf16>
    %cst_123 = arith.constant dense<0.000000e+00> : vector<24x24xf32>
    %280 = tpu.matmul %278, %279, %cst_123 {dimension_numbers = #tpu.dot_dimension_numbers<[1], [1], [0], [0], [0, 0, 1, 0], [], []>} : vector<24x8xbf16>, vector<24x8xbf16>, vector<24x24xf32> -> vector<24x24xf32>
    %281 = vector.extract_strided_slice %272 {offsets = [0, 0, 0], sizes = [24, 24, 8], strides = [1, 1, 1]} : vector<24x24x32xf32> to vector<24x24x8xf32>
    %cst_124 = arith.constant dense<0.000000e+00> : vector<24x24xf32>
    %282 = vector.multi_reduction <add>, %281, %cst_124 [2] : vector<24x24x8xf32> to vector<24x24xf32>
    %283 = arith.addf %280, %282 : vector<24x24xf32>
    %cst_125 = arith.constant 0.353553385 : f32
    %284 = vector.broadcast %cst_125 : f32 to vector<24x24xf32>
    %285 = arith.mulf %283, %284 : vector<24x24xf32>
    %cst_126 = arith.constant dense<0xFF800000> : vector<24xf32>
    %286 = vector.multi_reduction <maximumf>, %285, %cst_126 [1] : vector<24x24xf32> to vector<24xf32>
    %287 = vector.shape_cast %286 : vector<24xf32> to vector<24x1xf32>
    %288 = vector.broadcast %287 : vector<24x1xf32> to vector<24x24xf32>
    %289 = arith.subf %285, %288 : vector<24x24xf32>
    %290 = math.exp %289 : vector<24x24xf32>
    %cst_127 = arith.constant dense<0.000000e+00> : vector<24xf32>
    %291 = vector.multi_reduction <add>, %290, %cst_127 [1] : vector<24x24xf32> to vector<24xf32>
    %292 = vector.shape_cast %291 : vector<24xf32> to vector<24x1xf32>
    %293 = tpu.reciprocal %292 {approx = true} : vector<24x1xf32> -> vector<24x1xf32>
    %294 = vector.broadcast %293 : vector<24x1xf32> to vector<24x24xf32>
    %295 = arith.mulf %290, %294 : vector<24x24xf32>
    %296 = arith.truncf %295 : vector<24x24xf32> to vector<24x24xbf16>
    %297 = arith.truncf %277 : vector<24x8xf32> to vector<24x8xbf16>
    %cst_128 = arith.constant dense<0.000000e+00> : vector<24x8xf32>
    %298 = tpu.matmul %296, %297, %cst_128 {dimension_numbers = #tpu.dot_dimension_numbers<[1], [0], [0], [1], [0, 0, 1, 1], [], []>} : vector<24x24xbf16>, vector<24x8xbf16>, vector<24x8xf32> -> vector<24x8xf32>
    %299 = vector.extract_strided_slice %273 {offsets = [0, 0], sizes = [8, 32], strides = [1, 1]} : vector<32x32xf32> to vector<8x32xf32>
    %300 = arith.truncf %298 : vector<24x8xf32> to vector<24x8xbf16>
    %301 = arith.truncf %299 : vector<8x32xf32> to vector<8x32xbf16>
    %cst_129 = arith.constant dense<0.000000e+00> : vector<24x32xf32>
    %302 = tpu.matmul %300, %301, %cst_129 {dimension_numbers = #tpu.dot_dimension_numbers<[1], [0], [0], [1], [0, 0, 1, 1], [], []>} : vector<24x8xbf16>, vector<8x32xbf16>, vector<24x32xf32> -> vector<24x32xf32>
    %303 = arith.addf %274, %302 : vector<24x32xf32>
    %304 = vector.extract_strided_slice %254 {offsets = [0, 8], sizes = [24, 8], strides = [1, 1]} : vector<24x32xf32> to vector<24x8xf32>
    %305 = vector.extract_strided_slice %261 {offsets = [0, 8], sizes = [24, 8], strides = [1, 1]} : vector<24x32xf32> to vector<24x8xf32>
    %306 = vector.extract_strided_slice %268 {offsets = [0, 8], sizes = [24, 8], strides = [1, 1]} : vector<24x32xf32> to vector<24x8xf32>
    %307 = arith.truncf %304 : vector<24x8xf32> to vector<24x8xbf16>
    %308 = arith.truncf %305 : vector<24x8xf32> to vector<24x8xbf16>
    %cst_130 = arith.constant dense<0.000000e+00> : vector<24x24xf32>
    %309 = tpu.matmul %307, %308, %cst_130 {dimension_numbers = #tpu.dot_dimension_numbers<[1], [1], [0], [0], [0, 0, 1, 0], [], []>} : vector<24x8xbf16>, vector<24x8xbf16>, vector<24x24xf32> -> vector<24x24xf32>
    %310 = vector.extract_strided_slice %272 {offsets = [0, 0, 8], sizes = [24, 24, 8], strides = [1, 1, 1]} : vector<24x24x32xf32> to vector<24x24x8xf32>
    %cst_131 = arith.constant dense<0.000000e+00> : vector<24x24xf32>
    %311 = vector.multi_reduction <add>, %310, %cst_131 [2] : vector<24x24x8xf32> to vector<24x24xf32>
    %312 = arith.addf %309, %311 : vector<24x24xf32>
    %cst_132 = arith.constant 0.353553385 : f32
    %313 = vector.broadcast %cst_132 : f32 to vector<24x24xf32>
    %314 = arith.mulf %312, %313 : vector<24x24xf32>
    %cst_133 = arith.constant dense<0xFF800000> : vector<24xf32>
    %315 = vector.multi_reduction <maximumf>, %314, %cst_133 [1] : vector<24x24xf32> to vector<24xf32>
    %316 = vector.shape_cast %315 : vector<24xf32> to vector<24x1xf32>
    %317 = vector.broadcast %316 : vector<24x1xf32> to vector<24x24xf32>
    %318 = arith.subf %314, %317 : vector<24x24xf32>
    %319 = math.exp %318 : vector<24x24xf32>
    %cst_134 = arith.constant dense<0.000000e+00> : vector<24xf32>
    %320 = vector.multi_reduction <add>, %319, %cst_134 [1] : vector<24x24xf32> to vector<24xf32>
    %321 = vector.shape_cast %320 : vector<24xf32> to vector<24x1xf32>
    %322 = tpu.reciprocal %321 {approx = true} : vector<24x1xf32> -> vector<24x1xf32>
    %323 = vector.broadcast %322 : vector<24x1xf32> to vector<24x24xf32>
    %324 = arith.mulf %319, %323 : vector<24x24xf32>
    %325 = arith.truncf %324 : vector<24x24xf32> to vector<24x24xbf16>
    %326 = arith.truncf %306 : vector<24x8xf32> to vector<24x8xbf16>
    %cst_135 = arith.constant dense<0.000000e+00> : vector<24x8xf32>
    %327 = tpu.matmul %325, %326, %cst_135 {dimension_numbers = #tpu.dot_dimension_numbers<[1], [0], [0], [1], [0, 0, 1, 1], [], []>} : vector<24x24xbf16>, vector<24x8xbf16>, vector<24x8xf32> -> vector<24x8xf32>
    %328 = vector.extract_strided_slice %273 {offsets = [8, 0], sizes = [8, 32], strides = [1, 1]} : vector<32x32xf32> to vector<8x32xf32>
    %329 = arith.truncf %327 : vector<24x8xf32> to vector<24x8xbf16>
    %330 = arith.truncf %328 : vector<8x32xf32> to vector<8x32xbf16>
    %cst_136 = arith.constant dense<0.000000e+00> : vector<24x32xf32>
    %331 = tpu.matmul %329, %330, %cst_136 {dimension_numbers = #tpu.dot_dimension_numbers<[1], [0], [0], [1], [0, 0, 1, 1], [], []>} : vector<24x8xbf16>, vector<8x32xbf16>, vector<24x32xf32> -> vector<24x32xf32>
    %332 = arith.addf %303, %331 : vector<24x32xf32>
    %333 = vector.extract_strided_slice %254 {offsets = [0, 16], sizes = [24, 8], strides = [1, 1]} : vector<24x32xf32> to vector<24x8xf32>
    %334 = vector.extract_strided_slice %261 {offsets = [0, 16], sizes = [24, 8], strides = [1, 1]} : vector<24x32xf32> to vector<24x8xf32>
    %335 = vector.extract_strided_slice %268 {offsets = [0, 16], sizes = [24, 8], strides = [1, 1]} : vector<24x32xf32> to vector<24x8xf32>
    %336 = arith.truncf %333 : vector<24x8xf32> to vector<24x8xbf16>
    %337 = arith.truncf %334 : vector<24x8xf32> to vector<24x8xbf16>
    %cst_137 = arith.constant dense<0.000000e+00> : vector<24x24xf32>
    %338 = tpu.matmul %336, %337, %cst_137 {dimension_numbers = #tpu.dot_dimension_numbers<[1], [1], [0], [0], [0, 0, 1, 0], [], []>} : vector<24x8xbf16>, vector<24x8xbf16>, vector<24x24xf32> -> vector<24x24xf32>
    %339 = vector.extract_strided_slice %272 {offsets = [0, 0, 16], sizes = [24, 24, 8], strides = [1, 1, 1]} : vector<24x24x32xf32> to vector<24x24x8xf32>
    %cst_138 = arith.constant dense<0.000000e+00> : vector<24x24xf32>
    %340 = vector.multi_reduction <add>, %339, %cst_138 [2] : vector<24x24x8xf32> to vector<24x24xf32>
    %341 = arith.addf %338, %340 : vector<24x24xf32>
    %cst_139 = arith.constant 0.353553385 : f32
    %342 = vector.broadcast %cst_139 : f32 to vector<24x24xf32>
    %343 = arith.mulf %341, %342 : vector<24x24xf32>
    %cst_140 = arith.constant dense<0xFF800000> : vector<24xf32>
    %344 = vector.multi_reduction <maximumf>, %343, %cst_140 [1] : vector<24x24xf32> to vector<24xf32>
    %345 = vector.shape_cast %344 : vector<24xf32> to vector<24x1xf32>
    %346 = vector.broadcast %345 : vector<24x1xf32> to vector<24x24xf32>
    %347 = arith.subf %343, %346 : vector<24x24xf32>
    %348 = math.exp %347 : vector<24x24xf32>
    %cst_141 = arith.constant dense<0.000000e+00> : vector<24xf32>
    %349 = vector.multi_reduction <add>, %348, %cst_141 [1] : vector<24x24xf32> to vector<24xf32>
    %350 = vector.shape_cast %349 : vector<24xf32> to vector<24x1xf32>
    %351 = tpu.reciprocal %350 {approx = true} : vector<24x1xf32> -> vector<24x1xf32>
    %352 = vector.broadcast %351 : vector<24x1xf32> to vector<24x24xf32>
    %353 = arith.mulf %348, %352 : vector<24x24xf32>
    %354 = arith.truncf %353 : vector<24x24xf32> to vector<24x24xbf16>
    %355 = arith.truncf %335 : vector<24x8xf32> to vector<24x8xbf16>
    %cst_142 = arith.constant dense<0.000000e+00> : vector<24x8xf32>
    %356 = tpu.matmul %354, %355, %cst_142 {dimension_numbers = #tpu.dot_dimension_numbers<[1], [0], [0], [1], [0, 0, 1, 1], [], []>} : vector<24x24xbf16>, vector<24x8xbf16>, vector<24x8xf32> -> vector<24x8xf32>
    %357 = vector.extract_strided_slice %273 {offsets = [16, 0], sizes = [8, 32], strides = [1, 1]} : vector<32x32xf32> to vector<8x32xf32>
    %358 = arith.truncf %356 : vector<24x8xf32> to vector<24x8xbf16>
    %359 = arith.truncf %357 : vector<8x32xf32> to vector<8x32xbf16>
    %cst_143 = arith.constant dense<0.000000e+00> : vector<24x32xf32>
    %360 = tpu.matmul %358, %359, %cst_143 {dimension_numbers = #tpu.dot_dimension_numbers<[1], [0], [0], [1], [0, 0, 1, 1], [], []>} : vector<24x8xbf16>, vector<8x32xbf16>, vector<24x32xf32> -> vector<24x32xf32>
    %361 = arith.addf %332, %360 : vector<24x32xf32>
    %362 = vector.extract_strided_slice %254 {offsets = [0, 24], sizes = [24, 8], strides = [1, 1]} : vector<24x32xf32> to vector<24x8xf32>
    %363 = vector.extract_strided_slice %261 {offsets = [0, 24], sizes = [24, 8], strides = [1, 1]} : vector<24x32xf32> to vector<24x8xf32>
    %364 = vector.extract_strided_slice %268 {offsets = [0, 24], sizes = [24, 8], strides = [1, 1]} : vector<24x32xf32> to vector<24x8xf32>
    %365 = arith.truncf %362 : vector<24x8xf32> to vector<24x8xbf16>
    %366 = arith.truncf %363 : vector<24x8xf32> to vector<24x8xbf16>
    %cst_144 = arith.constant dense<0.000000e+00> : vector<24x24xf32>
    %367 = tpu.matmul %365, %366, %cst_144 {dimension_numbers = #tpu.dot_dimension_numbers<[1], [1], [0], [0], [0, 0, 1, 0], [], []>} : vector<24x8xbf16>, vector<24x8xbf16>, vector<24x24xf32> -> vector<24x24xf32>
    %368 = vector.extract_strided_slice %272 {offsets = [0, 0, 24], sizes = [24, 24, 8], strides = [1, 1, 1]} : vector<24x24x32xf32> to vector<24x24x8xf32>
    %cst_145 = arith.constant dense<0.000000e+00> : vector<24x24xf32>
    %369 = vector.multi_reduction <add>, %368, %cst_145 [2] : vector<24x24x8xf32> to vector<24x24xf32>
    %370 = arith.addf %367, %369 : vector<24x24xf32>
    %cst_146 = arith.constant 0.353553385 : f32
    %371 = vector.broadcast %cst_146 : f32 to vector<24x24xf32>
    %372 = arith.mulf %370, %371 : vector<24x24xf32>
    %cst_147 = arith.constant dense<0xFF800000> : vector<24xf32>
    %373 = vector.multi_reduction <maximumf>, %372, %cst_147 [1] : vector<24x24xf32> to vector<24xf32>
    %374 = vector.shape_cast %373 : vector<24xf32> to vector<24x1xf32>
    %375 = vector.broadcast %374 : vector<24x1xf32> to vector<24x24xf32>
    %376 = arith.subf %372, %375 : vector<24x24xf32>
    %377 = math.exp %376 : vector<24x24xf32>
    %cst_148 = arith.constant dense<0.000000e+00> : vector<24xf32>
    %378 = vector.multi_reduction <add>, %377, %cst_148 [1] : vector<24x24xf32> to vector<24xf32>
    %379 = vector.shape_cast %378 : vector<24xf32> to vector<24x1xf32>
    %380 = tpu.reciprocal %379 {approx = true} : vector<24x1xf32> -> vector<24x1xf32>
    %381 = vector.broadcast %380 : vector<24x1xf32> to vector<24x24xf32>
    %382 = arith.mulf %377, %381 : vector<24x24xf32>
    %383 = arith.truncf %382 : vector<24x24xf32> to vector<24x24xbf16>
    %384 = arith.truncf %364 : vector<24x8xf32> to vector<24x8xbf16>
    %cst_149 = arith.constant dense<0.000000e+00> : vector<24x8xf32>
    %385 = tpu.matmul %383, %384, %cst_149 {dimension_numbers = #tpu.dot_dimension_numbers<[1], [0], [0], [1], [0, 0, 1, 1], [], []>} : vector<24x24xbf16>, vector<24x8xbf16>, vector<24x8xf32> -> vector<24x8xf32>
    %386 = vector.extract_strided_slice %273 {offsets = [24, 0], sizes = [8, 32], strides = [1, 1]} : vector<32x32xf32> to vector<8x32xf32>
    %387 = arith.truncf %385 : vector<24x8xf32> to vector<24x8xbf16>
    %388 = arith.truncf %386 : vector<8x32xf32> to vector<8x32xbf16>
    %cst_150 = arith.constant dense<0.000000e+00> : vector<24x32xf32>
    %389 = tpu.matmul %387, %388, %cst_150 {dimension_numbers = #tpu.dot_dimension_numbers<[1], [0], [0], [1], [0, 0, 1, 1], [], []>} : vector<24x8xbf16>, vector<8x32xbf16>, vector<24x32xf32> -> vector<24x32xf32>
    %390 = arith.addf %361, %389 : vector<24x32xf32>
    %c0_151 = arith.constant 0 : index
    %c0_152 = arith.constant 0 : index
    %391 = vector.load %arg17[%c0_151, %c0_152] : memref<1x32xf32, #tpu.memory_space<vmem>>, vector<1x32xf32>
    %392 = vector.broadcast %391 : vector<1x32xf32> to vector<24x32xf32>
    %393 = arith.addf %390, %392 : vector<24x32xf32>
    %394 = arith.addf %247, %393 : vector<24x32xf32>
    %cst_153 = arith.constant dense<0.000000e+00> : vector<24xf32>
    %395 = vector.multi_reduction <add>, %394, %cst_153 [1] : vector<24x32xf32> to vector<24xf32>
    %396 = vector.shape_cast %395 : vector<24xf32> to vector<24x1xf32>
    %cst_154 = arith.constant 3.200000e+01 : f32
    %397 = vector.broadcast %cst_154 : f32 to vector<24x1xf32>
    %398 = arith.divf %396, %397 : vector<24x1xf32>
    %399 = vector.broadcast %398 : vector<24x1xf32> to vector<24x32xf32>
    %400 = arith.subf %394, %399 : vector<24x32xf32>
    %401 = vector.broadcast %398 : vector<24x1xf32> to vector<24x32xf32>
    %402 = arith.subf %394, %401 : vector<24x32xf32>
    %403 = arith.mulf %400, %402 : vector<24x32xf32>
    %cst_155 = arith.constant dense<0.000000e+00> : vector<24xf32>
    %404 = vector.multi_reduction <add>, %403, %cst_155 [1] : vector<24x32xf32> to vector<24xf32>
    %405 = vector.shape_cast %404 : vector<24xf32> to vector<24x1xf32>
    %cst_156 = arith.constant 3.200000e+01 : f32
    %406 = vector.broadcast %cst_156 : f32 to vector<24x1xf32>
    %407 = arith.divf %405, %406 : vector<24x1xf32>
    %408 = vector.broadcast %398 : vector<24x1xf32> to vector<24x32xf32>
    %409 = arith.subf %394, %408 : vector<24x32xf32>
    %cst_157 = arith.constant 9.99999974E-6 : f32
    %410 = vector.broadcast %cst_157 : f32 to vector<24x1xf32>
    %411 = arith.addf %407, %410 : vector<24x1xf32>
    %412 = math.rsqrt %411 : vector<24x1xf32>
    %413 = vector.broadcast %412 : vector<24x1xf32> to vector<24x32xf32>
    %414 = arith.mulf %409, %413 : vector<24x32xf32>
    %c0_158 = arith.constant 0 : index
    %c0_159 = arith.constant 0 : index
    %415 = vector.load %arg18[%c0_158, %c0_159] : memref<1x32xf32, #tpu.memory_space<vmem>>, vector<1x32xf32>
    %416 = vector.broadcast %415 : vector<1x32xf32> to vector<24x32xf32>
    %417 = arith.mulf %414, %416 : vector<24x32xf32>
    %c0_160 = arith.constant 0 : index
    %c0_161 = arith.constant 0 : index
    %418 = vector.load %arg19[%c0_160, %c0_161] : memref<1x32xf32, #tpu.memory_space<vmem>>, vector<1x32xf32>
    %419 = vector.broadcast %418 : vector<1x32xf32> to vector<24x32xf32>
    %420 = arith.addf %417, %419 : vector<24x32xf32>
    %c0_162 = arith.constant 0 : index
    %c0_163 = arith.constant 0 : index
    %421 = vector.load %arg20[%c0_162, %c0_163] : memref<24x32xf32, #tpu.memory_space<vmem>>, vector<24x32xf32>
    tpu.vector_store %arg20[%c0_162, %c0_163], %420 {strides = array<i32>} : memref<24x32xf32, #tpu.memory_space<vmem>>, vector<24x32xf32>,
    return
  }
}

module attributes {stable_mosaic.version = 11 : i64} {
  func.func @kernel(%arg0: memref<16x32xf32, #tpu.memory_space<vmem>>, %arg1: memref<4x16x16xf32, #tpu.memory_space<vmem>>, %arg2: memref<16x16x32xf32, #tpu.memory_space<vmem>>, %arg3: memref<32x32xf32, #tpu.memory_space<vmem>>, %arg4: memref<32x32xf32, #tpu.memory_space<vmem>>, %arg5: memref<32x64xf32, #tpu.memory_space<vmem>>, %arg6: memref<32x64xf32, #tpu.memory_space<vmem>>, %arg7: memref<32x32xf32, #tpu.memory_space<vmem>>, %arg8: memref<32x32xf32, #tpu.memory_space<vmem>>, %arg9: memref<64x32xf32, #tpu.memory_space<vmem>>, %arg10: memref<32x32xf32, #tpu.memory_space<vmem>>, %arg11: memref<1x32xf32, #tpu.memory_space<vmem>>, %arg12: memref<32x32xf32, #tpu.memory_space<vmem>>, %arg13: memref<1x32xf32, #tpu.memory_space<vmem>>, %arg14: memref<32x32xf32, #tpu.memory_space<vmem>>, %arg15: memref<1x32xf32, #tpu.memory_space<vmem>>, %arg16: memref<32x32xf32, #tpu.memory_space<vmem>>, %arg17: memref<1x32xf32, #tpu.memory_space<vmem>>, %arg18: memref<1x32xf32, #tpu.memory_space<vmem>>, %arg19: memref<1x32xf32, #tpu.memory_space<vmem>>, %arg20: memref<16x32xf32, #tpu.memory_space<vmem>>) attributes {dimension_semantics = [], scalar_prefetch = 0 : i64, scratch_operands = 0 : i64, tpu.core_type = #tpu.core_type<tc>} {
    %c0 = arith.constant 0 : index
    %c0_0 = arith.constant 0 : index
    %0 = vector.load %arg0[%c0, %c0_0] : memref<16x32xf32, #tpu.memory_space<vmem>>, vector<16x32xf32>
    %c0_1 = arith.constant 0 : index
    %c0_2 = arith.constant 0 : index
    %1 = vector.load %arg3[%c0_1, %c0_2] : memref<32x32xf32, #tpu.memory_space<vmem>>, vector<32x32xf32>
    %2 = arith.truncf %0 : vector<16x32xf32> to vector<16x32xbf16>
    %3 = arith.truncf %1 : vector<32x32xf32> to vector<32x32xbf16>
    %cst = arith.constant dense<0.000000e+00> : vector<16x32xf32>
    %4 = tpu.matmul %2, %3, %cst {dimension_numbers = #tpu.dot_dimension_numbers<[1], [0], [0], [1], [0, 0, 1, 1], [], []>} : vector<16x32xbf16>, vector<32x32xbf16>, vector<16x32xf32> -> vector<16x32xf32>
    %c0_3 = arith.constant 0 : index
    %c0_4 = arith.constant 0 : index
    %5 = vector.load %arg4[%c0_3, %c0_4] : memref<32x32xf32, #tpu.memory_space<vmem>>, vector<32x32xf32>
    %6 = arith.truncf %0 : vector<16x32xf32> to vector<16x32xbf16>
    %7 = arith.truncf %5 : vector<32x32xf32> to vector<32x32xbf16>
    %cst_5 = arith.constant dense<0.000000e+00> : vector<16x32xf32>
    %8 = tpu.matmul %6, %7, %cst_5 {dimension_numbers = #tpu.dot_dimension_numbers<[1], [0], [0], [1], [0, 0, 1, 1], [], []>} : vector<16x32xbf16>, vector<32x32xbf16>, vector<16x32xf32> -> vector<16x32xf32>
    %cst_6 = arith.constant 0.000000e+00 : f32
    %9 = vector.broadcast %cst_6 : f32 to vector<1x32xf32>
    %cst_7 = arith.constant 0.000000e+00 : f32
    %10 = vector.broadcast %cst_7 : f32 to vector<1x32xf32>
    %c0_8 = arith.constant 0 : index
    %c0_9 = arith.constant 0 : index
    %c0_10 = arith.constant 0 : index
    %11 = vector.load %arg1[%c0_8, %c0_9, %c0_10] : memref<4x16x16xf32, #tpu.memory_space<vmem>>, vector<1x16x16xf32>
    %12 = vector.shape_cast %11 : vector<1x16x16xf32> to vector<16x16xf32>
    %cst_11 = arith.constant dense<0.000000e+00> : vector<16x32xf32>
    %13 = tpu.matmul %12, %8, %cst_11 {dimension_numbers = #tpu.dot_dimension_numbers<[1], [0], [0], [1], [0, 0, 1, 1], [], []>} : vector<16x16xf32>, vector<16x32xf32>, vector<16x32xf32> -> vector<16x32xf32>
    %14 = arith.addf %4, %13 : vector<16x32xf32>
    %cst_12 = arith.constant dense<0.000000e+00> : vector<32xf32>
    %15 = vector.multi_reduction <add>, %14, %cst_12 [0] : vector<16x32xf32> to vector<32xf32>
    %16 = vector.shape_cast %15 : vector<32xf32> to vector<1x32xf32>
    %17 = arith.addf %9, %16 : vector<1x32xf32>
    %18 = arith.mulf %14, %14 : vector<16x32xf32>
    %cst_13 = arith.constant dense<0.000000e+00> : vector<32xf32>
    %19 = vector.multi_reduction <add>, %18, %cst_13 [0] : vector<16x32xf32> to vector<32xf32>
    %20 = vector.shape_cast %19 : vector<32xf32> to vector<1x32xf32>
    %21 = arith.addf %10, %20 : vector<1x32xf32>
    %c1 = arith.constant 1 : index
    %c0_14 = arith.constant 0 : index
    %c0_15 = arith.constant 0 : index
    %22 = vector.load %arg1[%c1, %c0_14, %c0_15] : memref<4x16x16xf32, #tpu.memory_space<vmem>>, vector<1x16x16xf32>
    %23 = vector.shape_cast %22 : vector<1x16x16xf32> to vector<16x16xf32>
    %cst_16 = arith.constant dense<0.000000e+00> : vector<16x32xf32>
    %24 = tpu.matmul %23, %8, %cst_16 {dimension_numbers = #tpu.dot_dimension_numbers<[1], [0], [0], [1], [0, 0, 1, 1], [], []>} : vector<16x16xf32>, vector<16x32xf32>, vector<16x32xf32> -> vector<16x32xf32>
    %25 = arith.addf %4, %24 : vector<16x32xf32>
    %cst_17 = arith.constant dense<0.000000e+00> : vector<32xf32>
    %26 = vector.multi_reduction <add>, %25, %cst_17 [0] : vector<16x32xf32> to vector<32xf32>
    %27 = vector.shape_cast %26 : vector<32xf32> to vector<1x32xf32>
    %28 = arith.addf %17, %27 : vector<1x32xf32>
    %29 = arith.mulf %25, %25 : vector<16x32xf32>
    %cst_18 = arith.constant dense<0.000000e+00> : vector<32xf32>
    %30 = vector.multi_reduction <add>, %29, %cst_18 [0] : vector<16x32xf32> to vector<32xf32>
    %31 = vector.shape_cast %30 : vector<32xf32> to vector<1x32xf32>
    %32 = arith.addf %21, %31 : vector<1x32xf32>
    %c2 = arith.constant 2 : index
    %c0_19 = arith.constant 0 : index
    %c0_20 = arith.constant 0 : index
    %33 = vector.load %arg1[%c2, %c0_19, %c0_20] : memref<4x16x16xf32, #tpu.memory_space<vmem>>, vector<1x16x16xf32>
    %34 = vector.shape_cast %33 : vector<1x16x16xf32> to vector<16x16xf32>
    %cst_21 = arith.constant dense<0.000000e+00> : vector<16x32xf32>
    %35 = tpu.matmul %34, %8, %cst_21 {dimension_numbers = #tpu.dot_dimension_numbers<[1], [0], [0], [1], [0, 0, 1, 1], [], []>} : vector<16x16xf32>, vector<16x32xf32>, vector<16x32xf32> -> vector<16x32xf32>
    %36 = arith.addf %4, %35 : vector<16x32xf32>
    %cst_22 = arith.constant dense<0.000000e+00> : vector<32xf32>
    %37 = vector.multi_reduction <add>, %36, %cst_22 [0] : vector<16x32xf32> to vector<32xf32>
    %38 = vector.shape_cast %37 : vector<32xf32> to vector<1x32xf32>
    %39 = arith.addf %28, %38 : vector<1x32xf32>
    %40 = arith.mulf %36, %36 : vector<16x32xf32>
    %cst_23 = arith.constant dense<0.000000e+00> : vector<32xf32>
    %41 = vector.multi_reduction <add>, %40, %cst_23 [0] : vector<16x32xf32> to vector<32xf32>
    %42 = vector.shape_cast %41 : vector<32xf32> to vector<1x32xf32>
    %43 = arith.addf %32, %42 : vector<1x32xf32>
    %c3 = arith.constant 3 : index
    %c0_24 = arith.constant 0 : index
    %c0_25 = arith.constant 0 : index
    %44 = vector.load %arg1[%c3, %c0_24, %c0_25] : memref<4x16x16xf32, #tpu.memory_space<vmem>>, vector<1x16x16xf32>
    %45 = vector.shape_cast %44 : vector<1x16x16xf32> to vector<16x16xf32>
    %cst_26 = arith.constant dense<0.000000e+00> : vector<16x32xf32>
    %46 = tpu.matmul %45, %8, %cst_26 {dimension_numbers = #tpu.dot_dimension_numbers<[1], [0], [0], [1], [0, 0, 1, 1], [], []>} : vector<16x16xf32>, vector<16x32xf32>, vector<16x32xf32> -> vector<16x32xf32>
    %47 = arith.addf %4, %46 : vector<16x32xf32>
    %cst_27 = arith.constant dense<0.000000e+00> : vector<32xf32>
    %48 = vector.multi_reduction <add>, %47, %cst_27 [0] : vector<16x32xf32> to vector<32xf32>
    %49 = vector.shape_cast %48 : vector<32xf32> to vector<1x32xf32>
    %50 = arith.addf %39, %49 : vector<1x32xf32>
    %51 = arith.mulf %47, %47 : vector<16x32xf32>
    %cst_28 = arith.constant dense<0.000000e+00> : vector<32xf32>
    %52 = vector.multi_reduction <add>, %51, %cst_28 [0] : vector<16x32xf32> to vector<32xf32>
    %53 = vector.shape_cast %52 : vector<32xf32> to vector<1x32xf32>
    %54 = arith.addf %43, %53 : vector<1x32xf32>
    %cst_29 = arith.constant 1.562500e-02 : f32
    %55 = vector.broadcast %cst_29 : f32 to vector<1x32xf32>
    %56 = arith.mulf %50, %55 : vector<1x32xf32>
    %cst_30 = arith.constant 1.562500e-02 : f32
    %57 = vector.broadcast %cst_30 : f32 to vector<1x32xf32>
    %58 = arith.mulf %54, %57 : vector<1x32xf32>
    %59 = arith.mulf %56, %56 : vector<1x32xf32>
    %60 = arith.subf %58, %59 : vector<1x32xf32>
    %cst_31 = arith.constant 0.000000e+00 : f32
    %61 = vector.broadcast %cst_31 : f32 to vector<1x32xf32>
    %62 = arith.maximumf %60, %61 : vector<1x32xf32>
    %cst_32 = arith.constant 9.99999974E-6 : f32
    %63 = vector.broadcast %cst_32 : f32 to vector<1x32xf32>
    %64 = arith.addf %62, %63 : vector<1x32xf32>
    %65 = math.rsqrt %64 : vector<1x32xf32>
    %66 = vector.broadcast %56 : vector<1x32xf32> to vector<16x32xf32>
    %67 = arith.subf %14, %66 : vector<16x32xf32>
    %68 = vector.broadcast %65 : vector<1x32xf32> to vector<16x32xf32>
    %69 = arith.mulf %67, %68 : vector<16x32xf32>
    %cst_33 = arith.constant 0.000000e+00 : f32
    %70 = vector.broadcast %cst_33 : f32 to vector<16x32xf32>
    %71 = arith.cmpf oge, %69, %70 : vector<16x32xf32>
    %cst_34 = arith.constant 2.000000e-01 : f32
    %72 = vector.broadcast %cst_34 : f32 to vector<16x32xf32>
    %73 = arith.mulf %72, %69 : vector<16x32xf32>
    %74 = arith.select %71, %69, %73 : vector<16x32xi1>, vector<16x32xf32>
    %75 = vector.broadcast %56 : vector<1x32xf32> to vector<16x32xf32>
    %76 = arith.subf %25, %75 : vector<16x32xf32>
    %77 = vector.broadcast %65 : vector<1x32xf32> to vector<16x32xf32>
    %78 = arith.mulf %76, %77 : vector<16x32xf32>
    %cst_35 = arith.constant 0.000000e+00 : f32
    %79 = vector.broadcast %cst_35 : f32 to vector<16x32xf32>
    %80 = arith.cmpf oge, %78, %79 : vector<16x32xf32>
    %cst_36 = arith.constant 2.000000e-01 : f32
    %81 = vector.broadcast %cst_36 : f32 to vector<16x32xf32>
    %82 = arith.mulf %81, %78 : vector<16x32xf32>
    %83 = arith.select %80, %78, %82 : vector<16x32xi1>, vector<16x32xf32>
    %84 = arith.maximumf %74, %83 : vector<16x32xf32>
    %85 = vector.broadcast %56 : vector<1x32xf32> to vector<16x32xf32>
    %86 = arith.subf %36, %85 : vector<16x32xf32>
    %87 = vector.broadcast %65 : vector<1x32xf32> to vector<16x32xf32>
    %88 = arith.mulf %86, %87 : vector<16x32xf32>
    %cst_37 = arith.constant 0.000000e+00 : f32
    %89 = vector.broadcast %cst_37 : f32 to vector<16x32xf32>
    %90 = arith.cmpf oge, %88, %89 : vector<16x32xf32>
    %cst_38 = arith.constant 2.000000e-01 : f32
    %91 = vector.broadcast %cst_38 : f32 to vector<16x32xf32>
    %92 = arith.mulf %91, %88 : vector<16x32xf32>
    %93 = arith.select %90, %88, %92 : vector<16x32xi1>, vector<16x32xf32>
    %94 = arith.maximumf %84, %93 : vector<16x32xf32>
    %95 = vector.broadcast %56 : vector<1x32xf32> to vector<16x32xf32>
    %96 = arith.subf %47, %95 : vector<16x32xf32>
    %97 = vector.broadcast %65 : vector<1x32xf32> to vector<16x32xf32>
    %98 = arith.mulf %96, %97 : vector<16x32xf32>
    %cst_39 = arith.constant 0.000000e+00 : f32
    %99 = vector.broadcast %cst_39 : f32 to vector<16x32xf32>
    %100 = arith.cmpf oge, %98, %99 : vector<16x32xf32>
    %cst_40 = arith.constant 2.000000e-01 : f32
    %101 = vector.broadcast %cst_40 : f32 to vector<16x32xf32>
    %102 = arith.mulf %101, %98 : vector<16x32xf32>
    %103 = arith.select %100, %98, %102 : vector<16x32xi1>, vector<16x32xf32>
    %104 = arith.maximumf %94, %103 : vector<16x32xf32>
    %c0_41 = arith.constant 0 : index
    %c0_42 = arith.constant 0 : index
    %105 = vector.load %arg5[%c0_41, %c0_42] : memref<32x64xf32, #tpu.memory_space<vmem>>, vector<32x64xf32>
    %106 = arith.truncf %104 : vector<16x32xf32> to vector<16x32xbf16>
    %107 = arith.truncf %105 : vector<32x64xf32> to vector<32x64xbf16>
    %cst_43 = arith.constant dense<0.000000e+00> : vector<16x64xf32>
    %108 = tpu.matmul %106, %107, %cst_43 {dimension_numbers = #tpu.dot_dimension_numbers<[1], [0], [0], [1], [0, 0, 1, 1], [], []>} : vector<16x32xbf16>, vector<32x64xbf16>, vector<16x64xf32> -> vector<16x64xf32>
    %c0_44 = arith.constant 0 : index
    %c0_45 = arith.constant 0 : index
    %109 = vector.load %arg6[%c0_44, %c0_45] : memref<32x64xf32, #tpu.memory_space<vmem>>, vector<32x64xf32>
    %110 = arith.truncf %104 : vector<16x32xf32> to vector<16x32xbf16>
    %111 = arith.truncf %109 : vector<32x64xf32> to vector<32x64xbf16>
    %cst_46 = arith.constant dense<0.000000e+00> : vector<16x64xf32>
    %112 = tpu.matmul %110, %111, %cst_46 {dimension_numbers = #tpu.dot_dimension_numbers<[1], [0], [0], [1], [0, 0, 1, 1], [], []>} : vector<16x32xbf16>, vector<32x64xbf16>, vector<16x64xf32> -> vector<16x64xf32>
    %cst_47 = arith.constant 0.000000e+00 : f32
    %113 = vector.broadcast %cst_47 : f32 to vector<1x64xf32>
    %cst_48 = arith.constant 0.000000e+00 : f32
    %114 = vector.broadcast %cst_48 : f32 to vector<1x64xf32>
    %c0_49 = arith.constant 0 : index
    %c0_50 = arith.constant 0 : index
    %c0_51 = arith.constant 0 : index
    %115 = vector.load %arg1[%c0_49, %c0_50, %c0_51] : memref<4x16x16xf32, #tpu.memory_space<vmem>>, vector<1x16x16xf32>
    %116 = vector.shape_cast %115 : vector<1x16x16xf32> to vector<16x16xf32>
    %cst_52 = arith.constant dense<0.000000e+00> : vector<16x64xf32>
    %117 = tpu.matmul %116, %112, %cst_52 {dimension_numbers = #tpu.dot_dimension_numbers<[1], [0], [0], [1], [0, 0, 1, 1], [], []>} : vector<16x16xf32>, vector<16x64xf32>, vector<16x64xf32> -> vector<16x64xf32>
    %118 = arith.addf %108, %117 : vector<16x64xf32>
    %cst_53 = arith.constant dense<0.000000e+00> : vector<64xf32>
    %119 = vector.multi_reduction <add>, %118, %cst_53 [0] : vector<16x64xf32> to vector<64xf32>
    %120 = vector.shape_cast %119 : vector<64xf32> to vector<1x64xf32>
    %121 = arith.addf %113, %120 : vector<1x64xf32>
    %122 = arith.mulf %118, %118 : vector<16x64xf32>
    %cst_54 = arith.constant dense<0.000000e+00> : vector<64xf32>
    %123 = vector.multi_reduction <add>, %122, %cst_54 [0] : vector<16x64xf32> to vector<64xf32>
    %124 = vector.shape_cast %123 : vector<64xf32> to vector<1x64xf32>
    %125 = arith.addf %114, %124 : vector<1x64xf32>
    %c1_55 = arith.constant 1 : index
    %c0_56 = arith.constant 0 : index
    %c0_57 = arith.constant 0 : index
    %126 = vector.load %arg1[%c1_55, %c0_56, %c0_57] : memref<4x16x16xf32, #tpu.memory_space<vmem>>, vector<1x16x16xf32>
    %127 = vector.shape_cast %126 : vector<1x16x16xf32> to vector<16x16xf32>
    %cst_58 = arith.constant dense<0.000000e+00> : vector<16x64xf32>
    %128 = tpu.matmul %127, %112, %cst_58 {dimension_numbers = #tpu.dot_dimension_numbers<[1], [0], [0], [1], [0, 0, 1, 1], [], []>} : vector<16x16xf32>, vector<16x64xf32>, vector<16x64xf32> -> vector<16x64xf32>
    %129 = arith.addf %108, %128 : vector<16x64xf32>
    %cst_59 = arith.constant dense<0.000000e+00> : vector<64xf32>
    %130 = vector.multi_reduction <add>, %129, %cst_59 [0] : vector<16x64xf32> to vector<64xf32>
    %131 = vector.shape_cast %130 : vector<64xf32> to vector<1x64xf32>
    %132 = arith.addf %121, %131 : vector<1x64xf32>
    %133 = arith.mulf %129, %129 : vector<16x64xf32>
    %cst_60 = arith.constant dense<0.000000e+00> : vector<64xf32>
    %134 = vector.multi_reduction <add>, %133, %cst_60 [0] : vector<16x64xf32> to vector<64xf32>
    %135 = vector.shape_cast %134 : vector<64xf32> to vector<1x64xf32>
    %136 = arith.addf %125, %135 : vector<1x64xf32>
    %c2_61 = arith.constant 2 : index
    %c0_62 = arith.constant 0 : index
    %c0_63 = arith.constant 0 : index
    %137 = vector.load %arg1[%c2_61, %c0_62, %c0_63] : memref<4x16x16xf32, #tpu.memory_space<vmem>>, vector<1x16x16xf32>
    %138 = vector.shape_cast %137 : vector<1x16x16xf32> to vector<16x16xf32>
    %cst_64 = arith.constant dense<0.000000e+00> : vector<16x64xf32>
    %139 = tpu.matmul %138, %112, %cst_64 {dimension_numbers = #tpu.dot_dimension_numbers<[1], [0], [0], [1], [0, 0, 1, 1], [], []>} : vector<16x16xf32>, vector<16x64xf32>, vector<16x64xf32> -> vector<16x64xf32>
    %140 = arith.addf %108, %139 : vector<16x64xf32>
    %cst_65 = arith.constant dense<0.000000e+00> : vector<64xf32>
    %141 = vector.multi_reduction <add>, %140, %cst_65 [0] : vector<16x64xf32> to vector<64xf32>
    %142 = vector.shape_cast %141 : vector<64xf32> to vector<1x64xf32>
    %143 = arith.addf %132, %142 : vector<1x64xf32>
    %144 = arith.mulf %140, %140 : vector<16x64xf32>
    %cst_66 = arith.constant dense<0.000000e+00> : vector<64xf32>
    %145 = vector.multi_reduction <add>, %144, %cst_66 [0] : vector<16x64xf32> to vector<64xf32>
    %146 = vector.shape_cast %145 : vector<64xf32> to vector<1x64xf32>
    %147 = arith.addf %136, %146 : vector<1x64xf32>
    %c3_67 = arith.constant 3 : index
    %c0_68 = arith.constant 0 : index
    %c0_69 = arith.constant 0 : index
    %148 = vector.load %arg1[%c3_67, %c0_68, %c0_69] : memref<4x16x16xf32, #tpu.memory_space<vmem>>, vector<1x16x16xf32>
    %149 = vector.shape_cast %148 : vector<1x16x16xf32> to vector<16x16xf32>
    %cst_70 = arith.constant dense<0.000000e+00> : vector<16x64xf32>
    %150 = tpu.matmul %149, %112, %cst_70 {dimension_numbers = #tpu.dot_dimension_numbers<[1], [0], [0], [1], [0, 0, 1, 1], [], []>} : vector<16x16xf32>, vector<16x64xf32>, vector<16x64xf32> -> vector<16x64xf32>
    %151 = arith.addf %108, %150 : vector<16x64xf32>
    %cst_71 = arith.constant dense<0.000000e+00> : vector<64xf32>
    %152 = vector.multi_reduction <add>, %151, %cst_71 [0] : vector<16x64xf32> to vector<64xf32>
    %153 = vector.shape_cast %152 : vector<64xf32> to vector<1x64xf32>
    %154 = arith.addf %143, %153 : vector<1x64xf32>
    %155 = arith.mulf %151, %151 : vector<16x64xf32>
    %cst_72 = arith.constant dense<0.000000e+00> : vector<64xf32>
    %156 = vector.multi_reduction <add>, %155, %cst_72 [0] : vector<16x64xf32> to vector<64xf32>
    %157 = vector.shape_cast %156 : vector<64xf32> to vector<1x64xf32>
    %158 = arith.addf %147, %157 : vector<1x64xf32>
    %cst_73 = arith.constant 1.562500e-02 : f32
    %159 = vector.broadcast %cst_73 : f32 to vector<1x64xf32>
    %160 = arith.mulf %154, %159 : vector<1x64xf32>
    %cst_74 = arith.constant 1.562500e-02 : f32
    %161 = vector.broadcast %cst_74 : f32 to vector<1x64xf32>
    %162 = arith.mulf %158, %161 : vector<1x64xf32>
    %163 = arith.mulf %160, %160 : vector<1x64xf32>
    %164 = arith.subf %162, %163 : vector<1x64xf32>
    %cst_75 = arith.constant 0.000000e+00 : f32
    %165 = vector.broadcast %cst_75 : f32 to vector<1x64xf32>
    %166 = arith.maximumf %164, %165 : vector<1x64xf32>
    %cst_76 = arith.constant 9.99999974E-6 : f32
    %167 = vector.broadcast %cst_76 : f32 to vector<1x64xf32>
    %168 = arith.addf %166, %167 : vector<1x64xf32>
    %169 = math.rsqrt %168 : vector<1x64xf32>
    %170 = vector.broadcast %160 : vector<1x64xf32> to vector<16x64xf32>
    %171 = arith.subf %118, %170 : vector<16x64xf32>
    %172 = vector.broadcast %169 : vector<1x64xf32> to vector<16x64xf32>
    %173 = arith.mulf %171, %172 : vector<16x64xf32>
    %cst_77 = arith.constant 0.000000e+00 : f32
    %174 = vector.broadcast %cst_77 : f32 to vector<16x64xf32>
    %175 = arith.cmpf oge, %173, %174 : vector<16x64xf32>
    %cst_78 = arith.constant 2.000000e-01 : f32
    %176 = vector.broadcast %cst_78 : f32 to vector<16x64xf32>
    %177 = arith.mulf %176, %173 : vector<16x64xf32>
    %178 = arith.select %175, %173, %177 : vector<16x64xi1>, vector<16x64xf32>
    %179 = vector.broadcast %160 : vector<1x64xf32> to vector<16x64xf32>
    %180 = arith.subf %129, %179 : vector<16x64xf32>
    %181 = vector.broadcast %169 : vector<1x64xf32> to vector<16x64xf32>
    %182 = arith.mulf %180, %181 : vector<16x64xf32>
    %cst_79 = arith.constant 0.000000e+00 : f32
    %183 = vector.broadcast %cst_79 : f32 to vector<16x64xf32>
    %184 = arith.cmpf oge, %182, %183 : vector<16x64xf32>
    %cst_80 = arith.constant 2.000000e-01 : f32
    %185 = vector.broadcast %cst_80 : f32 to vector<16x64xf32>
    %186 = arith.mulf %185, %182 : vector<16x64xf32>
    %187 = arith.select %184, %182, %186 : vector<16x64xi1>, vector<16x64xf32>
    %188 = arith.maximumf %178, %187 : vector<16x64xf32>
    %189 = vector.broadcast %160 : vector<1x64xf32> to vector<16x64xf32>
    %190 = arith.subf %140, %189 : vector<16x64xf32>
    %191 = vector.broadcast %169 : vector<1x64xf32> to vector<16x64xf32>
    %192 = arith.mulf %190, %191 : vector<16x64xf32>
    %cst_81 = arith.constant 0.000000e+00 : f32
    %193 = vector.broadcast %cst_81 : f32 to vector<16x64xf32>
    %194 = arith.cmpf oge, %192, %193 : vector<16x64xf32>
    %cst_82 = arith.constant 2.000000e-01 : f32
    %195 = vector.broadcast %cst_82 : f32 to vector<16x64xf32>
    %196 = arith.mulf %195, %192 : vector<16x64xf32>
    %197 = arith.select %194, %192, %196 : vector<16x64xi1>, vector<16x64xf32>
    %198 = arith.maximumf %188, %197 : vector<16x64xf32>
    %199 = vector.broadcast %160 : vector<1x64xf32> to vector<16x64xf32>
    %200 = arith.subf %151, %199 : vector<16x64xf32>
    %201 = vector.broadcast %169 : vector<1x64xf32> to vector<16x64xf32>
    %202 = arith.mulf %200, %201 : vector<16x64xf32>
    %cst_83 = arith.constant 0.000000e+00 : f32
    %203 = vector.broadcast %cst_83 : f32 to vector<16x64xf32>
    %204 = arith.cmpf oge, %202, %203 : vector<16x64xf32>
    %cst_84 = arith.constant 2.000000e-01 : f32
    %205 = vector.broadcast %cst_84 : f32 to vector<16x64xf32>
    %206 = arith.mulf %205, %202 : vector<16x64xf32>
    %207 = arith.select %204, %202, %206 : vector<16x64xi1>, vector<16x64xf32>
    %208 = arith.maximumf %198, %207 : vector<16x64xf32>
    %c0_85 = arith.constant 0 : index
    %c0_86 = arith.constant 0 : index
    %209 = vector.load %arg7[%c0_85, %c0_86] : memref<32x32xf32, #tpu.memory_space<vmem>>, vector<32x32xf32>
    %210 = arith.truncf %0 : vector<16x32xf32> to vector<16x32xbf16>
    %211 = arith.truncf %209 : vector<32x32xf32> to vector<32x32xbf16>
    %cst_87 = arith.constant dense<0.000000e+00> : vector<16x32xf32>
    %212 = tpu.matmul %210, %211, %cst_87 {dimension_numbers = #tpu.dot_dimension_numbers<[1], [0], [0], [1], [0, 0, 1, 1], [], []>} : vector<16x32xbf16>, vector<32x32xbf16>, vector<16x32xf32> -> vector<16x32xf32>
    %c0_88 = arith.constant 0 : index
    %c0_89 = arith.constant 0 : index
    %213 = vector.load %arg8[%c0_88, %c0_89] : memref<32x32xf32, #tpu.memory_space<vmem>>, vector<32x32xf32>
    %214 = arith.truncf %104 : vector<16x32xf32> to vector<16x32xbf16>
    %215 = arith.truncf %213 : vector<32x32xf32> to vector<32x32xbf16>
    %cst_90 = arith.constant dense<0.000000e+00> : vector<16x32xf32>
    %216 = tpu.matmul %214, %215, %cst_90 {dimension_numbers = #tpu.dot_dimension_numbers<[1], [0], [0], [1], [0, 0, 1, 1], [], []>} : vector<16x32xbf16>, vector<32x32xbf16>, vector<16x32xf32> -> vector<16x32xf32>
    %217 = arith.addf %212, %216 : vector<16x32xf32>
    %c0_91 = arith.constant 0 : index
    %c0_92 = arith.constant 0 : index
    %218 = vector.load %arg9[%c0_91, %c0_92] : memref<64x32xf32, #tpu.memory_space<vmem>>, vector<64x32xf32>
    %219 = arith.truncf %208 : vector<16x64xf32> to vector<16x64xbf16>
    %220 = arith.truncf %218 : vector<64x32xf32> to vector<64x32xbf16>
    %cst_93 = arith.constant dense<0.000000e+00> : vector<16x32xf32>
    %221 = tpu.matmul %219, %220, %cst_93 {dimension_numbers = #tpu.dot_dimension_numbers<[1], [0], [0], [1], [0, 0, 1, 1], [], []>} : vector<16x64xbf16>, vector<64x32xbf16>, vector<16x32xf32> -> vector<16x32xf32>
    %222 = arith.addf %217, %221 : vector<16x32xf32>
    %cst_94 = arith.constant dense<0.000000e+00> : vector<32xf32>
    %223 = vector.multi_reduction <add>, %222, %cst_94 [0] : vector<16x32xf32> to vector<32xf32>
    %224 = vector.shape_cast %223 : vector<32xf32> to vector<1x32xf32>
    %cst_95 = arith.constant 1.600000e+01 : f32
    %225 = vector.broadcast %cst_95 : f32 to vector<1x32xf32>
    %226 = arith.divf %224, %225 : vector<1x32xf32>
    %227 = arith.mulf %222, %222 : vector<16x32xf32>
    %cst_96 = arith.constant dense<0.000000e+00> : vector<32xf32>
    %228 = vector.multi_reduction <add>, %227, %cst_96 [0] : vector<16x32xf32> to vector<32xf32>
    %229 = vector.shape_cast %228 : vector<32xf32> to vector<1x32xf32>
    %cst_97 = arith.constant 1.600000e+01 : f32
    %230 = vector.broadcast %cst_97 : f32 to vector<1x32xf32>
    %231 = arith.divf %229, %230 : vector<1x32xf32>
    %232 = arith.mulf %226, %226 : vector<1x32xf32>
    %233 = arith.subf %231, %232 : vector<1x32xf32>
    %cst_98 = arith.constant 0.000000e+00 : f32
    %234 = vector.broadcast %cst_98 : f32 to vector<1x32xf32>
    %235 = arith.maximumf %233, %234 : vector<1x32xf32>
    %236 = vector.broadcast %226 : vector<1x32xf32> to vector<16x32xf32>
    %237 = arith.subf %222, %236 : vector<16x32xf32>
    %cst_99 = arith.constant 9.99999974E-6 : f32
    %238 = vector.broadcast %cst_99 : f32 to vector<1x32xf32>
    %239 = arith.addf %235, %238 : vector<1x32xf32>
    %240 = math.rsqrt %239 : vector<1x32xf32>
    %241 = vector.broadcast %240 : vector<1x32xf32> to vector<16x32xf32>
    %242 = arith.mulf %237, %241 : vector<16x32xf32>
    %cst_100 = arith.constant 0.000000e+00 : f32
    %243 = vector.broadcast %cst_100 : f32 to vector<16x32xf32>
    %244 = arith.cmpf oge, %242, %243 : vector<16x32xf32>
    %cst_101 = arith.constant 2.000000e-01 : f32
    %245 = vector.broadcast %cst_101 : f32 to vector<16x32xf32>
    %246 = arith.mulf %245, %242 : vector<16x32xf32>
    %247 = arith.select %244, %242, %246 : vector<16x32xi1>, vector<16x32xf32>
    %c0_102 = arith.constant 0 : index
    %c0_103 = arith.constant 0 : index
    %248 = vector.load %arg10[%c0_102, %c0_103] : memref<32x32xf32, #tpu.memory_space<vmem>>, vector<32x32xf32>
    %249 = arith.truncf %247 : vector<16x32xf32> to vector<16x32xbf16>
    %250 = arith.truncf %248 : vector<32x32xf32> to vector<32x32xbf16>
    %cst_104 = arith.constant dense<0.000000e+00> : vector<16x32xf32>
    %251 = tpu.matmul %249, %250, %cst_104 {dimension_numbers = #tpu.dot_dimension_numbers<[1], [0], [0], [1], [0, 0, 1, 1], [], []>} : vector<16x32xbf16>, vector<32x32xbf16>, vector<16x32xf32> -> vector<16x32xf32>
    %c0_105 = arith.constant 0 : index
    %c0_106 = arith.constant 0 : index
    %252 = vector.load %arg11[%c0_105, %c0_106] : memref<1x32xf32, #tpu.memory_space<vmem>>, vector<1x32xf32>
    %253 = vector.broadcast %252 : vector<1x32xf32> to vector<16x32xf32>
    %254 = arith.addf %251, %253 : vector<16x32xf32>
    %c0_107 = arith.constant 0 : index
    %c0_108 = arith.constant 0 : index
    %255 = vector.load %arg12[%c0_107, %c0_108] : memref<32x32xf32, #tpu.memory_space<vmem>>, vector<32x32xf32>
    %256 = arith.truncf %247 : vector<16x32xf32> to vector<16x32xbf16>
    %257 = arith.truncf %255 : vector<32x32xf32> to vector<32x32xbf16>
    %cst_109 = arith.constant dense<0.000000e+00> : vector<16x32xf32>
    %258 = tpu.matmul %256, %257, %cst_109 {dimension_numbers = #tpu.dot_dimension_numbers<[1], [0], [0], [1], [0, 0, 1, 1], [], []>} : vector<16x32xbf16>, vector<32x32xbf16>, vector<16x32xf32> -> vector<16x32xf32>
    %c0_110 = arith.constant 0 : index
    %c0_111 = arith.constant 0 : index
    %259 = vector.load %arg13[%c0_110, %c0_111] : memref<1x32xf32, #tpu.memory_space<vmem>>, vector<1x32xf32>
    %260 = vector.broadcast %259 : vector<1x32xf32> to vector<16x32xf32>
    %261 = arith.addf %258, %260 : vector<16x32xf32>
    %c0_112 = arith.constant 0 : index
    %c0_113 = arith.constant 0 : index
    %262 = vector.load %arg14[%c0_112, %c0_113] : memref<32x32xf32, #tpu.memory_space<vmem>>, vector<32x32xf32>
    %263 = arith.truncf %247 : vector<16x32xf32> to vector<16x32xbf16>
    %264 = arith.truncf %262 : vector<32x32xf32> to vector<32x32xbf16>
    %cst_114 = arith.constant dense<0.000000e+00> : vector<16x32xf32>
    %265 = tpu.matmul %263, %264, %cst_114 {dimension_numbers = #tpu.dot_dimension_numbers<[1], [0], [0], [1], [0, 0, 1, 1], [], []>} : vector<16x32xbf16>, vector<32x32xbf16>, vector<16x32xf32> -> vector<16x32xf32>
    %c0_115 = arith.constant 0 : index
    %c0_116 = arith.constant 0 : index
    %266 = vector.load %arg15[%c0_115, %c0_116] : memref<1x32xf32, #tpu.memory_space<vmem>>, vector<1x32xf32>
    %267 = vector.broadcast %266 : vector<1x32xf32> to vector<16x32xf32>
    %268 = arith.addf %265, %267 : vector<16x32xf32>
    %c0_117 = arith.constant 0 : index
    %c0_118 = arith.constant 0 : index
    %c0_119 = arith.constant 0 : index
    %269 = vector.load %arg2[%c0_117, %c0_118, %c0_119] : memref<16x16x32xf32, #tpu.memory_space<vmem>>, vector<16x16x32xf32>
    %270 = vector.shape_cast %254 : vector<16x32xf32> to vector<16x1x32xf32>
    %271 = vector.broadcast %270 : vector<16x1x32xf32> to vector<16x16x32xf32>
    %272 = arith.mulf %271, %269 : vector<16x16x32xf32>
    %c0_120 = arith.constant 0 : index
    %c0_121 = arith.constant 0 : index
    %273 = vector.load %arg16[%c0_120, %c0_121] : memref<32x32xf32, #tpu.memory_space<vmem>>, vector<32x32xf32>
    %cst_122 = arith.constant 0.000000e+00 : f32
    %274 = vector.broadcast %cst_122 : f32 to vector<16x32xf32>
    %275 = vector.extract_strided_slice %254 {offsets = [0, 0], sizes = [16, 8], strides = [1, 1]} : vector<16x32xf32> to vector<16x8xf32>
    %276 = vector.extract_strided_slice %261 {offsets = [0, 0], sizes = [16, 8], strides = [1, 1]} : vector<16x32xf32> to vector<16x8xf32>
    %277 = vector.extract_strided_slice %268 {offsets = [0, 0], sizes = [16, 8], strides = [1, 1]} : vector<16x32xf32> to vector<16x8xf32>
    %278 = arith.truncf %275 : vector<16x8xf32> to vector<16x8xbf16>
    %279 = arith.truncf %276 : vector<16x8xf32> to vector<16x8xbf16>
    %cst_123 = arith.constant dense<0.000000e+00> : vector<16x16xf32>
    %280 = tpu.matmul %278, %279, %cst_123 {dimension_numbers = #tpu.dot_dimension_numbers<[1], [1], [0], [0], [0, 0, 1, 0], [], []>} : vector<16x8xbf16>, vector<16x8xbf16>, vector<16x16xf32> -> vector<16x16xf32>
    %281 = vector.extract_strided_slice %272 {offsets = [0, 0, 0], sizes = [16, 16, 8], strides = [1, 1, 1]} : vector<16x16x32xf32> to vector<16x16x8xf32>
    %cst_124 = arith.constant dense<0.000000e+00> : vector<16x16xf32>
    %282 = vector.multi_reduction <add>, %281, %cst_124 [2] : vector<16x16x8xf32> to vector<16x16xf32>
    %283 = arith.addf %280, %282 : vector<16x16xf32>
    %cst_125 = arith.constant 0.353553385 : f32
    %284 = vector.broadcast %cst_125 : f32 to vector<16x16xf32>
    %285 = arith.mulf %283, %284 : vector<16x16xf32>
    %cst_126 = arith.constant dense<0xFF800000> : vector<16xf32>
    %286 = vector.multi_reduction <maximumf>, %285, %cst_126 [1] : vector<16x16xf32> to vector<16xf32>
    %287 = vector.shape_cast %286 : vector<16xf32> to vector<16x1xf32>
    %288 = vector.broadcast %287 : vector<16x1xf32> to vector<16x16xf32>
    %289 = arith.subf %285, %288 : vector<16x16xf32>
    %290 = math.exp %289 : vector<16x16xf32>
    %cst_127 = arith.constant dense<0.000000e+00> : vector<16xf32>
    %291 = vector.multi_reduction <add>, %290, %cst_127 [1] : vector<16x16xf32> to vector<16xf32>
    %292 = vector.shape_cast %291 : vector<16xf32> to vector<16x1xf32>
    %293 = tpu.reciprocal %292 {approx = true} : vector<16x1xf32> -> vector<16x1xf32>
    %294 = vector.broadcast %293 : vector<16x1xf32> to vector<16x16xf32>
    %295 = arith.mulf %290, %294 : vector<16x16xf32>
    %296 = arith.truncf %295 : vector<16x16xf32> to vector<16x16xbf16>
    %297 = arith.truncf %277 : vector<16x8xf32> to vector<16x8xbf16>
    %cst_128 = arith.constant dense<0.000000e+00> : vector<16x8xf32>
    %298 = tpu.matmul %296, %297, %cst_128 {dimension_numbers = #tpu.dot_dimension_numbers<[1], [0], [0], [1], [0, 0, 1, 1], [], []>} : vector<16x16xbf16>, vector<16x8xbf16>, vector<16x8xf32> -> vector<16x8xf32>
    %299 = vector.extract_strided_slice %273 {offsets = [0, 0], sizes = [8, 32], strides = [1, 1]} : vector<32x32xf32> to vector<8x32xf32>
    %300 = arith.truncf %298 : vector<16x8xf32> to vector<16x8xbf16>
    %301 = arith.truncf %299 : vector<8x32xf32> to vector<8x32xbf16>
    %cst_129 = arith.constant dense<0.000000e+00> : vector<16x32xf32>
    %302 = tpu.matmul %300, %301, %cst_129 {dimension_numbers = #tpu.dot_dimension_numbers<[1], [0], [0], [1], [0, 0, 1, 1], [], []>} : vector<16x8xbf16>, vector<8x32xbf16>, vector<16x32xf32> -> vector<16x32xf32>
    %303 = arith.addf %274, %302 : vector<16x32xf32>
    %304 = vector.extract_strided_slice %254 {offsets = [0, 8], sizes = [16, 8], strides = [1, 1]} : vector<16x32xf32> to vector<16x8xf32>
    %305 = vector.extract_strided_slice %261 {offsets = [0, 8], sizes = [16, 8], strides = [1, 1]} : vector<16x32xf32> to vector<16x8xf32>
    %306 = vector.extract_strided_slice %268 {offsets = [0, 8], sizes = [16, 8], strides = [1, 1]} : vector<16x32xf32> to vector<16x8xf32>
    %307 = arith.truncf %304 : vector<16x8xf32> to vector<16x8xbf16>
    %308 = arith.truncf %305 : vector<16x8xf32> to vector<16x8xbf16>
    %cst_130 = arith.constant dense<0.000000e+00> : vector<16x16xf32>
    %309 = tpu.matmul %307, %308, %cst_130 {dimension_numbers = #tpu.dot_dimension_numbers<[1], [1], [0], [0], [0, 0, 1, 0], [], []>} : vector<16x8xbf16>, vector<16x8xbf16>, vector<16x16xf32> -> vector<16x16xf32>
    %310 = vector.extract_strided_slice %272 {offsets = [0, 0, 8], sizes = [16, 16, 8], strides = [1, 1, 1]} : vector<16x16x32xf32> to vector<16x16x8xf32>
    %cst_131 = arith.constant dense<0.000000e+00> : vector<16x16xf32>
    %311 = vector.multi_reduction <add>, %310, %cst_131 [2] : vector<16x16x8xf32> to vector<16x16xf32>
    %312 = arith.addf %309, %311 : vector<16x16xf32>
    %cst_132 = arith.constant 0.353553385 : f32
    %313 = vector.broadcast %cst_132 : f32 to vector<16x16xf32>
    %314 = arith.mulf %312, %313 : vector<16x16xf32>
    %cst_133 = arith.constant dense<0xFF800000> : vector<16xf32>
    %315 = vector.multi_reduction <maximumf>, %314, %cst_133 [1] : vector<16x16xf32> to vector<16xf32>
    %316 = vector.shape_cast %315 : vector<16xf32> to vector<16x1xf32>
    %317 = vector.broadcast %316 : vector<16x1xf32> to vector<16x16xf32>
    %318 = arith.subf %314, %317 : vector<16x16xf32>
    %319 = math.exp %318 : vector<16x16xf32>
    %cst_134 = arith.constant dense<0.000000e+00> : vector<16xf32>
    %320 = vector.multi_reduction <add>, %319, %cst_134 [1] : vector<16x16xf32> to vector<16xf32>
    %321 = vector.shape_cast %320 : vector<16xf32> to vector<16x1xf32>
    %322 = tpu.reciprocal %321 {approx = true} : vector<16x1xf32> -> vector<16x1xf32>
    %323 = vector.broadcast %322 : vector<16x1xf32> to vector<16x16xf32>
    %324 = arith.mulf %319, %323 : vector<16x16xf32>
    %325 = arith.truncf %324 : vector<16x16xf32> to vector<16x16xbf16>
    %326 = arith.truncf %306 : vector<16x8xf32> to vector<16x8xbf16>
    %cst_135 = arith.constant dense<0.000000e+00> : vector<16x8xf32>
    %327 = tpu.matmul %325, %326, %cst_135 {dimension_numbers = #tpu.dot_dimension_numbers<[1], [0], [0], [1], [0, 0, 1, 1], [], []>} : vector<16x16xbf16>, vector<16x8xbf16>, vector<16x8xf32> -> vector<16x8xf32>
    %328 = vector.extract_strided_slice %273 {offsets = [8, 0], sizes = [8, 32], strides = [1, 1]} : vector<32x32xf32> to vector<8x32xf32>
    %329 = arith.truncf %327 : vector<16x8xf32> to vector<16x8xbf16>
    %330 = arith.truncf %328 : vector<8x32xf32> to vector<8x32xbf16>
    %cst_136 = arith.constant dense<0.000000e+00> : vector<16x32xf32>
    %331 = tpu.matmul %329, %330, %cst_136 {dimension_numbers = #tpu.dot_dimension_numbers<[1], [0], [0], [1], [0, 0, 1, 1], [], []>} : vector<16x8xbf16>, vector<8x32xbf16>, vector<16x32xf32> -> vector<16x32xf32>
    %332 = arith.addf %303, %331 : vector<16x32xf32>
    %333 = vector.extract_strided_slice %254 {offsets = [0, 16], sizes = [16, 8], strides = [1, 1]} : vector<16x32xf32> to vector<16x8xf32>
    %334 = vector.extract_strided_slice %261 {offsets = [0, 16], sizes = [16, 8], strides = [1, 1]} : vector<16x32xf32> to vector<16x8xf32>
    %335 = vector.extract_strided_slice %268 {offsets = [0, 16], sizes = [16, 8], strides = [1, 1]} : vector<16x32xf32> to vector<16x8xf32>
    %336 = arith.truncf %333 : vector<16x8xf32> to vector<16x8xbf16>
    %337 = arith.truncf %334 : vector<16x8xf32> to vector<16x8xbf16>
    %cst_137 = arith.constant dense<0.000000e+00> : vector<16x16xf32>
    %338 = tpu.matmul %336, %337, %cst_137 {dimension_numbers = #tpu.dot_dimension_numbers<[1], [1], [0], [0], [0, 0, 1, 0], [], []>} : vector<16x8xbf16>, vector<16x8xbf16>, vector<16x16xf32> -> vector<16x16xf32>
    %339 = vector.extract_strided_slice %272 {offsets = [0, 0, 16], sizes = [16, 16, 8], strides = [1, 1, 1]} : vector<16x16x32xf32> to vector<16x16x8xf32>
    %cst_138 = arith.constant dense<0.000000e+00> : vector<16x16xf32>
    %340 = vector.multi_reduction <add>, %339, %cst_138 [2] : vector<16x16x8xf32> to vector<16x16xf32>
    %341 = arith.addf %338, %340 : vector<16x16xf32>
    %cst_139 = arith.constant 0.353553385 : f32
    %342 = vector.broadcast %cst_139 : f32 to vector<16x16xf32>
    %343 = arith.mulf %341, %342 : vector<16x16xf32>
    %cst_140 = arith.constant dense<0xFF800000> : vector<16xf32>
    %344 = vector.multi_reduction <maximumf>, %343, %cst_140 [1] : vector<16x16xf32> to vector<16xf32>
    %345 = vector.shape_cast %344 : vector<16xf32> to vector<16x1xf32>
    %346 = vector.broadcast %345 : vector<16x1xf32> to vector<16x16xf32>
    %347 = arith.subf %343, %346 : vector<16x16xf32>
    %348 = math.exp %347 : vector<16x16xf32>
    %cst_141 = arith.constant dense<0.000000e+00> : vector<16xf32>
    %349 = vector.multi_reduction <add>, %348, %cst_141 [1] : vector<16x16xf32> to vector<16xf32>
    %350 = vector.shape_cast %349 : vector<16xf32> to vector<16x1xf32>
    %351 = tpu.reciprocal %350 {approx = true} : vector<16x1xf32> -> vector<16x1xf32>
    %352 = vector.broadcast %351 : vector<16x1xf32> to vector<16x16xf32>
    %353 = arith.mulf %348, %352 : vector<16x16xf32>
    %354 = arith.truncf %353 : vector<16x16xf32> to vector<16x16xbf16>
    %355 = arith.truncf %335 : vector<16x8xf32> to vector<16x8xbf16>
    %cst_142 = arith.constant dense<0.000000e+00> : vector<16x8xf32>
    %356 = tpu.matmul %354, %355, %cst_142 {dimension_numbers = #tpu.dot_dimension_numbers<[1], [0], [0], [1], [0, 0, 1, 1], [], []>} : vector<16x16xbf16>, vector<16x8xbf16>, vector<16x8xf32> -> vector<16x8xf32>
    %357 = vector.extract_strided_slice %273 {offsets = [16, 0], sizes = [8, 32], strides = [1, 1]} : vector<32x32xf32> to vector<8x32xf32>
    %358 = arith.truncf %356 : vector<16x8xf32> to vector<16x8xbf16>
    %359 = arith.truncf %357 : vector<8x32xf32> to vector<8x32xbf16>
    %cst_143 = arith.constant dense<0.000000e+00> : vector<16x32xf32>
    %360 = tpu.matmul %358, %359, %cst_143 {dimension_numbers = #tpu.dot_dimension_numbers<[1], [0], [0], [1], [0, 0, 1, 1], [], []>} : vector<16x8xbf16>, vector<8x32xbf16>, vector<16x32xf32> -> vector<16x32xf32>
    %361 = arith.addf %332, %360 : vector<16x32xf32>
    %362 = vector.extract_strided_slice %254 {offsets = [0, 24], sizes = [16, 8], strides = [1, 1]} : vector<16x32xf32> to vector<16x8xf32>
    %363 = vector.extract_strided_slice %261 {offsets = [0, 24], sizes = [16, 8], strides = [1, 1]} : vector<16x32xf32> to vector<16x8xf32>
    %364 = vector.extract_strided_slice %268 {offsets = [0, 24], sizes = [16, 8], strides = [1, 1]} : vector<16x32xf32> to vector<16x8xf32>
    %365 = arith.truncf %362 : vector<16x8xf32> to vector<16x8xbf16>
    %366 = arith.truncf %363 : vector<16x8xf32> to vector<16x8xbf16>
    %cst_144 = arith.constant dense<0.000000e+00> : vector<16x16xf32>
    %367 = tpu.matmul %365, %366, %cst_144 {dimension_numbers = #tpu.dot_dimension_numbers<[1], [1], [0], [0], [0, 0, 1, 0], [], []>} : vector<16x8xbf16>, vector<16x8xbf16>, vector<16x16xf32> -> vector<16x16xf32>
    %368 = vector.extract_strided_slice %272 {offsets = [0, 0, 24], sizes = [16, 16, 8], strides = [1, 1, 1]} : vector<16x16x32xf32> to vector<16x16x8xf32>
    %cst_145 = arith.constant dense<0.000000e+00> : vector<16x16xf32>
    %369 = vector.multi_reduction <add>, %368, %cst_145 [2] : vector<16x16x8xf32> to vector<16x16xf32>
    %370 = arith.addf %367, %369 : vector<16x16xf32>
    %cst_146 = arith.constant 0.353553385 : f32
    %371 = vector.broadcast %cst_146 : f32 to vector<16x16xf32>
    %372 = arith.mulf %370, %371 : vector<16x16xf32>
    %cst_147 = arith.constant dense<0xFF800000> : vector<16xf32>
    %373 = vector.multi_reduction <maximumf>, %372, %cst_147 [1] : vector<16x16xf32> to vector<16xf32>
    %374 = vector.shape_cast %373 : vector<16xf32> to vector<16x1xf32>
    %375 = vector.broadcast %374 : vector<16x1xf32> to vector<16x16xf32>
    %376 = arith.subf %372, %375 : vector<16x16xf32>
    %377 = math.exp %376 : vector<16x16xf32>
    %cst_148 = arith.constant dense<0.000000e+00> : vector<16xf32>
    %378 = vector.multi_reduction <add>, %377, %cst_148 [1] : vector<16x16xf32> to vector<16xf32>
    %379 = vector.shape_cast %378 : vector<16xf32> to vector<16x1xf32>
    %380 = tpu.reciprocal %379 {approx = true} : vector<16x1xf32> -> vector<16x1xf32>
    %381 = vector.broadcast %380 : vector<16x1xf32> to vector<16x16xf32>
    %382 = arith.mulf %377, %381 : vector<16x16xf32>
    %383 = arith.truncf %382 : vector<16x16xf32> to vector<16x16xbf16>
    %384 = arith.truncf %364 : vector<16x8xf32> to vector<16x8xbf16>
    %cst_149 = arith.constant dense<0.000000e+00> : vector<16x8xf32>
    %385 = tpu.matmul %383, %384, %cst_149 {dimension_numbers = #tpu.dot_dimension_numbers<[1], [0], [0], [1], [0, 0, 1, 1], [], []>} : vector<16x16xbf16>, vector<16x8xbf16>, vector<16x8xf32> -> vector<16x8xf32>
    %386 = vector.extract_strided_slice %273 {offsets = [24, 0], sizes = [8, 32], strides = [1, 1]} : vector<32x32xf32> to vector<8x32xf32>
    %387 = arith.truncf %385 : vector<16x8xf32> to vector<16x8xbf16>
    %388 = arith.truncf %386 : vector<8x32xf32> to vector<8x32xbf16>
    %cst_150 = arith.constant dense<0.000000e+00> : vector<16x32xf32>
    %389 = tpu.matmul %387, %388, %cst_150 {dimension_numbers = #tpu.dot_dimension_numbers<[1], [0], [0], [1], [0, 0, 1, 1], [], []>} : vector<16x8xbf16>, vector<8x32xbf16>, vector<16x32xf32> -> vector<16x32xf32>
    %390 = arith.addf %361, %389 : vector<16x32xf32>
    %c0_151 = arith.constant 0 : index
    %c0_152 = arith.constant 0 : index
    %391 = vector.load %arg17[%c0_151, %c0_152] : memref<1x32xf32, #tpu.memory_space<vmem>>, vector<1x32xf32>
    %392 = vector.broadcast %391 : vector<1x32xf32> to vector<16x32xf32>
    %393 = arith.addf %390, %392 : vector<16x32xf32>
    %394 = arith.addf %247, %393 : vector<16x32xf32>
    %cst_153 = arith.constant dense<0.000000e+00> : vector<16xf32>
    %395 = vector.multi_reduction <add>, %394, %cst_153 [1] : vector<16x32xf32> to vector<16xf32>
    %396 = vector.shape_cast %395 : vector<16xf32> to vector<16x1xf32>
    %cst_154 = arith.constant 3.200000e+01 : f32
    %397 = vector.broadcast %cst_154 : f32 to vector<16x1xf32>
    %398 = arith.divf %396, %397 : vector<16x1xf32>
    %399 = vector.broadcast %398 : vector<16x1xf32> to vector<16x32xf32>
    %400 = arith.subf %394, %399 : vector<16x32xf32>
    %401 = vector.broadcast %398 : vector<16x1xf32> to vector<16x32xf32>
    %402 = arith.subf %394, %401 : vector<16x32xf32>
    %403 = arith.mulf %400, %402 : vector<16x32xf32>
    %cst_155 = arith.constant dense<0.000000e+00> : vector<16xf32>
    %404 = vector.multi_reduction <add>, %403, %cst_155 [1] : vector<16x32xf32> to vector<16xf32>
    %405 = vector.shape_cast %404 : vector<16xf32> to vector<16x1xf32>
    %cst_156 = arith.constant 3.200000e+01 : f32
    %406 = vector.broadcast %cst_156 : f32 to vector<16x1xf32>
    %407 = arith.divf %405, %406 : vector<16x1xf32>
    %408 = vector.broadcast %398 : vector<16x1xf32> to vector<16x32xf32>
    %409 = arith.subf %394, %408 : vector<16x32xf32>
    %cst_157 = arith.constant 9.99999974E-6 : f32
    %410 = vector.broadcast %cst_157 : f32 to vector<16x1xf32>
    %411 = arith.addf %407, %410 : vector<16x1xf32>
    %412 = math.rsqrt %411 : vector<16x1xf32>
    %413 = vector.broadcast %412 : vector<16x1xf32> to vector<16x32xf32>
    %414 = arith.mulf %409, %413 : vector<16x32xf32>
    %c0_158 = arith.constant 0 : index
    %c0_159 = arith.constant 0 : index
    %415 = vector.load %arg18[%c0_158, %c0_159] : memref<1x32xf32, #tpu.memory_space<vmem>>, vector<1x32xf32>
    %416 = vector.broadcast %415 : vector<1x32xf32> to vector<16x32xf32>
    %417 = arith.mulf %414, %416 : vector<16x32xf32>
    %c0_160 = arith.constant 0 : index
    %c0_161 = arith.constant 0 : index
    %418 = vector.load %arg19[%c0_160, %c0_161] : memref<1x32xf32, #tpu.memory_space<vmem>>, vector<1x32xf32>
    %419 = vector.broadcast %418 : vector<1x32xf32> to vector<16x32xf32>
    %420 = arith.addf %417, %419 : vector<16x32xf32>
    %c0_162 = arith.constant 0 : index
    %c0_163 = arith.constant 0 : index
    %421 = vector.load %arg20[%c0_162, %c0_163] : memref<16x32xf32, #tpu.memory_space<vmem>>, vector<16x32xf32>
    tpu.vector_store %arg20[%c0_162, %c0_163], %420 {strides = array<i32>} : memref<16x32xf32, #tpu.memory_space<vmem>>, vector<16x32xf32>,
    return
  }
}

</mosaic_0001>

<llo_original>
// kernel: neg.3
$region0: #{neg.3}
  #allocation0 [shape = 's32[1]{0}', space=sflag, size = 0x4, scoped, tag = 'scoped memory for neg.3']
  %s0 = inlined_call_operand.vmem [shape: f32[24,24], index: 0, kind: input, shape index: {}]
  %s1 = inlined_call_operand.vmem [shape: f32[24,24], index: 1, kind: output, shape index: {}]
  %v2 = vld [vmem:[%s0] sm:$0xff]
  %3 = xla_tuple %v2
  %4 = xla_tuple %3
  %v5 = vxor.u32 %v2, 2147483648
  %6 = xla_tuple %v5
  %7 = vst [vmem:[%s1] sm:$0xff] %v5
  %s8 = scalar_lea.vmem %s0, 8
  %v9 = vld [vmem:[%s8] sm:$0xff]
  %10 = xla_tuple %v9
  %11 = xla_tuple %10
  %v12 = vxor.u32 %v9, 2147483648
  %13 = xla_tuple %v12
  %s14 = scalar_lea.vmem %s1, 8
  %15 = vst [vmem:[%s14] sm:$0xff] %v12
  %s16 = scalar_lea.vmem %s0, 16
  %v17 = vld [vmem:[%s16] sm:$0xff]
  %18 = xla_tuple %v17
  %19 = xla_tuple %18
  %v20 = vxor.u32 %v17, 2147483648
  %21 = xla_tuple %v20
  %s22 = scalar_lea.vmem %s1, 16
  %23 = vst [vmem:[%s22] sm:$0xff] %v20

// kernel: coarse_gcn_encoding_forward.6
$region0: #{coarse_gcn_encoding_forward.6}
  #allocation0 [shape = 'u32[]', space=smem, size = 0x4, offset = 0x4, fixed_abs, tag = 'smem constant byte address 0x4 - core index']
  #allocation1 [shape = 'u32[72,128]{1,0:T(1,128)}', space=vmem, size = 0x9000, scoped, tag = 'internal scratch']
  %s0 = inlined_call_operand.vmem [shape: f32[24,2], index: 0, kind: input, shape index: {}]
  %s1 = inlined_call_operand.hbm [shape: f32[2,24], index: 1, kind: input, shape index: {}]
  %s2 = inlined_call_operand.vmem [shape: f32[24,24], index: 2, kind: output, shape index: {}]
  %s3 = sld [smem:[#allocation0]]
  $region22: #{coarse_gcn_encoding_forward.6} parent=0
    _
  %s5 = ssub.s32 1, %s3
  %s6 = scalar_select 0, %s5, %s3
  $region1: #{coarse_gcn_encoding_forward.6} parent=0
    #allocation2 [shape = 'u8[1024]{0}', space=vmem, size = 0x400, scoped, tag = 'input window, operand 1, single buffered']
    #allocation3 [shape = 's32[1]{0}', space=sflag, size = 0x4, scoped, tag = 'scoped memory for coarse_gcn_encoding_forward.6']
    %7 = vsyncpa [#allocation3], 0
    // Predicated region
    $region2: #{coarse_gcn_encoding_forward.6} parent=1 // pred_check
      _
    $region3: #{coarse_gcn_encoding_forward.6} parent=1 // pred_check_branch
      %9 = sbr.rel (0) target = $region5
    $region4: #{coarse_gcn_encoding_forward.6} parent=1 // pred_region
      _
    $region5: #{coarse_gcn_encoding_forward.6} parent=1 // pred_fallthru
      _
    // Predicated region
    $region6: #{coarse_gcn_encoding_forward.6} parent=1 // pred_check
      _
    $region7: #{coarse_gcn_encoding_forward.6} parent=1 // pred_check_branch
      %11 = sbr.rel (0) target = $region9
    $region8: #{coarse_gcn_encoding_forward.6} parent=1 // pred_region
      %13 = vsyncadd [#allocation3], 0
      %s15 = sshll.u32 %s1, 4
      %s16 = int_to_ptr.hbm [resolvable:$true] %s15
      %s17 = sshll.u32 [#allocation2], 4
      %s18 = int_to_ptr.vmem [resolvable:$true] %s17
      %20 = dma.hbm_to_vmem [thread:$0]  %s16, 32, %s18, [#allocation3]
    $region9: #{coarse_gcn_encoding_forward.6} parent=1 // pred_fallthru
      _
    // Predicated region
    $region10: #{coarse_gcn_encoding_forward.6} parent=1 // pred_check
      _
    $region11: #{coarse_gcn_encoding_forward.6} parent=1 // pred_check_branch
      %22 = sbr.rel (0) target = $region13
    $region12: #{coarse_gcn_encoding_forward.6} parent=1 // pred_region
      %24 = dma.done [#allocation3], 32
    $region13: #{coarse_gcn_encoding_forward.6} parent=1 // pred_fallthru
      _
    %v25 = vld [vmem:[%s0] sm:$0xff]
    %v26 = vld [vmem:[%s0 + $0x8] sm:$0xff]
    %v27 = vld [vmem:[%s0 + $0x10] sm:$0xff]
    %v28 = vld [vmem:[#allocation2] sm:$0x3]
    %30 = vset.pattern.permute.xlu0 0
    %31 = vperm.xlu0 %30, %v25
    %v32 = vpop.permute.xlu0 %31
    %35 = vset.pattern.permute.xlu0 0
    %36 = vperm.xlu0 %35, %v26
    %v37 = vpop.permute.xlu0 %36
    %40 = vset.pattern.permute.xlu0 0
    %41 = vperm.xlu0 %40, %v27
    %v42 = vpop.permute.xlu0 %41
    %v44 = vperm.slane %v28, 0
    %v45 = vsub.f32 %v32, %v44
    %v46 = vsub.f32 %v37, %v44
    %v47 = vsub.f32 %v42, %v44
    %48 = vset.pattern.permute.xlu0 1
    %49 = vperm.xlu0 %48, %v25
    %v50 = vpop.permute.xlu0 %49
    %52 = vset.pattern.permute.xlu0 1
    %53 = vperm.xlu0 %52, %v26
    %v54 = vpop.permute.xlu0 %53
    %56 = vset.pattern.permute.xlu0 1
    %57 = vperm.xlu0 %56, %v27
    %v58 = vpop.permute.xlu0 %57
    %v60 = vperm.slane %v28, 1
    %v61 = vsub.f32 %v50, %v60
    %v62 = vsub.f32 %v54, %v60
    %v63 = vsub.f32 %v58, %v60
    %v64 = vmul.f32 %v45, %v45
    %v65 = vmul.f32 %v46, %v46
    %v66 = vmul.f32 %v47, %v47
    %v67 = vmul.f32 %v61, %v61
    %v68 = vmul.f32 %v62, %v62
    %v69 = vmul.f32 %v63, %v63
    %v70 = vadd.f32 %v64, %v67
    %v71 = vadd.f32 %v65, %v68
    %v72 = vadd.f32 %v66, %v69
    %v73 = vmax.f32 %v70, 1e-12
    %v74 = vmax.f32 %v71, 1e-12
    %v75 = vmax.f32 %v72, 1e-12
    %vm76 = vcmask 195584
    %77 = vst.msk [vmem:[%s2] sm:$0xff] %vm76, %v73
    %78 = vst.msk [vmem:[%s2 + $0x8] sm:$0xff] %vm76, %v74
    %79 = vst.msk [vmem:[%s2 + $0x10] sm:$0xff] %vm76, %v75
    // Predicated region
    $region14: #{coarse_gcn_encoding_forward.6} parent=1 // pred_check
      _
    $region15: #{coarse_gcn_encoding_forward.6} parent=1 // pred_check_branch
      %81 = sbr.rel (0) target = $region17
    $region16: #{coarse_gcn_encoding_forward.6} parent=1 // pred_region
      _
    $region17: #{coarse_gcn_encoding_forward.6} parent=1 // pred_fallthru
      _
    // Predicated region
    $region18: #{coarse_gcn_encoding_forward.6} parent=1 // pred_check
      _
    $region19: #{coarse_gcn_encoding_forward.6} parent=1 // pred_check_branch
      %83 = sbr.rel (0) target = $region21
    $region20: #{coarse_gcn_encoding_forward.6} parent=1 // pred_region
      _
    $region21: #{coarse_gcn_encoding_forward.6} parent=1 // pred_fallthru
      _
    %84 = vsyncpa [#allocation3], 1

// kernel: coarse_gcn_encoding_forward.4
$region0: #{coarse_gcn_encoding_forward.4}
  #allocation0 [shape = 'u32[]', space=smem, size = 0x4, offset = 0x4, fixed_abs, tag = 'smem constant byte address 0x4 - core index']
  #allocation1 [shape = 'u32[72,128]{1,0:T(1,128)}', space=vmem, size = 0x9000, scoped, tag = 'internal scratch']
  %s0 = inlined_call_operand.vmem [shape: f32[16,2], index: 0, kind: input, shape index: {}]
  %s1 = inlined_call_operand.vmem [shape: f32[2,16], index: 1, kind: input, shape index: {}]
  %s2 = inlined_call_operand.vmem [shape: f32[16,16], index: 2, kind: output, shape index: {}]
  %s3 = sld [smem:[#allocation0]]
  $region18: #{coarse_gcn_encoding_forward.4} parent=0
    _
  %s5 = ssub.s32 1, %s3
  %s6 = scalar_select 0, %s5, %s3
  // Predicated region
  $region2: #{coarse_gcn_encoding_forward.4} parent=0 // pred_check
    _
  $region3: #{coarse_gcn_encoding_forward.4} parent=0 // pred_check_branch
    %8 = sbr.rel (0) target = $region5
  $region4: #{coarse_gcn_encoding_forward.4} parent=0 // pred_region
    _
  $region5: #{coarse_gcn_encoding_forward.4} parent=0 // pred_fallthru
    _
  // Predicated region
  $region6: #{coarse_gcn_encoding_forward.4} parent=0 // pred_check
    _
  $region7: #{coarse_gcn_encoding_forward.4} parent=0 // pred_check_branch
    %10 = sbr.rel (0) target = $region9
  $region8: #{coarse_gcn_encoding_forward.4} parent=0 // pred_region
    _
  $region9: #{coarse_gcn_encoding_forward.4} parent=0 // pred_fallthru
    _
  %v11 = vld [vmem:[%s0] sm:$0xff]
  %v12 = vld [vmem:[%s0 + $0x8] sm:$0xff]
  %v13 = vld [vmem:[%s1] sm:$0x3]
  %15 = vset.pattern.permute.xlu0 0
  %16 = vperm.xlu0 %15, %v11
  %v17 = vpop.permute.xlu0 %16
  %20 = vset.pattern.permute.xlu0 0
  %21 = vperm.xlu0 %20, %v12
  %v22 = vpop.permute.xlu0 %21
  %v24 = vperm.slane %v13, 0
  %v25 = vsub.f32 %v17, %v24
  %v26 = vsub.f32 %v22, %v24
  %27 = vset.pattern.permute.xlu0 1
  %28 = vperm.xlu0 %27, %v11
  %v29 = vpop.permute.xlu0 %28
  %31 = vset.pattern.permute.xlu0 1
  %32 = vperm.xlu0 %31, %v12
  %v33 = vpop.permute.xlu0 %32
  %v35 = vperm.slane %v13, 1
  %v36 = vsub.f32 %v29, %v35
  %v37 = vsub.f32 %v33, %v35
  %v38 = vmul.f32 %v25, %v25
  %v39 = vmul.f32 %v26, %v26
  %v40 = vmul.f32 %v36, %v36
  %v41 = vmul.f32 %v37, %v37
  %v42 = vadd.f32 %v38, %v40
  %v43 = vadd.f32 %v39, %v41
  %v44 = vmax.f32 %v42, 1e-12
  %v45 = vmax.f32 %v43, 1e-12
  %vm46 = vcmask 130048
  %47 = vst.msk [vmem:[%s2] sm:$0xff] %vm46, %v44
  %48 = vst.msk [vmem:[%s2 + $0x8] sm:$0xff] %vm46, %v45
  // Predicated region
  $region10: #{coarse_gcn_encoding_forward.4} parent=0 // pred_check
    _
  $region11: #{coarse_gcn_encoding_forward.4} parent=0 // pred_check_branch
    %50 = sbr.rel (0) target = $region13
  $region12: #{coarse_gcn_encoding_forward.4} parent=0 // pred_region
    _
  $region13: #{coarse_gcn_encoding_forward.4} parent=0 // pred_fallthru
    _
  // Predicated region
  $region14: #{coarse_gcn_encoding_forward.4} parent=0 // pred_check
    _
  $region15: #{coarse_gcn_encoding_forward.4} parent=0 // pred_check_branch
    %52 = sbr.rel (0) target = $region17
  $region16: #{coarse_gcn_encoding_forward.4} parent=0 // pred_region
    _
  $region17: #{coarse_gcn_encoding_forward.4} parent=0 // pred_fallthru
    _

// kernel: neg.2
$region0: #{neg.2}
  #allocation0 [shape = 's32[1]{0}', space=sflag, size = 0x4, scoped, tag = 'scoped memory for neg.2']
  %s0 = inlined_call_operand.vmem [shape: f32[16,16], index: 0, kind: input, shape index: {}]
  %s1 = inlined_call_operand.vmem [shape: f32[16,16], index: 1, kind: output, shape index: {}]
  %v2 = vld [vmem:[%s0] sm:$0xff]
  %3 = xla_tuple %v2
  %4 = xla_tuple %3
  %v5 = vxor.u32 %v2, 2147483648
  %6 = xla_tuple %v5
  %7 = vst [vmem:[%s1] sm:$0xff] %v5
  %s8 = scalar_lea.vmem %s0, 8
  %v9 = vld [vmem:[%s8] sm:$0xff]
  %10 = xla_tuple %v9
  %11 = xla_tuple %10
  %v12 = vxor.u32 %v9, 2147483648
  %13 = xla_tuple %v12
  %s14 = scalar_lea.vmem %s1, 8
  %15 = vst [vmem:[%s14] sm:$0xff] %v12

// kernel: coarse_gcn_encoding_forward.7
$region0: #{coarse_gcn_encoding_forward.7}
  #allocation0 [shape = 'u32[]', space=smem, size = 0x4, offset = 0x4, fixed_abs, tag = 'smem constant byte address 0x4 - core index']
  #allocation1 [shape = 'u32[72,128]{1,0:T(1,128)}', space=vmem, size = 0x9000, scoped, tag = 'internal scratch']
  %s0 = inlined_call_operand.vmem [shape: f32[24,32], index: 0, kind: input, shape index: {}]
  %s1 = inlined_call_operand.vmem [shape: f32[4,24,24], index: 1, kind: input, shape index: {}]
  %s2 = inlined_call_operand.vmem [shape: f32[24,24,32], index: 2, kind: input, shape index: {}]
  %s3 = inlined_call_operand.vmem [shape: f32[32,32], index: 3, kind: input, shape index: {}]
  %s4 = inlined_call_operand.vmem [shape: f32[32,32], index: 4, kind: input, shape index: {}]
  %s5 = inlined_call_operand.vmem [shape: f32[32,64], index: 5, kind: input, shape index: {}]
  %s6 = inlined_call_operand.vmem [shape: f32[32,64], index: 6, kind: input, shape index: {}]
  %s7 = inlined_call_operand.vmem [shape: f32[32,32], index: 7, kind: input, shape index: {}]
  %s8 = inlined_call_operand.vmem [shape: f32[32,32], index: 8, kind: input, shape index: {}]
  %s9 = inlined_call_operand.vmem [shape: f32[64,32], index: 9, kind: input, shape index: {}]
  %s10 = inlined_call_operand.vmem [shape: f32[32,32], index: 10, kind: input, shape index: {}]
  %s11 = inlined_call_operand.vmem [shape: f32[1,32], index: 11, kind: input, shape index: {}]
  %s12 = inlined_call_operand.vmem [shape: f32[32,32], index: 12, kind: input, shape index: {}]
  %s13 = inlined_call_operand.vmem [shape: f32[1,32], index: 13, kind: input, shape index: {}]
  %s14 = inlined_call_operand.vmem [shape: f32[32,32], index: 14, kind: input, shape index: {}]
  %s15 = inlined_call_operand.vmem [shape: f32[1,32], index: 15, kind: input, shape index: {}]
  %s16 = inlined_call_operand.vmem [shape: f32[32,32], index: 16, kind: input, shape index: {}]
  %s17 = inlined_call_operand.vmem [shape: f32[1,32], index: 17, kind: input, shape index: {}]
  %s18 = inlined_call_operand.vmem [shape: f32[1,32], index: 18, kind: input, shape index: {}]
  %s19 = inlined_call_operand.vmem [shape: f32[1,32], index: 19, kind: input, shape index: {}]
  %s20 = inlined_call_operand.hbm [shape: f32[24,32], index: 20, kind: output, shape index: {}]
  %s21 = sld [smem:[#allocation0]]
  $region90: #{coarse_gcn_encoding_forward.7} parent=0
    _
  %s23 = ssub.s32 1, %s21
  %s24 = scalar_select 0, %s23, %s21
  $region1: #{coarse_gcn_encoding_forward.7} parent=0
    #allocation2 [shape = 'u8[12288]{0}', space=vmem, size = 0x3000, scoped, tag = 'output window, operand 0, single buffered']
    #allocation3 [shape = 's32[1]{0}', space=sflag, size = 0x4, scoped, tag = 'scoped memory for coarse_gcn_encoding_forward.7']
    %25 = vsyncpa [#allocation3], 0
    // Predicated region
    $region2: #{coarse_gcn_encoding_forward.7} parent=1 // pred_check
      _
    $region3: #{coarse_gcn_encoding_forward.7} parent=1 // pred_check_branch
      %27 = sbr.rel (0) target = $region5
    $region4: #{coarse_gcn_encoding_forward.7} parent=1 // pred_region
      _
    $region5: #{coarse_gcn_encoding_forward.7} parent=1 // pred_fallthru
      _
    // Predicated region
    $region6: #{coarse_gcn_encoding_forward.7} parent=1 // pred_check
      _
    $region7: #{coarse_gcn_encoding_forward.7} parent=1 // pred_check_branch
      %29 = sbr.rel (0) target = $region9
    $region8: #{coarse_gcn_encoding_forward.7} parent=1 // pred_region
      _
    $region9: #{coarse_gcn_encoding_forward.7} parent=1 // pred_fallthru
      _
    // Predicated region
    $region10: #{coarse_gcn_encoding_forward.7} parent=1 // pred_check
      _
    $region11: #{coarse_gcn_encoding_forward.7} parent=1 // pred_check_branch
      %31 = sbr.rel (0) target = $region13
    $region12: #{coarse_gcn_encoding_forward.7} parent=1 // pred_region
      _
    $region13: #{coarse_gcn_encoding_forward.7} parent=1 // pred_fallthru
      _
    // Predicated region
    $region14: #{coarse_gcn_encoding_forward.7} parent=1 // pred_check
      _
    $region15: #{coarse_gcn_encoding_forward.7} parent=1 // pred_check_branch
      %33 = sbr.rel (0) target = $region17
    $region16: #{coarse_gcn_encoding_forward.7} parent=1 // pred_region
      _
    $region17: #{coarse_gcn_encoding_forward.7} parent=1 // pred_fallthru
      _
    // Predicated region
    $region18: #{coarse_gcn_encoding_forward.7} parent=1 // pred_check
      _
    $region19: #{coarse_gcn_encoding_forward.7} parent=1 // pred_check_branch
      %35 = sbr.rel (0) target = $region21
    $region20: #{coarse_gcn_encoding_forward.7} parent=1 // pred_region
      _
    $region21: #{coarse_gcn_encoding_forward.7} parent=1 // pred_fallthru
      _
    // Predicated region
    $region22: #{coarse_gcn_encoding_forward.7} parent=1 // pred_check
      _
    $region23: #{coarse_gcn_encoding_forward.7} parent=1 // pred_check_branch
      %37 = sbr.rel (0) target = $region25
    $region24: #{coarse_gcn_encoding_forward.7} parent=1 // pred_region
      _
    $region25: #{coarse_gcn_encoding_forward.7} parent=1 // pred_fallthru
      _
    // Predicated region
    $region26: #{coarse_gcn_encoding_forward.7} parent=1 // pred_check
      _
    $region27: #{coarse_gcn_encoding_forward.7} parent=1 // pred_check_branch
      %39 = sbr.rel (0) target = $region29
    $region28: #{coarse_gcn_encoding_forward.7} parent=1 // pred_region
      _
    $region29: #{coarse_gcn_encoding_forward.7} parent=1 // pred_fallthru
      _
    // Predicated region
    $region30: #{coarse_gcn_encoding_forward.7} parent=1 // pred_check
      _
    $region31: #{coarse_gcn_encoding_forward.7} parent=1 // pred_check_branch
      %41 = sbr.rel (0) target = $region33
    $region32: #{coarse_gcn_encoding_forward.7} parent=1 // pred_region
      _
    $region33: #{coarse_gcn_encoding_forward.7} parent=1 // pred_fallthru
      _
    // Predicated region
    $region34: #{coarse_gcn_encoding_forward.7} parent=1 // pred_check
      _
    $region35: #{coarse_gcn_encoding_forward.7} parent=1 // pred_check_branch
      %43 = sbr.rel (0) target = $region37
    $region36: #{coarse_gcn_encoding_forward.7} parent=1 // pred_region
      _
    $region37: #{coarse_gcn_encoding_forward.7} parent=1 // pred_fallthru
      _
    // Predicated region
    $region38: #{coarse_gcn_encoding_forward.7} parent=1 // pred_check
      _
    $region39: #{coarse_gcn_encoding_forward.7} parent=1 // pred_check_branch
      %45 = sbr.rel (0) target = $region41
    $region40: #{coarse_gcn_encoding_forward.7} parent=1 // pred_region
      _
    $region41: #{coarse_gcn_encoding_forward.7} parent=1 // pred_fallthru
      _
    // Predicated region
    $region42: #{coarse_gcn_encoding_forward.7} parent=1 // pred_check
      _
    $region43: #{coarse_gcn_encoding_forward.7} parent=1 // pred_check_branch
      %47 = sbr.rel (0) target = $region45
    $region44: #{coarse_gcn_encoding_forward.7} parent=1 // pred_region
      _
    $region45: #{coarse_gcn_encoding_forward.7} parent=1 // pred_fallthru
      _
    // Predicated region
    $region46: #{coarse_gcn_encoding_forward.7} parent=1 // pred_check
      _
    $region47: #{coarse_gcn_encoding_forward.7} parent=1 // pred_check_branch
      %49 = sbr.rel (0) target = $region49
    $region48: #{coarse_gcn_encoding_forward.7} parent=1 // pred_region
      _
    $region49: #{coarse_gcn_encoding_forward.7} parent=1 // pred_fallthru
      _
    // Predicated region
    $region50: #{coarse_gcn_encoding_forward.7} parent=1 // pred_check
      _
    $region51: #{coarse_gcn_encoding_forward.7} parent=1 // pred_check_branch
      %51 = sbr.rel (0) target = $region53
    $region52: #{coarse_gcn_encoding_forward.7} parent=1 // pred_region
      _
    $region53: #{coarse_gcn_encoding_forward.7} parent=1 // pred_fallthru
      _
    // Predicated region
    $region54: #{coarse_gcn_encoding_forward.7} parent=1 // pred_check
      _
    $region55: #{coarse_gcn_encoding_forward.7} parent=1 // pred_check_branch
      %53 = sbr.rel (0) target = $region57
    $region56: #{coarse_gcn_encoding_forward.7} parent=1 // pred_region
      _
    $region57: #{coarse_gcn_encoding_forward.7} parent=1 // pred_fallthru
      _
    // Predicated region
    $region58: #{coarse_gcn_encoding_forward.7} parent=1 // pred_check
      _
    $region59: #{coarse_gcn_encoding_forward.7} parent=1 // pred_check_branch
      %55 = sbr.rel (0) target = $region61
    $region60: #{coarse_gcn_encoding_forward.7} parent=1 // pred_region
      _
    $region61: #{coarse_gcn_encoding_forward.7} parent=1 // pred_fallthru
      _
    // Predicated region
    $region62: #{coarse_gcn_encoding_forward.7} parent=1 // pred_check
      _
    $region63: #{coarse_gcn_encoding_forward.7} parent=1 // pred_check_branch
      %57 = sbr.rel (0) target = $region65
    $region64: #{coarse_gcn_encoding_forward.7} parent=1 // pred_region
      _
    $region65: #{coarse_gcn_encoding_forward.7} parent=1 // pred_fallthru
      _
    // Predicated region
    $region66: #{coarse_gcn_encoding_forward.7} parent=1 // pred_check
      _
    $region67: #{coarse_gcn_encoding_forward.7} parent=1 // pred_check_branch
      %59 = sbr.rel (0) target = $region69
    $region68: #{coarse_gcn_encoding_forward.7} parent=1 // pred_region
      _
    $region69: #{coarse_gcn_encoding_forward.7} parent=1 // pred_fallthru
      _
    // Predicated region
    $region70: #{coarse_gcn_encoding_forward.7} parent=1 // pred_check
      _
    $region71: #{coarse_gcn_encoding_forward.7} parent=1 // pred_check_branch
      %61 = sbr.rel (0) target = $region73
    $region72: #{coarse_gcn_encoding_forward.7} parent=1 // pred_region
      _
    $region73: #{coarse_gcn_encoding_forward.7} parent=1 // pred_fallthru
      _
    // Predicated region
    $region74: #{coarse_gcn_encoding_forward.7} parent=1 // pred_check
      _
    $region75: #{coarse_gcn_encoding_forward.7} parent=1 // pred_check_branch
      %63 = sbr.rel (0) target = $region77
    $region76: #{coarse_gcn_encoding_forward.7} parent=1 // pred_region
      _
    $region77: #{coarse_gcn_encoding_forward.7} parent=1 // pred_fallthru
      _
    // Predicated region
    $region78: #{coarse_gcn_encoding_forward.7} parent=1 // pred_check
      _
    $region79: #{coarse_gcn_encoding_forward.7} parent=1 // pred_check_branch
      %65 = sbr.rel (0) target = $region81
    $region80: #{coarse_gcn_encoding_forward.7} parent=1 // pred_region
      _
    $region81: #{coarse_gcn_encoding_forward.7} parent=1 // pred_fallthru
      _
    %v67 = vld [vmem:[%s0] sm:$0xff]
    %v68 = vld [vmem:[%s0 + $0x8] sm:$0xff]
    %v69 = vld [vmem:[%s0 + $0x10] sm:$0xff]
    %v70 = vld [vmem:[%s3] sm:$0xff]
    %v71 = vld [vmem:[%s3 + $0x8] sm:$0xff]
    %v72 = vld [vmem:[%s3 + $0x10] sm:$0xff]
    %v73 = vld [vmem:[%s3 + $0x18] sm:$0xff]
    %v74 = vpack.c.bf16 %v68, %v67
    %v75 = vpack.c.bf16 %v69, %v69
    %v76 = vpack.c.bf16 %v71, %v70
    %v77 = vpack.c.bf16 %v73, %v72
    %vm78 = vcmask 261120
    %v80 = vsel %vm78, %v74, 0
    %v83 = vsel %vm78, %v75, 0
    %85 = vmatpush.bf16.msra.mxu0 0
    %86 = vmatpush.bf16.msra.mxu0 0
    %87 = vmatpush.bf16.msra.mxu0 0
    %88 = vmatpush.bf16.msra.mxu0 0
    %89 = vmatpush.bf16.msra.mxu0 0
    %90 = vmatpush.bf16.msra.mxu0 0
    %91 = vmatpush.bf16.msra.mxu0 %v77
    %92 = vmatpush.bf16.msra.mxu0 %v76
    %93 = vmatmul.bf16.gmra.mxu0 %v80
    %v94 = vpop.f32.mrf.mxu0
    %v95 = vadd.f32 0.0, %v94
    %v96 = vpop.f32.mrf.mxu0
    %v97 = vadd.f32 0.0, %v96
    %98 = vmatmul.bf16.gmra.mxu0 %v83
    %v99 = vpop.f32.mrf.mxu0
    %v100 = vadd.f32 0.0, %v99
    %v101 = vpop.f32.mrf.mxu0
    %102 = vdwg.mxu0
    %v103 = vld [vmem:[%s4] sm:$0xff]
    %v104 = vld [vmem:[%s4 + $0x8] sm:$0xff]
    %v105 = vld [vmem:[%s4 + $0x10] sm:$0xff]
    %v106 = vld [vmem:[%s4 + $0x18] sm:$0xff]
    %v107 = vpack.c.bf16 %v104, %v103
    %v108 = vpack.c.bf16 %v106, %v105
    %109 = vmatpush.bf16.msra.mxu0 0
    %110 = vmatpush.bf16.msra.mxu0 0
    %111 = vmatpush.bf16.msra.mxu0 0
    %112 = vmatpush.bf16.msra.mxu0 0
    %113 = vmatpush.bf16.msra.mxu0 0
    %114 = vmatpush.bf16.msra.mxu0 0
    %115 = vmatpush.bf16.msra.mxu0 %v108
    %116 = vmatpush.bf16.msra.mxu0 %v107
    %117 = vmatmul.bf16.gmra.mxu0 %v80
    %v118 = vpop.f32.mrf.mxu0
    %v119 = vadd.f32 0.0, %v118
    %v120 = vpop.f32.mrf.mxu0
    %v121 = vadd.f32 0.0, %v120
    %122 = vmatmul.bf16.gmra.mxu0 %v83
    %v123 = vpop.f32.mrf.mxu0
    %v124 = vadd.f32 0.0, %v123
    %v125 = vpop.f32.mrf.mxu0
    %126 = vdwg.mxu0
    %v127 = vld [vmem:[%s1] sm:$0xff]
    %v128 = vld [vmem:[%s1 + $0x8] sm:$0xff]
    %v129 = vld [vmem:[%s1 + $0x10] sm:$0xff]
    %vm130 = vcmask 195584
    %v132 = vsel %vm130, %v127, 0
    %v135 = vsel %vm130, %v128, 0
    %v138 = vsel %vm130, %v129, 0
    %140 = vmatpush.msra.mxu0 0.0
    %141 = vmatpush.msra.mxu0 0.0
    %142 = vmatpush.msra.mxu0 0.0
    %143 = vmatpush.msra.mxu0 0.0
    %144 = vmatpush.msra.mxu0 0.0
    %145 = vmatpush.msra.mxu0 0.0
    %146 = vmatpush.msra.mxu0 0.0
    %147 = vmatpush.msra.mxu0 0.0
    %148 = vmatpush.msra.mxu0 0.0
    %149 = vmatpush.msra.mxu0 0.0
    %150 = vmatpush.msra.mxu0 0.0
    %151 = vmatpush.msra.mxu0 0.0
    %152 = vmatpush.msra.mxu0 0.0
    %153 = vmatpush.msra.mxu0 %v124
    %154 = vmatpush.msra.mxu0 %v121
    %155 = vmatpush.msra.mxu0 %v119
    %156 = vmatmul.f32.gmra.mxu0 %v132
    %v157 = vpop.f32.mrf.mxu0
    %v158 = vadd.f32 0.0, %v157
    %159 = vmatmul.f32.gmra.mxu0 %v135
    %v160 = vpop.f32.mrf.mxu0
    %v161 = vadd.f32 0.0, %v160
    %162 = vmatmul.f32.gmra.mxu0 %v138
    %v163 = vpop.f32.mrf.mxu0
    %v164 = vadd.f32 0.0, %v163
    %165 = vdwg.mxu0
    %v166 = vadd.f32 %v95, %v158
    %v167 = vadd.f32 %v97, %v161
    %v168 = vadd.f32 %v100, %v164
    %v169 = vsel %vm78, %v166, 0.0
    %v170 = vsel %vm78, %v167, 0.0
    %v171 = vadd.f32 %v169, %v170
    %v172 = vsel %vm78, %v168, 0.0
    %v173 = vadd.f32 %v171, %v172
    %v174 = vrot.slane %v173, 4
    %v175 = vadd.f32 %v173, %v174
    %v176 = vrot.slane %v175, 2
    %v177 = vadd.f32 %v175, %v176
    %v178 = vrot.slane %v177, 1
    %v179 = vadd.f32 %v177, %v178
    %v180 = vadd.f32 %v179, 0.0
    %v181 = vmul.f32 %v166, %v166
    %v182 = vmul.f32 %v167, %v167
    %v183 = vmul.f32 %v168, %v168
    %v184 = vsel %vm78, %v181, 0.0
    %v185 = vsel %vm78, %v182, 0.0
    %v186 = vadd.f32 %v184, %v185
    %v187 = vsel %vm78, %v183, 0.0
    %v188 = vadd.f32 %v186, %v187
    %v189 = vrot.slane %v188, 4
    %v190 = vadd.f32 %v188, %v189
    %v191 = vrot.slane %v190, 2
    %v192 = vadd.f32 %v190, %v191
    %v193 = vrot.slane %v192, 1
    %v194 = vadd.f32 %v192, %v193
    %v195 = vadd.f32 %v194, 0.0
    %s196 = scalar_lea.vmem %s1, 24
    %v197 = vld [vmem:[%s196] sm:$0xff]
    %v198 = vld [vmem:[%s196 + $0x8] sm:$0xff]
    %v199 = vld [vmem:[%s196 + $0x10] sm:$0xff]
    %v201 = vsel %vm130, %v197, 0
    %v204 = vsel %vm130, %v198, 0
    %v207 = vsel %vm130, %v199, 0
    %209 = vmatpush.msra.mxu0 0.0
    %210 = vmatpush.msra.mxu0 0.0
    %211 = vmatpush.msra.mxu0 0.0
    %212 = vmatpush.msra.mxu0 0.0
    %213 = vmatpush.msra.mxu0 0.0
    %214 = vmatpush.msra.mxu0 0.0
    %215 = vmatpush.msra.mxu0 0.0
    %216 = vmatpush.msra.mxu0 0.0
    %217 = vmatpush.msra.mxu0 0.0
    %218 = vmatpush.msra.mxu0 0.0
    %219 = vmatpush.msra.mxu0 0.0
    %220 = vmatpush.msra.mxu0 0.0
    %221 = vmatpush.msra.mxu0 0.0
    %222 = vmatpush.msra.mxu0 %v124
    %223 = vmatpush.msra.mxu0 %v121
    %224 = vmatpush.msra.mxu0 %v119
    %225 = vmatmul.f32.gmra.mxu0 %v201
    %v226 = vpop.f32.mrf.mxu0
    %v227 = vadd.f32 0.0, %v226
    %228 = vmatmul.f32.gmra.mxu0 %v204
    %v229 = vpop.f32.mrf.mxu0
    %v230 = vadd.f32 0.0, %v229
    %231 = vmatmul.f32.gmra.mxu0 %v207
    %v232 = vpop.f32.mrf.mxu0
    %v233 = vadd.f32 0.0, %v232
    %234 = vdwg.mxu0
    %v235 = vadd.f32 %v95, %v227
    %v236 = vadd.f32 %v97, %v230
    %v237 = vadd.f32 %v100, %v233
    %v238 = vsel %vm78, %v235, 0.0
    %v239 = vsel %vm78, %v236, 0.0
    %v240 = vadd.f32 %v238, %v239
    %v241 = vsel %vm78, %v237, 0.0
    %v242 = vadd.f32 %v240, %v241
    %v243 = vrot.slane %v242, 4
    %v244 = vadd.f32 %v242, %v243
    %v245 = vrot.slane %v244, 2
    %v246 = vadd.f32 %v244, %v245
    %v247 = vrot.slane %v246, 1
    %v248 = vadd.f32 %v246, %v247
    %v249 = vadd.f32 %v180, %v248
    %v250 = vmul.f32 %v235, %v235
    %v251 = vmul.f32 %v236, %v236
    %v252 = vmul.f32 %v237, %v237
    %v253 = vsel %vm78, %v250, 0.0
    %v254 = vsel %vm78, %v251, 0.0
    %v255 = vadd.f32 %v253, %v254
    %v256 = vsel %vm78, %v252, 0.0
    %v257 = vadd.f32 %v255, %v256
    %v258 = vrot.slane %v257, 4
    %v259 = vadd.f32 %v257, %v258
    %v260 = vrot.slane %v259, 2
    %v261 = vadd.f32 %v259, %v260
    %v262 = vrot.slane %v261, 1
    %v263 = vadd.f32 %v261, %v262
    %v264 = vadd.f32 %v195, %v263
    %s265 = scalar_lea.vmem %s1, 48
    %v266 = vld [vmem:[%s265] sm:$0xff]
    %v267 = vld [vmem:[%s265 + $0x8] sm:$0xff]
    %v268 = vld [vmem:[%s265 + $0x10] sm:$0xff]
    %v270 = vsel %vm130, %v266, 0
    %v273 = vsel %vm130, %v267, 0
    %v276 = vsel %vm130, %v268, 0
    %278 = vmatpush.msra.mxu0 0.0
    %279 = vmatpush.msra.mxu0 0.0
    %280 = vmatpush.msra.mxu0 0.0
    %281 = vmatpush.msra.mxu0 0.0
    %282 = vmatpush.msra.mxu0 0.0
    %283 = vmatpush.msra.mxu0 0.0
    %284 = vmatpush.msra.mxu0 0.0
    %285 = vmatpush.msra.mxu0 0.0
    %286 = vmatpush.msra.mxu0 0.0
    %287 = vmatpush.msra.mxu0 0.0
    %288 = vmatpush.msra.mxu0 0.0
    %289 = vmatpush.msra.mxu0 0.0
    %290 = vmatpush.msra.mxu0 0.0
    %291 = vmatpush.msra.mxu0 %v124
    %292 = vmatpush.msra.mxu0 %v121
    %293 = vmatpush.msra.mxu0 %v119
    %294 = vmatmul.f32.gmra.mxu0 %v270
    %v295 = vpop.f32.mrf.mxu0
    %v296 = vadd.f32 0.0, %v295
    %297 = vmatmul.f32.gmra.mxu0 %v273
    %v298 = vpop.f32.mrf.mxu0
    %v299 = vadd.f32 0.0, %v298
    %300 = vmatmul.f32.gmra.mxu0 %v276
    %v301 = vpop.f32.mrf.mxu0
    %v302 = vadd.f32 0.0, %v301
    %303 = vdwg.mxu0
    %v304 = vadd.f32 %v95, %v296
    %v305 = vadd.f32 %v97, %v299
    %v306 = vadd.f32 %v100, %v302
    %v307 = vsel %vm78, %v304, 0.0
    %v308 = vsel %vm78, %v305, 0.0
    %v309 = vadd.f32 %v307, %v308
    %v310 = vsel %vm78, %v306, 0.0
    %v311 = vadd.f32 %v309, %v310
    %v312 = vrot.slane %v311, 4
    %v313 = vadd.f32 %v311, %v312
    %v314 = vrot.slane %v313, 2
    %v315 = vadd.f32 %v313, %v314
    %v316 = vrot.slane %v315, 1
    %v317 = vadd.f32 %v315, %v316
    %v318 = vadd.f32 %v249, %v317
    %v319 = vmul.f32 %v304, %v304
    %v320 = vmul.f32 %v305, %v305
    %v321 = vmul.f32 %v306, %v306
    %v322 = vsel %vm78, %v319, 0.0
    %v323 = vsel %vm78, %v320, 0.0
    %v324 = vadd.f32 %v322, %v323
    %v325 = vsel %vm78, %v321, 0.0
    %v326 = vadd.f32 %v324, %v325
    %v327 = vrot.slane %v326, 4
    %v328 = vadd.f32 %v326, %v327
    %v329 = vrot.slane %v328, 2
    %v330 = vadd.f32 %v328, %v329
    %v331 = vrot.slane %v330, 1
    %v332 = vadd.f32 %v330, %v331
    %v333 = vadd.f32 %v264, %v332
    %s334 = scalar_lea.vmem %s1, 72
    %v335 = vld [vmem:[%s334] sm:$0xff]
    %v336 = vld [vmem:[%s334 + $0x8] sm:$0xff]
    %v337 = vld [vmem:[%s334 + $0x10] sm:$0xff]
    %v339 = vsel %vm130, %v335, 0
    %v342 = vsel %vm130, %v336, 0
    %v345 = vsel %vm130, %v337, 0
    %347 = vmatpush.msra.mxu0 0.0
    %348 = vmatpush.msra.mxu0 0.0
    %349 = vmatpush.msra.mxu0 0.0
    %350 = vmatpush.msra.mxu0 0.0
    %351 = vmatpush.msra.mxu0 0.0
    %352 = vmatpush.msra.mxu0 0.0
    %353 = vmatpush.msra.mxu0 0.0
    %354 = vmatpush.msra.mxu0 0.0
    %355 = vmatpush.msra.mxu0 0.0
    %356 = vmatpush.msra.mxu0 0.0
    %357 = vmatpush.msra.mxu0 0.0
    %358 = vmatpush.msra.mxu0 0.0
    %359 = vmatpush.msra.mxu0 0.0
    %360 = vmatpush.msra.mxu0 %v124
    %361 = vmatpush.msra.mxu0 %v121
    %362 = vmatpush.msra.mxu0 %v119
    %363 = vmatmul.f32.gmra.mxu0 %v339
    %v364 = vpop.f32.mrf.mxu0
    %v365 = vadd.f32 0.0, %v364
    %366 = vmatmul.f32.gmra.mxu0 %v342
    %v367 = vpop.f32.mrf.mxu0
    %v368 = vadd.f32 0.0, %v367
    %369 = vmatmul.f32.gmra.mxu0 %v345
    %v370 = vpop.f32.mrf.mxu0
    %v371 = vadd.f32 0.0, %v370
    %372 = vdwg.mxu0
    %v373 = vadd.f32 %v95, %v365
    %v374 = vadd.f32 %v97, %v368
    %v375 = vadd.f32 %v100, %v371
    %v376 = vsel %vm78, %v373, 0.0
    %v377 = vsel %vm78, %v374, 0.0
    %v378 = vadd.f32 %v376, %v377
    %v379 = vsel %vm78, %v375, 0.0
    %v380 = vadd.f32 %v378, %v379
    %v381 = vrot.slane %v380, 4
    %v382 = vadd.f32 %v380, %v381
    %v383 = vrot.slane %v382, 2
    %v384 = vadd.f32 %v382, %v383
    %v385 = vrot.slane %v384, 1
    %v386 = vadd.f32 %v384, %v385
    %v387 = vadd.f32 %v318, %v386
    %v388 = vmul.f32 %v373, %v373
    %v389 = vmul.f32 %v374, %v374
    %v390 = vmul.f32 %v375, %v375
    %v391 = vsel %vm78, %v388, 0.0
    %v392 = vsel %vm78, %v389, 0.0
    %v393 = vadd.f32 %v391, %v392
    %v394 = vsel %vm78, %v390, 0.0
    %v395 = vadd.f32 %v393, %v394
    %v396 = vrot.slane %v395, 4
    %v397 = vadd.f32 %v395, %v396
    %v398 = vrot.slane %v397, 2
    %v399 = vadd.f32 %v397, %v398
    %v400 = vrot.slane %v399, 1
    %v401 = vadd.f32 %v399, %v400
    %v402 = vadd.f32 %v333, %v401
    %v403 = vmul.f32 %v387, 0.010416667
    %v404 = vmul.f32 %v402, 0.010416667
    %v405 = vmul.f32 %v403, %v403
    %v406 = vsub.f32 %v404, %v405
    %v407 = vmax.f32 %v406, 0.0
    %v408 = vadd.f32 %v407, 1e-05
    %v409 = vrsqrt.pop %v408
    %v410 = vmul.f32 %v409, %v408
    %v411 = vmul.f32 %v410, %v409
    %v412 = vmul.f32 0.5, %v411
    %v413 = vsub.f32 1.5, %v412
    %v414 = vmul.f32 %v409, %v413
    %vm415 = vweird.f32 %v408
    %vm416 = vweird.f32 %v409
    %vm417 = vmor %vm415, %vm416
    %v418 = vsel %vm417, %v409, %v414
    %v419 = vsub.f32 %v166, %v403
    %v420 = vsub.f32 %v167, %v403
    %v421 = vsub.f32 %v168, %v403
    %v422 = vmul.f32 %v419, %v418
    %v423 = vmul.f32 %v420, %v418
    %v424 = vmul.f32 %v421, %v418
    %vm425 = vcmp.ge.f32.partialorder %v422, 0.0
    %vm426 = vcmp.ge.f32.partialorder %v423, 0.0
    %vm427 = vcmp.ge.f32.partialorder %v424, 0.0
    %v428 = vmul.f32 %v422, 0.2
    %v429 = vmul.f32 %v423, 0.2
    %v430 = vmul.f32 %v424, 0.2
    %v431 = vsel %vm425, %v422, %v428
    %v432 = vsel %vm426, %v423, %v429
    %v433 = vsel %vm427, %v424, %v430
    %v434 = vsub.f32 %v235, %v403
    %v435 = vsub.f32 %v236, %v403
    %v436 = vsub.f32 %v237, %v403
    %v437 = vmul.f32 %v434, %v418
    %v438 = vmul.f32 %v435, %v418
    %v439 = vmul.f32 %v436, %v418
    %vm440 = vcmp.ge.f32.partialorder %v437, 0.0
    %vm441 = vcmp.ge.f32.partialorder %v438, 0.0
    %vm442 = vcmp.ge.f32.partialorder %v439, 0.0
    %v443 = vmul.f32 %v437, 0.2
    %v444 = vmul.f32 %v438, 0.2
    %v445 = vmul.f32 %v439, 0.2
    %v446 = vsel %vm440, %v437, %v443
    %v447 = vsel %vm441, %v438, %v444
    %v448 = vsel %vm442, %v439, %v445
    %v449 = vmax.f32 %v431, %v446
    %v450 = vmax.f32 %v432, %v447
    %v451 = vmax.f32 %v433, %v448
    %v452 = vsub.f32 %v304, %v403
    %v453 = vsub.f32 %v305, %v403
    %v454 = vsub.f32 %v306, %v403
    %v455 = vmul.f32 %v452, %v418
    %v456 = vmul.f32 %v453, %v418
    %v457 = vmul.f32 %v454, %v418
    %vm458 = vcmp.ge.f32.partialorder %v455, 0.0
    %vm459 = vcmp.ge.f32.partialorder %v456, 0.0
    %vm460 = vcmp.ge.f32.partialorder %v457, 0.0
    %v461 = vmul.f32 %v455, 0.2
    %v462 = vmul.f32 %v456, 0.2
    %v463 = vmul.f32 %v457, 0.2
    %v464 = vsel %vm458, %v455, %v461
    %v465 = vsel %vm459, %v456, %v462
    %v466 = vsel %vm460, %v457, %v463
    %v467 = vmax.f32 %v449, %v464
    %v468 = vmax.f32 %v450, %v465
    %v469 = vmax.f32 %v451, %v466
    %v470 = vsub.f32 %v373, %v403
    %v471 = vsub.f32 %v374, %v403
    %v472 = vsub.f32 %v375, %v403
    %v473 = vmul.f32 %v470, %v418
    %v474 = vmul.f32 %v471, %v418
    %v475 = vmul.f32 %v472, %v418
    %vm476 = vcmp.ge.f32.partialorder %v473, 0.0
    %vm477 = vcmp.ge.f32.partialorder %v474, 0.0
    %vm478 = vcmp.ge.f32.partialorder %v475, 0.0
    %v479 = vmul.f32 %v473, 0.2
    %v480 = vmul.f32 %v474, 0.2
    %v481 = vmul.f32 %v475, 0.2
    %v482 = vsel %vm476, %v473, %v479
    %v483 = vsel %vm477, %v474, %v480
    %v484 = vsel %vm478, %v475, %v481
    %v485 = vmax.f32 %v467, %v482
    %v486 = vmax.f32 %v468, %v483
    %v487 = vmax.f32 %v469, %v484
    %v488 = vld [vmem:[%s5] sm:$0xff]
    %v489 = vld [vmem:[%s5 + $0x8] sm:$0xff]
    %v490 = vld [vmem:[%s5 + $0x10] sm:$0xff]
    %v491 = vld [vmem:[%s5 + $0x18] sm:$0xff]
    %v492 = vpack.c.bf16 %v486, %v485
    %v493 = vpack.c.bf16 %v487, %v487
    %v494 = vpack.c.bf16 %v489, %v488
    %v495 = vpack.c.bf16 %v491, %v490
    %v497 = vsel %vm78, %v492, 0
    %v500 = vsel %vm78, %v493, 0
    %502 = vmatpush.bf16.msra.mxu0 0
    %503 = vmatpush.bf16.msra.mxu0 0
    %504 = vmatpush.bf16.msra.mxu0 0
    %505 = vmatpush.bf16.msra.mxu0 0
    %506 = vmatpush.bf16.msra.mxu0 0
    %507 = vmatpush.bf16.msra.mxu0 0
    %508 = vmatpush.bf16.msra.mxu0 %v495
    %509 = vmatpush.bf16.msra.mxu0 %v494
    %510 = vmatmul.bf16.gmra.mxu0 %v497
    %v511 = vpop.f32.mrf.mxu0
    %v512 = vadd.f32 0.0, %v511
    %v513 = vpop.f32.mrf.mxu0
    %v514 = vadd.f32 0.0, %v513
    %515 = vmatmul.bf16.gmra.mxu0 %v500
    %v516 = vpop.f32.mrf.mxu0
    %v517 = vadd.f32 0.0, %v516
    %v518 = vpop.f32.mrf.mxu0
    %519 = vdwg.mxu0
    %v520 = vld [vmem:[%s6] sm:$0xff]
    %v521 = vld [vmem:[%s6 + $0x8] sm:$0xff]
    %v522 = vld [vmem:[%s6 + $0x10] sm:$0xff]
    %v523 = vld [vmem:[%s6 + $0x18] sm:$0xff]
    %v524 = vpack.c.bf16 %v521, %v520
    %v525 = vpack.c.bf16 %v523, %v522
    %526 = vmatpush.bf16.msra.mxu0 0
    %527 = vmatpush.bf16.msra.mxu0 0
    %528 = vmatpush.bf16.msra.mxu0 0
    %529 = vmatpush.bf16.msra.mxu0 0
    %530 = vmatpush.bf16.msra.mxu0 0
    %531 = vmatpush.bf16.msra.mxu0 0
    %532 = vmatpush.bf16.msra.mxu0 %v525
    %533 = vmatpush.bf16.msra.mxu0 %v524
    %534 = vmatmul.bf16.gmra.mxu0 %v497
    %v535 = vpop.f32.mrf.mxu0
    %v536 = vadd.f32 0.0, %v535
    %v537 = vpop.f32.mrf.mxu0
    %v538 = vadd.f32 0.0, %v537
    %539 = vmatmul.bf16.gmra.mxu0 %v500
    %v540 = vpop.f32.mrf.mxu0
    %v541 = vadd.f32 0.0, %v540
    %v542 = vpop.f32.mrf.mxu0
    %543 = vdwg.mxu0
    %544 = vmatpush.msra.mxu0 0.0
    %545 = vmatpush.msra.mxu0 0.0
    %546 = vmatpush.msra.mxu0 0.0
    %547 = vmatpush.msra.mxu0 0.0
    %548 = vmatpush.msra.mxu0 0.0
    %549 = vmatpush.msra.mxu0 0.0
    %550 = vmatpush.msra.mxu0 0.0
    %551 = vmatpush.msra.mxu0 0.0
    %552 = vmatpush.msra.mxu0 0.0
    %553 = vmatpush.msra.mxu0 0.0
    %554 = vmatpush.msra.mxu0 0.0
    %555 = vmatpush.msra.mxu0 0.0
    %556 = vmatpush.msra.mxu0 0.0
    %557 = vmatpush.msra.mxu0 %v541
    %558 = vmatpush.msra.mxu0 %v538
    %559 = vmatpush.msra.mxu0 %v536
    %560 = vmatmul.f32.gmra.mxu0 %v132
    %v561 = vpop.f32.mrf.mxu0
    %v562 = vadd.f32 0.0, %v561
    %563 = vmatmul.f32.gmra.mxu0 %v135
    %v564 = vpop.f32.mrf.mxu0
    %v565 = vadd.f32 0.0, %v564
    %566 = vmatmul.f32.gmra.mxu0 %v138
    %v567 = vpop.f32.mrf.mxu0
    %v568 = vadd.f32 0.0, %v567
    %569 = vdwg.mxu0
    %v570 = vadd.f32 %v512, %v562
    %v571 = vadd.f32 %v514, %v565
    %v572 = vadd.f32 %v517, %v568
    %vm573 = vcmask 523264
    %v574 = vsel %vm573, %v570, 0.0
    %v575 = vsel %vm573, %v571, 0.0
    %v576 = vadd.f32 %v574, %v575
    %v577 = vsel %vm573, %v572, 0.0
    %v578 = vadd.f32 %v576, %v577
    %v579 = vrot.slane %v578, 4
    %v580 = vadd.f32 %v578, %v579
    %v581 = vrot.slane %v580, 2
    %v582 = vadd.f32 %v580, %v581
    %v583 = vrot.slane %v582, 1
    %v584 = vadd.f32 %v582, %v583
    %v585 = vadd.f32 %v584, 0.0
    %v586 = vmul.f32 %v570, %v570
    %v587 = vmul.f32 %v571, %v571
    %v588 = vmul.f32 %v572, %v572
    %v589 = vsel %vm573, %v586, 0.0
    %v590 = vsel %vm573, %v587, 0.0
    %v591 = vadd.f32 %v589, %v590
    %v592 = vsel %vm573, %v588, 0.0
    %v593 = vadd.f32 %v591, %v592
    %v594 = vrot.slane %v593, 4
    %v595 = vadd.f32 %v593, %v594
    %v596 = vrot.slane %v595, 2
    %v597 = vadd.f32 %v595, %v596
    %v598 = vrot.slane %v597, 1
    %v599 = vadd.f32 %v597, %v598
    %v600 = vadd.f32 %v599, 0.0
    %601 = vmatpush.msra.mxu0 0.0
    %602 = vmatpush.msra.mxu0 0.0
    %603 = vmatpush.msra.mxu0 0.0
    %604 = vmatpush.msra.mxu0 0.0
    %605 = vmatpush.msra.mxu0 0.0
    %606 = vmatpush.msra.mxu0 0.0
    %607 = vmatpush.msra.mxu0 0.0
    %608 = vmatpush.msra.mxu0 0.0
    %609 = vmatpush.msra.mxu0 0.0
    %610 = vmatpush.msra.mxu0 0.0
    %611 = vmatpush.msra.mxu0 0.0
    %612 = vmatpush.msra.mxu0 0.0
    %613 = vmatpush.msra.mxu0 0.0
    %614 = vmatpush.msra.mxu0 %v541
    %615 = vmatpush.msra.mxu0 %v538
    %616 = vmatpush.msra.mxu0 %v536
    %617 = vmatmul.f32.gmra.mxu0 %v201
    %v618 = vpop.f32.mrf.mxu0
    %v619 = vadd.f32 0.0, %v618
    %620 = vmatmul.f32.gmra.mxu0 %v204
    %v621 = vpop.f32.mrf.mxu0
    %v622 = vadd.f32 0.0, %v621
    %623 = vmatmul.f32.gmra.mxu0 %v207
    %v624 = vpop.f32.mrf.mxu0
    %v625 = vadd.f32 0.0, %v624
    %626 = vdwg.mxu0
    %v627 = vadd.f32 %v512, %v619
    %v628 = vadd.f32 %v514, %v622
    %v629 = vadd.f32 %v517, %v625
    %v630 = vsel %vm573, %v627, 0.0
    %v631 = vsel %vm573, %v628, 0.0
    %v632 = vadd.f32 %v630, %v631
    %v633 = vsel %vm573, %v629, 0.0
    %v634 = vadd.f32 %v632, %v633
    %v635 = vrot.slane %v634, 4
    %v636 = vadd.f32 %v634, %v635
    %v637 = vrot.slane %v636, 2
    %v638 = vadd.f32 %v636, %v637
    %v639 = vrot.slane %v638, 1
    %v640 = vadd.f32 %v638, %v639
    %v641 = vadd.f32 %v585, %v640
    %v642 = vmul.f32 %v627, %v627
    %v643 = vmul.f32 %v628, %v628
    %v644 = vmul.f32 %v629, %v629
    %v645 = vsel %vm573, %v642, 0.0
    %v646 = vsel %vm573, %v643, 0.0
    %v647 = vadd.f32 %v645, %v646
    %v648 = vsel %vm573, %v644, 0.0
    %v649 = vadd.f32 %v647, %v648
    %v650 = vrot.slane %v649, 4
    %v651 = vadd.f32 %v649, %v650
    %v652 = vrot.slane %v651, 2
    %v653 = vadd.f32 %v651, %v652
    %v654 = vrot.slane %v653, 1
    %v655 = vadd.f32 %v653, %v654
    %v656 = vadd.f32 %v600, %v655
    %657 = vmatpush.msra.mxu0 0.0
    %658 = vmatpush.msra.mxu0 0.0
    %659 = vmatpush.msra.mxu0 0.0
    %660 = vmatpush.msra.mxu0 0.0
    %661 = vmatpush.msra.mxu0 0.0
    %662 = vmatpush.msra.mxu0 0.0
    %663 = vmatpush.msra.mxu0 0.0
    %664 = vmatpush.msra.mxu0 0.0
    %665 = vmatpush.msra.mxu0 0.0
    %666 = vmatpush.msra.mxu0 0.0
    %667 = vmatpush.msra.mxu0 0.0
    %668 = vmatpush.msra.mxu0 0.0
    %669 = vmatpush.msra.mxu0 0.0
    %670 = vmatpush.msra.mxu0 %v541
    %671 = vmatpush.msra.mxu0 %v538
    %672 = vmatpush.msra.mxu0 %v536
    %673 = vmatmul.f32.gmra.mxu0 %v270
    %v674 = vpop.f32.mrf.mxu0
    %v675 = vadd.f32 0.0, %v674
    %676 = vmatmul.f32.gmra.mxu0 %v273
    %v677 = vpop.f32.mrf.mxu0
    %v678 = vadd.f32 0.0, %v677
    %679 = vmatmul.f32.gmra.mxu0 %v276
    %v680 = vpop.f32.mrf.mxu0
    %v681 = vadd.f32 0.0, %v680
    %682 = vdwg.mxu0
    %v683 = vadd.f32 %v512, %v675
    %v684 = vadd.f32 %v514, %v678
    %v685 = vadd.f32 %v517, %v681
    %v686 = vsel %vm573, %v683, 0.0
    %v687 = vsel %vm573, %v684, 0.0
    %v688 = vadd.f32 %v686, %v687
    %v689 = vsel %vm573, %v685, 0.0
    %v690 = vadd.f32 %v688, %v689
    %v691 = vrot.slane %v690, 4
    %v692 = vadd.f32 %v690, %v691
    %v693 = vrot.slane %v692, 2
    %v694 = vadd.f32 %v692, %v693
    %v695 = vrot.slane %v694, 1
    %v696 = vadd.f32 %v694, %v695
    %v697 = vadd.f32 %v641, %v696
    %v698 = vmul.f32 %v683, %v683
    %v699 = vmul.f32 %v684, %v684
    %v700 = vmul.f32 %v685, %v685
    %v701 = vsel %vm573, %v698, 0.0
    %v702 = vsel %vm573, %v699, 0.0
    %v703 = vadd.f32 %v701, %v702
    %v704 = vsel %vm573, %v700, 0.0
    %v705 = vadd.f32 %v703, %v704
    %v706 = vrot.slane %v705, 4
    %v707 = vadd.f32 %v705, %v706
    %v708 = vrot.slane %v707, 2
    %v709 = vadd.f32 %v707, %v708
    %v710 = vrot.slane %v709, 1
    %v711 = vadd.f32 %v709, %v710
    %v712 = vadd.f32 %v656, %v711
    %713 = vmatpush.msra.mxu0 0.0
    %714 = vmatpush.msra.mxu0 0.0
    %715 = vmatpush.msra.mxu0 0.0
    %716 = vmatpush.msra.mxu0 0.0
    %717 = vmatpush.msra.mxu0 0.0
    %718 = vmatpush.msra.mxu0 0.0
    %719 = vmatpush.msra.mxu0 0.0
    %720 = vmatpush.msra.mxu0 0.0
    %721 = vmatpush.msra.mxu0 0.0
    %722 = vmatpush.msra.mxu0 0.0
    %723 = vmatpush.msra.mxu0 0.0
    %724 = vmatpush.msra.mxu0 0.0
    %725 = vmatpush.msra.mxu0 0.0
    %726 = vmatpush.msra.mxu0 %v541
    %727 = vmatpush.msra.mxu0 %v538
    %728 = vmatpush.msra.mxu0 %v536
    %729 = vmatmul.f32.gmra.mxu0 %v339
    %v730 = vpop.f32.mrf.mxu0
    %v731 = vadd.f32 0.0, %v730
    %732 = vmatmul.f32.gmra.mxu0 %v342
    %v733 = vpop.f32.mrf.mxu0
    %v734 = vadd.f32 0.0, %v733
    %735 = vmatmul.f32.gmra.mxu0 %v345
    %v736 = vpop.f32.mrf.mxu0
    %v737 = vadd.f32 0.0, %v736
    %738 = vdwg.mxu0
    %v739 = vadd.f32 %v512, %v731
    %v740 = vadd.f32 %v514, %v734
    %v741 = vadd.f32 %v517, %v737
    %v742 = vsel %vm573, %v739, 0.0
    %v743 = vsel %vm573, %v740, 0.0
    %v744 = vadd.f32 %v742, %v743
    %v745 = vsel %vm573, %v741, 0.0
    %v746 = vadd.f32 %v744, %v745
    %v747 = vrot.slane %v746, 4
    %v748 = vadd.f32 %v746, %v747
    %v749 = vrot.slane %v748, 2
    %v750 = vadd.f32 %v748, %v749
    %v751 = vrot.slane %v750, 1
    %v752 = vadd.f32 %v750, %v751
    %v753 = vadd.f32 %v697, %v752
    %v754 = vmul.f32 %v739, %v739
    %v755 = vmul.f32 %v740, %v740
    %v756 = vmul.f32 %v741, %v741
    %v757 = vsel %vm573, %v754, 0.0
    %v758 = vsel %vm573, %v755, 0.0
    %v759 = vadd.f32 %v757, %v758
    %v760 = vsel %vm573, %v756, 0.0
    %v761 = vadd.f32 %v759, %v760
    %v762 = vrot.slane %v761, 4
    %v763 = vadd.f32 %v761, %v762
    %v764 = vrot.slane %v763, 2
    %v765 = vadd.f32 %v763, %v764
    %v766 = vrot.slane %v765, 1
    %v767 = vadd.f32 %v765, %v766
    %v768 = vadd.f32 %v712, %v767
    %v769 = vmul.f32 %v753, 0.010416667
    %v770 = vmul.f32 %v768, 0.010416667
    %v771 = vmul.f32 %v769, %v769
    %v772 = vsub.f32 %v770, %v771
    %v773 = vmax.f32 %v772, 0.0
    %v774 = vadd.f32 %v773, 1e-05
    %v775 = vrsqrt.pop %v774
    %v776 = vmul.f32 %v775, %v774
    %v777 = vmul.f32 %v776, %v775
    %v778 = vmul.f32 0.5, %v777
    %v779 = vsub.f32 1.5, %v778
    %v780 = vmul.f32 %v775, %v779
    %vm781 = vweird.f32 %v774
    %vm782 = vweird.f32 %v775
    %vm783 = vmor %vm781, %vm782
    %v784 = vsel %vm783, %v775, %v780
    %v785 = vsub.f32 %v570, %v769
    %v786 = vsub.f32 %v571, %v769
    %v787 = vsub.f32 %v572, %v769
    %v788 = vmul.f32 %v785, %v784
    %v789 = vmul.f32 %v786, %v784
    %v790 = vmul.f32 %v787, %v784
    %vm791 = vcmp.ge.f32.partialorder %v788, 0.0
    %vm792 = vcmp.ge.f32.partialorder %v789, 0.0
    %vm793 = vcmp.ge.f32.partialorder %v790, 0.0
    %v794 = vmul.f32 %v788, 0.2
    %v795 = vmul.f32 %v789, 0.2
    %v796 = vmul.f32 %v790, 0.2
    %v797 = vsel %vm791, %v788, %v794
    %v798 = vsel %vm792, %v789, %v795
    %v799 = vsel %vm793, %v790, %v796
    %v800 = vsub.f32 %v627, %v769
    %v801 = vsub.f32 %v628, %v769
    %v802 = vsub.f32 %v629, %v769
    %v803 = vmul.f32 %v800, %v784
    %v804 = vmul.f32 %v801, %v784
    %v805 = vmul.f32 %v802, %v784
    %vm806 = vcmp.ge.f32.partialorder %v803, 0.0
    %vm807 = vcmp.ge.f32.partialorder %v804, 0.0
    %vm808 = vcmp.ge.f32.partialorder %v805, 0.0
    %v809 = vmul.f32 %v803, 0.2
    %v810 = vmul.f32 %v804, 0.2
    %v811 = vmul.f32 %v805, 0.2
    %v812 = vsel %vm806, %v803, %v809
    %v813 = vsel %vm807, %v804, %v810
    %v814 = vsel %vm808, %v805, %v811
    %v815 = vmax.f32 %v797, %v812
    %v816 = vmax.f32 %v798, %v813
    %v817 = vmax.f32 %v799, %v814
    %v818 = vsub.f32 %v683, %v769
    %v819 = vsub.f32 %v684, %v769
    %v820 = vsub.f32 %v685, %v769
    %v821 = vmul.f32 %v818, %v784
    %v822 = vmul.f32 %v819, %v784
    %v823 = vmul.f32 %v820, %v784
    %vm824 = vcmp.ge.f32.partialorder %v821, 0.0
    %vm825 = vcmp.ge.f32.partialorder %v822, 0.0
    %vm826 = vcmp.ge.f32.partialorder %v823, 0.0
    %v827 = vmul.f32 %v821, 0.2
    %v828 = vmul.f32 %v822, 0.2
    %v829 = vmul.f32 %v823, 0.2
    %v830 = vsel %vm824, %v821, %v827
    %v831 = vsel %vm825, %v822, %v828
    %v832 = vsel %vm826, %v823, %v829
    %v833 = vmax.f32 %v815, %v830
    %v834 = vmax.f32 %v816, %v831
    %v835 = vmax.f32 %v817, %v832
    %v836 = vsub.f32 %v739, %v769
    %v837 = vsub.f32 %v740, %v769
    %v838 = vsub.f32 %v741, %v769
    %v839 = vmul.f32 %v836, %v784
    %v840 = vmul.f32 %v837, %v784
    %v841 = vmul.f32 %v838, %v784
    %vm842 = vcmp.ge.f32.partialorder %v839, 0.0
    %vm843 = vcmp.ge.f32.partialorder %v840, 0.0
    %vm844 = vcmp.ge.f32.partialorder %v841, 0.0
    %v845 = vmul.f32 %v839, 0.2
    %v846 = vmul.f32 %v840, 0.2
    %v847 = vmul.f32 %v841, 0.2
    %v848 = vsel %vm842, %v839, %v845
    %v849 = vsel %vm843, %v840, %v846
    %v850 = vsel %vm844, %v841, %v847
    %v851 = vmax.f32 %v833, %v848
    %v852 = vmax.f32 %v834, %v849
    %v853 = vmax.f32 %v835, %v850
    %v854 = vld [vmem:[%s7] sm:$0xff]
    %v855 = vld [vmem:[%s7 + $0x8] sm:$0xff]
    %v856 = vld [vmem:[%s7 + $0x10] sm:$0xff]
    %v857 = vld [vmem:[%s7 + $0x18] sm:$0xff]
    %v858 = vpack.c.bf16 %v855, %v854
    %v859 = vpack.c.bf16 %v857, %v856
    %v860 = vld [vmem:[%s8] sm:$0xff]
    %v861 = vld [vmem:[%s8 + $0x8] sm:$0xff]
    %v862 = vld [vmem:[%s8 + $0x10] sm:$0xff]
    %v863 = vld [vmem:[%s8 + $0x18] sm:$0xff]
    %v864 = vpack.c.bf16 %v861, %v860
    %v865 = vpack.c.bf16 %v863, %v862
    %866 = vmatpush.bf16.msra.mxu0 0
    %867 = vmatpush.bf16.msra.mxu0 0
    %868 = vmatpush.bf16.msra.mxu0 0
    %869 = vmatpush.bf16.msra.mxu0 0
    %870 = vmatpush.bf16.msra.mxu0 0
    %871 = vmatpush.bf16.msra.mxu0 0
    %872 = vmatpush.bf16.msra.mxu0 %v865
    %873 = vmatpush.bf16.msra.mxu0 %v864
    %874 = vmatmul.bf16.gmra.mxu0 %v497
    %v875 = vpop.f32.mrf.mxu0
    %v876 = vadd.f32 0.0, %v875
    %v877 = vpop.f32.mrf.mxu0
    %v878 = vadd.f32 0.0, %v877
    %879 = vmatmul.bf16.gmra.mxu0 %v500
    %v880 = vpop.f32.mrf.mxu0
    %v881 = vadd.f32 0.0, %v880
    %v882 = vpop.f32.mrf.mxu0
    %883 = vdwg.mxu0
    %884 = vmatpush.bf16.msra.mxu0 0
    %885 = vmatpush.bf16.msra.mxu0 0
    %886 = vmatpush.bf16.msra.mxu0 0
    %887 = vmatpush.bf16.msra.mxu0 0
    %888 = vmatpush.bf16.msra.mxu0 0
    %889 = vmatpush.bf16.msra.mxu0 0
    %890 = vmatpush.bf16.msra.mxu0 %v859
    %891 = vmatpush.bf16.msra.mxu0 %v858
    %892 = vmatmul.bf16.gmra.mxu0 %v80
    %v893 = vpop.f32.mrf.mxu0
    %v894 = vadd.f32 %v876, %v893
    %v895 = vpop.f32.mrf.mxu0
    %v896 = vadd.f32 %v878, %v895
    %897 = vmatmul.bf16.gmra.mxu0 %v83
    %v898 = vpop.f32.mrf.mxu0
    %v899 = vadd.f32 %v881, %v898
    %v900 = vpop.f32.mrf.mxu0
    %901 = vdwg.mxu0
    %v902 = vld [vmem:[%s9] sm:$0xff]
    %v903 = vld [vmem:[%s9 + $0x8] sm:$0xff]
    %v904 = vld [vmem:[%s9 + $0x10] sm:$0xff]
    %v905 = vld [vmem:[%s9 + $0x18] sm:$0xff]
    %v906 = vld [vmem:[%s9 + $0x20] sm:$0xff]
    %v907 = vld [vmem:[%s9 + $0x28] sm:$0xff]
    %v908 = vld [vmem:[%s9 + $0x30] sm:$0xff]
    %v909 = vld [vmem:[%s9 + $0x38] sm:$0xff]
    %v910 = vpack.c.bf16 %v852, %v851
    %v911 = vpack.c.bf16 %v853, %v853
    %v912 = vpack.c.bf16 %v903, %v902
    %v913 = vpack.c.bf16 %v905, %v904
    %v914 = vpack.c.bf16 %v907, %v906
    %v915 = vpack.c.bf16 %v909, %v908
    %v917 = vsel %vm573, %v910, 0
    %v920 = vsel %vm573, %v911, 0
    %922 = vmatpush.bf16.msra.mxu0 0
    %923 = vmatpush.bf16.msra.mxu0 0
    %924 = vmatpush.bf16.msra.mxu0 0
    %925 = vmatpush.bf16.msra.mxu0 0
    %926 = vmatpush.bf16.msra.mxu0 %v915
    %927 = vmatpush.bf16.msra.mxu0 %v914
    %928 = vmatpush.bf16.msra.mxu0 %v913
    %929 = vmatpush.bf16.msra.mxu0 %v912
    %930 = vmatmul.bf16.gmra.mxu0 %v917
    %v931 = vpop.f32.mrf.mxu0
    %v932 = vadd.f32 0.0, %v931
    %v933 = vpop.f32.mrf.mxu0
    %v934 = vadd.f32 0.0, %v933
    %935 = vmatmul.bf16.gmra.mxu0 %v920
    %v936 = vpop.f32.mrf.mxu0
    %v937 = vadd.f32 0.0, %v936
    %v938 = vpop.f32.mrf.mxu0
    %939 = vdwg.mxu0
    %v940 = vadd.f32 %v894, %v932
    %v941 = vadd.f32 %v896, %v934
    %v942 = vadd.f32 %v899, %v937
    %v943 = vsel %vm78, %v940, 0.0
    %v944 = vsel %vm78, %v941, 0.0
    %v945 = vadd.f32 %v943, %v944
    %v946 = vsel %vm78, %v942, 0.0
    %v947 = vadd.f32 %v945, %v946
    %v948 = vrot.slane %v947, 4
    %v949 = vadd.f32 %v947, %v948
    %v950 = vrot.slane %v949, 2
    %v951 = vadd.f32 %v949, %v950
    %v952 = vrot.slane %v951, 1
    %v953 = vadd.f32 %v951, %v952
    %v954 = vrcp.pop 24.0
    %v955 = vmul.f32 24.0, %v954
    %v956 = vsub.f32 1.0, %v955
    %v957 = vmul.f32 %v954, %v956
    %v958 = vadd.f32 %v954, %v957
    %vm959 = vweird.f32 %v954
    %v960 = vsel %vm959, %v954, %v958
    %v961 = vmul.f32 %v953, %v960
    %v962 = vmul.f32 %v940, %v940
    %v963 = vmul.f32 %v941, %v941
    %v964 = vmul.f32 %v942, %v942
    %v965 = vsel %vm78, %v962, 0.0
    %v966 = vsel %vm78, %v963, 0.0
    %v967 = vadd.f32 %v965, %v966
    %v968 = vsel %vm78, %v964, 0.0
    %v969 = vadd.f32 %v967, %v968
    %v970 = vrot.slane %v969, 4
    %v971 = vadd.f32 %v969, %v970
    %v972 = vrot.slane %v971, 2
    %v973 = vadd.f32 %v971, %v972
    %v974 = vrot.slane %v973, 1
    %v975 = vadd.f32 %v973, %v974
    %v976 = vmul.f32 %v975, %v960
    %v977 = vmul.f32 %v961, %v961
    %v978 = vsub.f32 %v976, %v977
    %v979 = vmax.f32 %v978, 0.0
    %v980 = vsub.f32 %v940, %v961
    %v981 = vsub.f32 %v941, %v961
    %v982 = vsub.f32 %v942, %v961
    %v983 = vadd.f32 %v979, 1e-05
    %v984 = vrsqrt.pop %v983
    %v985 = vmul.f32 %v984, %v983
    %v986 = vmul.f32 %v985, %v984
    %v987 = vmul.f32 0.5, %v986
    %v988 = vsub.f32 1.5, %v987
    %v989 = vmul.f32 %v984, %v988
    %vm990 = vweird.f32 %v983
    %vm991 = vweird.f32 %v984
    %vm992 = vmor %vm990, %vm991
    %v993 = vsel %vm992, %v984, %v989
    %v994 = vmul.f32 %v980, %v993
    %v995 = vmul.f32 %v981, %v993
    %v996 = vmul.f32 %v982, %v993
    %vm997 = vcmp.ge.f32.partialorder %v994, 0.0
    %vm998 = vcmp.ge.f32.partialorder %v995, 0.0
    %vm999 = vcmp.ge.f32.partialorder %v996, 0.0
    %v1000 = vmul.f32 %v994, 0.2
    %v1001 = vmul.f32 %v995, 0.2
    %v1002 = vmul.f32 %v996, 0.2
    %v1003 = vsel %vm997, %v994, %v1000
    %v1004 = vsel %vm998, %v995, %v1001
    %v1005 = vsel %vm999, %v996, %v1002
    %v1006 = vld [vmem:[%s10] sm:$0xff]
    %v1007 = vld [vmem:[%s10 + $0x8] sm:$0xff]
    %v1008 = vld [vmem:[%s10 + $0x10] sm:$0xff]
    %v1009 = vld [vmem:[%s10 + $0x18] sm:$0xff]
    %v1010 = vpack.c.bf16 %v1004, %v1003
    %v1011 = vpack.c.bf16 %v1005, %v1005
    %v1012 = vpack.c.bf16 %v1007, %v1006
    %v1013 = vpack.c.bf16 %v1009, %v1008
    %v1014 = vld [vmem:[%s11] sm:$0x1]
    %v1016 = vperm.slane %v1014, 0
    %v1019 = vsel %vm78, %v1010, 0
    %v1022 = vsel %vm78, %v1011, 0
    %1024 = vmatpush.bf16.msra.mxu0 0
    %1025 = vmatpush.bf16.msra.mxu0 0
    %1026 = vmatpush.bf16.msra.mxu0 0
    %1027 = vmatpush.bf16.msra.mxu0 0
    %1028 = vmatpush.bf16.msra.mxu0 0
    %1029 = vmatpush.bf16.msra.mxu0 0
    %1030 = vmatpush.bf16.msra.mxu0 %v1013
    %1031 = vmatpush.bf16.msra.mxu0 %v1012
    %1032 = vmatmul.bf16.gmra.mxu0 %v1019
    %v1033 = vpop.f32.mrf.mxu0
    %v1034 = vadd.f32 %v1016, %v1033
    %v1035 = vpop.f32.mrf.mxu0
    %v1036 = vadd.f32 %v1016, %v1035
    %1037 = vmatmul.bf16.gmra.mxu0 %v1022
    %v1038 = vpop.f32.mrf.mxu0
    %v1039 = vadd.f32 %v1016, %v1038
    %v1040 = vpop.f32.mrf.mxu0
    %1041 = vdwg.mxu0
    %v1042 = vld [vmem:[%s12] sm:$0xff]
    %v1043 = vld [vmem:[%s12 + $0x8] sm:$0xff]
    %v1044 = vld [vmem:[%s12 + $0x10] sm:$0xff]
    %v1045 = vld [vmem:[%s12 + $0x18] sm:$0xff]
    %v1046 = vpack.c.bf16 %v1043, %v1042
    %v1047 = vpack.c.bf16 %v1045, %v1044
    %v1048 = vld [vmem:[%s13] sm:$0x1]
    %v1050 = vperm.slane %v1048, 0
    %1052 = vmatpush.bf16.msra.mxu0 0
    %1053 = vmatpush.bf16.msra.mxu0 0
    %1054 = vmatpush.bf16.msra.mxu0 0
    %1055 = vmatpush.bf16.msra.mxu0 0
    %1056 = vmatpush.bf16.msra.mxu0 0
    %1057 = vmatpush.bf16.msra.mxu0 0
    %1058 = vmatpush.bf16.msra.mxu0 %v1047
    %1059 = vmatpush.bf16.msra.mxu0 %v1046
    %1060 = vmatmul.bf16.gmra.mxu0 %v1019
    %v1061 = vpop.f32.mrf.mxu0
    %v1062 = vadd.f32 %v1050, %v1061
    %v1063 = vpop.f32.mrf.mxu0
    %v1064 = vadd.f32 %v1050, %v1063
    %1065 = vmatmul.bf16.gmra.mxu0 %v1022
    %v1066 = vpop.f32.mrf.mxu0
    %v1067 = vadd.f32 %v1050, %v1066
    %v1068 = vpop.f32.mrf.mxu0
    %1069 = vdwg.mxu0
    %v1070 = vld [vmem:[%s14] sm:$0xff]
    %v1071 = vld [vmem:[%s14 + $0x8] sm:$0xff]
    %v1072 = vld [vmem:[%s14 + $0x10] sm:$0xff]
    %v1073 = vld [vmem:[%s14 + $0x18] sm:$0xff]
    %v1074 = vpack.c.bf16 %v1071, %v1070
    %v1075 = vpack.c.bf16 %v1073, %v1072
    %v1076 = vld [vmem:[%s15] sm:$0x1]
    %v1078 = vperm.slane %v1076, 0
    %1080 = vmatpush.bf16.msra.mxu0 0
    %1081 = vmatpush.bf16.msra.mxu0 0
    %1082 = vmatpush.bf16.msra.mxu0 0
    %1083 = vmatpush.bf16.msra.mxu0 0
    %1084 = vmatpush.bf16.msra.mxu0 0
    %1085 = vmatpush.bf16.msra.mxu0 0
    %1086 = vmatpush.bf16.msra.mxu0 %v1075
    %1087 = vmatpush.bf16.msra.mxu0 %v1074
    %1088 = vmatmul.bf16.gmra.mxu0 %v1019
    %v1089 = vpop.f32.mrf.mxu0
    %v1090 = vadd.f32 %v1078, %v1089
    %v1091 = vpop.f32.mrf.mxu0
    %v1092 = vadd.f32 %v1078, %v1091
    %1093 = vmatmul.bf16.gmra.mxu0 %v1022
    %v1094 = vpop.f32.mrf.mxu0
    %v1095 = vadd.f32 %v1078, %v1094
    %v1096 = vpop.f32.mrf.mxu0
    %1097 = vdwg.mxu0
    %v1098 = vld [vmem:[%s2] sm:$0xff]
    %v1099 = vld [vmem:[%s2 + $0x8] sm:$0xff]
    %v1100 = vld [vmem:[%s2 + $0x10] sm:$0xff]
    %v1101 = vld [vmem:[%s2 + $0x18] sm:$0xff]
    %v1102 = vld [vmem:[%s2 + $0x20] sm:$0xff]
    %v1103 = vld [vmem:[%s2 + $0x28] sm:$0xff]
    %v1104 = vld [vmem:[%s2 + $0x30] sm:$0xff]
    %v1105 = vld [vmem:[%s2 + $0x38] sm:$0xff]
    %v1106 = vld [vmem:[%s2 + $0x40] sm:$0xff]
    %v1107 = vld [vmem:[%s2 + $0x48] sm:$0xff]
    %v1108 = vld [vmem:[%s2 + $0x50] sm:$0xff]
    %v1109 = vld [vmem:[%s2 + $0x58] sm:$0xff]
    %v1110 = vld [vmem:[%s2 + $0x60] sm:$0xff]
    %v1111 = vld [vmem:[%s2 + $0x68] sm:$0xff]
    %v1112 = vld [vmem:[%s2 + $0x70] sm:$0xff]
    %v1113 = vld [vmem:[%s2 + $0x78] sm:$0xff]
    %v1114 = vld [vmem:[%s2 + $0x80] sm:$0xff]
    %v1115 = vld [vmem:[%s2 + $0x88] sm:$0xff]
    %v1116 = vld [vmem:[%s2 + $0x90] sm:$0xff]
    %v1117 = vld [vmem:[%s2 + $0x98] sm:$0xff]
    %v1118 = vld [vmem:[%s2 + $0xa0] sm:$0xff]
    %v1119 = vld [vmem:[%s2 + $0xa8] sm:$0xff]
    %v1120 = vld [vmem:[%s2 + $0xb0] sm:$0xff]
    %v1121 = vld [vmem:[%s2 + $0xb8] sm:$0xff]
    %v1122 = vld [vmem:[%s2 + $0xc0] sm:$0xff]
    %v1123 = vld [vmem:[%s2 + $0xc8] sm:$0xff]
    %v1124 = vld [vmem:[%s2 + $0xd0] sm:$0xff]
    %v1125 = vld [vmem:[%s2 + $0xd8] sm:$0xff]
    %v1126 = vld [vmem:[%s2 + $0xe0] sm:$0xff]
    %v1127 = vld [vmem:[%s2 + $0xe8] sm:$0xff]
    %v1128 = vld [vmem:[%s2 + $0xf0] sm:$0xff]
    %v1129 = vld [vmem:[%s2 + $0xf8] sm:$0xff]
    %v1130 = vld [vmem:[%s2 + $0x100] sm:$0xff]
    %v1131 = vld [vmem:[%s2 + $0x108] sm:$0xff]
    %v1132 = vld [vmem:[%s2 + $0x110] sm:$0xff]
    %v1133 = vld [vmem:[%s2 + $0x118] sm:$0xff]
    %v1134 = vld [vmem:[%s2 + $0x120] sm:$0xff]
    %v1135 = vld [vmem:[%s2 + $0x128] sm:$0xff]
    %v1136 = vld [vmem:[%s2 + $0x130] sm:$0xff]
    %v1137 = vld [vmem:[%s2 + $0x138] sm:$0xff]
    %v1138 = vld [vmem:[%s2 + $0x140] sm:$0xff]
    %v1139 = vld [vmem:[%s2 + $0x148] sm:$0xff]
    %v1140 = vld [vmem:[%s2 + $0x150] sm:$0xff]
    %v1141 = vld [vmem:[%s2 + $0x158] sm:$0xff]
    %v1142 = vld [vmem:[%s2 + $0x160] sm:$0xff]
    %v1143 = vld [vmem:[%s2 + $0x168] sm:$0xff]
    %v1144 = vld [vmem:[%s2 + $0x170] sm:$0xff]
    %v1145 = vld [vmem:[%s2 + $0x178] sm:$0xff]
    %v1146 = vld [vmem:[%s2 + $0x180] sm:$0xff]
    %v1147 = vld [vmem:[%s2 + $0x188] sm:$0xff]
    %v1148 = vld [vmem:[%s2 + $0x190] sm:$0xff]
    %v1149 = vld [vmem:[%s2 + $0x198] sm:$0xff]
    %v1150 = vld [vmem:[%s2 + $0x1a0] sm:$0xff]
    %v1151 = vld [vmem:[%s2 + $0x1a8] sm:$0xff]
    %v1152 = vld [vmem:[%s2 + $0x1b0] sm:$0xff]
    %v1153 = vld [vmem:[%s2 + $0x1b8] sm:$0xff]
    %v1154 = vld [vmem:[%s2 + $0x1c0] sm:$0xff]
    %v1155 = vld [vmem:[%s2 + $0x1c8] sm:$0xff]
    %v1156 = vld [vmem:[%s2 + $0x1d0] sm:$0xff]
    %v1157 = vld [vmem:[%s2 + $0x1d8] sm:$0xff]
    %v1158 = vld [vmem:[%s2 + $0x1e0] sm:$0xff]
    %v1159 = vld [vmem:[%s2 + $0x1e8] sm:$0xff]
    %v1160 = vld [vmem:[%s2 + $0x1f0] sm:$0xff]
    %v1161 = vld [vmem:[%s2 + $0x1f8] sm:$0xff]
    %v1162 = vld [vmem:[%s2 + $0x200] sm:$0xff]
    %v1163 = vld [vmem:[%s2 + $0x208] sm:$0xff]
    %v1164 = vld [vmem:[%s2 + $0x210] sm:$0xff]
    %v1165 = vld [vmem:[%s2 + $0x218] sm:$0xff]
    %v1166 = vld [vmem:[%s2 + $0x220] sm:$0xff]
    %v1167 = vld [vmem:[%s2 + $0x228] sm:$0xff]
    %v1168 = vld [vmem:[%s2 + $0x230] sm:$0xff]
    %v1169 = vld [vmem:[%s2 + $0x238] sm:$0xff]
    %v1173 = vrot.slane %v1034, 1
    %v1174 = vrot.slane %v1034, 2
    %v1175 = vrot.slane %v1034, 3
    %v1176 = vrot.slane %v1034, 4
    %v1177 = vrot.slane %v1034, 5
    %v1178 = vrot.slane %v1034, 6
    %v1179 = vrot.slane %v1034, 7
    %v1180 = vrot.slane %v1036, 1
    %v1181 = vrot.slane %v1036, 2
    %v1182 = vrot.slane %v1036, 3
    %v1183 = vrot.slane %v1036, 4
    %v1184 = vrot.slane %v1036, 5
    %v1185 = vrot.slane %v1036, 6
    %v1186 = vrot.slane %v1036, 7
    %v1187 = vrot.slane %v1039, 1
    %v1188 = vrot.slane %v1039, 2
    %v1189 = vrot.slane %v1039, 3
    %v1190 = vrot.slane %v1039, 4
    %v1191 = vrot.slane %v1039, 5
    %v1192 = vrot.slane %v1039, 6
    %v1193 = vrot.slane %v1039, 7
    %v1194 = vperm.slane %v1034, 0
    %v1195 = vperm.slane %v1173, 0
    %v1196 = vperm.slane %v1174, 0
    %v1197 = vperm.slane %v1175, 0
    %v1198 = vperm.slane %v1176, 0
    %v1199 = vperm.slane %v1177, 0
    %v1200 = vperm.slane %v1178, 0
    %v1201 = vperm.slane %v1179, 0
    %v1202 = vperm.slane %v1036, 0
    %v1203 = vperm.slane %v1180, 0
    %v1204 = vperm.slane %v1181, 0
    %v1205 = vperm.slane %v1182, 0
    %v1206 = vperm.slane %v1183, 0
    %v1207 = vperm.slane %v1184, 0
    %v1208 = vperm.slane %v1185, 0
    %v1209 = vperm.slane %v1186, 0
    %v1210 = vperm.slane %v1039, 0
    %v1211 = vperm.slane %v1187, 0
    %v1212 = vperm.slane %v1188, 0
    %v1213 = vperm.slane %v1189, 0
    %v1214 = vperm.slane %v1190, 0
    %v1215 = vperm.slane %v1191, 0
    %v1216 = vperm.slane %v1192, 0
    %v1217 = vperm.slane %v1193, 0
    %v1242 = vmul.f32 %v1194, %v1098
    %v1243 = vmul.f32 %v1194, %v1099
    %v1244 = vmul.f32 %v1194, %v1100
    %v1245 = vmul.f32 %v1195, %v1101
    %v1246 = vmul.f32 %v1195, %v1102
    %v1247 = vmul.f32 %v1195, %v1103
    %v1248 = vmul.f32 %v1196, %v1104
    %v1249 = vmul.f32 %v1196, %v1105
    %v1250 = vmul.f32 %v1196, %v1106
    %v1251 = vmul.f32 %v1197, %v1107
    %v1252 = vmul.f32 %v1197, %v1108
    %v1253 = vmul.f32 %v1197, %v1109
    %v1254 = vmul.f32 %v1198, %v1110
    %v1255 = vmul.f32 %v1198, %v1111
    %v1256 = vmul.f32 %v1198, %v1112
    %v1257 = vmul.f32 %v1199, %v1113
    %v1258 = vmul.f32 %v1199, %v1114
    %v1259 = vmul.f32 %v1199, %v1115
    %v1260 = vmul.f32 %v1200, %v1116
    %v1261 = vmul.f32 %v1200, %v1117
    %v1262 = vmul.f32 %v1200, %v1118
    %v1263 = vmul.f32 %v1201, %v1119
    %v1264 = vmul.f32 %v1201, %v1120
    %v1265 = vmul.f32 %v1201, %v1121
    %v1266 = vmul.f32 %v1202, %v1122
    %v1267 = vmul.f32 %v1202, %v1123
    %v1268 = vmul.f32 %v1202, %v1124
    %v1269 = vmul.f32 %v1203, %v1125
    %v1270 = vmul.f32 %v1203, %v1126
    %v1271 = vmul.f32 %v1203, %v1127
    %v1272 = vmul.f32 %v1204, %v1128
    %v1273 = vmul.f32 %v1204, %v1129
    %v1274 = vmul.f32 %v1204, %v1130
    %v1275 = vmul.f32 %v1205, %v1131
    %v1276 = vmul.f32 %v1205, %v1132
    %v1277 = vmul.f32 %v1205, %v1133
    %v1278 = vmul.f32 %v1206, %v1134
    %v1279 = vmul.f32 %v1206, %v1135
    %v1280 = vmul.f32 %v1206, %v1136
    %v1281 = vmul.f32 %v1207, %v1137
    %v1282 = vmul.f32 %v1207, %v1138
    %v1283 = vmul.f32 %v1207, %v1139
    %v1284 = vmul.f32 %v1208, %v1140
    %v1285 = vmul.f32 %v1208, %v1141
    %v1286 = vmul.f32 %v1208, %v1142
    %v1287 = vmul.f32 %v1209, %v1143
    %v1288 = vmul.f32 %v1209, %v1144
    %v1289 = vmul.f32 %v1209, %v1145
    %v1290 = vmul.f32 %v1210, %v1146
    %v1291 = vmul.f32 %v1210, %v1147
    %v1292 = vmul.f32 %v1210, %v1148
    %v1293 = vmul.f32 %v1211, %v1149
    %v1294 = vmul.f32 %v1211, %v1150
    %v1295 = vmul.f32 %v1211, %v1151
    %v1296 = vmul.f32 %v1212, %v1152
    %v1297 = vmul.f32 %v1212, %v1153
    %v1298 = vmul.f32 %v1212, %v1154
    %v1299 = vmul.f32 %v1213, %v1155
    %v1300 = vmul.f32 %v1213, %v1156
    %v1301 = vmul.f32 %v1213, %v1157
    %v1302 = vmul.f32 %v1214, %v1158
    %v1303 = vmul.f32 %v1214, %v1159
    %v1304 = vmul.f32 %v1214, %v1160
    %v1305 = vmul.f32 %v1215, %v1161
    %v1306 = vmul.f32 %v1215, %v1162
    %v1307 = vmul.f32 %v1215, %v1163
    %v1308 = vmul.f32 %v1216, %v1164
    %v1309 = vmul.f32 %v1216, %v1165
    %v1310 = vmul.f32 %v1216, %v1166
    %v1311 = vmul.f32 %v1217, %v1167
    %v1312 = vmul.f32 %v1217, %v1168
    %v1313 = vmul.f32 %v1217, %v1169
    %v1314 = vld [vmem:[%s16] sm:$0xff]
    %v1315 = vld [vmem:[%s16 + $0x8] sm:$0xff]
    %v1316 = vld [vmem:[%s16 + $0x10] sm:$0xff]
    %v1317 = vld [vmem:[%s16 + $0x18] sm:$0xff]
    %v1318 = vpack.c.bf16 %v1036, %v1034
    %v1319 = vpack.c.bf16 %v1039, %v1039
    %v1320 = vpack.c.bf16 %v1064, %v1062
    %v1321 = vpack.c.bf16 %v1067, %v1067
    %vm1322 = vcmask 64512
    %v1323 = vsel %vm1322, %v1242, 0.0
    %1324 = vadd.xlane.f32.xlu0 %v1323
    %v1325 = vpop.xlane.xlu0 %1324
    %v1326 = vsel %vm1322, %v1243, 0.0
    %1327 = vadd.xlane.f32.xlu0 %v1326
    %v1328 = vpop.xlane.xlu0 %1327
    %v1329 = vsel %vm1322, %v1244, 0.0
    %1330 = vadd.xlane.f32.xlu0 %v1329
    %v1331 = vpop.xlane.xlu0 %1330
    %v1332 = vsel %vm1322, %v1245, 0.0
    %1333 = vadd.xlane.f32.xlu0 %v1332
    %v1334 = vpop.xlane.xlu0 %1333
    %v1335 = vsel %vm1322, %v1246, 0.0
    %1336 = vadd.xlane.f32.xlu0 %v1335
    %v1337 = vpop.xlane.xlu0 %1336
    %v1338 = vsel %vm1322, %v1247, 0.0
    %1339 = vadd.xlane.f32.xlu0 %v1338
    %v1340 = vpop.xlane.xlu0 %1339
    %v1341 = vsel %vm1322, %v1248, 0.0
    %1342 = vadd.xlane.f32.xlu0 %v1341
    %v1343 = vpop.xlane.xlu0 %1342
    %v1344 = vsel %vm1322, %v1249, 0.0
    %1345 = vadd.xlane.f32.xlu0 %v1344
    %v1346 = vpop.xlane.xlu0 %1345
    %v1347 = vsel %vm1322, %v1250, 0.0
    %1348 = vadd.xlane.f32.xlu0 %v1347
    %v1349 = vpop.xlane.xlu0 %1348
    %v1350 = vsel %vm1322, %v1251, 0.0
    %1351 = vadd.xlane.f32.xlu0 %v1350
    %v1352 = vpop.xlane.xlu0 %1351
    %v1353 = vsel %vm1322, %v1252, 0.0
    %1354 = vadd.xlane.f32.xlu0 %v1353
    %v1355 = vpop.xlane.xlu0 %1354
    %v1356 = vsel %vm1322, %v1253, 0.0
    %1357 = vadd.xlane.f32.xlu0 %v1356
    %v1358 = vpop.xlane.xlu0 %1357
    %v1359 = vsel %vm1322, %v1254, 0.0
    %1360 = vadd.xlane.f32.xlu0 %v1359
    %v1361 = vpop.xlane.xlu0 %1360
    %v1362 = vsel %vm1322, %v1255, 0.0
    %1363 = vadd.xlane.f32.xlu0 %v1362
    %v1364 = vpop.xlane.xlu0 %1363
    %v1365 = vsel %vm1322, %v1256, 0.0
    %1366 = vadd.xlane.f32.xlu0 %v1365
    %v1367 = vpop.xlane.xlu0 %1366
    %v1368 = vsel %vm1322, %v1257, 0.0
    %1369 = vadd.xlane.f32.xlu0 %v1368
    %v1370 = vpop.xlane.xlu0 %1369
    %v1371 = vsel %vm1322, %v1258, 0.0
    %1372 = vadd.xlane.f32.xlu0 %v1371
    %v1373 = vpop.xlane.xlu0 %1372
    %v1374 = vsel %vm1322, %v1259, 0.0
    %1375 = vadd.xlane.f32.xlu0 %v1374
    %v1376 = vpop.xlane.xlu0 %1375
    %v1377 = vsel %vm1322, %v1260, 0.0
    %1378 = vadd.xlane.f32.xlu0 %v1377
    %v1379 = vpop.xlane.xlu0 %1378
    %v1380 = vsel %vm1322, %v1261, 0.0
    %1381 = vadd.xlane.f32.xlu0 %v1380
    %v1382 = vpop.xlane.xlu0 %1381
    %v1383 = vsel %vm1322, %v1262, 0.0
    %1384 = vadd.xlane.f32.xlu0 %v1383
    %v1385 = vpop.xlane.xlu0 %1384
    %v1386 = vsel %vm1322, %v1263, 0.0
    %1387 = vadd.xlane.f32.xlu0 %v1386
    %v1388 = vpop.xlane.xlu0 %1387
    %v1389 = vsel %vm1322, %v1264, 0.0
    %1390 = vadd.xlane.f32.xlu0 %v1389
    %v1391 = vpop.xlane.xlu0 %1390
    %v1392 = vsel %vm1322, %v1265, 0.0
    %1393 = vadd.xlane.f32.xlu0 %v1392
    %v1394 = vpop.xlane.xlu0 %1393
    %v1395 = vsel %vm1322, %v1266, 0.0
    %1396 = vadd.xlane.f32.xlu0 %v1395
    %v1397 = vpop.xlane.xlu0 %1396
    %v1398 = vsel %vm1322, %v1267, 0.0
    %1399 = vadd.xlane.f32.xlu0 %v1398
    %v1400 = vpop.xlane.xlu0 %1399
    %v1401 = vsel %vm1322, %v1268, 0.0
    %1402 = vadd.xlane.f32.xlu0 %v1401
    %v1403 = vpop.xlane.xlu0 %1402
    %v1404 = vsel %vm1322, %v1269, 0.0
    %1405 = vadd.xlane.f32.xlu0 %v1404
    %v1406 = vpop.xlane.xlu0 %1405
    %v1407 = vsel %vm1322, %v1270, 0.0
    %1408 = vadd.xlane.f32.xlu0 %v1407
    %v1409 = vpop.xlane.xlu0 %1408
    %v1410 = vsel %vm1322, %v1271, 0.0
    %1411 = vadd.xlane.f32.xlu0 %v1410
    %v1412 = vpop.xlane.xlu0 %1411
    %v1413 = vsel %vm1322, %v1272, 0.0
    %1414 = vadd.xlane.f32.xlu0 %v1413
    %v1415 = vpop.xlane.xlu0 %1414
    %v1416 = vsel %vm1322, %v1273, 0.0
    %1417 = vadd.xlane.f32.xlu0 %v1416
    %v1418 = vpop.xlane.xlu0 %1417
    %v1419 = vsel %vm1322, %v1274, 0.0
    %1420 = vadd.xlane.f32.xlu0 %v1419
    %v1421 = vpop.xlane.xlu0 %1420
    %v1422 = vsel %vm1322, %v1275, 0.0
    %1423 = vadd.xlane.f32.xlu0 %v1422
    %v1424 = vpop.xlane.xlu0 %1423
    %v1425 = vsel %vm1322, %v1276, 0.0
    %1426 = vadd.xlane.f32.xlu0 %v1425
    %v1427 = vpop.xlane.xlu0 %1426
    %v1428 = vsel %vm1322, %v1277, 0.0
    %1429 = vadd.xlane.f32.xlu0 %v1428
    %v1430 = vpop.xlane.xlu0 %1429
    %v1431 = vsel %vm1322, %v1278, 0.0
    %1432 = vadd.xlane.f32.xlu0 %v1431
    %v1433 = vpop.xlane.xlu0 %1432
    %v1434 = vsel %vm1322, %v1279, 0.0
    %1435 = vadd.xlane.f32.xlu0 %v1434
    %v1436 = vpop.xlane.xlu0 %1435
    %v1437 = vsel %vm1322, %v1280, 0.0
    %1438 = vadd.xlane.f32.xlu0 %v1437
    %v1439 = vpop.xlane.xlu0 %1438
    %v1440 = vsel %vm1322, %v1281, 0.0
    %1441 = vadd.xlane.f32.xlu0 %v1440
    %v1442 = vpop.xlane.xlu0 %1441
    %v1443 = vsel %vm1322, %v1282, 0.0
    %1444 = vadd.xlane.f32.xlu0 %v1443
    %v1445 = vpop.xlane.xlu0 %1444
    %v1446 = vsel %vm1322, %v1283, 0.0
    %1447 = vadd.xlane.f32.xlu0 %v1446
    %v1448 = vpop.xlane.xlu0 %1447
    %v1449 = vsel %vm1322, %v1284, 0.0
    %1450 = vadd.xlane.f32.xlu0 %v1449
    %v1451 = vpop.xlane.xlu0 %1450
    %v1452 = vsel %vm1322, %v1285, 0.0
    %1453 = vadd.xlane.f32.xlu0 %v1452
    %v1454 = vpop.xlane.xlu0 %1453
    %v1455 = vsel %vm1322, %v1286, 0.0
    %1456 = vadd.xlane.f32.xlu0 %v1455
    %v1457 = vpop.xlane.xlu0 %1456
    %v1458 = vsel %vm1322, %v1287, 0.0
    %1459 = vadd.xlane.f32.xlu0 %v1458
    %v1460 = vpop.xlane.xlu0 %1459
    %v1461 = vsel %vm1322, %v1288, 0.0
    %1462 = vadd.xlane.f32.xlu0 %v1461
    %v1463 = vpop.xlane.xlu0 %1462
    %v1464 = vsel %vm1322, %v1289, 0.0
    %1465 = vadd.xlane.f32.xlu0 %v1464
    %v1466 = vpop.xlane.xlu0 %1465
    %v1467 = vsel %vm1322, %v1290, 0.0
    %1468 = vadd.xlane.f32.xlu0 %v1467
    %v1469 = vpop.xlane.xlu0 %1468
    %v1470 = vsel %vm1322, %v1291, 0.0
    %1471 = vadd.xlane.f32.xlu0 %v1470
    %v1472 = vpop.xlane.xlu0 %1471
    %v1473 = vsel %vm1322, %v1292, 0.0
    %1474 = vadd.xlane.f32.xlu0 %v1473
    %v1475 = vpop.xlane.xlu0 %1474
    %v1476 = vsel %vm1322, %v1293, 0.0
    %1477 = vadd.xlane.f32.xlu0 %v1476
    %v1478 = vpop.xlane.xlu0 %1477
    %v1479 = vsel %vm1322, %v1294, 0.0
    %1480 = vadd.xlane.f32.xlu0 %v1479
    %v1481 = vpop.xlane.xlu0 %1480
    %v1482 = vsel %vm1322, %v1295, 0.0
    %1483 = vadd.xlane.f32.xlu0 %v1482
    %v1484 = vpop.xlane.xlu0 %1483
    %v1485 = vsel %vm1322, %v1296, 0.0
    %1486 = vadd.xlane.f32.xlu0 %v1485
    %v1487 = vpop.xlane.xlu0 %1486
    %v1488 = vsel %vm1322, %v1297, 0.0
    %1489 = vadd.xlane.f32.xlu0 %v1488
    %v1490 = vpop.xlane.xlu0 %1489
    %v1491 = vsel %vm1322, %v1298, 0.0
    %1492 = vadd.xlane.f32.xlu0 %v1491
    %v1493 = vpop.xlane.xlu0 %1492
    %v1494 = vsel %vm1322, %v1299, 0.0
    %1495 = vadd.xlane.f32.xlu0 %v1494
    %v1496 = vpop.xlane.xlu0 %1495
    %v1497 = vsel %vm1322, %v1300, 0.0
    %1498 = vadd.xlane.f32.xlu0 %v1497
    %v1499 = vpop.xlane.xlu0 %1498
    %v1500 = vsel %vm1322, %v1301, 0.0
    %1501 = vadd.xlane.f32.xlu0 %v1500
    %v1502 = vpop.xlane.xlu0 %1501
    %v1503 = vsel %vm1322, %v1302, 0.0
    %1504 = vadd.xlane.f32.xlu0 %v1503
    %v1505 = vpop.xlane.xlu0 %1504
    %v1506 = vsel %vm1322, %v1303, 0.0
    %1507 = vadd.xlane.f32.xlu0 %v1506
    %v1508 = vpop.xlane.xlu0 %1507
    %v1509 = vsel %vm1322, %v1304, 0.0
    %1510 = vadd.xlane.f32.xlu0 %v1509
    %v1511 = vpop.xlane.xlu0 %1510
    %v1512 = vsel %vm1322, %v1305, 0.0
    %1513 = vadd.xlane.f32.xlu0 %v1512
    %v1514 = vpop.xlane.xlu0 %1513
    %v1515 = vsel %vm1322, %v1306, 0.0
    %1516 = vadd.xlane.f32.xlu0 %v1515
    %v1517 = vpop.xlane.xlu0 %1516
    %v1518 = vsel %vm1322, %v1307, 0.0
    %1519 = vadd.xlane.f32.xlu0 %v1518
    %v1520 = vpop.xlane.xlu0 %1519
    %v1521 = vsel %vm1322, %v1308, 0.0
    %1522 = vadd.xlane.f32.xlu0 %v1521
    %v1523 = vpop.xlane.xlu0 %1522
    %v1524 = vsel %vm1322, %v1309, 0.0
    %1525 = vadd.xlane.f32.xlu0 %v1524
    %v1526 = vpop.xlane.xlu0 %1525
    %v1527 = vsel %vm1322, %v1310, 0.0
    %1528 = vadd.xlane.f32.xlu0 %v1527
    %v1529 = vpop.xlane.xlu0 %1528
    %v1530 = vsel %vm1322, %v1311, 0.0
    %1531 = vadd.xlane.f32.xlu0 %v1530
    %v1532 = vpop.xlane.xlu0 %1531
    %v1533 = vsel %vm1322, %v1312, 0.0
    %1534 = vadd.xlane.f32.xlu0 %v1533
    %v1535 = vpop.xlane.xlu0 %1534
    %v1536 = vsel %vm1322, %v1313, 0.0
    %1537 = vadd.xlane.f32.xlu0 %v1536
    %v1538 = vpop.xlane.xlu0 %1537
    %v1611 = vlaneseq
    %v1612 = vand.u32 %v1611, 127
    %v1613 = vperm.slane %v1325, %v1612
    %v1614 = vadd.s32 %v1612, 4294967288
    %v1615 = vperm.slane %v1328, %v1614
    %vm1616 = vcmask 130112
    %v1617 = vsel %vm1616, %v1615, %v1613
    %v1618 = vadd.s32 %v1612, 4294967280
    %v1619 = vperm.slane %v1331, %v1618
    %vm1620 = vcmask 195712
    %v1621 = vsel %vm1620, %v1619, %v1617
    %v1622 = vperm.slane %v1334, %v1612
    %v1623 = vperm.slane %v1337, %v1614
    %v1624 = vsel %vm1616, %v1623, %v1622
    %v1625 = vperm.slane %v1340, %v1618
    %v1626 = vsel %vm1620, %v1625, %v1624
    %v1627 = vperm.slane %v1343, %v1612
    %v1628 = vperm.slane %v1346, %v1614
    %v1629 = vsel %vm1616, %v1628, %v1627
    %v1630 = vperm.slane %v1349, %v1618
    %v1631 = vsel %vm1620, %v1630, %v1629
    %v1632 = vperm.slane %v1352, %v1612
    %v1633 = vperm.slane %v1355, %v1614
    %v1634 = vsel %vm1616, %v1633, %v1632
    %v1635 = vperm.slane %v1358, %v1618
    %v1636 = vsel %vm1620, %v1635, %v1634
    %v1637 = vperm.slane %v1361, %v1612
    %v1638 = vperm.slane %v1364, %v1614
    %v1639 = vsel %vm1616, %v1638, %v1637
    %v1640 = vperm.slane %v1367, %v1618
    %v1641 = vsel %vm1620, %v1640, %v1639
    %v1642 = vperm.slane %v1370, %v1612
    %v1643 = vperm.slane %v1373, %v1614
    %v1644 = vsel %vm1616, %v1643, %v1642
    %v1645 = vperm.slane %v1376, %v1618
    %v1646 = vsel %vm1620, %v1645, %v1644
    %v1647 = vperm.slane %v1379, %v1612
    %v1648 = vperm.slane %v1382, %v1614
    %v1649 = vsel %vm1616, %v1648, %v1647
    %v1650 = vperm.slane %v1385, %v1618
    %v1651 = vsel %vm1620, %v1650, %v1649
    %v1652 = vperm.slane %v1388, %v1612
    %v1653 = vperm.slane %v1391, %v1614
    %v1654 = vsel %vm1616, %v1653, %v1652
    %v1655 = vperm.slane %v1394, %v1618
    %v1656 = vsel %vm1620, %v1655, %v1654
    %v1657 = vperm.slane %v1397, %v1612
    %v1658 = vperm.slane %v1400, %v1614
    %v1659 = vsel %vm1616, %v1658, %v1657
    %v1660 = vperm.slane %v1403, %v1618
    %v1661 = vsel %vm1620, %v1660, %v1659
    %v1662 = vperm.slane %v1406, %v1612
    %v1663 = vperm.slane %v1409, %v1614
    %v1664 = vsel %vm1616, %v1663, %v1662
    %v1665 = vperm.slane %v1412, %v1618
    %v1666 = vsel %vm1620, %v1665, %v1664
    %v1667 = vperm.slane %v1415, %v1612
    %v1668 = vperm.slane %v1418, %v1614
    %v1669 = vsel %vm1616, %v1668, %v1667
    %v1670 = vperm.slane %v1421, %v1618
    %v1671 = vsel %vm1620, %v1670, %v1669
    %v1672 = vperm.slane %v1424, %v1612
    %v1673 = vperm.slane %v1427, %v1614
    %v1674 = vsel %vm1616, %v1673, %v1672
    %v1675 = vperm.slane %v1430, %v1618
    %v1676 = vsel %vm1620, %v1675, %v1674
    %v1677 = vperm.slane %v1433, %v1612
    %v1678 = vperm.slane %v1436, %v1614
    %v1679 = vsel %vm1616, %v1678, %v1677
    %v1680 = vperm.slane %v1439, %v1618
    %v1681 = vsel %vm1620, %v1680, %v1679
    %v1682 = vperm.slane %v1442, %v1612
    %v1683 = vperm.slane %v1445, %v1614
    %v1684 = vsel %vm1616, %v1683, %v1682
    %v1685 = vperm.slane %v1448, %v1618
    %v1686 = vsel %vm1620, %v1685, %v1684
    %v1687 = vperm.slane %v1451, %v1612
    %v1688 = vperm.slane %v1454, %v1614
    %v1689 = vsel %vm1616, %v1688, %v1687
    %v1690 = vperm.slane %v1457, %v1618
    %v1691 = vsel %vm1620, %v1690, %v1689
    %v1692 = vperm.slane %v1460, %v1612
    %v1693 = vperm.slane %v1463, %v1614
    %v1694 = vsel %vm1616, %v1693, %v1692
    %v1695 = vperm.slane %v1466, %v1618
    %v1696 = vsel %vm1620, %v1695, %v1694
    %v1697 = vperm.slane %v1469, %v1612
    %v1698 = vperm.slane %v1472, %v1614
    %v1699 = vsel %vm1616, %v1698, %v1697
    %v1700 = vperm.slane %v1475, %v1618
    %v1701 = vsel %vm1620, %v1700, %v1699
    %v1702 = vperm.slane %v1478, %v1612
    %v1703 = vperm.slane %v1481, %v1614
    %v1704 = vsel %vm1616, %v1703, %v1702
    %v1705 = vperm.slane %v1484, %v1618
    %v1706 = vsel %vm1620, %v1705, %v1704
    %v1707 = vperm.slane %v1487, %v1612
    %v1708 = vperm.slane %v1490, %v1614
    %v1709 = vsel %vm1616, %v1708, %v1707
    %v1710 = vperm.slane %v1493, %v1618
    %v1711 = vsel %vm1620, %v1710, %v1709
    %v1712 = vperm.slane %v1496, %v1612
    %v1713 = vperm.slane %v1499, %v1614
    %v1714 = vsel %vm1616, %v1713, %v1712
    %v1715 = vperm.slane %v1502, %v1618
    %v1716 = vsel %vm1620, %v1715, %v1714
    %v1717 = vperm.slane %v1505, %v1612
    %v1718 = vperm.slane %v1508, %v1614
    %v1719 = vsel %vm1616, %v1718, %v1717
    %v1720 = vperm.slane %v1511, %v1618
    %v1721 = vsel %vm1620, %v1720, %v1719
    %v1722 = vperm.slane %v1514, %v1612
    %v1723 = vperm.slane %v1517, %v1614
    %v1724 = vsel %vm1616, %v1723, %v1722
    %v1725 = vperm.slane %v1520, %v1618
    %v1726 = vsel %vm1620, %v1725, %v1724
    %v1727 = vperm.slane %v1523, %v1612
    %v1728 = vperm.slane %v1526, %v1614
    %v1729 = vsel %vm1616, %v1728, %v1727
    %v1730 = vperm.slane %v1529, %v1618
    %v1731 = vsel %vm1620, %v1730, %v1729
    %v1732 = vperm.slane %v1532, %v1612
    %v1733 = vperm.slane %v1535, %v1614
    %v1734 = vsel %vm1616, %v1733, %v1732
    %v1735 = vperm.slane %v1538, %v1618
    %v1736 = vsel %vm1620, %v1735, %v1734
    %vm1737 = vcmask 1041409
    %v1738 = vsel %vm1737, %v1626, %v1621
    %vm1739 = vcmask 1042434
    %v1740 = vsel %vm1739, %v1631, %v1738
    %vm1741 = vcmask 1043459
    %v1742 = vsel %vm1741, %v1636, %v1740
    %vm1743 = vcmask 1044484
    %v1744 = vsel %vm1743, %v1641, %v1742
    %vm1745 = vcmask 1045509
    %v1746 = vsel %vm1745, %v1646, %v1744
    %vm1747 = vcmask 1046534
    %v1748 = vsel %vm1747, %v1651, %v1746
    %vm1749 = vcmask 1047559
    %v1750 = vsel %vm1749, %v1656, %v1748
    %v1751 = vsel %vm1737, %v1666, %v1661
    %v1752 = vsel %vm1739, %v1671, %v1751
    %v1753 = vsel %vm1741, %v1676, %v1752
    %v1754 = vsel %vm1743, %v1681, %v1753
    %v1755 = vsel %vm1745, %v1686, %v1754
    %v1756 = vsel %vm1747, %v1691, %v1755
    %v1757 = vsel %vm1749, %v1696, %v1756
    %v1758 = vsel %vm1737, %v1706, %v1701
    %v1759 = vsel %vm1739, %v1711, %v1758
    %v1760 = vsel %vm1741, %v1716, %v1759
    %v1761 = vsel %vm1743, %v1721, %v1760
    %v1762 = vsel %vm1745, %v1726, %v1761
    %v1763 = vsel %vm1747, %v1731, %v1762
    %v1764 = vsel %vm1749, %v1736, %v1763
    %v1769 = vsel %vm1322, %v1318, 0
    %v1772 = vsel %vm1322, %v1319, 0
    %v1775 = vsel %vm1322, %v1320, 0
    %v1778 = vsel %vm1322, %v1321, 0
    %1780 = vmatpush.bf16.xpose.msra.mxu0 0
    %1781 = vmatpush.bf16.xpose.msra.mxu0 0
    %1782 = vmatpush.bf16.xpose.msra.mxu0 0
    %1783 = vmatpush.bf16.xpose.msra.mxu0 0
    %1784 = vmatpush.bf16.xpose.msra.mxu0 0
    %1785 = vmatpush.bf16.xpose.msra.mxu0 0
    %1786 = vmatpush.bf16.xpose.msra.mxu0 %v1778
    %1787 = vmatpush.bf16.xpose.msra.mxu0 %v1775
    %1788 = vmatmul.bf16.gmra.mxu0 %v1769
    %v1789 = vpop.f32.mrf.mxu0
    %v1790 = vadd.f32 %v1750, %v1789
    %v1791 = vpop.f32.mrf.mxu0
    %v1792 = vadd.f32 %v1757, %v1791
    %1793 = vmatmul.bf16.gmra.mxu0 %v1772
    %v1794 = vpop.f32.mrf.mxu0
    %v1795 = vadd.f32 %v1764, %v1794
    %v1796 = vpop.f32.mrf.mxu0
    %1797 = vdwg.mxu0
    %v1798 = vmul.f32 %v1790, 0.35355338
    %v1799 = vmul.f32 %v1792, 0.35355338
    %v1800 = vmul.f32 %v1795, 0.35355338
    %v1801 = vsel %vm130, %v1798, -inf
    %1802 = vmax.xlane.f32.xlu0 %v1801
    %v1803 = vpop.xlane.xlu0 %1802
    %v1804 = vsel %vm130, %v1799, -inf
    %1805 = vmax.xlane.f32.xlu0 %v1804
    %v1806 = vpop.xlane.xlu0 %1805
    %v1807 = vsel %vm130, %v1800, -inf
    %1808 = vmax.xlane.f32.xlu0 %v1807
    %v1809 = vpop.xlane.xlu0 %1808
    %v1810 = vsub.f32 %v1798, %v1803
    %v1811 = vsub.f32 %v1799, %v1806
    %v1812 = vsub.f32 %v1800, %v1809
    %v1813 = vmul.f32 %v1810, 1.442695
    %v1814 = vpow.pop %v1813
    %v1815 = vmul.f32 %v1811, 1.442695
    %v1816 = vpow.pop %v1815
    %v1817 = vmul.f32 %v1812, 1.442695
    %v1818 = vpow.pop %v1817
    %v1819 = vsel %vm130, %v1814, 0.0
    %1820 = vadd.xlane.f32.xlu0 %v1819
    %v1821 = vpop.xlane.xlu0 %1820
    %v1822 = vsel %vm130, %v1816, 0.0
    %1823 = vadd.xlane.f32.xlu0 %v1822
    %v1824 = vpop.xlane.xlu0 %1823
    %v1825 = vsel %vm130, %v1818, 0.0
    %1826 = vadd.xlane.f32.xlu0 %v1825
    %v1827 = vpop.xlane.xlu0 %1826
    %v1828 = vrcp.pop %v1821
    %v1829 = vrcp.pop %v1824
    %v1830 = vrcp.pop %v1827
    %v1831 = vmul.f32 %v1814, %v1828
    %v1832 = vmul.f32 %v1816, %v1829
    %v1833 = vmul.f32 %v1818, %v1830
    %v1834 = vpack.c.bf16 %v1832, %v1831
    %v1835 = vpack.c.bf16 %v1833, %v1833
    %v1836 = vpack.c.bf16 %v1092, %v1090
    %v1837 = vpack.c.bf16 %v1095, %v1095
    %v1839 = vsel %vm130, %v1834, 0
    %v1842 = vsel %vm130, %v1835, 0
    %vm1844 = vcmask 1043456
    %v1846 = vsel %vm1844, %v1837, 0
    %1848 = vmatpush.bf16.msra.mxu0 0
    %1849 = vmatpush.bf16.msra.mxu0 0
    %1850 = vmatpush.bf16.msra.mxu0 0
    %1851 = vmatpush.bf16.msra.mxu0 0
    %1852 = vmatpush.bf16.msra.mxu0 0
    %1853 = vmatpush.bf16.msra.mxu0 0
    %1854 = vmatpush.bf16.msra.mxu0 %v1846
    %1855 = vmatpush.bf16.msra.mxu0 %v1836
    %1856 = vmatmul.bf16.gmra.mxu0 %v1839
    %v1857 = vpop.f32.mrf.mxu0
    %v1858 = vadd.f32 0.0, %v1857
    %v1859 = vpop.f32.mrf.mxu0
    %v1860 = vadd.f32 0.0, %v1859
    %1861 = vmatmul.bf16.gmra.mxu0 %v1842
    %v1862 = vpop.f32.mrf.mxu0
    %v1863 = vadd.f32 0.0, %v1862
    %v1864 = vpop.f32.mrf.mxu0
    %1865 = vdwg.mxu0
    %v1866 = vpack.c.bf16 %v1860, %v1858
    %v1867 = vpack.c.bf16 %v1863, %v1863
    %v1868 = vpack.c.bf16 %v1314, %v1314
    %1941 = vrot.lane.b32.xlu0 %v1242, 120
    %v1942 = vpop.permute.xlu0 %1941
    %1943 = vrot.lane.b32.xlu0 %v1243, 120
    %v1944 = vpop.permute.xlu0 %1943
    %1945 = vrot.lane.b32.xlu0 %v1244, 120
    %v1946 = vpop.permute.xlu0 %1945
    %1947 = vrot.lane.b32.xlu0 %v1245, 120
    %v1948 = vpop.permute.xlu0 %1947
    %1949 = vrot.lane.b32.xlu0 %v1246, 120
    %v1950 = vpop.permute.xlu0 %1949
    %1951 = vrot.lane.b32.xlu0 %v1247, 120
    %v1952 = vpop.permute.xlu0 %1951
    %1953 = vrot.lane.b32.xlu0 %v1248, 120
    %v1954 = vpop.permute.xlu0 %1953
    %1955 = vrot.lane.b32.xlu0 %v1249, 120
    %v1956 = vpop.permute.xlu0 %1955
    %1957 = vrot.lane.b32.xlu0 %v1250, 120
    %v1958 = vpop.permute.xlu0 %1957
    %1959 = vrot.lane.b32.xlu0 %v1251, 120
    %v1960 = vpop.permute.xlu0 %1959
    %1961 = vrot.lane.b32.xlu0 %v1252, 120
    %v1962 = vpop.permute.xlu0 %1961
    %1963 = vrot.lane.b32.xlu0 %v1253, 120
    %v1964 = vpop.permute.xlu0 %1963
    %1965 = vrot.lane.b32.xlu0 %v1254, 120
    %v1966 = vpop.permute.xlu0 %1965
    %1967 = vrot.lane.b32.xlu0 %v1255, 120
    %v1968 = vpop.permute.xlu0 %1967
    %1969 = vrot.lane.b32.xlu0 %v1256, 120
    %v1970 = vpop.permute.xlu0 %1969
    %1971 = vrot.lane.b32.xlu0 %v1257, 120
    %v1972 = vpop.permute.xlu0 %1971
    %1973 = vrot.lane.b32.xlu0 %v1258, 120
    %v1974 = vpop.permute.xlu0 %1973
    %1975 = vrot.lane.b32.xlu0 %v1259, 120
    %v1976 = vpop.permute.xlu0 %1975
    %1977 = vrot.lane.b32.xlu0 %v1260, 120
    %v1978 = vpop.permute.xlu0 %1977
    %1979 = vrot.lane.b32.xlu0 %v1261, 120
    %v1980 = vpop.permute.xlu0 %1979
    %1981 = vrot.lane.b32.xlu0 %v1262, 120
    %v1982 = vpop.permute.xlu0 %1981
    %1983 = vrot.lane.b32.xlu0 %v1263, 120
    %v1984 = vpop.permute.xlu0 %1983
    %1985 = vrot.lane.b32.xlu0 %v1264, 120
    %v1986 = vpop.permute.xlu0 %1985
    %1987 = vrot.lane.b32.xlu0 %v1265, 120
    %v1988 = vpop.permute.xlu0 %1987
    %1989 = vrot.lane.b32.xlu0 %v1266, 120
    %v1990 = vpop.permute.xlu0 %1989
    %1991 = vrot.lane.b32.xlu0 %v1267, 120
    %v1992 = vpop.permute.xlu0 %1991
    %1993 = vrot.lane.b32.xlu0 %v1268, 120
    %v1994 = vpop.permute.xlu0 %1993
    %1995 = vrot.lane.b32.xlu0 %v1269, 120
    %v1996 = vpop.permute.xlu0 %1995
    %1997 = vrot.lane.b32.xlu0 %v1270, 120
    %v1998 = vpop.permute.xlu0 %1997
    %1999 = vrot.lane.b32.xlu0 %v1271, 120
    %v2000 = vpop.permute.xlu0 %1999
    %2001 = vrot.lane.b32.xlu0 %v1272, 120
    %v2002 = vpop.permute.xlu0 %2001
    %2003 = vrot.lane.b32.xlu0 %v1273, 120
    %v2004 = vpop.permute.xlu0 %2003
    %2005 = vrot.lane.b32.xlu0 %v1274, 120
    %v2006 = vpop.permute.xlu0 %2005
    %2007 = vrot.lane.b32.xlu0 %v1275, 120
    %v2008 = vpop.permute.xlu0 %2007
    %2009 = vrot.lane.b32.xlu0 %v1276, 120
    %v2010 = vpop.permute.xlu0 %2009
    %2011 = vrot.lane.b32.xlu0 %v1277, 120
    %v2012 = vpop.permute.xlu0 %2011
    %2013 = vrot.lane.b32.xlu0 %v1278, 120
    %v2014 = vpop.permute.xlu0 %2013
    %2015 = vrot.lane.b32.xlu0 %v1279, 120
    %v2016 = vpop.permute.xlu0 %2015
    %2017 = vrot.lane.b32.xlu0 %v1280, 120
    %v2018 = vpop.permute.xlu0 %2017
    %2019 = vrot.lane.b32.xlu0 %v1281, 120
    %v2020 = vpop.permute.xlu0 %2019
    %2021 = vrot.lane.b32.xlu0 %v1282, 120
    %v2022 = vpop.permute.xlu0 %2021
    %2023 = vrot.lane.b32.xlu0 %v1283, 120
    %v2024 = vpop.permute.xlu0 %2023
    %2025 = vrot.lane.b32.xlu0 %v1284, 120
    %v2026 = vpop.permute.xlu0 %2025
    %2027 = vrot.lane.b32.xlu0 %v1285, 120
    %v2028 = vpop.permute.xlu0 %2027
    %2029 = vrot.lane.b32.xlu0 %v1286, 120
    %v2030 = vpop.permute.xlu0 %2029
    %2031 = vrot.lane.b32.xlu0 %v1287, 120
    %v2032 = vpop.permute.xlu0 %2031
    %2033 = vrot.lane.b32.xlu0 %v1288, 120
    %v2034 = vpop.permute.xlu0 %2033
    %2035 = vrot.lane.b32.xlu0 %v1289, 120
    %v2036 = vpop.permute.xlu0 %2035
    %2037 = vrot.lane.b32.xlu0 %v1290, 120
    %v2038 = vpop.permute.xlu0 %2037
    %2039 = vrot.lane.b32.xlu0 %v1291, 120
    %v2040 = vpop.permute.xlu0 %2039
    %2041 = vrot.lane.b32.xlu0 %v1292, 120
    %v2042 = vpop.permute.xlu0 %2041
    %2043 = vrot.lane.b32.xlu0 %v1293, 120
    %v2044 = vpop.permute.xlu0 %2043
    %2045 = vrot.lane.b32.xlu0 %v1294, 120
    %v2046 = vpop.permute.xlu0 %2045
    %2047 = vrot.lane.b32.xlu0 %v1295, 120
    %v2048 = vpop.permute.xlu0 %2047
    %2049 = vrot.lane.b32.xlu0 %v1296, 120
    %v2050 = vpop.permute.xlu0 %2049
    %2051 = vrot.lane.b32.xlu0 %v1297, 120
    %v2052 = vpop.permute.xlu0 %2051
    %2053 = vrot.lane.b32.xlu0 %v1298, 120
    %v2054 = vpop.permute.xlu0 %2053
    %2055 = vrot.lane.b32.xlu0 %v1299, 120
    %v2056 = vpop.permute.xlu0 %2055
    %2057 = vrot.lane.b32.xlu0 %v1300, 120
    %v2058 = vpop.permute.xlu0 %2057
    %2059 = vrot.lane.b32.xlu0 %v1301, 120
    %v2060 = vpop.permute.xlu0 %2059
    %2061 = vrot.lane.b32.xlu0 %v1302, 120
    %v2062 = vpop.permute.xlu0 %2061
    %2063 = vrot.lane.b32.xlu0 %v1303, 120
    %v2064 = vpop.permute.xlu0 %2063
    %2065 = vrot.lane.b32.xlu0 %v1304, 120
    %v2066 = vpop.permute.xlu0 %2065
    %2067 = vrot.lane.b32.xlu0 %v1305, 120
    %v2068 = vpop.permute.xlu0 %2067
    %2069 = vrot.lane.b32.xlu0 %v1306, 120
    %v2070 = vpop.permute.xlu0 %2069
    %2071 = vrot.lane.b32.xlu0 %v1307, 120
    %v2072 = vpop.permute.xlu0 %2071
    %2073 = vrot.lane.b32.xlu0 %v1308, 120
    %v2074 = vpop.permute.xlu0 %2073
    %2075 = vrot.lane.b32.xlu0 %v1309, 120
    %v2076 = vpop.permute.xlu0 %2075
    %2077 = vrot.lane.b32.xlu0 %v1310, 120
    %v2078 = vpop.permute.xlu0 %2077
    %2079 = vrot.lane.b32.xlu0 %v1311, 120
    %v2080 = vpop.permute.xlu0 %2079
    %2081 = vrot.lane.b32.xlu0 %v1312, 120
    %v2082 = vpop.permute.xlu0 %2081
    %2083 = vrot.lane.b32.xlu0 %v1313, 120
    %v2084 = vpop.permute.xlu0 %2083
    %v2157 = vsel %vm1322, %v1942, 0.0
    %2158 = vadd.xlane.f32.xlu0 %v2157
    %v2159 = vpop.xlane.xlu0 %2158
    %v2160 = vsel %vm1322, %v1944, 0.0
    %2161 = vadd.xlane.f32.xlu0 %v2160
    %v2162 = vpop.xlane.xlu0 %2161
    %v2163 = vsel %vm1322, %v1946, 0.0
    %2164 = vadd.xlane.f32.xlu0 %v2163
    %v2165 = vpop.xlane.xlu0 %2164
    %v2166 = vsel %vm1322, %v1948, 0.0
    %2167 = vadd.xlane.f32.xlu0 %v2166
    %v2168 = vpop.xlane.xlu0 %2167
    %v2169 = vsel %vm1322, %v1950, 0.0
    %2170 = vadd.xlane.f32.xlu0 %v2169
    %v2171 = vpop.xlane.xlu0 %2170
    %v2172 = vsel %vm1322, %v1952, 0.0
    %2173 = vadd.xlane.f32.xlu0 %v2172
    %v2174 = vpop.xlane.xlu0 %2173
    %v2175 = vsel %vm1322, %v1954, 0.0
    %2176 = vadd.xlane.f32.xlu0 %v2175
    %v2177 = vpop.xlane.xlu0 %2176
    %v2178 = vsel %vm1322, %v1956, 0.0
    %2179 = vadd.xlane.f32.xlu0 %v2178
    %v2180 = vpop.xlane.xlu0 %2179
    %v2181 = vsel %vm1322, %v1958, 0.0
    %2182 = vadd.xlane.f32.xlu0 %v2181
    %v2183 = vpop.xlane.xlu0 %2182
    %v2184 = vsel %vm1322, %v1960, 0.0
    %2185 = vadd.xlane.f32.xlu0 %v2184
    %v2186 = vpop.xlane.xlu0 %2185
    %v2187 = vsel %vm1322, %v1962, 0.0
    %2188 = vadd.xlane.f32.xlu0 %v2187
    %v2189 = vpop.xlane.xlu0 %2188
    %v2190 = vsel %vm1322, %v1964, 0.0
    %2191 = vadd.xlane.f32.xlu0 %v2190
    %v2192 = vpop.xlane.xlu0 %2191
    %v2193 = vsel %vm1322, %v1966, 0.0
    %2194 = vadd.xlane.f32.xlu0 %v2193
    %v2195 = vpop.xlane.xlu0 %2194
    %v2196 = vsel %vm1322, %v1968, 0.0
    %2197 = vadd.xlane.f32.xlu0 %v2196
    %v2198 = vpop.xlane.xlu0 %2197
    %v2199 = vsel %vm1322, %v1970, 0.0
    %2200 = vadd.xlane.f32.xlu0 %v2199
    %v2201 = vpop.xlane.xlu0 %2200
    %v2202 = vsel %vm1322, %v1972, 0.0
    %2203 = vadd.xlane.f32.xlu0 %v2202
    %v2204 = vpop.xlane.xlu0 %2203
    %v2205 = vsel %vm1322, %v1974, 0.0
    %2206 = vadd.xlane.f32.xlu0 %v2205
    %v2207 = vpop.xlane.xlu0 %2206
    %v2208 = vsel %vm1322, %v1976, 0.0
    %2209 = vadd.xlane.f32.xlu0 %v2208
    %v2210 = vpop.xlane.xlu0 %2209
    %v2211 = vsel %vm1322, %v1978, 0.0
    %2212 = vadd.xlane.f32.xlu0 %v2211
    %v2213 = vpop.xlane.xlu0 %2212
    %v2214 = vsel %vm1322, %v1980, 0.0
    %2215 = vadd.xlane.f32.xlu0 %v2214
    %v2216 = vpop.xlane.xlu0 %2215
    %v2217 = vsel %vm1322, %v1982, 0.0
    %2218 = vadd.xlane.f32.xlu0 %v2217
    %v2219 = vpop.xlane.xlu0 %2218
    %v2220 = vsel %vm1322, %v1984, 0.0
    %2221 = vadd.xlane.f32.xlu0 %v2220
    %v2222 = vpop.xlane.xlu0 %2221
    %v2223 = vsel %vm1322, %v1986, 0.0
    %2224 = vadd.xlane.f32.xlu0 %v2223
    %v2225 = vpop.xlane.xlu0 %2224
    %v2226 = vsel %vm1322, %v1988, 0.0
    %2227 = vadd.xlane.f32.xlu0 %v2226
    %v2228 = vpop.xlane.xlu0 %2227
    %v2229 = vsel %vm1322, %v1990, 0.0
    %2230 = vadd.xlane.f32.xlu0 %v2229
    %v2231 = vpop.xlane.xlu0 %2230
    %v2232 = vsel %vm1322, %v1992, 0.0
    %2233 = vadd.xlane.f32.xlu0 %v2232
    %v2234 = vpop.xlane.xlu0 %2233
    %v2235 = vsel %vm1322, %v1994, 0.0
    %2236 = vadd.xlane.f32.xlu0 %v2235
    %v2237 = vpop.xlane.xlu0 %2236
    %v2238 = vsel %vm1322, %v1996, 0.0
    %2239 = vadd.xlane.f32.xlu0 %v2238
    %v2240 = vpop.xlane.xlu0 %2239
    %v2241 = vsel %vm1322, %v1998, 0.0
    %2242 = vadd.xlane.f32.xlu0 %v2241
    %v2243 = vpop.xlane.xlu0 %2242
    %v2244 = vsel %vm1322, %v2000, 0.0
    %2245 = vadd.xlane.f32.xlu0 %v2244
    %v2246 = vpop.xlane.xlu0 %2245
    %v2247 = vsel %vm1322, %v2002, 0.0
    %2248 = vadd.xlane.f32.xlu0 %v2247
    %v2249 = vpop.xlane.xlu0 %2248
    %v2250 = vsel %vm1322, %v2004, 0.0
    %2251 = vadd.xlane.f32.xlu0 %v2250
    %v2252 = vpop.xlane.xlu0 %2251
    %v2253 = vsel %vm1322, %v2006, 0.0
    %2254 = vadd.xlane.f32.xlu0 %v2253
    %v2255 = vpop.xlane.xlu0 %2254
    %v2256 = vsel %vm1322, %v2008, 0.0
    %2257 = vadd.xlane.f32.xlu0 %v2256
    %v2258 = vpop.xlane.xlu0 %2257
    %v2259 = vsel %vm1322, %v2010, 0.0
    %2260 = vadd.xlane.f32.xlu0 %v2259
    %v2261 = vpop.xlane.xlu0 %2260
    %v2262 = vsel %vm1322, %v2012, 0.0
    %2263 = vadd.xlane.f32.xlu0 %v2262
    %v2264 = vpop.xlane.xlu0 %2263
    %v2265 = vsel %vm1322, %v2014, 0.0
    %2266 = vadd.xlane.f32.xlu0 %v2265
    %v2267 = vpop.xlane.xlu0 %2266
    %v2268 = vsel %vm1322, %v2016, 0.0
    %2269 = vadd.xlane.f32.xlu0 %v2268
    %v2270 = vpop.xlane.xlu0 %2269
    %v2271 = vsel %vm1322, %v2018, 0.0
    %2272 = vadd.xlane.f32.xlu0 %v2271
    %v2273 = vpop.xlane.xlu0 %2272
    %v2274 = vsel %vm1322, %v2020, 0.0
    %2275 = vadd.xlane.f32.xlu0 %v2274
    %v2276 = vpop.xlane.xlu0 %2275
    %v2277 = vsel %vm1322, %v2022, 0.0
    %2278 = vadd.xlane.f32.xlu0 %v2277
    %v2279 = vpop.xlane.xlu0 %2278
    %v2280 = vsel %vm1322, %v2024, 0.0
    %2281 = vadd.xlane.f32.xlu0 %v2280
    %v2282 = vpop.xlane.xlu0 %2281
    %v2283 = vsel %vm1322, %v2026, 0.0
    %2284 = vadd.xlane.f32.xlu0 %v2283
    %v2285 = vpop.xlane.xlu0 %2284
    %v2286 = vsel %vm1322, %v2028, 0.0
    %2287 = vadd.xlane.f32.xlu0 %v2286
    %v2288 = vpop.xlane.xlu0 %2287
    %v2289 = vsel %vm1322, %v2030, 0.0
    %2290 = vadd.xlane.f32.xlu0 %v2289
    %v2291 = vpop.xlane.xlu0 %2290
    %v2292 = vsel %vm1322, %v2032, 0.0
    %2293 = vadd.xlane.f32.xlu0 %v2292
    %v2294 = vpop.xlane.xlu0 %2293
    %v2295 = vsel %vm1322, %v2034, 0.0
    %2296 = vadd.xlane.f32.xlu0 %v2295
    %v2297 = vpop.xlane.xlu0 %2296
    %v2298 = vsel %vm1322, %v2036, 0.0
    %2299 = vadd.xlane.f32.xlu0 %v2298
    %v2300 = vpop.xlane.xlu0 %2299
    %v2301 = vsel %vm1322, %v2038, 0.0
    %2302 = vadd.xlane.f32.xlu0 %v2301
    %v2303 = vpop.xlane.xlu0 %2302
    %v2304 = vsel %vm1322, %v2040, 0.0
    %2305 = vadd.xlane.f32.xlu0 %v2304
    %v2306 = vpop.xlane.xlu0 %2305
    %v2307 = vsel %vm1322, %v2042, 0.0
    %2308 = vadd.xlane.f32.xlu0 %v2307
    %v2309 = vpop.xlane.xlu0 %2308
    %v2310 = vsel %vm1322, %v2044, 0.0
    %2311 = vadd.xlane.f32.xlu0 %v2310
    %v2312 = vpop.xlane.xlu0 %2311
    %v2313 = vsel %vm1322, %v2046, 0.0
    %2314 = vadd.xlane.f32.xlu0 %v2313
    %v2315 = vpop.xlane.xlu0 %2314
    %v2316 = vsel %vm1322, %v2048, 0.0
    %2317 = vadd.xlane.f32.xlu0 %v2316
    %v2318 = vpop.xlane.xlu0 %2317
    %v2319 = vsel %vm1322, %v2050, 0.0
    %2320 = vadd.xlane.f32.xlu0 %v2319
    %v2321 = vpop.xlane.xlu0 %2320
    %v2322 = vsel %vm1322, %v2052, 0.0
    %2323 = vadd.xlane.f32.xlu0 %v2322
    %v2324 = vpop.xlane.xlu0 %2323
    %v2325 = vsel %vm1322, %v2054, 0.0
    %2326 = vadd.xlane.f32.xlu0 %v2325
    %v2327 = vpop.xlane.xlu0 %2326
    %v2328 = vsel %vm1322, %v2056, 0.0
    %2329 = vadd.xlane.f32.xlu0 %v2328
    %v2330 = vpop.xlane.xlu0 %2329
    %v2331 = vsel %vm1322, %v2058, 0.0
    %2332 = vadd.xlane.f32.xlu0 %v2331
    %v2333 = vpop.xlane.xlu0 %2332
    %v2334 = vsel %vm1322, %v2060, 0.0
    %2335 = vadd.xlane.f32.xlu0 %v2334
    %v2336 = vpop.xlane.xlu0 %2335
    %v2337 = vsel %vm1322, %v2062, 0.0
    %2338 = vadd.xlane.f32.xlu0 %v2337
    %v2339 = vpop.xlane.xlu0 %2338
    %v2340 = vsel %vm1322, %v2064, 0.0
    %2341 = vadd.xlane.f32.xlu0 %v2340
    %v2342 = vpop.xlane.xlu0 %2341
    %v2343 = vsel %vm1322, %v2066, 0.0
    %2344 = vadd.xlane.f32.xlu0 %v2343
    %v2345 = vpop.xlane.xlu0 %2344
    %v2346 = vsel %vm1322, %v2068, 0.0
    %2347 = vadd.xlane.f32.xlu0 %v2346
    %v2348 = vpop.xlane.xlu0 %2347
    %v2349 = vsel %vm1322, %v2070, 0.0
    %2350 = vadd.xlane.f32.xlu0 %v2349
    %v2351 = vpop.xlane.xlu0 %2350
    %v2352 = vsel %vm1322, %v2072, 0.0
    %2353 = vadd.xlane.f32.xlu0 %v2352
    %v2354 = vpop.xlane.xlu0 %2353
    %v2355 = vsel %vm1322, %v2074, 0.0
    %2356 = vadd.xlane.f32.xlu0 %v2355
    %v2357 = vpop.xlane.xlu0 %2356
    %v2358 = vsel %vm1322, %v2076, 0.0
    %2359 = vadd.xlane.f32.xlu0 %v2358
    %v2360 = vpop.xlane.xlu0 %2359
    %v2361 = vsel %vm1322, %v2078, 0.0
    %2362 = vadd.xlane.f32.xlu0 %v2361
    %v2363 = vpop.xlane.xlu0 %2362
    %v2364 = vsel %vm1322, %v2080, 0.0
    %2365 = vadd.xlane.f32.xlu0 %v2364
    %v2366 = vpop.xlane.xlu0 %2365
    %v2367 = vsel %vm1322, %v2082, 0.0
    %2368 = vadd.xlane.f32.xlu0 %v2367
    %v2369 = vpop.xlane.xlu0 %2368
    %v2370 = vsel %vm1322, %v2084, 0.0
    %2371 = vadd.xlane.f32.xlu0 %v2370
    %v2372 = vpop.xlane.xlu0 %2371
    %2375 = vrot.lane.b32.xlu0 %v1318, 120
    %v2376 = vpop.permute.xlu0 %2375
    %2377 = vrot.lane.b32.xlu0 %v1319, 120
    %v2378 = vpop.permute.xlu0 %2377
    %2381 = vrot.lane.b32.xlu0 %v1320, 120
    %v2382 = vpop.permute.xlu0 %2381
    %2383 = vrot.lane.b32.xlu0 %v1321, 120
    %v2384 = vpop.permute.xlu0 %2383
    %v2457 = vperm.slane %v2159, %v1612
    %v2458 = vperm.slane %v2162, %v1614
    %v2459 = vsel %vm1616, %v2458, %v2457
    %v2460 = vperm.slane %v2165, %v1618
    %v2461 = vsel %vm1620, %v2460, %v2459
    %v2462 = vperm.slane %v2168, %v1612
    %v2463 = vperm.slane %v2171, %v1614
    %v2464 = vsel %vm1616, %v2463, %v2462
    %v2465 = vperm.slane %v2174, %v1618
    %v2466 = vsel %vm1620, %v2465, %v2464
    %v2467 = vperm.slane %v2177, %v1612
    %v2468 = vperm.slane %v2180, %v1614
    %v2469 = vsel %vm1616, %v2468, %v2467
    %v2470 = vperm.slane %v2183, %v1618
    %v2471 = vsel %vm1620, %v2470, %v2469
    %v2472 = vperm.slane %v2186, %v1612
    %v2473 = vperm.slane %v2189, %v1614
    %v2474 = vsel %vm1616, %v2473, %v2472
    %v2475 = vperm.slane %v2192, %v1618
    %v2476 = vsel %vm1620, %v2475, %v2474
    %v2477 = vperm.slane %v2195, %v1612
    %v2478 = vperm.slane %v2198, %v1614
    %v2479 = vsel %vm1616, %v2478, %v2477
    %v2480 = vperm.slane %v2201, %v1618
    %v2481 = vsel %vm1620, %v2480, %v2479
    %v2482 = vperm.slane %v2204, %v1612
    %v2483 = vperm.slane %v2207, %v1614
    %v2484 = vsel %vm1616, %v2483, %v2482
    %v2485 = vperm.slane %v2210, %v1618
    %v2486 = vsel %vm1620, %v2485, %v2484
    %v2487 = vperm.slane %v2213, %v1612
    %v2488 = vperm.slane %v2216, %v1614
    %v2489 = vsel %vm1616, %v2488, %v2487
    %v2490 = vperm.slane %v2219, %v1618
    %v2491 = vsel %vm1620, %v2490, %v2489
    %v2492 = vperm.slane %v2222, %v1612
    %v2493 = vperm.slane %v2225, %v1614
    %v2494 = vsel %vm1616, %v2493, %v2492
    %v2495 = vperm.slane %v2228, %v1618
    %v2496 = vsel %vm1620, %v2495, %v2494
    %v2497 = vperm.slane %v2231, %v1612
    %v2498 = vperm.slane %v2234, %v1614
    %v2499 = vsel %vm1616, %v2498, %v2497
    %v2500 = vperm.slane %v2237, %v1618
    %v2501 = vsel %vm1620, %v2500, %v2499
    %v2502 = vperm.slane %v2240, %v1612
    %v2503 = vperm.slane %v2243, %v1614
    %v2504 = vsel %vm1616, %v2503, %v2502
    %v2505 = vperm.slane %v2246, %v1618
    %v2506 = vsel %vm1620, %v2505, %v2504
    %v2507 = vperm.slane %v2249, %v1612
    %v2508 = vperm.slane %v2252, %v1614
    %v2509 = vsel %vm1616, %v2508, %v2507
    %v2510 = vperm.slane %v2255, %v1618
    %v2511 = vsel %vm1620, %v2510, %v2509
    %v2512 = vperm.slane %v2258, %v1612
    %v2513 = vperm.slane %v2261, %v1614
    %v2514 = vsel %vm1616, %v2513, %v2512
    %v2515 = vperm.slane %v2264, %v1618
    %v2516 = vsel %vm1620, %v2515, %v2514
    %v2517 = vperm.slane %v2267, %v1612
    %v2518 = vperm.slane %v2270, %v1614
    %v2519 = vsel %vm1616, %v2518, %v2517
    %v2520 = vperm.slane %v2273, %v1618
    %v2521 = vsel %vm1620, %v2520, %v2519
    %v2522 = vperm.slane %v2276, %v1612
    %v2523 = vperm.slane %v2279, %v1614
    %v2524 = vsel %vm1616, %v2523, %v2522
    %v2525 = vperm.slane %v2282, %v1618
    %v2526 = vsel %vm1620, %v2525, %v2524
    %v2527 = vperm.slane %v2285, %v1612
    %v2528 = vperm.slane %v2288, %v1614
    %v2529 = vsel %vm1616, %v2528, %v2527
    %v2530 = vperm.slane %v2291, %v1618
    %v2531 = vsel %vm1620, %v2530, %v2529
    %v2532 = vperm.slane %v2294, %v1612
    %v2533 = vperm.slane %v2297, %v1614
    %v2534 = vsel %vm1616, %v2533, %v2532
    %v2535 = vperm.slane %v2300, %v1618
    %v2536 = vsel %vm1620, %v2535, %v2534
    %v2537 = vperm.slane %v2303, %v1612
    %v2538 = vperm.slane %v2306, %v1614
    %v2539 = vsel %vm1616, %v2538, %v2537
    %v2540 = vperm.slane %v2309, %v1618
    %v2541 = vsel %vm1620, %v2540, %v2539
    %v2542 = vperm.slane %v2312, %v1612
    %v2543 = vperm.slane %v2315, %v1614
    %v2544 = vsel %vm1616, %v2543, %v2542
    %v2545 = vperm.slane %v2318, %v1618
    %v2546 = vsel %vm1620, %v2545, %v2544
    %v2547 = vperm.slane %v2321, %v1612
    %v2548 = vperm.slane %v2324, %v1614
    %v2549 = vsel %vm1616, %v2548, %v2547
    %v2550 = vperm.slane %v2327, %v1618
    %v2551 = vsel %vm1620, %v2550, %v2549
    %v2552 = vperm.slane %v2330, %v1612
    %v2553 = vperm.slane %v2333, %v1614
    %v2554 = vsel %vm1616, %v2553, %v2552
    %v2555 = vperm.slane %v2336, %v1618
    %v2556 = vsel %vm1620, %v2555, %v2554
    %v2557 = vperm.slane %v2339, %v1612
    %v2558 = vperm.slane %v2342, %v1614
    %v2559 = vsel %vm1616, %v2558, %v2557
    %v2560 = vperm.slane %v2345, %v1618
    %v2561 = vsel %vm1620, %v2560, %v2559
    %v2562 = vperm.slane %v2348, %v1612
    %v2563 = vperm.slane %v2351, %v1614
    %v2564 = vsel %vm1616, %v2563, %v2562
    %v2565 = vperm.slane %v2354, %v1618
    %v2566 = vsel %vm1620, %v2565, %v2564
    %v2567 = vperm.slane %v2357, %v1612
    %v2568 = vperm.slane %v2360, %v1614
    %v2569 = vsel %vm1616, %v2568, %v2567
    %v2570 = vperm.slane %v2363, %v1618
    %v2571 = vsel %vm1620, %v2570, %v2569
    %v2572 = vperm.slane %v2366, %v1612
    %v2573 = vperm.slane %v2369, %v1614
    %v2574 = vsel %vm1616, %v2573, %v2572
    %v2575 = vperm.slane %v2372, %v1618
    %v2576 = vsel %vm1620, %v2575, %v2574
    %v2577 = vsel %vm1737, %v2466, %v2461
    %v2578 = vsel %vm1739, %v2471, %v2577
    %v2579 = vsel %vm1741, %v2476, %v2578
    %v2580 = vsel %vm1743, %v2481, %v2579
    %v2581 = vsel %vm1745, %v2486, %v2580
    %v2582 = vsel %vm1747, %v2491, %v2581
    %v2583 = vsel %vm1749, %v2496, %v2582
    %v2584 = vsel %vm1737, %v2506, %v2501
    %v2585 = vsel %vm1739, %v2511, %v2584
    %v2586 = vsel %vm1741, %v2516, %v2585
    %v2587 = vsel %vm1743, %v2521, %v2586
    %v2588 = vsel %vm1745, %v2526, %v2587
    %v2589 = vsel %vm1747, %v2531, %v2588
    %v2590 = vsel %vm1749, %v2536, %v2589
    %v2591 = vsel %vm1737, %v2546, %v2541
    %v2592 = vsel %vm1739, %v2551, %v2591
    %v2593 = vsel %vm1741, %v2556, %v2592
    %v2594 = vsel %vm1743, %v2561, %v2593
    %v2595 = vsel %vm1745, %v2566, %v2594
    %v2596 = vsel %vm1747, %v2571, %v2595
    %v2597 = vsel %vm1749, %v2576, %v2596
    %v2602 = vsel %vm1322, %v2376, 0
    %v2605 = vsel %vm1322, %v2378, 0
    %v2608 = vsel %vm1322, %v2382, 0
    %v2611 = vsel %vm1322, %v2384, 0
    %2613 = vmatpush.bf16.xpose.msra.mxu0 0
    %2614 = vmatpush.bf16.xpose.msra.mxu0 0
    %2615 = vmatpush.bf16.xpose.msra.mxu0 0
    %2616 = vmatpush.bf16.xpose.msra.mxu0 0
    %2617 = vmatpush.bf16.xpose.msra.mxu0 0
    %2618 = vmatpush.bf16.xpose.msra.mxu0 0
    %2619 = vmatpush.bf16.xpose.msra.mxu0 %v2611
    %2620 = vmatpush.bf16.xpose.msra.mxu0 %v2608
    %2621 = vmatmul.bf16.gmra.mxu0 %v2602
    %v2622 = vpop.f32.mrf.mxu0
    %v2623 = vadd.f32 %v2583, %v2622
    %v2624 = vpop.f32.mrf.mxu0
    %v2625 = vadd.f32 %v2590, %v2624
    %2626 = vmatmul.bf16.gmra.mxu0 %v2605
    %v2627 = vpop.f32.mrf.mxu0
    %v2628 = vadd.f32 %v2597, %v2627
    %v2629 = vpop.f32.mrf.mxu0
    %2630 = vdwg.mxu0
    %v2631 = vmul.f32 %v2623, 0.35355338
    %v2632 = vmul.f32 %v2625, 0.35355338
    %v2633 = vmul.f32 %v2628, 0.35355338
    %v2634 = vsel %vm130, %v2631, -inf
    %2635 = vmax.xlane.f32.xlu0 %v2634
    %v2636 = vpop.xlane.xlu0 %2635
    %v2637 = vsel %vm130, %v2632, -inf
    %2638 = vmax.xlane.f32.xlu0 %v2637
    %v2639 = vpop.xlane.xlu0 %2638
    %v2640 = vsel %vm130, %v2633, -inf
    %2641 = vmax.xlane.f32.xlu0 %v2640
    %v2642 = vpop.xlane.xlu0 %2641
    %v2643 = vsub.f32 %v2631, %v2636
    %v2644 = vsub.f32 %v2632, %v2639
    %v2645 = vsub.f32 %v2633, %v2642
    %v2646 = vmul.f32 %v2643, 1.442695
    %v2647 = vpow.pop %v2646
    %v2648 = vmul.f32 %v2644, 1.442695
    %v2649 = vpow.pop %v2648
    %v2650 = vmul.f32 %v2645, 1.442695
    %v2651 = vpow.pop %v2650
    %v2652 = vsel %vm130, %v2647, 0.0
    %2653 = vadd.xlane.f32.xlu0 %v2652
    %v2654 = vpop.xlane.xlu0 %2653
    %v2655 = vsel %vm130, %v2649, 0.0
    %2656 = vadd.xlane.f32.xlu0 %v2655
    %v2657 = vpop.xlane.xlu0 %2656
    %v2658 = vsel %vm130, %v2651, 0.0
    %2659 = vadd.xlane.f32.xlu0 %v2658
    %v2660 = vpop.xlane.xlu0 %2659
    %v2661 = vrcp.pop %v2654
    %v2662 = vrcp.pop %v2657
    %v2663 = vrcp.pop %v2660
    %v2664 = vmul.f32 %v2647, %v2661
    %v2665 = vmul.f32 %v2649, %v2662
    %v2666 = vmul.f32 %v2651, %v2663
    %v2667 = vpack.c.bf16 %v2665, %v2664
    %v2668 = vpack.c.bf16 %v2666, %v2666
    %2671 = vrot.lane.b32.xlu0 %v1836, 120
    %v2672 = vpop.permute.xlu0 %2671
    %2673 = vrot.lane.b32.xlu0 %v1837, 120
    %v2674 = vpop.permute.xlu0 %2673
    %v2677 = vsel %vm130, %v2667, 0
    %v2680 = vsel %vm130, %v2668, 0
    %v2683 = vsel %vm1844, %v2674, 0
    %2685 = vmatpush.bf16.msra.mxu0 0
    %2686 = vmatpush.bf16.msra.mxu0 0
    %2687 = vmatpush.bf16.msra.mxu0 0
    %2688 = vmatpush.bf16.msra.mxu0 0
    %2689 = vmatpush.bf16.msra.mxu0 0
    %2690 = vmatpush.bf16.msra.mxu0 0
    %2691 = vmatpush.bf16.msra.mxu0 %v2683
    %2692 = vmatpush.bf16.msra.mxu0 %v2672
    %2693 = vmatmul.bf16.gmra.mxu0 %v2677
    %v2694 = vpop.f32.mrf.mxu0
    %v2695 = vadd.f32 0.0, %v2694
    %v2696 = vpop.f32.mrf.mxu0
    %v2697 = vadd.f32 0.0, %v2696
    %2698 = vmatmul.bf16.gmra.mxu0 %v2680
    %v2699 = vpop.f32.mrf.mxu0
    %v2700 = vadd.f32 0.0, %v2699
    %v2701 = vpop.f32.mrf.mxu0
    %2702 = vdwg.mxu0
    %v2703 = vpack.c.bf16 %v2697, %v2695
    %v2704 = vpack.c.bf16 %v2700, %v2700
    %v2705 = vpack.c.bf16 %v1315, %v1315
    %v2707 = vsel %vm1322, %v2703, 0
    %v2710 = vsel %vm1322, %v2704, 0
    %v2713 = vsel %vm1844, %v2705, 0
    %2715 = vmatpush.bf16.msra.mxu0 0
    %2716 = vmatpush.bf16.msra.mxu0 0
    %2717 = vmatpush.bf16.msra.mxu0 0
    %2718 = vmatpush.bf16.msra.mxu0 0
    %2719 = vmatpush.bf16.msra.mxu0 0
    %2720 = vmatpush.bf16.msra.mxu0 0
    %2721 = vmatpush.bf16.msra.mxu0 0
    %2722 = vmatpush.bf16.msra.mxu0 %v2713
    %2723 = vmatmul.bf16.gmra.mxu0 %v2707
    %v2724 = vpop.f32.mrf.mxu0
    %v2725 = vadd.f32 0.0, %v2724
    %v2726 = vpop.f32.mrf.mxu0
    %v2727 = vadd.f32 0.0, %v2726
    %2728 = vmatmul.bf16.gmra.mxu0 %v2710
    %v2729 = vpop.f32.mrf.mxu0
    %v2730 = vadd.f32 0.0, %v2729
    %v2731 = vpop.f32.mrf.mxu0
    %2732 = vdwg.mxu0
    %v2734 = vsel %vm1322, %v1866, 0
    %v2737 = vsel %vm1322, %v1867, 0
    %v2740 = vsel %vm1844, %v1868, 0
    %2742 = vmatpush.bf16.msra.mxu0 0
    %2743 = vmatpush.bf16.msra.mxu0 0
    %2744 = vmatpush.bf16.msra.mxu0 0
    %2745 = vmatpush.bf16.msra.mxu0 0
    %2746 = vmatpush.bf16.msra.mxu0 0
    %2747 = vmatpush.bf16.msra.mxu0 0
    %2748 = vmatpush.bf16.msra.mxu0 0
    %2749 = vmatpush.bf16.msra.mxu0 %v2740
    %2750 = vmatmul.bf16.gmra.mxu0 %v2734
    %v2751 = vpop.f32.mrf.mxu0
    %v2752 = vadd.f32 %v2725, %v2751
    %v2753 = vpop.f32.mrf.mxu0
    %v2754 = vadd.f32 %v2727, %v2753
    %2755 = vmatmul.bf16.gmra.mxu0 %v2737
    %v2756 = vpop.f32.mrf.mxu0
    %v2757 = vadd.f32 %v2730, %v2756
    %v2758 = vpop.f32.mrf.mxu0
    %2759 = vdwg.mxu0
    %2760 = vrot.lane.b32.xlu0 %v1242, 112
    %v2761 = vpop.permute.xlu0 %2760
    %2762 = vrot.lane.b32.xlu0 %v1243, 112
    %v2763 = vpop.permute.xlu0 %2762
    %2764 = vrot.lane.b32.xlu0 %v1244, 112
    %v2765 = vpop.permute.xlu0 %2764
    %2766 = vrot.lane.b32.xlu0 %v1245, 112
    %v2767 = vpop.permute.xlu0 %2766
    %2768 = vrot.lane.b32.xlu0 %v1246, 112
    %v2769 = vpop.permute.xlu0 %2768
    %2770 = vrot.lane.b32.xlu0 %v1247, 112
    %v2771 = vpop.permute.xlu0 %2770
    %2772 = vrot.lane.b32.xlu0 %v1248, 112
    %v2773 = vpop.permute.xlu0 %2772
    %2774 = vrot.lane.b32.xlu0 %v1249, 112
    %v2775 = vpop.permute.xlu0 %2774
    %2776 = vrot.lane.b32.xlu0 %v1250, 112
    %v2777 = vpop.permute.xlu0 %2776
    %2778 = vrot.lane.b32.xlu0 %v1251, 112
    %v2779 = vpop.permute.xlu0 %2778
    %2780 = vrot.lane.b32.xlu0 %v1252, 112
    %v2781 = vpop.permute.xlu0 %2780
    %2782 = vrot.lane.b32.xlu0 %v1253, 112
    %v2783 = vpop.permute.xlu0 %2782
    %2784 = vrot.lane.b32.xlu0 %v1254, 112
    %v2785 = vpop.permute.xlu0 %2784
    %2786 = vrot.lane.b32.xlu0 %v1255, 112
    %v2787 = vpop.permute.xlu0 %2786
    %2788 = vrot.lane.b32.xlu0 %v1256, 112
    %v2789 = vpop.permute.xlu0 %2788
    %2790 = vrot.lane.b32.xlu0 %v1257, 112
    %v2791 = vpop.permute.xlu0 %2790
    %2792 = vrot.lane.b32.xlu0 %v1258, 112
    %v2793 = vpop.permute.xlu0 %2792
    %2794 = vrot.lane.b32.xlu0 %v1259, 112
    %v2795 = vpop.permute.xlu0 %2794
    %2796 = vrot.lane.b32.xlu0 %v1260, 112
    %v2797 = vpop.permute.xlu0 %2796
    %2798 = vrot.lane.b32.xlu0 %v1261, 112
    %v2799 = vpop.permute.xlu0 %2798
    %2800 = vrot.lane.b32.xlu0 %v1262, 112
    %v2801 = vpop.permute.xlu0 %2800
    %2802 = vrot.lane.b32.xlu0 %v1263, 112
    %v2803 = vpop.permute.xlu0 %2802
    %2804 = vrot.lane.b32.xlu0 %v1264, 112
    %v2805 = vpop.permute.xlu0 %2804
    %2806 = vrot.lane.b32.xlu0 %v1265, 112
    %v2807 = vpop.permute.xlu0 %2806
    %2808 = vrot.lane.b32.xlu0 %v1266, 112
    %v2809 = vpop.permute.xlu0 %2808
    %2810 = vrot.lane.b32.xlu0 %v1267, 112
    %v2811 = vpop.permute.xlu0 %2810
    %2812 = vrot.lane.b32.xlu0 %v1268, 112
    %v2813 = vpop.permute.xlu0 %2812
    %2814 = vrot.lane.b32.xlu0 %v1269, 112
    %v2815 = vpop.permute.xlu0 %2814
    %2816 = vrot.lane.b32.xlu0 %v1270, 112
    %v2817 = vpop.permute.xlu0 %2816
    %2818 = vrot.lane.b32.xlu0 %v1271, 112
    %v2819 = vpop.permute.xlu0 %2818
    %2820 = vrot.lane.b32.xlu0 %v1272, 112
    %v2821 = vpop.permute.xlu0 %2820
    %2822 = vrot.lane.b32.xlu0 %v1273, 112
    %v2823 = vpop.permute.xlu0 %2822
    %2824 = vrot.lane.b32.xlu0 %v1274, 112
    %v2825 = vpop.permute.xlu0 %2824
    %2826 = vrot.lane.b32.xlu0 %v1275, 112
    %v2827 = vpop.permute.xlu0 %2826
    %2828 = vrot.lane.b32.xlu0 %v1276, 112
    %v2829 = vpop.permute.xlu0 %2828
    %2830 = vrot.lane.b32.xlu0 %v1277, 112
    %v2831 = vpop.permute.xlu0 %2830
    %2832 = vrot.lane.b32.xlu0 %v1278, 112
    %v2833 = vpop.permute.xlu0 %2832
    %2834 = vrot.lane.b32.xlu0 %v1279, 112
    %v2835 = vpop.permute.xlu0 %2834
    %2836 = vrot.lane.b32.xlu0 %v1280, 112
    %v2837 = vpop.permute.xlu0 %2836
    %2838 = vrot.lane.b32.xlu0 %v1281, 112
    %v2839 = vpop.permute.xlu0 %2838
    %2840 = vrot.lane.b32.xlu0 %v1282, 112
    %v2841 = vpop.permute.xlu0 %2840
    %2842 = vrot.lane.b32.xlu0 %v1283, 112
    %v2843 = vpop.permute.xlu0 %2842
    %2844 = vrot.lane.b32.xlu0 %v1284, 112
    %v2845 = vpop.permute.xlu0 %2844
    %2846 = vrot.lane.b32.xlu0 %v1285, 112
    %v2847 = vpop.permute.xlu0 %2846
    %2848 = vrot.lane.b32.xlu0 %v1286, 112
    %v2849 = vpop.permute.xlu0 %2848
    %2850 = vrot.lane.b32.xlu0 %v1287, 112
    %v2851 = vpop.permute.xlu0 %2850
    %2852 = vrot.lane.b32.xlu0 %v1288, 112
    %v2853 = vpop.permute.xlu0 %2852
    %2854 = vrot.lane.b32.xlu0 %v1289, 112
    %v2855 = vpop.permute.xlu0 %2854
    %2856 = vrot.lane.b32.xlu0 %v1290, 112
    %v2857 = vpop.permute.xlu0 %2856
    %2858 = vrot.lane.b32.xlu0 %v1291, 112
    %v2859 = vpop.permute.xlu0 %2858
    %2860 = vrot.lane.b32.xlu0 %v1292, 112
    %v2861 = vpop.permute.xlu0 %2860
    %2862 = vrot.lane.b32.xlu0 %v1293, 112
    %v2863 = vpop.permute.xlu0 %2862
    %2864 = vrot.lane.b32.xlu0 %v1294, 112
    %v2865 = vpop.permute.xlu0 %2864
    %2866 = vrot.lane.b32.xlu0 %v1295, 112
    %v2867 = vpop.permute.xlu0 %2866
    %2868 = vrot.lane.b32.xlu0 %v1296, 112
    %v2869 = vpop.permute.xlu0 %2868
    %2870 = vrot.lane.b32.xlu0 %v1297, 112
    %v2871 = vpop.permute.xlu0 %2870
    %2872 = vrot.lane.b32.xlu0 %v1298, 112
    %v2873 = vpop.permute.xlu0 %2872
    %2874 = vrot.lane.b32.xlu0 %v1299, 112
    %v2875 = vpop.permute.xlu0 %2874
    %2876 = vrot.lane.b32.xlu0 %v1300, 112
    %v2877 = vpop.permute.xlu0 %2876
    %2878 = vrot.lane.b32.xlu0 %v1301, 112
    %v2879 = vpop.permute.xlu0 %2878
    %2880 = vrot.lane.b32.xlu0 %v1302, 112
    %v2881 = vpop.permute.xlu0 %2880
    %2882 = vrot.lane.b32.xlu0 %v1303, 112
    %v2883 = vpop.permute.xlu0 %2882
    %2884 = vrot.lane.b32.xlu0 %v1304, 112
    %v2885 = vpop.permute.xlu0 %2884
    %2886 = vrot.lane.b32.xlu0 %v1305, 112
    %v2887 = vpop.permute.xlu0 %2886
    %2888 = vrot.lane.b32.xlu0 %v1306, 112
    %v2889 = vpop.permute.xlu0 %2888
    %2890 = vrot.lane.b32.xlu0 %v1307, 112
    %v2891 = vpop.permute.xlu0 %2890
    %2892 = vrot.lane.b32.xlu0 %v1308, 112
    %v2893 = vpop.permute.xlu0 %2892
    %2894 = vrot.lane.b32.xlu0 %v1309, 112
    %v2895 = vpop.permute.xlu0 %2894
    %2896 = vrot.lane.b32.xlu0 %v1310, 112
    %v2897 = vpop.permute.xlu0 %2896
    %2898 = vrot.lane.b32.xlu0 %v1311, 112
    %v2899 = vpop.permute.xlu0 %2898
    %2900 = vrot.lane.b32.xlu0 %v1312, 112
    %v2901 = vpop.permute.xlu0 %2900
    %2902 = vrot.lane.b32.xlu0 %v1313, 112
    %v2903 = vpop.permute.xlu0 %2902
    %v2976 = vsel %vm1322, %v2761, 0.0
    %2977 = vadd.xlane.f32.xlu0 %v2976
    %v2978 = vpop.xlane.xlu0 %2977
    %v2979 = vsel %vm1322, %v2763, 0.0
    %2980 = vadd.xlane.f32.xlu0 %v2979
    %v2981 = vpop.xlane.xlu0 %2980
    %v2982 = vsel %vm1322, %v2765, 0.0
    %2983 = vadd.xlane.f32.xlu0 %v2982
    %v2984 = vpop.xlane.xlu0 %2983
    %v2985 = vsel %vm1322, %v2767, 0.0
    %2986 = vadd.xlane.f32.xlu0 %v2985
    %v2987 = vpop.xlane.xlu0 %2986
    %v2988 = vsel %vm1322, %v2769, 0.0
    %2989 = vadd.xlane.f32.xlu0 %v2988
    %v2990 = vpop.xlane.xlu0 %2989
    %v2991 = vsel %vm1322, %v2771, 0.0
    %2992 = vadd.xlane.f32.xlu0 %v2991
    %v2993 = vpop.xlane.xlu0 %2992
    %v2994 = vsel %vm1322, %v2773, 0.0
    %2995 = vadd.xlane.f32.xlu0 %v2994
    %v2996 = vpop.xlane.xlu0 %2995
    %v2997 = vsel %vm1322, %v2775, 0.0
    %2998 = vadd.xlane.f32.xlu0 %v2997
    %v2999 = vpop.xlane.xlu0 %2998
    %v3000 = vsel %vm1322, %v2777, 0.0
    %3001 = vadd.xlane.f32.xlu0 %v3000
    %v3002 = vpop.xlane.xlu0 %3001
    %v3003 = vsel %vm1322, %v2779, 0.0
    %3004 = vadd.xlane.f32.xlu0 %v3003
    %v3005 = vpop.xlane.xlu0 %3004
    %v3006 = vsel %vm1322, %v2781, 0.0
    %3007 = vadd.xlane.f32.xlu0 %v3006
    %v3008 = vpop.xlane.xlu0 %3007
    %v3009 = vsel %vm1322, %v2783, 0.0
    %3010 = vadd.xlane.f32.xlu0 %v3009
    %v3011 = vpop.xlane.xlu0 %3010
    %v3012 = vsel %vm1322, %v2785, 0.0
    %3013 = vadd.xlane.f32.xlu0 %v3012
    %v3014 = vpop.xlane.xlu0 %3013
    %v3015 = vsel %vm1322, %v2787, 0.0
    %3016 = vadd.xlane.f32.xlu0 %v3015
    %v3017 = vpop.xlane.xlu0 %3016
    %v3018 = vsel %vm1322, %v2789, 0.0
    %3019 = vadd.xlane.f32.xlu0 %v3018
    %v3020 = vpop.xlane.xlu0 %3019
    %v3021 = vsel %vm1322, %v2791, 0.0
    %3022 = vadd.xlane.f32.xlu0 %v3021
    %v3023 = vpop.xlane.xlu0 %3022
    %v3024 = vsel %vm1322, %v2793, 0.0
    %3025 = vadd.xlane.f32.xlu0 %v3024
    %v3026 = vpop.xlane.xlu0 %3025
    %v3027 = vsel %vm1322, %v2795, 0.0
    %3028 = vadd.xlane.f32.xlu0 %v3027
    %v3029 = vpop.xlane.xlu0 %3028
    %v3030 = vsel %vm1322, %v2797, 0.0
    %3031 = vadd.xlane.f32.xlu0 %v3030
    %v3032 = vpop.xlane.xlu0 %3031
    %v3033 = vsel %vm1322, %v2799, 0.0
    %3034 = vadd.xlane.f32.xlu0 %v3033
    %v3035 = vpop.xlane.xlu0 %3034
    %v3036 = vsel %vm1322, %v2801, 0.0
    %3037 = vadd.xlane.f32.xlu0 %v3036
    %v3038 = vpop.xlane.xlu0 %3037
    %v3039 = vsel %vm1322, %v2803, 0.0
    %3040 = vadd.xlane.f32.xlu0 %v3039
    %v3041 = vpop.xlane.xlu0 %3040
    %v3042 = vsel %vm1322, %v2805, 0.0
    %3043 = vadd.xlane.f32.xlu0 %v3042
    %v3044 = vpop.xlane.xlu0 %3043
    %v3045 = vsel %vm1322, %v2807, 0.0
    %3046 = vadd.xlane.f32.xlu0 %v3045
    %v3047 = vpop.xlane.xlu0 %3046
    %v3048 = vsel %vm1322, %v2809, 0.0
    %3049 = vadd.xlane.f32.xlu0 %v3048
    %v3050 = vpop.xlane.xlu0 %3049
    %v3051 = vsel %vm1322, %v2811, 0.0
    %3052 = vadd.xlane.f32.xlu0 %v3051
    %v3053 = vpop.xlane.xlu0 %3052
    %v3054 = vsel %vm1322, %v2813, 0.0
    %3055 = vadd.xlane.f32.xlu0 %v3054
    %v3056 = vpop.xlane.xlu0 %3055
    %v3057 = vsel %vm1322, %v2815, 0.0
    %3058 = vadd.xlane.f32.xlu0 %v3057
    %v3059 = vpop.xlane.xlu0 %3058
    %v3060 = vsel %vm1322, %v2817, 0.0
    %3061 = vadd.xlane.f32.xlu0 %v3060
    %v3062 = vpop.xlane.xlu0 %3061
    %v3063 = vsel %vm1322, %v2819, 0.0
    %3064 = vadd.xlane.f32.xlu0 %v3063
    %v3065 = vpop.xlane.xlu0 %3064
    %v3066 = vsel %vm1322, %v2821, 0.0
    %3067 = vadd.xlane.f32.xlu0 %v3066
    %v3068 = vpop.xlane.xlu0 %3067
    %v3069 = vsel %vm1322, %v2823, 0.0
    %3070 = vadd.xlane.f32.xlu0 %v3069
    %v3071 = vpop.xlane.xlu0 %3070
    %v3072 = vsel %vm1322, %v2825, 0.0
    %3073 = vadd.xlane.f32.xlu0 %v3072
    %v3074 = vpop.xlane.xlu0 %3073
    %v3075 = vsel %vm1322, %v2827, 0.0
    %3076 = vadd.xlane.f32.xlu0 %v3075
    %v3077 = vpop.xlane.xlu0 %3076
    %v3078 = vsel %vm1322, %v2829, 0.0
    %3079 = vadd.xlane.f32.xlu0 %v3078
    %v3080 = vpop.xlane.xlu0 %3079
    %v3081 = vsel %vm1322, %v2831, 0.0
    %3082 = vadd.xlane.f32.xlu0 %v3081
    %v3083 = vpop.xlane.xlu0 %3082
    %v3084 = vsel %vm1322, %v2833, 0.0
    %3085 = vadd.xlane.f32.xlu0 %v3084
    %v3086 = vpop.xlane.xlu0 %3085
    %v3087 = vsel %vm1322, %v2835, 0.0
    %3088 = vadd.xlane.f32.xlu0 %v3087
    %v3089 = vpop.xlane.xlu0 %3088
    %v3090 = vsel %vm1322, %v2837, 0.0
    %3091 = vadd.xlane.f32.xlu0 %v3090
    %v3092 = vpop.xlane.xlu0 %3091
    %v3093 = vsel %vm1322, %v2839, 0.0
    %3094 = vadd.xlane.f32.xlu0 %v3093
    %v3095 = vpop.xlane.xlu0 %3094
    %v3096 = vsel %vm1322, %v2841, 0.0
    %3097 = vadd.xlane.f32.xlu0 %v3096
    %v3098 = vpop.xlane.xlu0 %3097
    %v3099 = vsel %vm1322, %v2843, 0.0
    %3100 = vadd.xlane.f32.xlu0 %v3099
    %v3101 = vpop.xlane.xlu0 %3100
    %v3102 = vsel %vm1322, %v2845, 0.0
    %3103 = vadd.xlane.f32.xlu0 %v3102
    %v3104 = vpop.xlane.xlu0 %3103
    %v3105 = vsel %vm1322, %v2847, 0.0
    %3106 = vadd.xlane.f32.xlu0 %v3105
    %v3107 = vpop.xlane.xlu0 %3106
    %v3108 = vsel %vm1322, %v2849, 0.0
    %3109 = vadd.xlane.f32.xlu0 %v3108
    %v3110 = vpop.xlane.xlu0 %3109
    %v3111 = vsel %vm1322, %v2851, 0.0
    %3112 = vadd.xlane.f32.xlu0 %v3111
    %v3113 = vpop.xlane.xlu0 %3112
    %v3114 = vsel %vm1322, %v2853, 0.0
    %3115 = vadd.xlane.f32.xlu0 %v3114
    %v3116 = vpop.xlane.xlu0 %3115
    %v3117 = vsel %vm1322, %v2855, 0.0
    %3118 = vadd.xlane.f32.xlu0 %v3117
    %v3119 = vpop.xlane.xlu0 %3118
    %v3120 = vsel %vm1322, %v2857, 0.0
    %3121 = vadd.xlane.f32.xlu0 %v3120
    %v3122 = vpop.xlane.xlu0 %3121
    %v3123 = vsel %vm1322, %v2859, 0.0
    %3124 = vadd.xlane.f32.xlu0 %v3123
    %v3125 = vpop.xlane.xlu0 %3124
    %v3126 = vsel %vm1322, %v2861, 0.0
    %3127 = vadd.xlane.f32.xlu0 %v3126
    %v3128 = vpop.xlane.xlu0 %3127
    %v3129 = vsel %vm1322, %v2863, 0.0
    %3130 = vadd.xlane.f32.xlu0 %v3129
    %v3131 = vpop.xlane.xlu0 %3130
    %v3132 = vsel %vm1322, %v2865, 0.0
    %3133 = vadd.xlane.f32.xlu0 %v3132
    %v3134 = vpop.xlane.xlu0 %3133
    %v3135 = vsel %vm1322, %v2867, 0.0
    %3136 = vadd.xlane.f32.xlu0 %v3135
    %v3137 = vpop.xlane.xlu0 %3136
    %v3138 = vsel %vm1322, %v2869, 0.0
    %3139 = vadd.xlane.f32.xlu0 %v3138
    %v3140 = vpop.xlane.xlu0 %3139
    %v3141 = vsel %vm1322, %v2871, 0.0
    %3142 = vadd.xlane.f32.xlu0 %v3141
    %v3143 = vpop.xlane.xlu0 %3142
    %v3144 = vsel %vm1322, %v2873, 0.0
    %3145 = vadd.xlane.f32.xlu0 %v3144
    %v3146 = vpop.xlane.xlu0 %3145
    %v3147 = vsel %vm1322, %v2875, 0.0
    %3148 = vadd.xlane.f32.xlu0 %v3147
    %v3149 = vpop.xlane.xlu0 %3148
    %v3150 = vsel %vm1322, %v2877, 0.0
    %3151 = vadd.xlane.f32.xlu0 %v3150
    %v3152 = vpop.xlane.xlu0 %3151
    %v3153 = vsel %vm1322, %v2879, 0.0
    %3154 = vadd.xlane.f32.xlu0 %v3153
    %v3155 = vpop.xlane.xlu0 %3154
    %v3156 = vsel %vm1322, %v2881, 0.0
    %3157 = vadd.xlane.f32.xlu0 %v3156
    %v3158 = vpop.xlane.xlu0 %3157
    %v3159 = vsel %vm1322, %v2883, 0.0
    %3160 = vadd.xlane.f32.xlu0 %v3159
    %v3161 = vpop.xlane.xlu0 %3160
    %v3162 = vsel %vm1322, %v2885, 0.0
    %3163 = vadd.xlane.f32.xlu0 %v3162
    %v3164 = vpop.xlane.xlu0 %3163
    %v3165 = vsel %vm1322, %v2887, 0.0
    %3166 = vadd.xlane.f32.xlu0 %v3165
    %v3167 = vpop.xlane.xlu0 %3166
    %v3168 = vsel %vm1322, %v2889, 0.0
    %3169 = vadd.xlane.f32.xlu0 %v3168
    %v3170 = vpop.xlane.xlu0 %3169
    %v3171 = vsel %vm1322, %v2891, 0.0
    %3172 = vadd.xlane.f32.xlu0 %v3171
    %v3173 = vpop.xlane.xlu0 %3172
    %v3174 = vsel %vm1322, %v2893, 0.0
    %3175 = vadd.xlane.f32.xlu0 %v3174
    %v3176 = vpop.xlane.xlu0 %3175
    %v3177 = vsel %vm1322, %v2895, 0.0
    %3178 = vadd.xlane.f32.xlu0 %v3177
    %v3179 = vpop.xlane.xlu0 %3178
    %v3180 = vsel %vm1322, %v2897, 0.0
    %3181 = vadd.xlane.f32.xlu0 %v3180
    %v3182 = vpop.xlane.xlu0 %3181
    %v3183 = vsel %vm1322, %v2899, 0.0
    %3184 = vadd.xlane.f32.xlu0 %v3183
    %v3185 = vpop.xlane.xlu0 %3184
    %v3186 = vsel %vm1322, %v2901, 0.0
    %3187 = vadd.xlane.f32.xlu0 %v3186
    %v3188 = vpop.xlane.xlu0 %3187
    %v3189 = vsel %vm1322, %v2903, 0.0
    %3190 = vadd.xlane.f32.xlu0 %v3189
    %v3191 = vpop.xlane.xlu0 %3190
    %3192 = vrot.lane.b32.xlu0 %v1318, 112
    %v3193 = vpop.permute.xlu0 %3192
    %3194 = vrot.lane.b32.xlu0 %v1319, 112
    %v3195 = vpop.permute.xlu0 %3194
    %3196 = vrot.lane.b32.xlu0 %v1320, 112
    %v3197 = vpop.permute.xlu0 %3196
    %3198 = vrot.lane.b32.xlu0 %v1321, 112
    %v3199 = vpop.permute.xlu0 %3198
    %v3272 = vperm.slane %v2978, %v1612
    %v3273 = vperm.slane %v2981, %v1614
    %v3274 = vsel %vm1616, %v3273, %v3272
    %v3275 = vperm.slane %v2984, %v1618
    %v3276 = vsel %vm1620, %v3275, %v3274
    %v3277 = vperm.slane %v2987, %v1612
    %v3278 = vperm.slane %v2990, %v1614
    %v3279 = vsel %vm1616, %v3278, %v3277
    %v3280 = vperm.slane %v2993, %v1618
    %v3281 = vsel %vm1620, %v3280, %v3279
    %v3282 = vperm.slane %v2996, %v1612
    %v3283 = vperm.slane %v2999, %v1614
    %v3284 = vsel %vm1616, %v3283, %v3282
    %v3285 = vperm.slane %v3002, %v1618
    %v3286 = vsel %vm1620, %v3285, %v3284
    %v3287 = vperm.slane %v3005, %v1612
    %v3288 = vperm.slane %v3008, %v1614
    %v3289 = vsel %vm1616, %v3288, %v3287
    %v3290 = vperm.slane %v3011, %v1618
    %v3291 = vsel %vm1620, %v3290, %v3289
    %v3292 = vperm.slane %v3014, %v1612
    %v3293 = vperm.slane %v3017, %v1614
    %v3294 = vsel %vm1616, %v3293, %v3292
    %v3295 = vperm.slane %v3020, %v1618
    %v3296 = vsel %vm1620, %v3295, %v3294
    %v3297 = vperm.slane %v3023, %v1612
    %v3298 = vperm.slane %v3026, %v1614
    %v3299 = vsel %vm1616, %v3298, %v3297
    %v3300 = vperm.slane %v3029, %v1618
    %v3301 = vsel %vm1620, %v3300, %v3299
    %v3302 = vperm.slane %v3032, %v1612
    %v3303 = vperm.slane %v3035, %v1614
    %v3304 = vsel %vm1616, %v3303, %v3302
    %v3305 = vperm.slane %v3038, %v1618
    %v3306 = vsel %vm1620, %v3305, %v3304
    %v3307 = vperm.slane %v3041, %v1612
    %v3308 = vperm.slane %v3044, %v1614
    %v3309 = vsel %vm1616, %v3308, %v3307
    %v3310 = vperm.slane %v3047, %v1618
    %v3311 = vsel %vm1620, %v3310, %v3309
    %v3312 = vperm.slane %v3050, %v1612
    %v3313 = vperm.slane %v3053, %v1614
    %v3314 = vsel %vm1616, %v3313, %v3312
    %v3315 = vperm.slane %v3056, %v1618
    %v3316 = vsel %vm1620, %v3315, %v3314
    %v3317 = vperm.slane %v3059, %v1612
    %v3318 = vperm.slane %v3062, %v1614
    %v3319 = vsel %vm1616, %v3318, %v3317
    %v3320 = vperm.slane %v3065, %v1618
    %v3321 = vsel %vm1620, %v3320, %v3319
    %v3322 = vperm.slane %v3068, %v1612
    %v3323 = vperm.slane %v3071, %v1614
    %v3324 = vsel %vm1616, %v3323, %v3322
    %v3325 = vperm.slane %v3074, %v1618
    %v3326 = vsel %vm1620, %v3325, %v3324
    %v3327 = vperm.slane %v3077, %v1612
    %v3328 = vperm.slane %v3080, %v1614
    %v3329 = vsel %vm1616, %v3328, %v3327
    %v3330 = vperm.slane %v3083, %v1618
    %v3331 = vsel %vm1620, %v3330, %v3329
    %v3332 = vperm.slane %v3086, %v1612
    %v3333 = vperm.slane %v3089, %v1614
    %v3334 = vsel %vm1616, %v3333, %v3332
    %v3335 = vperm.slane %v3092, %v1618
    %v3336 = vsel %vm1620, %v3335, %v3334
    %v3337 = vperm.slane %v3095, %v1612
    %v3338 = vperm.slane %v3098, %v1614
    %v3339 = vsel %vm1616, %v3338, %v3337
    %v3340 = vperm.slane %v3101, %v1618
    %v3341 = vsel %vm1620, %v3340, %v3339
    %v3342 = vperm.slane %v3104, %v1612
    %v3343 = vperm.slane %v3107, %v1614
    %v3344 = vsel %vm1616, %v3343, %v3342
    %v3345 = vperm.slane %v3110, %v1618
    %v3346 = vsel %vm1620, %v3345, %v3344
    %v3347 = vperm.slane %v3113, %v1612
    %v3348 = vperm.slane %v3116, %v1614
    %v3349 = vsel %vm1616, %v3348, %v3347
    %v3350 = vperm.slane %v3119, %v1618
    %v3351 = vsel %vm1620, %v3350, %v3349
    %v3352 = vperm.slane %v3122, %v1612
    %v3353 = vperm.slane %v3125, %v1614
    %v3354 = vsel %vm1616, %v3353, %v3352
    %v3355 = vperm.slane %v3128, %v1618
    %v3356 = vsel %vm1620, %v3355, %v3354
    %v3357 = vperm.slane %v3131, %v1612
    %v3358 = vperm.slane %v3134, %v1614
    %v3359 = vsel %vm1616, %v3358, %v3357
    %v3360 = vperm.slane %v3137, %v1618
    %v3361 = vsel %vm1620, %v3360, %v3359
    %v3362 = vperm.slane %v3140, %v1612
    %v3363 = vperm.slane %v3143, %v1614
    %v3364 = vsel %vm1616, %v3363, %v3362
    %v3365 = vperm.slane %v3146, %v1618
    %v3366 = vsel %vm1620, %v3365, %v3364
    %v3367 = vperm.slane %v3149, %v1612
    %v3368 = vperm.slane %v3152, %v1614
    %v3369 = vsel %vm1616, %v3368, %v3367
    %v3370 = vperm.slane %v3155, %v1618
    %v3371 = vsel %vm1620, %v3370, %v3369
    %v3372 = vperm.slane %v3158, %v1612
    %v3373 = vperm.slane %v3161, %v1614
    %v3374 = vsel %vm1616, %v3373, %v3372
    %v3375 = vperm.slane %v3164, %v1618
    %v3376 = vsel %vm1620, %v3375, %v3374
    %v3377 = vperm.slane %v3167, %v1612
    %v3378 = vperm.slane %v3170, %v1614
    %v3379 = vsel %vm1616, %v3378, %v3377
    %v3380 = vperm.slane %v3173, %v1618
    %v3381 = vsel %vm1620, %v3380, %v3379
    %v3382 = vperm.slane %v3176, %v1612
    %v3383 = vperm.slane %v3179, %v1614
    %v3384 = vsel %vm1616, %v3383, %v3382
    %v3385 = vperm.slane %v3182, %v1618
    %v3386 = vsel %vm1620, %v3385, %v3384
    %v3387 = vperm.slane %v3185, %v1612
    %v3388 = vperm.slane %v3188, %v1614
    %v3389 = vsel %vm1616, %v3388, %v3387
    %v3390 = vperm.slane %v3191, %v1618
    %v3391 = vsel %vm1620, %v3390, %v3389
    %v3392 = vsel %vm1737, %v3281, %v3276
    %v3393 = vsel %vm1739, %v3286, %v3392
    %v3394 = vsel %vm1741, %v3291, %v3393
    %v3395 = vsel %vm1743, %v3296, %v3394
    %v3396 = vsel %vm1745, %v3301, %v3395
    %v3397 = vsel %vm1747, %v3306, %v3396
    %v3398 = vsel %vm1749, %v3311, %v3397
    %v3399 = vsel %vm1737, %v3321, %v3316
    %v3400 = vsel %vm1739, %v3326, %v3399
    %v3401 = vsel %vm1741, %v3331, %v3400
    %v3402 = vsel %vm1743, %v3336, %v3401
    %v3403 = vsel %vm1745, %v3341, %v3402
    %v3404 = vsel %vm1747, %v3346, %v3403
    %v3405 = vsel %vm1749, %v3351, %v3404
    %v3406 = vsel %vm1737, %v3361, %v3356
    %v3407 = vsel %vm1739, %v3366, %v3406
    %v3408 = vsel %vm1741, %v3371, %v3407
    %v3409 = vsel %vm1743, %v3376, %v3408
    %v3410 = vsel %vm1745, %v3381, %v3409
    %v3411 = vsel %vm1747, %v3386, %v3410
    %v3412 = vsel %vm1749, %v3391, %v3411
    %v3417 = vsel %vm1322, %v3193, 0
    %v3420 = vsel %vm1322, %v3195, 0
    %v3423 = vsel %vm1322, %v3197, 0
    %v3426 = vsel %vm1322, %v3199, 0
    %3428 = vmatpush.bf16.xpose.msra.mxu0 0
    %3429 = vmatpush.bf16.xpose.msra.mxu0 0
    %3430 = vmatpush.bf16.xpose.msra.mxu0 0
    %3431 = vmatpush.bf16.xpose.msra.mxu0 0
    %3432 = vmatpush.bf16.xpose.msra.mxu0 0
    %3433 = vmatpush.bf16.xpose.msra.mxu0 0
    %3434 = vmatpush.bf16.xpose.msra.mxu0 %v3426
    %3435 = vmatpush.bf16.xpose.msra.mxu0 %v3423
    %3436 = vmatmul.bf16.gmra.mxu0 %v3417
    %v3437 = vpop.f32.mrf.mxu0
    %v3438 = vadd.f32 %v3398, %v3437
    %v3439 = vpop.f32.mrf.mxu0
    %v3440 = vadd.f32 %v3405, %v3439
    %3441 = vmatmul.bf16.gmra.mxu0 %v3420
    %v3442 = vpop.f32.mrf.mxu0
    %v3443 = vadd.f32 %v3412, %v3442
    %v3444 = vpop.f32.mrf.mxu0
    %3445 = vdwg.mxu0
    %v3446 = vmul.f32 %v3438, 0.35355338
    %v3447 = vmul.f32 %v3440, 0.35355338
    %v3448 = vmul.f32 %v3443, 0.35355338
    %v3449 = vsel %vm130, %v3446, -inf
    %3450 = vmax.xlane.f32.xlu0 %v3449
    %v3451 = vpop.xlane.xlu0 %3450
    %v3452 = vsel %vm130, %v3447, -inf
    %3453 = vmax.xlane.f32.xlu0 %v3452
    %v3454 = vpop.xlane.xlu0 %3453
    %v3455 = vsel %vm130, %v3448, -inf
    %3456 = vmax.xlane.f32.xlu0 %v3455
    %v3457 = vpop.xlane.xlu0 %3456
    %v3458 = vsub.f32 %v3446, %v3451
    %v3459 = vsub.f32 %v3447, %v3454
    %v3460 = vsub.f32 %v3448, %v3457
    %v3461 = vmul.f32 %v3458, 1.442695
    %v3462 = vpow.pop %v3461
    %v3463 = vmul.f32 %v3459, 1.442695
    %v3464 = vpow.pop %v3463
    %v3465 = vmul.f32 %v3460, 1.442695
    %v3466 = vpow.pop %v3465
    %v3467 = vsel %vm130, %v3462, 0.0
    %3468 = vadd.xlane.f32.xlu0 %v3467
    %v3469 = vpop.xlane.xlu0 %3468
    %v3470 = vsel %vm130, %v3464, 0.0
    %3471 = vadd.xlane.f32.xlu0 %v3470
    %v3472 = vpop.xlane.xlu0 %3471
    %v3473 = vsel %vm130, %v3466, 0.0
    %3474 = vadd.xlane.f32.xlu0 %v3473
    %v3475 = vpop.xlane.xlu0 %3474
    %v3476 = vrcp.pop %v3469
    %v3477 = vrcp.pop %v3472
    %v3478 = vrcp.pop %v3475
    %v3479 = vmul.f32 %v3462, %v3476
    %v3480 = vmul.f32 %v3464, %v3477
    %v3481 = vmul.f32 %v3466, %v3478
    %v3482 = vpack.c.bf16 %v3480, %v3479
    %v3483 = vpack.c.bf16 %v3481, %v3481
    %3484 = vrot.lane.b32.xlu0 %v1836, 112
    %v3485 = vpop.permute.xlu0 %3484
    %3486 = vrot.lane.b32.xlu0 %v1837, 112
    %v3487 = vpop.permute.xlu0 %3486
    %v3490 = vsel %vm130, %v3482, 0
    %v3493 = vsel %vm130, %v3483, 0
    %v3496 = vsel %vm1844, %v3487, 0
    %3498 = vmatpush.bf16.msra.mxu0 0
    %3499 = vmatpush.bf16.msra.mxu0 0
    %3500 = vmatpush.bf16.msra.mxu0 0
    %3501 = vmatpush.bf16.msra.mxu0 0
    %3502 = vmatpush.bf16.msra.mxu0 0
    %3503 = vmatpush.bf16.msra.mxu0 0
    %3504 = vmatpush.bf16.msra.mxu0 %v3496
    %3505 = vmatpush.bf16.msra.mxu0 %v3485
    %3506 = vmatmul.bf16.gmra.mxu0 %v3490
    %v3507 = vpop.f32.mrf.mxu0
    %v3508 = vadd.f32 0.0, %v3507
    %v3509 = vpop.f32.mrf.mxu0
    %v3510 = vadd.f32 0.0, %v3509
    %3511 = vmatmul.bf16.gmra.mxu0 %v3493
    %v3512 = vpop.f32.mrf.mxu0
    %v3513 = vadd.f32 0.0, %v3512
    %v3514 = vpop.f32.mrf.mxu0
    %3515 = vdwg.mxu0
    %v3516 = vpack.c.bf16 %v3510, %v3508
    %v3517 = vpack.c.bf16 %v3513, %v3513
    %v3518 = vpack.c.bf16 %v1316, %v1316
    %v3520 = vsel %vm1322, %v3516, 0
    %v3523 = vsel %vm1322, %v3517, 0
    %v3526 = vsel %vm1844, %v3518, 0
    %3528 = vmatpush.bf16.msra.mxu0 0
    %3529 = vmatpush.bf16.msra.mxu0 0
    %3530 = vmatpush.bf16.msra.mxu0 0
    %3531 = vmatpush.bf16.msra.mxu0 0
    %3532 = vmatpush.bf16.msra.mxu0 0
    %3533 = vmatpush.bf16.msra.mxu0 0
    %3534 = vmatpush.bf16.msra.mxu0 0
    %3535 = vmatpush.bf16.msra.mxu0 %v3526
    %3536 = vmatmul.bf16.gmra.mxu0 %v3520
    %v3537 = vpop.f32.mrf.mxu0
    %v3538 = vadd.f32 0.0, %v3537
    %v3539 = vpop.f32.mrf.mxu0
    %v3540 = vadd.f32 0.0, %v3539
    %3541 = vmatmul.bf16.gmra.mxu0 %v3523
    %v3542 = vpop.f32.mrf.mxu0
    %v3543 = vadd.f32 0.0, %v3542
    %v3544 = vpop.f32.mrf.mxu0
    %3545 = vdwg.mxu0
    %v3546 = vadd.f32 %v2752, %v3538
    %v3547 = vadd.f32 %v2754, %v3540
    %v3548 = vadd.f32 %v2757, %v3543
    %3549 = vrot.lane.b32.xlu0 %v1242, 104
    %v3550 = vpop.permute.xlu0 %3549
    %3551 = vrot.lane.b32.xlu0 %v1243, 104
    %v3552 = vpop.permute.xlu0 %3551
    %3553 = vrot.lane.b32.xlu0 %v1244, 104
    %v3554 = vpop.permute.xlu0 %3553
    %3555 = vrot.lane.b32.xlu0 %v1245, 104
    %v3556 = vpop.permute.xlu0 %3555
    %3557 = vrot.lane.b32.xlu0 %v1246, 104
    %v3558 = vpop.permute.xlu0 %3557
    %3559 = vrot.lane.b32.xlu0 %v1247, 104
    %v3560 = vpop.permute.xlu0 %3559
    %3561 = vrot.lane.b32.xlu0 %v1248, 104
    %v3562 = vpop.permute.xlu0 %3561
    %3563 = vrot.lane.b32.xlu0 %v1249, 104
    %v3564 = vpop.permute.xlu0 %3563
    %3565 = vrot.lane.b32.xlu0 %v1250, 104
    %v3566 = vpop.permute.xlu0 %3565
    %3567 = vrot.lane.b32.xlu0 %v1251, 104
    %v3568 = vpop.permute.xlu0 %3567
    %3569 = vrot.lane.b32.xlu0 %v1252, 104
    %v3570 = vpop.permute.xlu0 %3569
    %3571 = vrot.lane.b32.xlu0 %v1253, 104
    %v3572 = vpop.permute.xlu0 %3571
    %3573 = vrot.lane.b32.xlu0 %v1254, 104
    %v3574 = vpop.permute.xlu0 %3573
    %3575 = vrot.lane.b32.xlu0 %v1255, 104
    %v3576 = vpop.permute.xlu0 %3575
    %3577 = vrot.lane.b32.xlu0 %v1256, 104
    %v3578 = vpop.permute.xlu0 %3577
    %3579 = vrot.lane.b32.xlu0 %v1257, 104
    %v3580 = vpop.permute.xlu0 %3579
    %3581 = vrot.lane.b32.xlu0 %v1258, 104
    %v3582 = vpop.permute.xlu0 %3581
    %3583 = vrot.lane.b32.xlu0 %v1259, 104
    %v3584 = vpop.permute.xlu0 %3583
    %3585 = vrot.lane.b32.xlu0 %v1260, 104
    %v3586 = vpop.permute.xlu0 %3585
    %3587 = vrot.lane.b32.xlu0 %v1261, 104
    %v3588 = vpop.permute.xlu0 %3587
    %3589 = vrot.lane.b32.xlu0 %v1262, 104
    %v3590 = vpop.permute.xlu0 %3589
    %3591 = vrot.lane.b32.xlu0 %v1263, 104
    %v3592 = vpop.permute.xlu0 %3591
    %3593 = vrot.lane.b32.xlu0 %v1264, 104
    %v3594 = vpop.permute.xlu0 %3593
    %3595 = vrot.lane.b32.xlu0 %v1265, 104
    %v3596 = vpop.permute.xlu0 %3595
    %3597 = vrot.lane.b32.xlu0 %v1266, 104
    %v3598 = vpop.permute.xlu0 %3597
    %3599 = vrot.lane.b32.xlu0 %v1267, 104
    %v3600 = vpop.permute.xlu0 %3599
    %3601 = vrot.lane.b32.xlu0 %v1268, 104
    %v3602 = vpop.permute.xlu0 %3601
    %3603 = vrot.lane.b32.xlu0 %v1269, 104
    %v3604 = vpop.permute.xlu0 %3603
    %3605 = vrot.lane.b32.xlu0 %v1270, 104
    %v3606 = vpop.permute.xlu0 %3605
    %3607 = vrot.lane.b32.xlu0 %v1271, 104
    %v3608 = vpop.permute.xlu0 %3607
    %3609 = vrot.lane.b32.xlu0 %v1272, 104
    %v3610 = vpop.permute.xlu0 %3609
    %3611 = vrot.lane.b32.xlu0 %v1273, 104
    %v3612 = vpop.permute.xlu0 %3611
    %3613 = vrot.lane.b32.xlu0 %v1274, 104
    %v3614 = vpop.permute.xlu0 %3613
    %3615 = vrot.lane.b32.xlu0 %v1275, 104
    %v3616 = vpop.permute.xlu0 %3615
    %3617 = vrot.lane.b32.xlu0 %v1276, 104
    %v3618 = vpop.permute.xlu0 %3617
    %3619 = vrot.lane.b32.xlu0 %v1277, 104
    %v3620 = vpop.permute.xlu0 %3619
    %3621 = vrot.lane.b32.xlu0 %v1278, 104
    %v3622 = vpop.permute.xlu0 %3621
    %3623 = vrot.lane.b32.xlu0 %v1279, 104
    %v3624 = vpop.permute.xlu0 %3623
    %3625 = vrot.lane.b32.xlu0 %v1280, 104
    %v3626 = vpop.permute.xlu0 %3625
    %3627 = vrot.lane.b32.xlu0 %v1281, 104
    %v3628 = vpop.permute.xlu0 %3627
    %3629 = vrot.lane.b32.xlu0 %v1282, 104
    %v3630 = vpop.permute.xlu0 %3629
    %3631 = vrot.lane.b32.xlu0 %v1283, 104
    %v3632 = vpop.permute.xlu0 %3631
    %3633 = vrot.lane.b32.xlu0 %v1284, 104
    %v3634 = vpop.permute.xlu0 %3633
    %3635 = vrot.lane.b32.xlu0 %v1285, 104
    %v3636 = vpop.permute.xlu0 %3635
    %3637 = vrot.lane.b32.xlu0 %v1286, 104
    %v3638 = vpop.permute.xlu0 %3637
    %3639 = vrot.lane.b32.xlu0 %v1287, 104
    %v3640 = vpop.permute.xlu0 %3639
    %3641 = vrot.lane.b32.xlu0 %v1288, 104
    %v3642 = vpop.permute.xlu0 %3641
    %3643 = vrot.lane.b32.xlu0 %v1289, 104
    %v3644 = vpop.permute.xlu0 %3643
    %3645 = vrot.lane.b32.xlu0 %v1290, 104
    %v3646 = vpop.permute.xlu0 %3645
    %3647 = vrot.lane.b32.xlu0 %v1291, 104
    %v3648 = vpop.permute.xlu0 %3647
    %3649 = vrot.lane.b32.xlu0 %v1292, 104
    %v3650 = vpop.permute.xlu0 %3649
    %3651 = vrot.lane.b32.xlu0 %v1293, 104
    %v3652 = vpop.permute.xlu0 %3651
    %3653 = vrot.lane.b32.xlu0 %v1294, 104
    %v3654 = vpop.permute.xlu0 %3653
    %3655 = vrot.lane.b32.xlu0 %v1295, 104
    %v3656 = vpop.permute.xlu0 %3655
    %3657 = vrot.lane.b32.xlu0 %v1296, 104
    %v3658 = vpop.permute.xlu0 %3657
    %3659 = vrot.lane.b32.xlu0 %v1297, 104
    %v3660 = vpop.permute.xlu0 %3659
    %3661 = vrot.lane.b32.xlu0 %v1298, 104
    %v3662 = vpop.permute.xlu0 %3661
    %3663 = vrot.lane.b32.xlu0 %v1299, 104
    %v3664 = vpop.permute.xlu0 %3663
    %3665 = vrot.lane.b32.xlu0 %v1300, 104
    %v3666 = vpop.permute.xlu0 %3665
    %3667 = vrot.lane.b32.xlu0 %v1301, 104
    %v3668 = vpop.permute.xlu0 %3667
    %3669 = vrot.lane.b32.xlu0 %v1302, 104
    %v3670 = vpop.permute.xlu0 %3669
    %3671 = vrot.lane.b32.xlu0 %v1303, 104
    %v3672 = vpop.permute.xlu0 %3671
    %3673 = vrot.lane.b32.xlu0 %v1304, 104
    %v3674 = vpop.permute.xlu0 %3673
    %3675 = vrot.lane.b32.xlu0 %v1305, 104
    %v3676 = vpop.permute.xlu0 %3675
    %3677 = vrot.lane.b32.xlu0 %v1306, 104
    %v3678 = vpop.permute.xlu0 %3677
    %3679 = vrot.lane.b32.xlu0 %v1307, 104
    %v3680 = vpop.permute.xlu0 %3679
    %3681 = vrot.lane.b32.xlu0 %v1308, 104
    %v3682 = vpop.permute.xlu0 %3681
    %3683 = vrot.lane.b32.xlu0 %v1309, 104
    %v3684 = vpop.permute.xlu0 %3683
    %3685 = vrot.lane.b32.xlu0 %v1310, 104
    %v3686 = vpop.permute.xlu0 %3685
    %3687 = vrot.lane.b32.xlu0 %v1311, 104
    %v3688 = vpop.permute.xlu0 %3687
    %3689 = vrot.lane.b32.xlu0 %v1312, 104
    %v3690 = vpop.permute.xlu0 %3689
    %3691 = vrot.lane.b32.xlu0 %v1313, 104
    %v3692 = vpop.permute.xlu0 %3691
    %v3765 = vsel %vm1322, %v3550, 0.0
    %3766 = vadd.xlane.f32.xlu0 %v3765
    %v3767 = vpop.xlane.xlu0 %3766
    %v3768 = vsel %vm1322, %v3552, 0.0
    %3769 = vadd.xlane.f32.xlu0 %v3768
    %v3770 = vpop.xlane.xlu0 %3769
    %v3771 = vsel %vm1322, %v3554, 0.0
    %3772 = vadd.xlane.f32.xlu0 %v3771
    %v3773 = vpop.xlane.xlu0 %3772
    %v3774 = vsel %vm1322, %v3556, 0.0
    %3775 = vadd.xlane.f32.xlu0 %v3774
    %v3776 = vpop.xlane.xlu0 %3775
    %v3777 = vsel %vm1322, %v3558, 0.0
    %3778 = vadd.xlane.f32.xlu0 %v3777
    %v3779 = vpop.xlane.xlu0 %3778
    %v3780 = vsel %vm1322, %v3560, 0.0
    %3781 = vadd.xlane.f32.xlu0 %v3780
    %v3782 = vpop.xlane.xlu0 %3781
    %v3783 = vsel %vm1322, %v3562, 0.0
    %3784 = vadd.xlane.f32.xlu0 %v3783
    %v3785 = vpop.xlane.xlu0 %3784
    %v3786 = vsel %vm1322, %v3564, 0.0
    %3787 = vadd.xlane.f32.xlu0 %v3786
    %v3788 = vpop.xlane.xlu0 %3787
    %v3789 = vsel %vm1322, %v3566, 0.0
    %3790 = vadd.xlane.f32.xlu0 %v3789
    %v3791 = vpop.xlane.xlu0 %3790
    %v3792 = vsel %vm1322, %v3568, 0.0
    %3793 = vadd.xlane.f32.xlu0 %v3792
    %v3794 = vpop.xlane.xlu0 %3793
    %v3795 = vsel %vm1322, %v3570, 0.0
    %3796 = vadd.xlane.f32.xlu0 %v3795
    %v3797 = vpop.xlane.xlu0 %3796
    %v3798 = vsel %vm1322, %v3572, 0.0
    %3799 = vadd.xlane.f32.xlu0 %v3798
    %v3800 = vpop.xlane.xlu0 %3799
    %v3801 = vsel %vm1322, %v3574, 0.0
    %3802 = vadd.xlane.f32.xlu0 %v3801
    %v3803 = vpop.xlane.xlu0 %3802
    %v3804 = vsel %vm1322, %v3576, 0.0
    %3805 = vadd.xlane.f32.xlu0 %v3804
    %v3806 = vpop.xlane.xlu0 %3805
    %v3807 = vsel %vm1322, %v3578, 0.0
    %3808 = vadd.xlane.f32.xlu0 %v3807
    %v3809 = vpop.xlane.xlu0 %3808
    %v3810 = vsel %vm1322, %v3580, 0.0
    %3811 = vadd.xlane.f32.xlu0 %v3810
    %v3812 = vpop.xlane.xlu0 %3811
    %v3813 = vsel %vm1322, %v3582, 0.0
    %3814 = vadd.xlane.f32.xlu0 %v3813
    %v3815 = vpop.xlane.xlu0 %3814
    %v3816 = vsel %vm1322, %v3584, 0.0
    %3817 = vadd.xlane.f32.xlu0 %v3816
    %v3818 = vpop.xlane.xlu0 %3817
    %v3819 = vsel %vm1322, %v3586, 0.0
    %3820 = vadd.xlane.f32.xlu0 %v3819
    %v3821 = vpop.xlane.xlu0 %3820
    %v3822 = vsel %vm1322, %v3588, 0.0
    %3823 = vadd.xlane.f32.xlu0 %v3822
    %v3824 = vpop.xlane.xlu0 %3823
    %v3825 = vsel %vm1322, %v3590, 0.0
    %3826 = vadd.xlane.f32.xlu0 %v3825
    %v3827 = vpop.xlane.xlu0 %3826
    %v3828 = vsel %vm1322, %v3592, 0.0
    %3829 = vadd.xlane.f32.xlu0 %v3828
    %v3830 = vpop.xlane.xlu0 %3829
    %v3831 = vsel %vm1322, %v3594, 0.0
    %3832 = vadd.xlane.f32.xlu0 %v3831
    %v3833 = vpop.xlane.xlu0 %3832
    %v3834 = vsel %vm1322, %v3596, 0.0
    %3835 = vadd.xlane.f32.xlu0 %v3834
    %v3836 = vpop.xlane.xlu0 %3835
    %v3837 = vsel %vm1322, %v3598, 0.0
    %3838 = vadd.xlane.f32.xlu0 %v3837
    %v3839 = vpop.xlane.xlu0 %3838
    %v3840 = vsel %vm1322, %v3600, 0.0
    %3841 = vadd.xlane.f32.xlu0 %v3840
    %v3842 = vpop.xlane.xlu0 %3841
    %v3843 = vsel %vm1322, %v3602, 0.0
    %3844 = vadd.xlane.f32.xlu0 %v3843
    %v3845 = vpop.xlane.xlu0 %3844
    %v3846 = vsel %vm1322, %v3604, 0.0
    %3847 = vadd.xlane.f32.xlu0 %v3846
    %v3848 = vpop.xlane.xlu0 %3847
    %v3849 = vsel %vm1322, %v3606, 0.0
    %3850 = vadd.xlane.f32.xlu0 %v3849
    %v3851 = vpop.xlane.xlu0 %3850
    %v3852 = vsel %vm1322, %v3608, 0.0
    %3853 = vadd.xlane.f32.xlu0 %v3852
    %v3854 = vpop.xlane.xlu0 %3853
    %v3855 = vsel %vm1322, %v3610, 0.0
    %3856 = vadd.xlane.f32.xlu0 %v3855
    %v3857 = vpop.xlane.xlu0 %3856
    %v3858 = vsel %vm1322, %v3612, 0.0
    %3859 = vadd.xlane.f32.xlu0 %v3858
    %v3860 = vpop.xlane.xlu0 %3859
    %v3861 = vsel %vm1322, %v3614, 0.0
    %3862 = vadd.xlane.f32.xlu0 %v3861
    %v3863 = vpop.xlane.xlu0 %3862
    %v3864 = vsel %vm1322, %v3616, 0.0
    %3865 = vadd.xlane.f32.xlu0 %v3864
    %v3866 = vpop.xlane.xlu0 %3865
    %v3867 = vsel %vm1322, %v3618, 0.0
    %3868 = vadd.xlane.f32.xlu0 %v3867
    %v3869 = vpop.xlane.xlu0 %3868
    %v3870 = vsel %vm1322, %v3620, 0.0
    %3871 = vadd.xlane.f32.xlu0 %v3870
    %v3872 = vpop.xlane.xlu0 %3871
    %v3873 = vsel %vm1322, %v3622, 0.0
    %3874 = vadd.xlane.f32.xlu0 %v3873
    %v3875 = vpop.xlane.xlu0 %3874
    %v3876 = vsel %vm1322, %v3624, 0.0
    %3877 = vadd.xlane.f32.xlu0 %v3876
    %v3878 = vpop.xlane.xlu0 %3877
    %v3879 = vsel %vm1322, %v3626, 0.0
    %3880 = vadd.xlane.f32.xlu0 %v3879
    %v3881 = vpop.xlane.xlu0 %3880
    %v3882 = vsel %vm1322, %v3628, 0.0
    %3883 = vadd.xlane.f32.xlu0 %v3882
    %v3884 = vpop.xlane.xlu0 %3883
    %v3885 = vsel %vm1322, %v3630, 0.0
    %3886 = vadd.xlane.f32.xlu0 %v3885
    %v3887 = vpop.xlane.xlu0 %3886
    %v3888 = vsel %vm1322, %v3632, 0.0
    %3889 = vadd.xlane.f32.xlu0 %v3888
    %v3890 = vpop.xlane.xlu0 %3889
    %v3891 = vsel %vm1322, %v3634, 0.0
    %3892 = vadd.xlane.f32.xlu0 %v3891
    %v3893 = vpop.xlane.xlu0 %3892
    %v3894 = vsel %vm1322, %v3636, 0.0
    %3895 = vadd.xlane.f32.xlu0 %v3894
    %v3896 = vpop.xlane.xlu0 %3895
    %v3897 = vsel %vm1322, %v3638, 0.0
    %3898 = vadd.xlane.f32.xlu0 %v3897
    %v3899 = vpop.xlane.xlu0 %3898
    %v3900 = vsel %vm1322, %v3640, 0.0
    %3901 = vadd.xlane.f32.xlu0 %v3900
    %v3902 = vpop.xlane.xlu0 %3901
    %v3903 = vsel %vm1322, %v3642, 0.0
    %3904 = vadd.xlane.f32.xlu0 %v3903
    %v3905 = vpop.xlane.xlu0 %3904
    %v3906 = vsel %vm1322, %v3644, 0.0
    %3907 = vadd.xlane.f32.xlu0 %v3906
    %v3908 = vpop.xlane.xlu0 %3907
    %v3909 = vsel %vm1322, %v3646, 0.0
    %3910 = vadd.xlane.f32.xlu0 %v3909
    %v3911 = vpop.xlane.xlu0 %3910
    %v3912 = vsel %vm1322, %v3648, 0.0
    %3913 = vadd.xlane.f32.xlu0 %v3912
    %v3914 = vpop.xlane.xlu0 %3913
    %v3915 = vsel %vm1322, %v3650, 0.0
    %3916 = vadd.xlane.f32.xlu0 %v3915
    %v3917 = vpop.xlane.xlu0 %3916
    %v3918 = vsel %vm1322, %v3652, 0.0
    %3919 = vadd.xlane.f32.xlu0 %v3918
    %v3920 = vpop.xlane.xlu0 %3919
    %v3921 = vsel %vm1322, %v3654, 0.0
    %3922 = vadd.xlane.f32.xlu0 %v3921
    %v3923 = vpop.xlane.xlu0 %3922
    %v3924 = vsel %vm1322, %v3656, 0.0
    %3925 = vadd.xlane.f32.xlu0 %v3924
    %v3926 = vpop.xlane.xlu0 %3925
    %v3927 = vsel %vm1322, %v3658, 0.0
    %3928 = vadd.xlane.f32.xlu0 %v3927
    %v3929 = vpop.xlane.xlu0 %3928
    %v3930 = vsel %vm1322, %v3660, 0.0
    %3931 = vadd.xlane.f32.xlu0 %v3930
    %v3932 = vpop.xlane.xlu0 %3931
    %v3933 = vsel %vm1322, %v3662, 0.0
    %3934 = vadd.xlane.f32.xlu0 %v3933
    %v3935 = vpop.xlane.xlu0 %3934
    %v3936 = vsel %vm1322, %v3664, 0.0
    %3937 = vadd.xlane.f32.xlu0 %v3936
    %v3938 = vpop.xlane.xlu0 %3937
    %v3939 = vsel %vm1322, %v3666, 0.0
    %3940 = vadd.xlane.f32.xlu0 %v3939
    %v3941 = vpop.xlane.xlu0 %3940
    %v3942 = vsel %vm1322, %v3668, 0.0
    %3943 = vadd.xlane.f32.xlu0 %v3942
    %v3944 = vpop.xlane.xlu0 %3943
    %v3945 = vsel %vm1322, %v3670, 0.0
    %3946 = vadd.xlane.f32.xlu0 %v3945
    %v3947 = vpop.xlane.xlu0 %3946
    %v3948 = vsel %vm1322, %v3672, 0.0
    %3949 = vadd.xlane.f32.xlu0 %v3948
    %v3950 = vpop.xlane.xlu0 %3949
    %v3951 = vsel %vm1322, %v3674, 0.0
    %3952 = vadd.xlane.f32.xlu0 %v3951
    %v3953 = vpop.xlane.xlu0 %3952
    %v3954 = vsel %vm1322, %v3676, 0.0
    %3955 = vadd.xlane.f32.xlu0 %v3954
    %v3956 = vpop.xlane.xlu0 %3955
    %v3957 = vsel %vm1322, %v3678, 0.0
    %3958 = vadd.xlane.f32.xlu0 %v3957
    %v3959 = vpop.xlane.xlu0 %3958
    %v3960 = vsel %vm1322, %v3680, 0.0
    %3961 = vadd.xlane.f32.xlu0 %v3960
    %v3962 = vpop.xlane.xlu0 %3961
    %v3963 = vsel %vm1322, %v3682, 0.0
    %3964 = vadd.xlane.f32.xlu0 %v3963
    %v3965 = vpop.xlane.xlu0 %3964
    %v3966 = vsel %vm1322, %v3684, 0.0
    %3967 = vadd.xlane.f32.xlu0 %v3966
    %v3968 = vpop.xlane.xlu0 %3967
    %v3969 = vsel %vm1322, %v3686, 0.0
    %3970 = vadd.xlane.f32.xlu0 %v3969
    %v3971 = vpop.xlane.xlu0 %3970
    %v3972 = vsel %vm1322, %v3688, 0.0
    %3973 = vadd.xlane.f32.xlu0 %v3972
    %v3974 = vpop.xlane.xlu0 %3973
    %v3975 = vsel %vm1322, %v3690, 0.0
    %3976 = vadd.xlane.f32.xlu0 %v3975
    %v3977 = vpop.xlane.xlu0 %3976
    %v3978 = vsel %vm1322, %v3692, 0.0
    %3979 = vadd.xlane.f32.xlu0 %v3978
    %v3980 = vpop.xlane.xlu0 %3979
    %3981 = vrot.lane.b32.xlu0 %v1318, 104
    %v3982 = vpop.permute.xlu0 %3981
    %3983 = vrot.lane.b32.xlu0 %v1319, 104
    %v3984 = vpop.permute.xlu0 %3983
    %3985 = vrot.lane.b32.xlu0 %v1320, 104
    %v3986 = vpop.permute.xlu0 %3985
    %3987 = vrot.lane.b32.xlu0 %v1321, 104
    %v3988 = vpop.permute.xlu0 %3987
    %v4061 = vperm.slane %v3767, %v1612
    %v4062 = vperm.slane %v3770, %v1614
    %v4063 = vsel %vm1616, %v4062, %v4061
    %v4064 = vperm.slane %v3773, %v1618
    %v4065 = vsel %vm1620, %v4064, %v4063
    %v4066 = vperm.slane %v3776, %v1612
    %v4067 = vperm.slane %v3779, %v1614
    %v4068 = vsel %vm1616, %v4067, %v4066
    %v4069 = vperm.slane %v3782, %v1618
    %v4070 = vsel %vm1620, %v4069, %v4068
    %v4071 = vperm.slane %v3785, %v1612
    %v4072 = vperm.slane %v3788, %v1614
    %v4073 = vsel %vm1616, %v4072, %v4071
    %v4074 = vperm.slane %v3791, %v1618
    %v4075 = vsel %vm1620, %v4074, %v4073
    %v4076 = vperm.slane %v3794, %v1612
    %v4077 = vperm.slane %v3797, %v1614
    %v4078 = vsel %vm1616, %v4077, %v4076
    %v4079 = vperm.slane %v3800, %v1618
    %v4080 = vsel %vm1620, %v4079, %v4078
    %v4081 = vperm.slane %v3803, %v1612
    %v4082 = vperm.slane %v3806, %v1614
    %v4083 = vsel %vm1616, %v4082, %v4081
    %v4084 = vperm.slane %v3809, %v1618
    %v4085 = vsel %vm1620, %v4084, %v4083
    %v4086 = vperm.slane %v3812, %v1612
    %v4087 = vperm.slane %v3815, %v1614
    %v4088 = vsel %vm1616, %v4087, %v4086
    %v4089 = vperm.slane %v3818, %v1618
    %v4090 = vsel %vm1620, %v4089, %v4088
    %v4091 = vperm.slane %v3821, %v1612
    %v4092 = vperm.slane %v3824, %v1614
    %v4093 = vsel %vm1616, %v4092, %v4091
    %v4094 = vperm.slane %v3827, %v1618
    %v4095 = vsel %vm1620, %v4094, %v4093
    %v4096 = vperm.slane %v3830, %v1612
    %v4097 = vperm.slane %v3833, %v1614
    %v4098 = vsel %vm1616, %v4097, %v4096
    %v4099 = vperm.slane %v3836, %v1618
    %v4100 = vsel %vm1620, %v4099, %v4098
    %v4101 = vperm.slane %v3839, %v1612
    %v4102 = vperm.slane %v3842, %v1614
    %v4103 = vsel %vm1616, %v4102, %v4101
    %v4104 = vperm.slane %v3845, %v1618
    %v4105 = vsel %vm1620, %v4104, %v4103
    %v4106 = vperm.slane %v3848, %v1612
    %v4107 = vperm.slane %v3851, %v1614
    %v4108 = vsel %vm1616, %v4107, %v4106
    %v4109 = vperm.slane %v3854, %v1618
    %v4110 = vsel %vm1620, %v4109, %v4108
    %v4111 = vperm.slane %v3857, %v1612
    %v4112 = vperm.slane %v3860, %v1614
    %v4113 = vsel %vm1616, %v4112, %v4111
    %v4114 = vperm.slane %v3863, %v1618
    %v4115 = vsel %vm1620, %v4114, %v4113
    %v4116 = vperm.slane %v3866, %v1612
    %v4117 = vperm.slane %v3869, %v1614
    %v4118 = vsel %vm1616, %v4117, %v4116
    %v4119 = vperm.slane %v3872, %v1618
    %v4120 = vsel %vm1620, %v4119, %v4118
    %v4121 = vperm.slane %v3875, %v1612
    %v4122 = vperm.slane %v3878, %v1614
    %v4123 = vsel %vm1616, %v4122, %v4121
    %v4124 = vperm.slane %v3881, %v1618
    %v4125 = vsel %vm1620, %v4124, %v4123
    %v4126 = vperm.slane %v3884, %v1612
    %v4127 = vperm.slane %v3887, %v1614
    %v4128 = vsel %vm1616, %v4127, %v4126
    %v4129 = vperm.slane %v3890, %v1618
    %v4130 = vsel %vm1620, %v4129, %v4128
    %v4131 = vperm.slane %v3893, %v1612
    %v4132 = vperm.slane %v3896, %v1614
    %v4133 = vsel %vm1616, %v4132, %v4131
    %v4134 = vperm.slane %v3899, %v1618
    %v4135 = vsel %vm1620, %v4134, %v4133
    %v4136 = vperm.slane %v3902, %v1612
    %v4137 = vperm.slane %v3905, %v1614
    %v4138 = vsel %vm1616, %v4137, %v4136
    %v4139 = vperm.slane %v3908, %v1618
    %v4140 = vsel %vm1620, %v4139, %v4138
    %v4141 = vperm.slane %v3911, %v1612
    %v4142 = vperm.slane %v3914, %v1614
    %v4143 = vsel %vm1616, %v4142, %v4141
    %v4144 = vperm.slane %v3917, %v1618
    %v4145 = vsel %vm1620, %v4144, %v4143
    %v4146 = vperm.slane %v3920, %v1612
    %v4147 = vperm.slane %v3923, %v1614
    %v4148 = vsel %vm1616, %v4147, %v4146
    %v4149 = vperm.slane %v3926, %v1618
    %v4150 = vsel %vm1620, %v4149, %v4148
    %v4151 = vperm.slane %v3929, %v1612
    %v4152 = vperm.slane %v3932, %v1614
    %v4153 = vsel %vm1616, %v4152, %v4151
    %v4154 = vperm.slane %v3935, %v1618
    %v4155 = vsel %vm1620, %v4154, %v4153
    %v4156 = vperm.slane %v3938, %v1612
    %v4157 = vperm.slane %v3941, %v1614
    %v4158 = vsel %vm1616, %v4157, %v4156
    %v4159 = vperm.slane %v3944, %v1618
    %v4160 = vsel %vm1620, %v4159, %v4158
    %v4161 = vperm.slane %v3947, %v1612
    %v4162 = vperm.slane %v3950, %v1614
    %v4163 = vsel %vm1616, %v4162, %v4161
    %v4164 = vperm.slane %v3953, %v1618
    %v4165 = vsel %vm1620, %v4164, %v4163
    %v4166 = vperm.slane %v3956, %v1612
    %v4167 = vperm.slane %v3959, %v1614
    %v4168 = vsel %vm1616, %v4167, %v4166
    %v4169 = vperm.slane %v3962, %v1618
    %v4170 = vsel %vm1620, %v4169, %v4168
    %v4171 = vperm.slane %v3965, %v1612
    %v4172 = vperm.slane %v3968, %v1614
    %v4173 = vsel %vm1616, %v4172, %v4171
    %v4174 = vperm.slane %v3971, %v1618
    %v4175 = vsel %vm1620, %v4174, %v4173
    %v4176 = vperm.slane %v3974, %v1612
    %v4177 = vperm.slane %v3977, %v1614
    %v4178 = vsel %vm1616, %v4177, %v4176
    %v4179 = vperm.slane %v3980, %v1618
    %v4180 = vsel %vm1620, %v4179, %v4178
    %v4181 = vsel %vm1737, %v4070, %v4065
    %v4182 = vsel %vm1739, %v4075, %v4181
    %v4183 = vsel %vm1741, %v4080, %v4182
    %v4184 = vsel %vm1743, %v4085, %v4183
    %v4185 = vsel %vm1745, %v4090, %v4184
    %v4186 = vsel %vm1747, %v4095, %v4185
    %v4187 = vsel %vm1749, %v4100, %v4186
    %v4188 = vsel %vm1737, %v4110, %v4105
    %v4189 = vsel %vm1739, %v4115, %v4188
    %v4190 = vsel %vm1741, %v4120, %v4189
    %v4191 = vsel %vm1743, %v4125, %v4190
    %v4192 = vsel %vm1745, %v4130, %v4191
    %v4193 = vsel %vm1747, %v4135, %v4192
    %v4194 = vsel %vm1749, %v4140, %v4193
    %v4195 = vsel %vm1737, %v4150, %v4145
    %v4196 = vsel %vm1739, %v4155, %v4195
    %v4197 = vsel %vm1741, %v4160, %v4196
    %v4198 = vsel %vm1743, %v4165, %v4197
    %v4199 = vsel %vm1745, %v4170, %v4198
    %v4200 = vsel %vm1747, %v4175, %v4199
    %v4201 = vsel %vm1749, %v4180, %v4200
    %v4206 = vsel %vm1322, %v3982, 0
    %v4209 = vsel %vm1322, %v3984, 0
    %v4212 = vsel %vm1322, %v3986, 0
    %v4215 = vsel %vm1322, %v3988, 0
    %4217 = vmatpush.bf16.xpose.msra.mxu0 0
    %4218 = vmatpush.bf16.xpose.msra.mxu0 0
    %4219 = vmatpush.bf16.xpose.msra.mxu0 0
    %4220 = vmatpush.bf16.xpose.msra.mxu0 0
    %4221 = vmatpush.bf16.xpose.msra.mxu0 0
    %4222 = vmatpush.bf16.xpose.msra.mxu0 0
    %4223 = vmatpush.bf16.xpose.msra.mxu0 %v4215
    %4224 = vmatpush.bf16.xpose.msra.mxu0 %v4212
    %4225 = vmatmul.bf16.gmra.mxu0 %v4206
    %v4226 = vpop.f32.mrf.mxu0
    %v4227 = vadd.f32 %v4187, %v4226
    %v4228 = vpop.f32.mrf.mxu0
    %v4229 = vadd.f32 %v4194, %v4228
    %4230 = vmatmul.bf16.gmra.mxu0 %v4209
    %v4231 = vpop.f32.mrf.mxu0
    %v4232 = vadd.f32 %v4201, %v4231
    %v4233 = vpop.f32.mrf.mxu0
    %4234 = vdwg.mxu0
    %v4235 = vmul.f32 %v4227, 0.35355338
    %v4236 = vmul.f32 %v4229, 0.35355338
    %v4237 = vmul.f32 %v4232, 0.35355338
    %v4238 = vsel %vm130, %v4235, -inf
    %4239 = vmax.xlane.f32.xlu0 %v4238
    %v4240 = vpop.xlane.xlu0 %4239
    %v4241 = vsel %vm130, %v4236, -inf
    %4242 = vmax.xlane.f32.xlu0 %v4241
    %v4243 = vpop.xlane.xlu0 %4242
    %v4244 = vsel %vm130, %v4237, -inf
    %4245 = vmax.xlane.f32.xlu0 %v4244
    %v4246 = vpop.xlane.xlu0 %4245
    %v4247 = vsub.f32 %v4235, %v4240
    %v4248 = vsub.f32 %v4236, %v4243
    %v4249 = vsub.f32 %v4237, %v4246
    %v4250 = vmul.f32 %v4247, 1.442695
    %v4251 = vpow.pop %v4250
    %v4252 = vmul.f32 %v4248, 1.442695
    %v4253 = vpow.pop %v4252
    %v4254 = vmul.f32 %v4249, 1.442695
    %v4255 = vpow.pop %v4254
    %v4256 = vsel %vm130, %v4251, 0.0
    %4257 = vadd.xlane.f32.xlu0 %v4256
    %v4258 = vpop.xlane.xlu0 %4257
    %v4259 = vsel %vm130, %v4253, 0.0
    %4260 = vadd.xlane.f32.xlu0 %v4259
    %v4261 = vpop.xlane.xlu0 %4260
    %v4262 = vsel %vm130, %v4255, 0.0
    %4263 = vadd.xlane.f32.xlu0 %v4262
    %v4264 = vpop.xlane.xlu0 %4263
    %v4265 = vrcp.pop %v4258
    %v4266 = vrcp.pop %v4261
    %v4267 = vrcp.pop %v4264
    %v4268 = vmul.f32 %v4251, %v4265
    %v4269 = vmul.f32 %v4253, %v4266
    %v4270 = vmul.f32 %v4255, %v4267
    %v4271 = vpack.c.bf16 %v4269, %v4268
    %v4272 = vpack.c.bf16 %v4270, %v4270
    %4273 = vrot.lane.b32.xlu0 %v1836, 104
    %v4274 = vpop.permute.xlu0 %4273
    %4275 = vrot.lane.b32.xlu0 %v1837, 104
    %v4276 = vpop.permute.xlu0 %4275
    %v4279 = vsel %vm130, %v4271, 0
    %v4282 = vsel %vm130, %v4272, 0
    %v4285 = vsel %vm1844, %v4276, 0
    %4287 = vmatpush.bf16.msra.mxu0 0
    %4288 = vmatpush.bf16.msra.mxu0 0
    %4289 = vmatpush.bf16.msra.mxu0 0
    %4290 = vmatpush.bf16.msra.mxu0 0
    %4291 = vmatpush.bf16.msra.mxu0 0
    %4292 = vmatpush.bf16.msra.mxu0 0
    %4293 = vmatpush.bf16.msra.mxu0 %v4285
    %4294 = vmatpush.bf16.msra.mxu0 %v4274
    %4295 = vmatmul.bf16.gmra.mxu0 %v4279
    %v4296 = vpop.f32.mrf.mxu0
    %v4297 = vadd.f32 0.0, %v4296
    %v4298 = vpop.f32.mrf.mxu0
    %v4299 = vadd.f32 0.0, %v4298
    %4300 = vmatmul.bf16.gmra.mxu0 %v4282
    %v4301 = vpop.f32.mrf.mxu0
    %v4302 = vadd.f32 0.0, %v4301
    %v4303 = vpop.f32.mrf.mxu0
    %4304 = vdwg.mxu0
    %v4305 = vpack.c.bf16 %v4299, %v4297
    %v4306 = vpack.c.bf16 %v4302, %v4302
    %v4307 = vpack.c.bf16 %v1317, %v1317
    %v4309 = vsel %vm1322, %v4305, 0
    %v4312 = vsel %vm1322, %v4306, 0
    %v4315 = vsel %vm1844, %v4307, 0
    %4317 = vmatpush.bf16.msra.mxu0 0
    %4318 = vmatpush.bf16.msra.mxu0 0
    %4319 = vmatpush.bf16.msra.mxu0 0
    %4320 = vmatpush.bf16.msra.mxu0 0
    %4321 = vmatpush.bf16.msra.mxu0 0
    %4322 = vmatpush.bf16.msra.mxu0 0
    %4323 = vmatpush.bf16.msra.mxu0 0
    %4324 = vmatpush.bf16.msra.mxu0 %v4315
    %4325 = vmatmul.bf16.gmra.mxu0 %v4309
    %v4326 = vpop.f32.mrf.mxu0
    %v4327 = vadd.f32 0.0, %v4326
    %v4328 = vpop.f32.mrf.mxu0
    %v4329 = vadd.f32 0.0, %v4328
    %4330 = vmatmul.bf16.gmra.mxu0 %v4312
    %v4331 = vpop.f32.mrf.mxu0
    %v4332 = vadd.f32 0.0, %v4331
    %v4333 = vpop.f32.mrf.mxu0
    %4334 = vdwg.mxu0
    %v4335 = vadd.f32 %v3546, %v4327
    %v4336 = vadd.f32 %v3547, %v4329
    %v4337 = vadd.f32 %v3548, %v4332
    %v4338 = vld [vmem:[%s17] sm:$0x1]
    %v4340 = vperm.slane %v4338, 0
    %v4342 = vadd.f32 %v4335, %v4340
    %v4343 = vadd.f32 %v4336, %v4340
    %v4344 = vadd.f32 %v4337, %v4340
    %v4345 = vadd.f32 %v1003, %v4342
    %v4346 = vadd.f32 %v1004, %v4343
    %v4347 = vadd.f32 %v1005, %v4344
    %v4348 = vsel %vm78, %v4345, 0.0
    %4349 = vadd.xlane.f32.xlu0 %v4348
    %v4350 = vpop.xlane.xlu0 %4349
    %v4351 = vsel %vm78, %v4346, 0.0
    %4352 = vadd.xlane.f32.xlu0 %v4351
    %v4353 = vpop.xlane.xlu0 %4352
    %v4354 = vsel %vm78, %v4347, 0.0
    %4355 = vadd.xlane.f32.xlu0 %v4354
    %v4356 = vpop.xlane.xlu0 %4355
    %v4357 = vrcp.pop 32.0
    %v4358 = vmul.f32 32.0, %v4357
    %v4359 = vsub.f32 1.0, %v4358
    %v4360 = vmul.f32 %v4357, %v4359
    %v4361 = vadd.f32 %v4357, %v4360
    %vm4362 = vweird.f32 %v4357
    %v4363 = vsel %vm4362, %v4357, %v4361
    %v4364 = vmul.f32 %v4350, %v4363
    %v4365 = vmul.f32 %v4353, %v4363
    %v4366 = vmul.f32 %v4356, %v4363
    %v4367 = vsub.f32 %v4345, %v4364
    %v4368 = vsub.f32 %v4346, %v4365
    %v4369 = vsub.f32 %v4347, %v4366
    %v4370 = vmul.f32 %v4367, %v4367
    %v4371 = vmul.f32 %v4368, %v4368
    %v4372 = vmul.f32 %v4369, %v4369
    %v4373 = vsel %vm78, %v4370, 0.0
    %4374 = vadd.xlane.f32.xlu0 %v4373
    %v4375 = vpop.xlane.xlu0 %4374
    %v4376 = vsel %vm78, %v4371, 0.0
    %4377 = vadd.xlane.f32.xlu0 %v4376
    %v4378 = vpop.xlane.xlu0 %4377
    %v4379 = vsel %vm78, %v4372, 0.0
    %4380 = vadd.xlane.f32.xlu0 %v4379
    %v4381 = vpop.xlane.xlu0 %4380
    %v4382 = vmul.f32 %v4375, %v4363
    %v4383 = vmul.f32 %v4378, %v4363
    %v4384 = vmul.f32 %v4381, %v4363
    %v4385 = vadd.f32 %v4382, 1e-05
    %v4386 = vadd.f32 %v4383, 1e-05
    %v4387 = vadd.f32 %v4384, 1e-05
    %v4388 = vrsqrt.pop %v4385
    %v4389 = vmul.f32 %v4388, %v4385
    %v4390 = vmul.f32 %v4389, %v4388
    %v4391 = vmul.f32 0.5, %v4390
    %v4392 = vsub.f32 1.5, %v4391
    %v4393 = vmul.f32 %v4388, %v4392
    %vm4394 = vweird.f32 %v4385
    %vm4395 = vweird.f32 %v4388
    %vm4396 = vmor %vm4394, %vm4395
    %v4397 = vsel %vm4396, %v4388, %v4393
    %v4398 = vrsqrt.pop %v4386
    %v4399 = vmul.f32 %v4398, %v4386
    %v4400 = vmul.f32 %v4399, %v4398
    %v4401 = vmul.f32 0.5, %v4400
    %v4402 = vsub.f32 1.5, %v4401
    %v4403 = vmul.f32 %v4398, %v4402
    %vm4404 = vweird.f32 %v4386
    %vm4405 = vweird.f32 %v4398
    %vm4406 = vmor %vm4404, %vm4405
    %v4407 = vsel %vm4406, %v4398, %v4403
    %v4408 = vrsqrt.pop %v4387
    %v4409 = vmul.f32 %v4408, %v4387
    %v4410 = vmul.f32 %v4409, %v4408
    %v4411 = vmul.f32 0.5, %v4410
    %v4412 = vsub.f32 1.5, %v4411
    %v4413 = vmul.f32 %v4408, %v4412
    %vm4414 = vweird.f32 %v4387
    %vm4415 = vweird.f32 %v4408
    %vm4416 = vmor %vm4414, %vm4415
    %v4417 = vsel %vm4416, %v4408, %v4413
    %v4418 = vmul.f32 %v4367, %v4397
    %v4419 = vmul.f32 %v4368, %v4407
    %v4420 = vmul.f32 %v4369, %v4417
    %v4421 = vld [vmem:[%s18] sm:$0x1]
    %v4423 = vperm.slane %v4421, 0
    %v4425 = vmul.f32 %v4418, %v4423
    %v4426 = vmul.f32 %v4419, %v4423
    %v4427 = vmul.f32 %v4420, %v4423
    %v4428 = vld [vmem:[%s19] sm:$0x1]
    %v4430 = vperm.slane %v4428, 0
    %v4432 = vadd.f32 %v4425, %v4430
    %v4433 = vadd.f32 %v4426, %v4430
    %v4434 = vadd.f32 %v4427, %v4430
    %4435 = vst.msk [vmem:[#allocation2] sm:$0xff] %vm78, %v4432
    %4436 = vst.msk [vmem:[#allocation2 + $0x8] sm:$0xff] %vm78, %v4433
    %4437 = vst.msk [vmem:[#allocation2 + $0x10] sm:$0xff] %vm78, %v4434
    // Predicated region
    $region82: #{coarse_gcn_encoding_forward.7} parent=1 // pred_check
      _
    $region83: #{coarse_gcn_encoding_forward.7} parent=1 // pred_check_branch
      %4439 = sbr.rel (0) target = $region85
    $region84: #{coarse_gcn_encoding_forward.7} parent=1 // pred_region
      %4441 = vsyncadd [#allocation3], 0
      %s4442 = sshll.u32 [#allocation2], 4
      %s4443 = int_to_ptr.vmem [resolvable:$true] %s4442
      %s4444 = sshll.u32 %s20, 4
      %s4445 = int_to_ptr.hbm [resolvable:$true] %s4444
      %4450 = dma.vmem_to_hbm [thread:$0]  %s4443, 384, %s4445, [#allocation3], 128, 128, 8
    $region85: #{coarse_gcn_encoding_forward.7} parent=1 // pred_fallthru
      _
    // Predicated region
    $region86: #{coarse_gcn_encoding_forward.7} parent=1 // pred_check
      _
    $region87: #{coarse_gcn_encoding_forward.7} parent=1 // pred_check_branch
      %4452 = sbr.rel (0) target = $region89
    $region88: #{coarse_gcn_encoding_forward.7} parent=1 // pred_region
      %4454 = dma.done [#allocation3], 384
    $region89: #{coarse_gcn_encoding_forward.7} parent=1 // pred_fallthru
      _
    %4455 = vsyncpa [#allocation3], 1

// kernel: coarse_gcn_encoding_forward.5
$region0: #{coarse_gcn_encoding_forward.5}
  #allocation0 [shape = 'u32[]', space=smem, size = 0x4, offset = 0x4, fixed_abs, tag = 'smem constant byte address 0x4 - core index']
  #allocation1 [shape = 'u32[72,128]{1,0:T(1,128)}', space=vmem, size = 0x9000, scoped, tag = 'internal scratch']
  %s0 = inlined_call_operand.vmem [shape: f32[16,32], index: 0, kind: input, shape index: {}]
  %s1 = inlined_call_operand.vmem [shape: f32[4,16,16], index: 1, kind: input, shape index: {}]
  %s2 = inlined_call_operand.vmem [shape: f32[16,16,32], index: 2, kind: input, shape index: {}]
  %s3 = inlined_call_operand.vmem [shape: f32[32,32], index: 3, kind: input, shape index: {}]
  %s4 = inlined_call_operand.vmem [shape: f32[32,32], index: 4, kind: input, shape index: {}]
  %s5 = inlined_call_operand.vmem [shape: f32[32,64], index: 5, kind: input, shape index: {}]
  %s6 = inlined_call_operand.vmem [shape: f32[32,64], index: 6, kind: input, shape index: {}]
  %s7 = inlined_call_operand.vmem [shape: f32[32,32], index: 7, kind: input, shape index: {}]
  %s8 = inlined_call_operand.vmem [shape: f32[32,32], index: 8, kind: input, shape index: {}]
  %s9 = inlined_call_operand.vmem [shape: f32[64,32], index: 9, kind: input, shape index: {}]
  %s10 = inlined_call_operand.vmem [shape: f32[32,32], index: 10, kind: input, shape index: {}]
  %s11 = inlined_call_operand.vmem [shape: f32[1,32], index: 11, kind: input, shape index: {}]
  %s12 = inlined_call_operand.vmem [shape: f32[32,32], index: 12, kind: input, shape index: {}]
  %s13 = inlined_call_operand.vmem [shape: f32[1,32], index: 13, kind: input, shape index: {}]
  %s14 = inlined_call_operand.vmem [shape: f32[32,32], index: 14, kind: input, shape index: {}]
  %s15 = inlined_call_operand.vmem [shape: f32[1,32], index: 15, kind: input, shape index: {}]
  %s16 = inlined_call_operand.vmem [shape: f32[32,32], index: 16, kind: input, shape index: {}]
  %s17 = inlined_call_operand.vmem [shape: f32[1,32], index: 17, kind: input, shape index: {}]
  %s18 = inlined_call_operand.vmem [shape: f32[1,32], index: 18, kind: input, shape index: {}]
  %s19 = inlined_call_operand.vmem [shape: f32[1,32], index: 19, kind: input, shape index: {}]
  %s20 = inlined_call_operand.hbm [shape: f32[16,32], index: 20, kind: output, shape index: {}]
  %s21 = sld [smem:[#allocation0]]
  $region90: #{coarse_gcn_encoding_forward.5} parent=0
    _
  %s23 = ssub.s32 1, %s21
  %s24 = scalar_select 0, %s23, %s21
  $region1: #{coarse_gcn_encoding_forward.5} parent=0
    #allocation2 [shape = 'u8[8192]{0}', space=vmem, size = 0x2000, scoped, tag = 'output window, operand 0, single buffered']
    #allocation3 [shape = 's32[1]{0}', space=sflag, size = 0x4, scoped, tag = 'scoped memory for coarse_gcn_encoding_forward.5']
    %25 = vsyncpa [#allocation3], 0
    // Predicated region
    $region2: #{coarse_gcn_encoding_forward.5} parent=1 // pred_check
      _
    $region3: #{coarse_gcn_encoding_forward.5} parent=1 // pred_check_branch
      %27 = sbr.rel (0) target = $region5
    $region4: #{coarse_gcn_encoding_forward.5} parent=1 // pred_region
      _
    $region5: #{coarse_gcn_encoding_forward.5} parent=1 // pred_fallthru
      _
    // Predicated region
    $region6: #{coarse_gcn_encoding_forward.5} parent=1 // pred_check
      _
    $region7: #{coarse_gcn_encoding_forward.5} parent=1 // pred_check_branch
      %29 = sbr.rel (0) target = $region9
    $region8: #{coarse_gcn_encoding_forward.5} parent=1 // pred_region
      _
    $region9: #{coarse_gcn_encoding_forward.5} parent=1 // pred_fallthru
      _
    // Predicated region
    $region10: #{coarse_gcn_encoding_forward.5} parent=1 // pred_check
      _
    $region11: #{coarse_gcn_encoding_forward.5} parent=1 // pred_check_branch
      %31 = sbr.rel (0) target = $region13
    $region12: #{coarse_gcn_encoding_forward.5} parent=1 // pred_region
      _
    $region13: #{coarse_gcn_encoding_forward.5} parent=1 // pred_fallthru
      _
    // Predicated region
    $region14: #{coarse_gcn_encoding_forward.5} parent=1 // pred_check
      _
    $region15: #{coarse_gcn_encoding_forward.5} parent=1 // pred_check_branch
      %33 = sbr.rel (0) target = $region17
    $region16: #{coarse_gcn_encoding_forward.5} parent=1 // pred_region
      _
    $region17: #{coarse_gcn_encoding_forward.5} parent=1 // pred_fallthru
      _
    // Predicated region
    $region18: #{coarse_gcn_encoding_forward.5} parent=1 // pred_check
      _
    $region19: #{coarse_gcn_encoding_forward.5} parent=1 // pred_check_branch
      %35 = sbr.rel (0) target = $region21
    $region20: #{coarse_gcn_encoding_forward.5} parent=1 // pred_region
      _
    $region21: #{coarse_gcn_encoding_forward.5} parent=1 // pred_fallthru
      _
    // Predicated region
    $region22: #{coarse_gcn_encoding_forward.5} parent=1 // pred_check
      _
    $region23: #{coarse_gcn_encoding_forward.5} parent=1 // pred_check_branch
      %37 = sbr.rel (0) target = $region25
    $region24: #{coarse_gcn_encoding_forward.5} parent=1 // pred_region
      _
    $region25: #{coarse_gcn_encoding_forward.5} parent=1 // pred_fallthru
      _
    // Predicated region
    $region26: #{coarse_gcn_encoding_forward.5} parent=1 // pred_check
      _
    $region27: #{coarse_gcn_encoding_forward.5} parent=1 // pred_check_branch
      %39 = sbr.rel (0) target = $region29
    $region28: #{coarse_gcn_encoding_forward.5} parent=1 // pred_region
      _
    $region29: #{coarse_gcn_encoding_forward.5} parent=1 // pred_fallthru
      _
    // Predicated region
    $region30: #{coarse_gcn_encoding_forward.5} parent=1 // pred_check
      _
    $region31: #{coarse_gcn_encoding_forward.5} parent=1 // pred_check_branch
      %41 = sbr.rel (0) target = $region33
    $region32: #{coarse_gcn_encoding_forward.5} parent=1 // pred_region
      _
    $region33: #{coarse_gcn_encoding_forward.5} parent=1 // pred_fallthru
      _
    // Predicated region
    $region34: #{coarse_gcn_encoding_forward.5} parent=1 // pred_check
      _
    $region35: #{coarse_gcn_encoding_forward.5} parent=1 // pred_check_branch
      %43 = sbr.rel (0) target = $region37
    $region36: #{coarse_gcn_encoding_forward.5} parent=1 // pred_region
      _
    $region37: #{coarse_gcn_encoding_forward.5} parent=1 // pred_fallthru
      _
    // Predicated region
    $region38: #{coarse_gcn_encoding_forward.5} parent=1 // pred_check
      _
    $region39: #{coarse_gcn_encoding_forward.5} parent=1 // pred_check_branch
      %45 = sbr.rel (0) target = $region41
    $region40: #{coarse_gcn_encoding_forward.5} parent=1 // pred_region
      _
    $region41: #{coarse_gcn_encoding_forward.5} parent=1 // pred_fallthru
      _
    // Predicated region
    $region42: #{coarse_gcn_encoding_forward.5} parent=1 // pred_check
      _
    $region43: #{coarse_gcn_encoding_forward.5} parent=1 // pred_check_branch
      %47 = sbr.rel (0) target = $region45
    $region44: #{coarse_gcn_encoding_forward.5} parent=1 // pred_region
      _
    $region45: #{coarse_gcn_encoding_forward.5} parent=1 // pred_fallthru
      _
    // Predicated region
    $region46: #{coarse_gcn_encoding_forward.5} parent=1 // pred_check
      _
    $region47: #{coarse_gcn_encoding_forward.5} parent=1 // pred_check_branch
      %49 = sbr.rel (0) target = $region49
    $region48: #{coarse_gcn_encoding_forward.5} parent=1 // pred_region
      _
    $region49: #{coarse_gcn_encoding_forward.5} parent=1 // pred_fallthru
      _
    // Predicated region
    $region50: #{coarse_gcn_encoding_forward.5} parent=1 // pred_check
      _
    $region51: #{coarse_gcn_encoding_forward.5} parent=1 // pred_check_branch
      %51 = sbr.rel (0) target = $region53
    $region52: #{coarse_gcn_encoding_forward.5} parent=1 // pred_region
      _
    $region53: #{coarse_gcn_encoding_forward.5} parent=1 // pred_fallthru
      _
    // Predicated region
    $region54: #{coarse_gcn_encoding_forward.5} parent=1 // pred_check
      _
    $region55: #{coarse_gcn_encoding_forward.5} parent=1 // pred_check_branch
      %53 = sbr.rel (0) target = $region57
    $region56: #{coarse_gcn_encoding_forward.5} parent=1 // pred_region
      _
    $region57: #{coarse_gcn_encoding_forward.5} parent=1 // pred_fallthru
      _
    // Predicated region
    $region58: #{coarse_gcn_encoding_forward.5} parent=1 // pred_check
      _
    $region59: #{coarse_gcn_encoding_forward.5} parent=1 // pred_check_branch
      %55 = sbr.rel (0) target = $region61
    $region60: #{coarse_gcn_encoding_forward.5} parent=1 // pred_region
      _
    $region61: #{coarse_gcn_encoding_forward.5} parent=1 // pred_fallthru
      _
    // Predicated region
    $region62: #{coarse_gcn_encoding_forward.5} parent=1 // pred_check
      _
    $region63: #{coarse_gcn_encoding_forward.5} parent=1 // pred_check_branch
      %57 = sbr.rel (0) target = $region65
    $region64: #{coarse_gcn_encoding_forward.5} parent=1 // pred_region
      _
    $region65: #{coarse_gcn_encoding_forward.5} parent=1 // pred_fallthru
      _
    // Predicated region
    $region66: #{coarse_gcn_encoding_forward.5} parent=1 // pred_check
      _
    $region67: #{coarse_gcn_encoding_forward.5} parent=1 // pred_check_branch
      %59 = sbr.rel (0) target = $region69
    $region68: #{coarse_gcn_encoding_forward.5} parent=1 // pred_region
      _
    $region69: #{coarse_gcn_encoding_forward.5} parent=1 // pred_fallthru
      _
    // Predicated region
    $region70: #{coarse_gcn_encoding_forward.5} parent=1 // pred_check
      _
    $region71: #{coarse_gcn_encoding_forward.5} parent=1 // pred_check_branch
      %61 = sbr.rel (0) target = $region73
    $region72: #{coarse_gcn_encoding_forward.5} parent=1 // pred_region
      _
    $region73: #{coarse_gcn_encoding_forward.5} parent=1 // pred_fallthru
      _
    // Predicated region
    $region74: #{coarse_gcn_encoding_forward.5} parent=1 // pred_check
      _
    $region75: #{coarse_gcn_encoding_forward.5} parent=1 // pred_check_branch
      %63 = sbr.rel (0) target = $region77
    $region76: #{coarse_gcn_encoding_forward.5} parent=1 // pred_region
      _
    $region77: #{coarse_gcn_encoding_forward.5} parent=1 // pred_fallthru
      _
    // Predicated region
    $region78: #{coarse_gcn_encoding_forward.5} parent=1 // pred_check
      _
    $region79: #{coarse_gcn_encoding_forward.5} parent=1 // pred_check_branch
      %65 = sbr.rel (0) target = $region81
    $region80: #{coarse_gcn_encoding_forward.5} parent=1 // pred_region
      _
    $region81: #{coarse_gcn_encoding_forward.5} parent=1 // pred_fallthru
      _
    %v67 = vld [vmem:[%s0] sm:$0xff]
    %v68 = vld [vmem:[%s0 + $0x8] sm:$0xff]
    %v69 = vld [vmem:[%s3] sm:$0xff]
    %v70 = vld [vmem:[%s3 + $0x8] sm:$0xff]
    %v71 = vld [vmem:[%s3 + $0x10] sm:$0xff]
    %v72 = vld [vmem:[%s3 + $0x18] sm:$0xff]
    %v73 = vpack.c.bf16 %v68, %v67
    %v74 = vpack.c.bf16 %v70, %v69
    %v75 = vpack.c.bf16 %v72, %v71
    %vm76 = vcmask 261120
    %v78 = vsel %vm76, %v73, 0
    %80 = vmatpush.bf16.msra.mxu0 0
    %81 = vmatpush.bf16.msra.mxu0 0
    %82 = vmatpush.bf16.msra.mxu0 0
    %83 = vmatpush.bf16.msra.mxu0 0
    %84 = vmatpush.bf16.msra.mxu0 0
    %85 = vmatpush.bf16.msra.mxu0 0
    %86 = vmatpush.bf16.msra.mxu0 %v75
    %87 = vmatpush.bf16.msra.mxu0 %v74
    %88 = vmatmul.bf16.gmra.mxu0 %v78
    %v89 = vpop.f32.mrf.mxu0
    %v90 = vadd.f32 0.0, %v89
    %v91 = vpop.f32.mrf.mxu0
    %v92 = vadd.f32 0.0, %v91
    %93 = vdwg.mxu0
    %v94 = vld [vmem:[%s4] sm:$0xff]
    %v95 = vld [vmem:[%s4 + $0x8] sm:$0xff]
    %v96 = vld [vmem:[%s4 + $0x10] sm:$0xff]
    %v97 = vld [vmem:[%s4 + $0x18] sm:$0xff]
    %v98 = vpack.c.bf16 %v95, %v94
    %v99 = vpack.c.bf16 %v97, %v96
    %100 = vmatpush.bf16.msra.mxu0 0
    %101 = vmatpush.bf16.msra.mxu0 0
    %102 = vmatpush.bf16.msra.mxu0 0
    %103 = vmatpush.bf16.msra.mxu0 0
    %104 = vmatpush.bf16.msra.mxu0 0
    %105 = vmatpush.bf16.msra.mxu0 0
    %106 = vmatpush.bf16.msra.mxu0 %v99
    %107 = vmatpush.bf16.msra.mxu0 %v98
    %108 = vmatmul.bf16.gmra.mxu0 %v78
    %v109 = vpop.f32.mrf.mxu0
    %v110 = vadd.f32 0.0, %v109
    %v111 = vpop.f32.mrf.mxu0
    %v112 = vadd.f32 0.0, %v111
    %113 = vdwg.mxu0
    %v114 = vld [vmem:[%s1] sm:$0xff]
    %v115 = vld [vmem:[%s1 + $0x8] sm:$0xff]
    %vm116 = vcmask 130048
    %v118 = vsel %vm116, %v114, 0
    %v121 = vsel %vm116, %v115, 0
    %123 = vmatpush.msra.mxu0 0.0
    %124 = vmatpush.msra.mxu0 0.0
    %125 = vmatpush.msra.mxu0 0.0
    %126 = vmatpush.msra.mxu0 0.0
    %127 = vmatpush.msra.mxu0 0.0
    %128 = vmatpush.msra.mxu0 0.0
    %129 = vmatpush.msra.mxu0 0.0
    %130 = vmatpush.msra.mxu0 0.0
    %131 = vmatpush.msra.mxu0 0.0
    %132 = vmatpush.msra.mxu0 0.0
    %133 = vmatpush.msra.mxu0 0.0
    %134 = vmatpush.msra.mxu0 0.0
    %135 = vmatpush.msra.mxu0 0.0
    %136 = vmatpush.msra.mxu0 0.0
    %137 = vmatpush.msra.mxu0 %v112
    %138 = vmatpush.msra.mxu0 %v110
    %139 = vmatmul.f32.gmra.mxu0 %v118
    %v140 = vpop.f32.mrf.mxu0
    %v141 = vadd.f32 0.0, %v140
    %142 = vmatmul.f32.gmra.mxu0 %v121
    %v143 = vpop.f32.mrf.mxu0
    %v144 = vadd.f32 0.0, %v143
    %145 = vdwg.mxu0
    %v146 = vadd.f32 %v90, %v141
    %v147 = vadd.f32 %v92, %v144
    %v148 = vsel %vm76, %v146, 0.0
    %v149 = vsel %vm76, %v147, 0.0
    %v150 = vadd.f32 %v148, %v149
    %v151 = vrot.slane %v150, 4
    %v152 = vadd.f32 %v150, %v151
    %v153 = vrot.slane %v152, 2
    %v154 = vadd.f32 %v152, %v153
    %v155 = vrot.slane %v154, 1
    %v156 = vadd.f32 %v154, %v155
    %v157 = vadd.f32 %v156, 0.0
    %v158 = vmul.f32 %v146, %v146
    %v159 = vmul.f32 %v147, %v147
    %v160 = vsel %vm76, %v158, 0.0
    %v161 = vsel %vm76, %v159, 0.0
    %v162 = vadd.f32 %v160, %v161
    %v163 = vrot.slane %v162, 4
    %v164 = vadd.f32 %v162, %v163
    %v165 = vrot.slane %v164, 2
    %v166 = vadd.f32 %v164, %v165
    %v167 = vrot.slane %v166, 1
    %v168 = vadd.f32 %v166, %v167
    %v169 = vadd.f32 %v168, 0.0
    %s170 = scalar_lea.vmem %s1, 16
    %v171 = vld [vmem:[%s170] sm:$0xff]
    %v172 = vld [vmem:[%s170 + $0x8] sm:$0xff]
    %v174 = vsel %vm116, %v171, 0
    %v177 = vsel %vm116, %v172, 0
    %179 = vmatpush.msra.mxu0 0.0
    %180 = vmatpush.msra.mxu0 0.0
    %181 = vmatpush.msra.mxu0 0.0
    %182 = vmatpush.msra.mxu0 0.0
    %183 = vmatpush.msra.mxu0 0.0
    %184 = vmatpush.msra.mxu0 0.0
    %185 = vmatpush.msra.mxu0 0.0
    %186 = vmatpush.msra.mxu0 0.0
    %187 = vmatpush.msra.mxu0 0.0
    %188 = vmatpush.msra.mxu0 0.0
    %189 = vmatpush.msra.mxu0 0.0
    %190 = vmatpush.msra.mxu0 0.0
    %191 = vmatpush.msra.mxu0 0.0
    %192 = vmatpush.msra.mxu0 0.0
    %193 = vmatpush.msra.mxu0 %v112
    %194 = vmatpush.msra.mxu0 %v110
    %195 = vmatmul.f32.gmra.mxu0 %v174
    %v196 = vpop.f32.mrf.mxu0
    %v197 = vadd.f32 0.0, %v196
    %198 = vmatmul.f32.gmra.mxu0 %v177
    %v199 = vpop.f32.mrf.mxu0
    %v200 = vadd.f32 0.0, %v199
    %201 = vdwg.mxu0
    %v202 = vadd.f32 %v90, %v197
    %v203 = vadd.f32 %v92, %v200
    %v204 = vsel %vm76, %v202, 0.0
    %v205 = vsel %vm76, %v203, 0.0
    %v206 = vadd.f32 %v204, %v205
    %v207 = vrot.slane %v206, 4
    %v208 = vadd.f32 %v206, %v207
    %v209 = vrot.slane %v208, 2
    %v210 = vadd.f32 %v208, %v209
    %v211 = vrot.slane %v210, 1
    %v212 = vadd.f32 %v210, %v211
    %v213 = vadd.f32 %v157, %v212
    %v214 = vmul.f32 %v202, %v202
    %v215 = vmul.f32 %v203, %v203
    %v216 = vsel %vm76, %v214, 0.0
    %v217 = vsel %vm76, %v215, 0.0
    %v218 = vadd.f32 %v216, %v217
    %v219 = vrot.slane %v218, 4
    %v220 = vadd.f32 %v218, %v219
    %v221 = vrot.slane %v220, 2
    %v222 = vadd.f32 %v220, %v221
    %v223 = vrot.slane %v222, 1
    %v224 = vadd.f32 %v222, %v223
    %v225 = vadd.f32 %v169, %v224
    %s226 = scalar_lea.vmem %s1, 32
    %v227 = vld [vmem:[%s226] sm:$0xff]
    %v228 = vld [vmem:[%s226 + $0x8] sm:$0xff]
    %v230 = vsel %vm116, %v227, 0
    %v233 = vsel %vm116, %v228, 0
    %235 = vmatpush.msra.mxu0 0.0
    %236 = vmatpush.msra.mxu0 0.0
    %237 = vmatpush.msra.mxu0 0.0
    %238 = vmatpush.msra.mxu0 0.0
    %239 = vmatpush.msra.mxu0 0.0
    %240 = vmatpush.msra.mxu0 0.0
    %241 = vmatpush.msra.mxu0 0.0
    %242 = vmatpush.msra.mxu0 0.0
    %243 = vmatpush.msra.mxu0 0.0
    %244 = vmatpush.msra.mxu0 0.0
    %245 = vmatpush.msra.mxu0 0.0
    %246 = vmatpush.msra.mxu0 0.0
    %247 = vmatpush.msra.mxu0 0.0
    %248 = vmatpush.msra.mxu0 0.0
    %249 = vmatpush.msra.mxu0 %v112
    %250 = vmatpush.msra.mxu0 %v110
    %251 = vmatmul.f32.gmra.mxu0 %v230
    %v252 = vpop.f32.mrf.mxu0
    %v253 = vadd.f32 0.0, %v252
    %254 = vmatmul.f32.gmra.mxu0 %v233
    %v255 = vpop.f32.mrf.mxu0
    %v256 = vadd.f32 0.0, %v255
    %257 = vdwg.mxu0
    %v258 = vadd.f32 %v90, %v253
    %v259 = vadd.f32 %v92, %v256
    %v260 = vsel %vm76, %v258, 0.0
    %v261 = vsel %vm76, %v259, 0.0
    %v262 = vadd.f32 %v260, %v261
    %v263 = vrot.slane %v262, 4
    %v264 = vadd.f32 %v262, %v263
    %v265 = vrot.slane %v264, 2
    %v266 = vadd.f32 %v264, %v265
    %v267 = vrot.slane %v266, 1
    %v268 = vadd.f32 %v266, %v267
    %v269 = vadd.f32 %v213, %v268
    %v270 = vmul.f32 %v258, %v258
    %v271 = vmul.f32 %v259, %v259
    %v272 = vsel %vm76, %v270, 0.0
    %v273 = vsel %vm76, %v271, 0.0
    %v274 = vadd.f32 %v272, %v273
    %v275 = vrot.slane %v274, 4
    %v276 = vadd.f32 %v274, %v275
    %v277 = vrot.slane %v276, 2
    %v278 = vadd.f32 %v276, %v277
    %v279 = vrot.slane %v278, 1
    %v280 = vadd.f32 %v278, %v279
    %v281 = vadd.f32 %v225, %v280
    %s282 = scalar_lea.vmem %s1, 48
    %v283 = vld [vmem:[%s282] sm:$0xff]
    %v284 = vld [vmem:[%s282 + $0x8] sm:$0xff]
    %v286 = vsel %vm116, %v283, 0
    %v289 = vsel %vm116, %v284, 0
    %291 = vmatpush.msra.mxu0 0.0
    %292 = vmatpush.msra.mxu0 0.0
    %293 = vmatpush.msra.mxu0 0.0
    %294 = vmatpush.msra.mxu0 0.0
    %295 = vmatpush.msra.mxu0 0.0
    %296 = vmatpush.msra.mxu0 0.0
    %297 = vmatpush.msra.mxu0 0.0
    %298 = vmatpush.msra.mxu0 0.0
    %299 = vmatpush.msra.mxu0 0.0
    %300 = vmatpush.msra.mxu0 0.0
    %301 = vmatpush.msra.mxu0 0.0
    %302 = vmatpush.msra.mxu0 0.0
    %303 = vmatpush.msra.mxu0 0.0
    %304 = vmatpush.msra.mxu0 0.0
    %305 = vmatpush.msra.mxu0 %v112
    %306 = vmatpush.msra.mxu0 %v110
    %307 = vmatmul.f32.gmra.mxu0 %v286
    %v308 = vpop.f32.mrf.mxu0
    %v309 = vadd.f32 0.0, %v308
    %310 = vmatmul.f32.gmra.mxu0 %v289
    %v311 = vpop.f32.mrf.mxu0
    %v312 = vadd.f32 0.0, %v311
    %313 = vdwg.mxu0
    %v314 = vadd.f32 %v90, %v309
    %v315 = vadd.f32 %v92, %v312
    %v316 = vsel %vm76, %v314, 0.0
    %v317 = vsel %vm76, %v315, 0.0
    %v318 = vadd.f32 %v316, %v317
    %v319 = vrot.slane %v318, 4
    %v320 = vadd.f32 %v318, %v319
    %v321 = vrot.slane %v320, 2
    %v322 = vadd.f32 %v320, %v321
    %v323 = vrot.slane %v322, 1
    %v324 = vadd.f32 %v322, %v323
    %v325 = vadd.f32 %v269, %v324
    %v326 = vmul.f32 %v314, %v314
    %v327 = vmul.f32 %v315, %v315
    %v328 = vsel %vm76, %v326, 0.0
    %v329 = vsel %vm76, %v327, 0.0
    %v330 = vadd.f32 %v328, %v329
    %v331 = vrot.slane %v330, 4
    %v332 = vadd.f32 %v330, %v331
    %v333 = vrot.slane %v332, 2
    %v334 = vadd.f32 %v332, %v333
    %v335 = vrot.slane %v334, 1
    %v336 = vadd.f32 %v334, %v335
    %v337 = vadd.f32 %v281, %v336
    %v338 = vmul.f32 %v325, 0.015625
    %v339 = vmul.f32 %v337, 0.015625
    %v340 = vmul.f32 %v338, %v338
    %v341 = vsub.f32 %v339, %v340
    %v342 = vmax.f32 %v341, 0.0
    %v343 = vadd.f32 %v342, 1e-05
    %v344 = vrsqrt.pop %v343
    %v345 = vmul.f32 %v344, %v343
    %v346 = vmul.f32 %v345, %v344
    %v347 = vmul.f32 0.5, %v346
    %v348 = vsub.f32 1.5, %v347
    %v349 = vmul.f32 %v344, %v348
    %vm350 = vweird.f32 %v343
    %vm351 = vweird.f32 %v344
    %vm352 = vmor %vm350, %vm351
    %v353 = vsel %vm352, %v344, %v349
    %v354 = vsub.f32 %v146, %v338
    %v355 = vsub.f32 %v147, %v338
    %v356 = vmul.f32 %v354, %v353
    %v357 = vmul.f32 %v355, %v353
    %vm358 = vcmp.ge.f32.partialorder %v356, 0.0
    %vm359 = vcmp.ge.f32.partialorder %v357, 0.0
    %v360 = vmul.f32 %v356, 0.2
    %v361 = vmul.f32 %v357, 0.2
    %v362 = vsel %vm358, %v356, %v360
    %v363 = vsel %vm359, %v357, %v361
    %v364 = vsub.f32 %v202, %v338
    %v365 = vsub.f32 %v203, %v338
    %v366 = vmul.f32 %v364, %v353
    %v367 = vmul.f32 %v365, %v353
    %vm368 = vcmp.ge.f32.partialorder %v366, 0.0
    %vm369 = vcmp.ge.f32.partialorder %v367, 0.0
    %v370 = vmul.f32 %v366, 0.2
    %v371 = vmul.f32 %v367, 0.2
    %v372 = vsel %vm368, %v366, %v370
    %v373 = vsel %vm369, %v367, %v371
    %v374 = vmax.f32 %v362, %v372
    %v375 = vmax.f32 %v363, %v373
    %v376 = vsub.f32 %v258, %v338
    %v377 = vsub.f32 %v259, %v338
    %v378 = vmul.f32 %v376, %v353
    %v379 = vmul.f32 %v377, %v353
    %vm380 = vcmp.ge.f32.partialorder %v378, 0.0
    %vm381 = vcmp.ge.f32.partialorder %v379, 0.0
    %v382 = vmul.f32 %v378, 0.2
    %v383 = vmul.f32 %v379, 0.2
    %v384 = vsel %vm380, %v378, %v382
    %v385 = vsel %vm381, %v379, %v383
    %v386 = vmax.f32 %v374, %v384
    %v387 = vmax.f32 %v375, %v385
    %v388 = vsub.f32 %v314, %v338
    %v389 = vsub.f32 %v315, %v338
    %v390 = vmul.f32 %v388, %v353
    %v391 = vmul.f32 %v389, %v353
    %vm392 = vcmp.ge.f32.partialorder %v390, 0.0
    %vm393 = vcmp.ge.f32.partialorder %v391, 0.0
    %v394 = vmul.f32 %v390, 0.2
    %v395 = vmul.f32 %v391, 0.2
    %v396 = vsel %vm392, %v390, %v394
    %v397 = vsel %vm393, %v391, %v395
    %v398 = vmax.f32 %v386, %v396
    %v399 = vmax.f32 %v387, %v397
    %v400 = vld [vmem:[%s5] sm:$0xff]
    %v401 = vld [vmem:[%s5 + $0x8] sm:$0xff]
    %v402 = vld [vmem:[%s5 + $0x10] sm:$0xff]
    %v403 = vld [vmem:[%s5 + $0x18] sm:$0xff]
    %v404 = vpack.c.bf16 %v399, %v398
    %v405 = vpack.c.bf16 %v401, %v400
    %v406 = vpack.c.bf16 %v403, %v402
    %v408 = vsel %vm76, %v404, 0
    %410 = vmatpush.bf16.msra.mxu0 0
    %411 = vmatpush.bf16.msra.mxu0 0
    %412 = vmatpush.bf16.msra.mxu0 0
    %413 = vmatpush.bf16.msra.mxu0 0
    %414 = vmatpush.bf16.msra.mxu0 0
    %415 = vmatpush.bf16.msra.mxu0 0
    %416 = vmatpush.bf16.msra.mxu0 %v406
    %417 = vmatpush.bf16.msra.mxu0 %v405
    %418 = vmatmul.bf16.gmra.mxu0 %v408
    %v419 = vpop.f32.mrf.mxu0
    %v420 = vadd.f32 0.0, %v419
    %v421 = vpop.f32.mrf.mxu0
    %v422 = vadd.f32 0.0, %v421
    %423 = vdwg.mxu0
    %v424 = vld [vmem:[%s6] sm:$0xff]
    %v425 = vld [vmem:[%s6 + $0x8] sm:$0xff]
    %v426 = vld [vmem:[%s6 + $0x10] sm:$0xff]
    %v427 = vld [vmem:[%s6 + $0x18] sm:$0xff]
    %v428 = vpack.c.bf16 %v425, %v424
    %v429 = vpack.c.bf16 %v427, %v426
    %430 = vmatpush.bf16.msra.mxu0 0
    %431 = vmatpush.bf16.msra.mxu0 0
    %432 = vmatpush.bf16.msra.mxu0 0
    %433 = vmatpush.bf16.msra.mxu0 0
    %434 = vmatpush.bf16.msra.mxu0 0
    %435 = vmatpush.bf16.msra.mxu0 0
    %436 = vmatpush.bf16.msra.mxu0 %v429
    %437 = vmatpush.bf16.msra.mxu0 %v428
    %438 = vmatmul.bf16.gmra.mxu0 %v408
    %v439 = vpop.f32.mrf.mxu0
    %v440 = vadd.f32 0.0, %v439
    %v441 = vpop.f32.mrf.mxu0
    %v442 = vadd.f32 0.0, %v441
    %443 = vdwg.mxu0
    %444 = vmatpush.msra.mxu0 0.0
    %445 = vmatpush.msra.mxu0 0.0
    %446 = vmatpush.msra.mxu0 0.0
    %447 = vmatpush.msra.mxu0 0.0
    %448 = vmatpush.msra.mxu0 0.0
    %449 = vmatpush.msra.mxu0 0.0
    %450 = vmatpush.msra.mxu0 0.0
    %451 = vmatpush.msra.mxu0 0.0
    %452 = vmatpush.msra.mxu0 0.0
    %453 = vmatpush.msra.mxu0 0.0
    %454 = vmatpush.msra.mxu0 0.0
    %455 = vmatpush.msra.mxu0 0.0
    %456 = vmatpush.msra.mxu0 0.0
    %457 = vmatpush.msra.mxu0 0.0
    %458 = vmatpush.msra.mxu0 %v442
    %459 = vmatpush.msra.mxu0 %v440
    %460 = vmatmul.f32.gmra.mxu0 %v118
    %v461 = vpop.f32.mrf.mxu0
    %v462 = vadd.f32 0.0, %v461
    %463 = vmatmul.f32.gmra.mxu0 %v121
    %v464 = vpop.f32.mrf.mxu0
    %v465 = vadd.f32 0.0, %v464
    %466 = vdwg.mxu0
    %v467 = vadd.f32 %v420, %v462
    %v468 = vadd.f32 %v422, %v465
    %vm469 = vcmask 523264
    %v470 = vsel %vm469, %v467, 0.0
    %v471 = vsel %vm469, %v468, 0.0
    %v472 = vadd.f32 %v470, %v471
    %v473 = vrot.slane %v472, 4
    %v474 = vadd.f32 %v472, %v473
    %v475 = vrot.slane %v474, 2
    %v476 = vadd.f32 %v474, %v475
    %v477 = vrot.slane %v476, 1
    %v478 = vadd.f32 %v476, %v477
    %v479 = vadd.f32 %v478, 0.0
    %v480 = vmul.f32 %v467, %v467
    %v481 = vmul.f32 %v468, %v468
    %v482 = vsel %vm469, %v480, 0.0
    %v483 = vsel %vm469, %v481, 0.0
    %v484 = vadd.f32 %v482, %v483
    %v485 = vrot.slane %v484, 4
    %v486 = vadd.f32 %v484, %v485
    %v487 = vrot.slane %v486, 2
    %v488 = vadd.f32 %v486, %v487
    %v489 = vrot.slane %v488, 1
    %v490 = vadd.f32 %v488, %v489
    %v491 = vadd.f32 %v490, 0.0
    %492 = vmatpush.msra.mxu0 0.0
    %493 = vmatpush.msra.mxu0 0.0
    %494 = vmatpush.msra.mxu0 0.0
    %495 = vmatpush.msra.mxu0 0.0
    %496 = vmatpush.msra.mxu0 0.0
    %497 = vmatpush.msra.mxu0 0.0
    %498 = vmatpush.msra.mxu0 0.0
    %499 = vmatpush.msra.mxu0 0.0
    %500 = vmatpush.msra.mxu0 0.0
    %501 = vmatpush.msra.mxu0 0.0
    %502 = vmatpush.msra.mxu0 0.0
    %503 = vmatpush.msra.mxu0 0.0
    %504 = vmatpush.msra.mxu0 0.0
    %505 = vmatpush.msra.mxu0 0.0
    %506 = vmatpush.msra.mxu0 %v442
    %507 = vmatpush.msra.mxu0 %v440
    %508 = vmatmul.f32.gmra.mxu0 %v174
    %v509 = vpop.f32.mrf.mxu0
    %v510 = vadd.f32 0.0, %v509
    %511 = vmatmul.f32.gmra.mxu0 %v177
    %v512 = vpop.f32.mrf.mxu0
    %v513 = vadd.f32 0.0, %v512
    %514 = vdwg.mxu0
    %v515 = vadd.f32 %v420, %v510
    %v516 = vadd.f32 %v422, %v513
    %v517 = vsel %vm469, %v515, 0.0
    %v518 = vsel %vm469, %v516, 0.0
    %v519 = vadd.f32 %v517, %v518
    %v520 = vrot.slane %v519, 4
    %v521 = vadd.f32 %v519, %v520
    %v522 = vrot.slane %v521, 2
    %v523 = vadd.f32 %v521, %v522
    %v524 = vrot.slane %v523, 1
    %v525 = vadd.f32 %v523, %v524
    %v526 = vadd.f32 %v479, %v525
    %v527 = vmul.f32 %v515, %v515
    %v528 = vmul.f32 %v516, %v516
    %v529 = vsel %vm469, %v527, 0.0
    %v530 = vsel %vm469, %v528, 0.0
    %v531 = vadd.f32 %v529, %v530
    %v532 = vrot.slane %v531, 4
    %v533 = vadd.f32 %v531, %v532
    %v534 = vrot.slane %v533, 2
    %v535 = vadd.f32 %v533, %v534
    %v536 = vrot.slane %v535, 1
    %v537 = vadd.f32 %v535, %v536
    %v538 = vadd.f32 %v491, %v537
    %539 = vmatpush.msra.mxu0 0.0
    %540 = vmatpush.msra.mxu0 0.0
    %541 = vmatpush.msra.mxu0 0.0
    %542 = vmatpush.msra.mxu0 0.0
    %543 = vmatpush.msra.mxu0 0.0
    %544 = vmatpush.msra.mxu0 0.0
    %545 = vmatpush.msra.mxu0 0.0
    %546 = vmatpush.msra.mxu0 0.0
    %547 = vmatpush.msra.mxu0 0.0
    %548 = vmatpush.msra.mxu0 0.0
    %549 = vmatpush.msra.mxu0 0.0
    %550 = vmatpush.msra.mxu0 0.0
    %551 = vmatpush.msra.mxu0 0.0
    %552 = vmatpush.msra.mxu0 0.0
    %553 = vmatpush.msra.mxu0 %v442
    %554 = vmatpush.msra.mxu0 %v440
    %555 = vmatmul.f32.gmra.mxu0 %v230
    %v556 = vpop.f32.mrf.mxu0
    %v557 = vadd.f32 0.0, %v556
    %558 = vmatmul.f32.gmra.mxu0 %v233
    %v559 = vpop.f32.mrf.mxu0
    %v560 = vadd.f32 0.0, %v559
    %561 = vdwg.mxu0
    %v562 = vadd.f32 %v420, %v557
    %v563 = vadd.f32 %v422, %v560
    %v564 = vsel %vm469, %v562, 0.0
    %v565 = vsel %vm469, %v563, 0.0
    %v566 = vadd.f32 %v564, %v565
    %v567 = vrot.slane %v566, 4
    %v568 = vadd.f32 %v566, %v567
    %v569 = vrot.slane %v568, 2
    %v570 = vadd.f32 %v568, %v569
    %v571 = vrot.slane %v570, 1
    %v572 = vadd.f32 %v570, %v571
    %v573 = vadd.f32 %v526, %v572
    %v574 = vmul.f32 %v562, %v562
    %v575 = vmul.f32 %v563, %v563
    %v576 = vsel %vm469, %v574, 0.0
    %v577 = vsel %vm469, %v575, 0.0
    %v578 = vadd.f32 %v576, %v577
    %v579 = vrot.slane %v578, 4
    %v580 = vadd.f32 %v578, %v579
    %v581 = vrot.slane %v580, 2
    %v582 = vadd.f32 %v580, %v581
    %v583 = vrot.slane %v582, 1
    %v584 = vadd.f32 %v582, %v583
    %v585 = vadd.f32 %v538, %v584
    %586 = vmatpush.msra.mxu0 0.0
    %587 = vmatpush.msra.mxu0 0.0
    %588 = vmatpush.msra.mxu0 0.0
    %589 = vmatpush.msra.mxu0 0.0
    %590 = vmatpush.msra.mxu0 0.0
    %591 = vmatpush.msra.mxu0 0.0
    %592 = vmatpush.msra.mxu0 0.0
    %593 = vmatpush.msra.mxu0 0.0
    %594 = vmatpush.msra.mxu0 0.0
    %595 = vmatpush.msra.mxu0 0.0
    %596 = vmatpush.msra.mxu0 0.0
    %597 = vmatpush.msra.mxu0 0.0
    %598 = vmatpush.msra.mxu0 0.0
    %599 = vmatpush.msra.mxu0 0.0
    %600 = vmatpush.msra.mxu0 %v442
    %601 = vmatpush.msra.mxu0 %v440
    %602 = vmatmul.f32.gmra.mxu0 %v286
    %v603 = vpop.f32.mrf.mxu0
    %v604 = vadd.f32 0.0, %v603
    %605 = vmatmul.f32.gmra.mxu0 %v289
    %v606 = vpop.f32.mrf.mxu0
    %v607 = vadd.f32 0.0, %v606
    %608 = vdwg.mxu0
    %v609 = vadd.f32 %v420, %v604
    %v610 = vadd.f32 %v422, %v607
    %v611 = vsel %vm469, %v609, 0.0
    %v612 = vsel %vm469, %v610, 0.0
    %v613 = vadd.f32 %v611, %v612
    %v614 = vrot.slane %v613, 4
    %v615 = vadd.f32 %v613, %v614
    %v616 = vrot.slane %v615, 2
    %v617 = vadd.f32 %v615, %v616
    %v618 = vrot.slane %v617, 1
    %v619 = vadd.f32 %v617, %v618
    %v620 = vadd.f32 %v573, %v619
    %v621 = vmul.f32 %v609, %v609
    %v622 = vmul.f32 %v610, %v610
    %v623 = vsel %vm469, %v621, 0.0
    %v624 = vsel %vm469, %v622, 0.0
    %v625 = vadd.f32 %v623, %v624
    %v626 = vrot.slane %v625, 4
    %v627 = vadd.f32 %v625, %v626
    %v628 = vrot.slane %v627, 2
    %v629 = vadd.f32 %v627, %v628
    %v630 = vrot.slane %v629, 1
    %v631 = vadd.f32 %v629, %v630
    %v632 = vadd.f32 %v585, %v631
    %v633 = vmul.f32 %v620, 0.015625
    %v634 = vmul.f32 %v632, 0.015625
    %v635 = vmul.f32 %v633, %v633
    %v636 = vsub.f32 %v634, %v635
    %v637 = vmax.f32 %v636, 0.0
    %v638 = vadd.f32 %v637, 1e-05
    %v639 = vrsqrt.pop %v638
    %v640 = vmul.f32 %v639, %v638
    %v641 = vmul.f32 %v640, %v639
    %v642 = vmul.f32 0.5, %v641
    %v643 = vsub.f32 1.5, %v642
    %v644 = vmul.f32 %v639, %v643
    %vm645 = vweird.f32 %v638
    %vm646 = vweird.f32 %v639
    %vm647 = vmor %vm645, %vm646
    %v648 = vsel %vm647, %v639, %v644
    %v649 = vsub.f32 %v467, %v633
    %v650 = vsub.f32 %v468, %v633
    %v651 = vmul.f32 %v649, %v648
    %v652 = vmul.f32 %v650, %v648
    %vm653 = vcmp.ge.f32.partialorder %v651, 0.0
    %vm654 = vcmp.ge.f32.partialorder %v652, 0.0
    %v655 = vmul.f32 %v651, 0.2
    %v656 = vmul.f32 %v652, 0.2
    %v657 = vsel %vm653, %v651, %v655
    %v658 = vsel %vm654, %v652, %v656
    %v659 = vsub.f32 %v515, %v633
    %v660 = vsub.f32 %v516, %v633
    %v661 = vmul.f32 %v659, %v648
    %v662 = vmul.f32 %v660, %v648
    %vm663 = vcmp.ge.f32.partialorder %v661, 0.0
    %vm664 = vcmp.ge.f32.partialorder %v662, 0.0
    %v665 = vmul.f32 %v661, 0.2
    %v666 = vmul.f32 %v662, 0.2
    %v667 = vsel %vm663, %v661, %v665
    %v668 = vsel %vm664, %v662, %v666
    %v669 = vmax.f32 %v657, %v667
    %v670 = vmax.f32 %v658, %v668
    %v671 = vsub.f32 %v562, %v633
    %v672 = vsub.f32 %v563, %v633
    %v673 = vmul.f32 %v671, %v648
    %v674 = vmul.f32 %v672, %v648
    %vm675 = vcmp.ge.f32.partialorder %v673, 0.0
    %vm676 = vcmp.ge.f32.partialorder %v674, 0.0
    %v677 = vmul.f32 %v673, 0.2
    %v678 = vmul.f32 %v674, 0.2
    %v679 = vsel %vm675, %v673, %v677
    %v680 = vsel %vm676, %v674, %v678
    %v681 = vmax.f32 %v669, %v679
    %v682 = vmax.f32 %v670, %v680
    %v683 = vsub.f32 %v609, %v633
    %v684 = vsub.f32 %v610, %v633
    %v685 = vmul.f32 %v683, %v648
    %v686 = vmul.f32 %v684, %v648
    %vm687 = vcmp.ge.f32.partialorder %v685, 0.0
    %vm688 = vcmp.ge.f32.partialorder %v686, 0.0
    %v689 = vmul.f32 %v685, 0.2
    %v690 = vmul.f32 %v686, 0.2
    %v691 = vsel %vm687, %v685, %v689
    %v692 = vsel %vm688, %v686, %v690
    %v693 = vmax.f32 %v681, %v691
    %v694 = vmax.f32 %v682, %v692
    %v695 = vld [vmem:[%s7] sm:$0xff]
    %v696 = vld [vmem:[%s7 + $0x8] sm:$0xff]
    %v697 = vld [vmem:[%s7 + $0x10] sm:$0xff]
    %v698 = vld [vmem:[%s7 + $0x18] sm:$0xff]
    %v699 = vpack.c.bf16 %v696, %v695
    %v700 = vpack.c.bf16 %v698, %v697
    %v701 = vld [vmem:[%s8] sm:$0xff]
    %v702 = vld [vmem:[%s8 + $0x8] sm:$0xff]
    %v703 = vld [vmem:[%s8 + $0x10] sm:$0xff]
    %v704 = vld [vmem:[%s8 + $0x18] sm:$0xff]
    %v705 = vpack.c.bf16 %v702, %v701
    %v706 = vpack.c.bf16 %v704, %v703
    %707 = vmatpush.bf16.msra.mxu0 0
    %708 = vmatpush.bf16.msra.mxu0 0
    %709 = vmatpush.bf16.msra.mxu0 0
    %710 = vmatpush.bf16.msra.mxu0 0
    %711 = vmatpush.bf16.msra.mxu0 0
    %712 = vmatpush.bf16.msra.mxu0 0
    %713 = vmatpush.bf16.msra.mxu0 %v706
    %714 = vmatpush.bf16.msra.mxu0 %v705
    %715 = vmatmul.bf16.gmra.mxu0 %v408
    %v716 = vpop.f32.mrf.mxu0
    %v717 = vadd.f32 0.0, %v716
    %v718 = vpop.f32.mrf.mxu0
    %v719 = vadd.f32 0.0, %v718
    %720 = vdwg.mxu0
    %721 = vmatpush.bf16.msra.mxu0 0
    %722 = vmatpush.bf16.msra.mxu0 0
    %723 = vmatpush.bf16.msra.mxu0 0
    %724 = vmatpush.bf16.msra.mxu0 0
    %725 = vmatpush.bf16.msra.mxu0 0
    %726 = vmatpush.bf16.msra.mxu0 0
    %727 = vmatpush.bf16.msra.mxu0 %v700
    %728 = vmatpush.bf16.msra.mxu0 %v699
    %729 = vmatmul.bf16.gmra.mxu0 %v78
    %v730 = vpop.f32.mrf.mxu0
    %v731 = vadd.f32 %v717, %v730
    %v732 = vpop.f32.mrf.mxu0
    %v733 = vadd.f32 %v719, %v732
    %734 = vdwg.mxu0
    %v735 = vld [vmem:[%s9] sm:$0xff]
    %v736 = vld [vmem:[%s9 + $0x8] sm:$0xff]
    %v737 = vld [vmem:[%s9 + $0x10] sm:$0xff]
    %v738 = vld [vmem:[%s9 + $0x18] sm:$0xff]
    %v739 = vld [vmem:[%s9 + $0x20] sm:$0xff]
    %v740 = vld [vmem:[%s9 + $0x28] sm:$0xff]
    %v741 = vld [vmem:[%s9 + $0x30] sm:$0xff]
    %v742 = vld [vmem:[%s9 + $0x38] sm:$0xff]
    %v743 = vpack.c.bf16 %v694, %v693
    %v744 = vpack.c.bf16 %v736, %v735
    %v745 = vpack.c.bf16 %v738, %v737
    %v746 = vpack.c.bf16 %v740, %v739
    %v747 = vpack.c.bf16 %v742, %v741
    %v749 = vsel %vm469, %v743, 0
    %751 = vmatpush.bf16.msra.mxu0 0
    %752 = vmatpush.bf16.msra.mxu0 0
    %753 = vmatpush.bf16.msra.mxu0 0
    %754 = vmatpush.bf16.msra.mxu0 0
    %755 = vmatpush.bf16.msra.mxu0 %v747
    %756 = vmatpush.bf16.msra.mxu0 %v746
    %757 = vmatpush.bf16.msra.mxu0 %v745
    %758 = vmatpush.bf16.msra.mxu0 %v744
    %759 = vmatmul.bf16.gmra.mxu0 %v749
    %v760 = vpop.f32.mrf.mxu0
    %v761 = vadd.f32 0.0, %v760
    %v762 = vpop.f32.mrf.mxu0
    %v763 = vadd.f32 0.0, %v762
    %764 = vdwg.mxu0
    %v765 = vadd.f32 %v731, %v761
    %v766 = vadd.f32 %v733, %v763
    %v767 = vsel %vm76, %v765, 0.0
    %v768 = vsel %vm76, %v766, 0.0
    %v769 = vadd.f32 %v767, %v768
    %v770 = vrot.slane %v769, 4
    %v771 = vadd.f32 %v769, %v770
    %v772 = vrot.slane %v771, 2
    %v773 = vadd.f32 %v771, %v772
    %v774 = vrot.slane %v773, 1
    %v775 = vadd.f32 %v773, %v774
    %v776 = vrcp.pop 16.0
    %v777 = vmul.f32 16.0, %v776
    %v778 = vsub.f32 1.0, %v777
    %v779 = vmul.f32 %v776, %v778
    %v780 = vadd.f32 %v776, %v779
    %vm781 = vweird.f32 %v776
    %v782 = vsel %vm781, %v776, %v780
    %v783 = vmul.f32 %v775, %v782
    %v784 = vmul.f32 %v765, %v765
    %v785 = vmul.f32 %v766, %v766
    %v786 = vsel %vm76, %v784, 0.0
    %v787 = vsel %vm76, %v785, 0.0
    %v788 = vadd.f32 %v786, %v787
    %v789 = vrot.slane %v788, 4
    %v790 = vadd.f32 %v788, %v789
    %v791 = vrot.slane %v790, 2
    %v792 = vadd.f32 %v790, %v791
    %v793 = vrot.slane %v792, 1
    %v794 = vadd.f32 %v792, %v793
    %v795 = vmul.f32 %v794, %v782
    %v796 = vmul.f32 %v783, %v783
    %v797 = vsub.f32 %v795, %v796
    %v798 = vmax.f32 %v797, 0.0
    %v799 = vsub.f32 %v765, %v783
    %v800 = vsub.f32 %v766, %v783
    %v801 = vadd.f32 %v798, 1e-05
    %v802 = vrsqrt.pop %v801
    %v803 = vmul.f32 %v802, %v801
    %v804 = vmul.f32 %v803, %v802
    %v805 = vmul.f32 0.5, %v804
    %v806 = vsub.f32 1.5, %v805
    %v807 = vmul.f32 %v802, %v806
    %vm808 = vweird.f32 %v801
    %vm809 = vweird.f32 %v802
    %vm810 = vmor %vm808, %vm809
    %v811 = vsel %vm810, %v802, %v807
    %v812 = vmul.f32 %v799, %v811
    %v813 = vmul.f32 %v800, %v811
    %vm814 = vcmp.ge.f32.partialorder %v812, 0.0
    %vm815 = vcmp.ge.f32.partialorder %v813, 0.0
    %v816 = vmul.f32 %v812, 0.2
    %v817 = vmul.f32 %v813, 0.2
    %v818 = vsel %vm814, %v812, %v816
    %v819 = vsel %vm815, %v813, %v817
    %v820 = vld [vmem:[%s10] sm:$0xff]
    %v821 = vld [vmem:[%s10 + $0x8] sm:$0xff]
    %v822 = vld [vmem:[%s10 + $0x10] sm:$0xff]
    %v823 = vld [vmem:[%s10 + $0x18] sm:$0xff]
    %v824 = vpack.c.bf16 %v819, %v818
    %v825 = vpack.c.bf16 %v821, %v820
    %v826 = vpack.c.bf16 %v823, %v822
    %v827 = vld [vmem:[%s11] sm:$0x1]
    %v829 = vperm.slane %v827, 0
    %v832 = vsel %vm76, %v824, 0
    %834 = vmatpush.bf16.msra.mxu0 0
    %835 = vmatpush.bf16.msra.mxu0 0
    %836 = vmatpush.bf16.msra.mxu0 0
    %837 = vmatpush.bf16.msra.mxu0 0
    %838 = vmatpush.bf16.msra.mxu0 0
    %839 = vmatpush.bf16.msra.mxu0 0
    %840 = vmatpush.bf16.msra.mxu0 %v826
    %841 = vmatpush.bf16.msra.mxu0 %v825
    %842 = vmatmul.bf16.gmra.mxu0 %v832
    %v843 = vpop.f32.mrf.mxu0
    %v844 = vadd.f32 %v829, %v843
    %v845 = vpop.f32.mrf.mxu0
    %v846 = vadd.f32 %v829, %v845
    %847 = vdwg.mxu0
    %v848 = vld [vmem:[%s12] sm:$0xff]
    %v849 = vld [vmem:[%s12 + $0x8] sm:$0xff]
    %v850 = vld [vmem:[%s12 + $0x10] sm:$0xff]
    %v851 = vld [vmem:[%s12 + $0x18] sm:$0xff]
    %v852 = vpack.c.bf16 %v849, %v848
    %v853 = vpack.c.bf16 %v851, %v850
    %v854 = vld [vmem:[%s13] sm:$0x1]
    %v856 = vperm.slane %v854, 0
    %858 = vmatpush.bf16.msra.mxu0 0
    %859 = vmatpush.bf16.msra.mxu0 0
    %860 = vmatpush.bf16.msra.mxu0 0
    %861 = vmatpush.bf16.msra.mxu0 0
    %862 = vmatpush.bf16.msra.mxu0 0
    %863 = vmatpush.bf16.msra.mxu0 0
    %864 = vmatpush.bf16.msra.mxu0 %v853
    %865 = vmatpush.bf16.msra.mxu0 %v852
    %866 = vmatmul.bf16.gmra.mxu0 %v832
    %v867 = vpop.f32.mrf.mxu0
    %v868 = vadd.f32 %v856, %v867
    %v869 = vpop.f32.mrf.mxu0
    %v870 = vadd.f32 %v856, %v869
    %871 = vdwg.mxu0
    %v872 = vld [vmem:[%s14] sm:$0xff]
    %v873 = vld [vmem:[%s14 + $0x8] sm:$0xff]
    %v874 = vld [vmem:[%s14 + $0x10] sm:$0xff]
    %v875 = vld [vmem:[%s14 + $0x18] sm:$0xff]
    %v876 = vpack.c.bf16 %v873, %v872
    %v877 = vpack.c.bf16 %v875, %v874
    %v878 = vld [vmem:[%s15] sm:$0x1]
    %v880 = vperm.slane %v878, 0
    %882 = vmatpush.bf16.msra.mxu0 0
    %883 = vmatpush.bf16.msra.mxu0 0
    %884 = vmatpush.bf16.msra.mxu0 0
    %885 = vmatpush.bf16.msra.mxu0 0
    %886 = vmatpush.bf16.msra.mxu0 0
    %887 = vmatpush.bf16.msra.mxu0 0
    %888 = vmatpush.bf16.msra.mxu0 %v877
    %889 = vmatpush.bf16.msra.mxu0 %v876
    %890 = vmatmul.bf16.gmra.mxu0 %v832
    %v891 = vpop.f32.mrf.mxu0
    %v892 = vadd.f32 %v880, %v891
    %v893 = vpop.f32.mrf.mxu0
    %v894 = vadd.f32 %v880, %v893
    %895 = vdwg.mxu0
    %v896 = vld [vmem:[%s2] sm:$0xff]
    %v897 = vld [vmem:[%s2 + $0x8] sm:$0xff]
    %v898 = vld [vmem:[%s2 + $0x10] sm:$0xff]
    %v899 = vld [vmem:[%s2 + $0x18] sm:$0xff]
    %v900 = vld [vmem:[%s2 + $0x20] sm:$0xff]
    %v901 = vld [vmem:[%s2 + $0x28] sm:$0xff]
    %v902 = vld [vmem:[%s2 + $0x30] sm:$0xff]
    %v903 = vld [vmem:[%s2 + $0x38] sm:$0xff]
    %v904 = vld [vmem:[%s2 + $0x40] sm:$0xff]
    %v905 = vld [vmem:[%s2 + $0x48] sm:$0xff]
    %v906 = vld [vmem:[%s2 + $0x50] sm:$0xff]
    %v907 = vld [vmem:[%s2 + $0x58] sm:$0xff]
    %v908 = vld [vmem:[%s2 + $0x60] sm:$0xff]
    %v909 = vld [vmem:[%s2 + $0x68] sm:$0xff]
    %v910 = vld [vmem:[%s2 + $0x70] sm:$0xff]
    %v911 = vld [vmem:[%s2 + $0x78] sm:$0xff]
    %v912 = vld [vmem:[%s2 + $0x80] sm:$0xff]
    %v913 = vld [vmem:[%s2 + $0x88] sm:$0xff]
    %v914 = vld [vmem:[%s2 + $0x90] sm:$0xff]
    %v915 = vld [vmem:[%s2 + $0x98] sm:$0xff]
    %v916 = vld [vmem:[%s2 + $0xa0] sm:$0xff]
    %v917 = vld [vmem:[%s2 + $0xa8] sm:$0xff]
    %v918 = vld [vmem:[%s2 + $0xb0] sm:$0xff]
    %v919 = vld [vmem:[%s2 + $0xb8] sm:$0xff]
    %v920 = vld [vmem:[%s2 + $0xc0] sm:$0xff]
    %v921 = vld [vmem:[%s2 + $0xc8] sm:$0xff]
    %v922 = vld [vmem:[%s2 + $0xd0] sm:$0xff]
    %v923 = vld [vmem:[%s2 + $0xd8] sm:$0xff]
    %v924 = vld [vmem:[%s2 + $0xe0] sm:$0xff]
    %v925 = vld [vmem:[%s2 + $0xe8] sm:$0xff]
    %v926 = vld [vmem:[%s2 + $0xf0] sm:$0xff]
    %v927 = vld [vmem:[%s2 + $0xf8] sm:$0xff]
    %v930 = vrot.slane %v844, 1
    %v931 = vrot.slane %v844, 2
    %v932 = vrot.slane %v844, 3
    %v933 = vrot.slane %v844, 4
    %v934 = vrot.slane %v844, 5
    %v935 = vrot.slane %v844, 6
    %v936 = vrot.slane %v844, 7
    %v937 = vrot.slane %v846, 1
    %v938 = vrot.slane %v846, 2
    %v939 = vrot.slane %v846, 3
    %v940 = vrot.slane %v846, 4
    %v941 = vrot.slane %v846, 5
    %v942 = vrot.slane %v846, 6
    %v943 = vrot.slane %v846, 7
    %v944 = vperm.slane %v844, 0
    %v945 = vperm.slane %v930, 0
    %v946 = vperm.slane %v931, 0
    %v947 = vperm.slane %v932, 0
    %v948 = vperm.slane %v933, 0
    %v949 = vperm.slane %v934, 0
    %v950 = vperm.slane %v935, 0
    %v951 = vperm.slane %v936, 0
    %v952 = vperm.slane %v846, 0
    %v953 = vperm.slane %v937, 0
    %v954 = vperm.slane %v938, 0
    %v955 = vperm.slane %v939, 0
    %v956 = vperm.slane %v940, 0
    %v957 = vperm.slane %v941, 0
    %v958 = vperm.slane %v942, 0
    %v959 = vperm.slane %v943, 0
    %v976 = vmul.f32 %v944, %v896
    %v977 = vmul.f32 %v944, %v897
    %v978 = vmul.f32 %v945, %v898
    %v979 = vmul.f32 %v945, %v899
    %v980 = vmul.f32 %v946, %v900
    %v981 = vmul.f32 %v946, %v901
    %v982 = vmul.f32 %v947, %v902
    %v983 = vmul.f32 %v947, %v903
    %v984 = vmul.f32 %v948, %v904
    %v985 = vmul.f32 %v948, %v905
    %v986 = vmul.f32 %v949, %v906
    %v987 = vmul.f32 %v949, %v907
    %v988 = vmul.f32 %v950, %v908
    %v989 = vmul.f32 %v950, %v909
    %v990 = vmul.f32 %v951, %v910
    %v991 = vmul.f32 %v951, %v911
    %v992 = vmul.f32 %v952, %v912
    %v993 = vmul.f32 %v952, %v913
    %v994 = vmul.f32 %v953, %v914
    %v995 = vmul.f32 %v953, %v915
    %v996 = vmul.f32 %v954, %v916
    %v997 = vmul.f32 %v954, %v917
    %v998 = vmul.f32 %v955, %v918
    %v999 = vmul.f32 %v955, %v919
    %v1000 = vmul.f32 %v956, %v920
    %v1001 = vmul.f32 %v956, %v921
    %v1002 = vmul.f32 %v957, %v922
    %v1003 = vmul.f32 %v957, %v923
    %v1004 = vmul.f32 %v958, %v924
    %v1005 = vmul.f32 %v958, %v925
    %v1006 = vmul.f32 %v959, %v926
    %v1007 = vmul.f32 %v959, %v927
    %v1008 = vld [vmem:[%s16] sm:$0xff]
    %v1009 = vld [vmem:[%s16 + $0x8] sm:$0xff]
    %v1010 = vld [vmem:[%s16 + $0x10] sm:$0xff]
    %v1011 = vld [vmem:[%s16 + $0x18] sm:$0xff]
    %v1012 = vpack.c.bf16 %v846, %v844
    %v1013 = vpack.c.bf16 %v870, %v868
    %vm1014 = vcmask 64512
    %v1015 = vsel %vm1014, %v976, 0.0
    %1016 = vadd.xlane.f32.xlu0 %v1015
    %v1017 = vpop.xlane.xlu0 %1016
    %v1018 = vsel %vm1014, %v977, 0.0
    %1019 = vadd.xlane.f32.xlu0 %v1018
    %v1020 = vpop.xlane.xlu0 %1019
    %v1021 = vsel %vm1014, %v978, 0.0
    %1022 = vadd.xlane.f32.xlu0 %v1021
    %v1023 = vpop.xlane.xlu0 %1022
    %v1024 = vsel %vm1014, %v979, 0.0
    %1025 = vadd.xlane.f32.xlu0 %v1024
    %v1026 = vpop.xlane.xlu0 %1025
    %v1027 = vsel %vm1014, %v980, 0.0
    %1028 = vadd.xlane.f32.xlu0 %v1027
    %v1029 = vpop.xlane.xlu0 %1028
    %v1030 = vsel %vm1014, %v981, 0.0
    %1031 = vadd.xlane.f32.xlu0 %v1030
    %v1032 = vpop.xlane.xlu0 %1031
    %v1033 = vsel %vm1014, %v982, 0.0
    %1034 = vadd.xlane.f32.xlu0 %v1033
    %v1035 = vpop.xlane.xlu0 %1034
    %v1036 = vsel %vm1014, %v983, 0.0
    %1037 = vadd.xlane.f32.xlu0 %v1036
    %v1038 = vpop.xlane.xlu0 %1037
    %v1039 = vsel %vm1014, %v984, 0.0
    %1040 = vadd.xlane.f32.xlu0 %v1039
    %v1041 = vpop.xlane.xlu0 %1040
    %v1042 = vsel %vm1014, %v985, 0.0
    %1043 = vadd.xlane.f32.xlu0 %v1042
    %v1044 = vpop.xlane.xlu0 %1043
    %v1045 = vsel %vm1014, %v986, 0.0
    %1046 = vadd.xlane.f32.xlu0 %v1045
    %v1047 = vpop.xlane.xlu0 %1046
    %v1048 = vsel %vm1014, %v987, 0.0
    %1049 = vadd.xlane.f32.xlu0 %v1048
    %v1050 = vpop.xlane.xlu0 %1049
    %v1051 = vsel %vm1014, %v988, 0.0
    %1052 = vadd.xlane.f32.xlu0 %v1051
    %v1053 = vpop.xlane.xlu0 %1052
    %v1054 = vsel %vm1014, %v989, 0.0
    %1055 = vadd.xlane.f32.xlu0 %v1054
    %v1056 = vpop.xlane.xlu0 %1055
    %v1057 = vsel %vm1014, %v990, 0.0
    %1058 = vadd.xlane.f32.xlu0 %v1057
    %v1059 = vpop.xlane.xlu0 %1058
    %v1060 = vsel %vm1014, %v991, 0.0
    %1061 = vadd.xlane.f32.xlu0 %v1060
    %v1062 = vpop.xlane.xlu0 %1061
    %v1063 = vsel %vm1014, %v992, 0.0
    %1064 = vadd.xlane.f32.xlu0 %v1063
    %v1065 = vpop.xlane.xlu0 %1064
    %v1066 = vsel %vm1014, %v993, 0.0
    %1067 = vadd.xlane.f32.xlu0 %v1066
    %v1068 = vpop.xlane.xlu0 %1067
    %v1069 = vsel %vm1014, %v994, 0.0
    %1070 = vadd.xlane.f32.xlu0 %v1069
    %v1071 = vpop.xlane.xlu0 %1070
    %v1072 = vsel %vm1014, %v995, 0.0
    %1073 = vadd.xlane.f32.xlu0 %v1072
    %v1074 = vpop.xlane.xlu0 %1073
    %v1075 = vsel %vm1014, %v996, 0.0
    %1076 = vadd.xlane.f32.xlu0 %v1075
    %v1077 = vpop.xlane.xlu0 %1076
    %v1078 = vsel %vm1014, %v997, 0.0
    %1079 = vadd.xlane.f32.xlu0 %v1078
    %v1080 = vpop.xlane.xlu0 %1079
    %v1081 = vsel %vm1014, %v998, 0.0
    %1082 = vadd.xlane.f32.xlu0 %v1081
    %v1083 = vpop.xlane.xlu0 %1082
    %v1084 = vsel %vm1014, %v999, 0.0
    %1085 = vadd.xlane.f32.xlu0 %v1084
    %v1086 = vpop.xlane.xlu0 %1085
    %v1087 = vsel %vm1014, %v1000, 0.0
    %1088 = vadd.xlane.f32.xlu0 %v1087
    %v1089 = vpop.xlane.xlu0 %1088
    %v1090 = vsel %vm1014, %v1001, 0.0
    %1091 = vadd.xlane.f32.xlu0 %v1090
    %v1092 = vpop.xlane.xlu0 %1091
    %v1093 = vsel %vm1014, %v1002, 0.0
    %1094 = vadd.xlane.f32.xlu0 %v1093
    %v1095 = vpop.xlane.xlu0 %1094
    %v1096 = vsel %vm1014, %v1003, 0.0
    %1097 = vadd.xlane.f32.xlu0 %v1096
    %v1098 = vpop.xlane.xlu0 %1097
    %v1099 = vsel %vm1014, %v1004, 0.0
    %1100 = vadd.xlane.f32.xlu0 %v1099
    %v1101 = vpop.xlane.xlu0 %1100
    %v1102 = vsel %vm1014, %v1005, 0.0
    %1103 = vadd.xlane.f32.xlu0 %v1102
    %v1104 = vpop.xlane.xlu0 %1103
    %v1105 = vsel %vm1014, %v1006, 0.0
    %1106 = vadd.xlane.f32.xlu0 %v1105
    %v1107 = vpop.xlane.xlu0 %1106
    %v1108 = vsel %vm1014, %v1007, 0.0
    %1109 = vadd.xlane.f32.xlu0 %v1108
    %v1110 = vpop.xlane.xlu0 %1109
    %v1143 = vlaneseq
    %v1144 = vand.u32 %v1143, 127
    %v1145 = vperm.slane %v1017, %v1144
    %v1146 = vadd.s32 %v1144, 4294967288
    %v1147 = vperm.slane %v1020, %v1146
    %vm1148 = vcmask 130112
    %v1149 = vsel %vm1148, %v1147, %v1145
    %v1150 = vperm.slane %v1023, %v1144
    %v1151 = vperm.slane %v1026, %v1146
    %v1152 = vsel %vm1148, %v1151, %v1150
    %v1153 = vperm.slane %v1029, %v1144
    %v1154 = vperm.slane %v1032, %v1146
    %v1155 = vsel %vm1148, %v1154, %v1153
    %v1156 = vperm.slane %v1035, %v1144
    %v1157 = vperm.slane %v1038, %v1146
    %v1158 = vsel %vm1148, %v1157, %v1156
    %v1159 = vperm.slane %v1041, %v1144
    %v1160 = vperm.slane %v1044, %v1146
    %v1161 = vsel %vm1148, %v1160, %v1159
    %v1162 = vperm.slane %v1047, %v1144
    %v1163 = vperm.slane %v1050, %v1146
    %v1164 = vsel %vm1148, %v1163, %v1162
    %v1165 = vperm.slane %v1053, %v1144
    %v1166 = vperm.slane %v1056, %v1146
    %v1167 = vsel %vm1148, %v1166, %v1165
    %v1168 = vperm.slane %v1059, %v1144
    %v1169 = vperm.slane %v1062, %v1146
    %v1170 = vsel %vm1148, %v1169, %v1168
    %v1171 = vperm.slane %v1065, %v1144
    %v1172 = vperm.slane %v1068, %v1146
    %v1173 = vsel %vm1148, %v1172, %v1171
    %v1174 = vperm.slane %v1071, %v1144
    %v1175 = vperm.slane %v1074, %v1146
    %v1176 = vsel %vm1148, %v1175, %v1174
    %v1177 = vperm.slane %v1077, %v1144
    %v1178 = vperm.slane %v1080, %v1146
    %v1179 = vsel %vm1148, %v1178, %v1177
    %v1180 = vperm.slane %v1083, %v1144
    %v1181 = vperm.slane %v1086, %v1146
    %v1182 = vsel %vm1148, %v1181, %v1180
    %v1183 = vperm.slane %v1089, %v1144
    %v1184 = vperm.slane %v1092, %v1146
    %v1185 = vsel %vm1148, %v1184, %v1183
    %v1186 = vperm.slane %v1095, %v1144
    %v1187 = vperm.slane %v1098, %v1146
    %v1188 = vsel %vm1148, %v1187, %v1186
    %v1189 = vperm.slane %v1101, %v1144
    %v1190 = vperm.slane %v1104, %v1146
    %v1191 = vsel %vm1148, %v1190, %v1189
    %v1192 = vperm.slane %v1107, %v1144
    %v1193 = vperm.slane %v1110, %v1146
    %v1194 = vsel %vm1148, %v1193, %v1192
    %vm1195 = vcmask 1041409
    %v1196 = vsel %vm1195, %v1152, %v1149
    %vm1197 = vcmask 1042434
    %v1198 = vsel %vm1197, %v1155, %v1196
    %vm1199 = vcmask 1043459
    %v1200 = vsel %vm1199, %v1158, %v1198
    %vm1201 = vcmask 1044484
    %v1202 = vsel %vm1201, %v1161, %v1200
    %vm1203 = vcmask 1045509
    %v1204 = vsel %vm1203, %v1164, %v1202
    %vm1205 = vcmask 1046534
    %v1206 = vsel %vm1205, %v1167, %v1204
    %vm1207 = vcmask 1047559
    %v1208 = vsel %vm1207, %v1170, %v1206
    %v1209 = vsel %vm1195, %v1176, %v1173
    %v1210 = vsel %vm1197, %v1179, %v1209
    %v1211 = vsel %vm1199, %v1182, %v1210
    %v1212 = vsel %vm1201, %v1185, %v1211
    %v1213 = vsel %vm1203, %v1188, %v1212
    %v1214 = vsel %vm1205, %v1191, %v1213
    %v1215 = vsel %vm1207, %v1194, %v1214
    %v1219 = vsel %vm1014, %v1012, 0
    %v1222 = vsel %vm1014, %v1013, 0
    %1224 = vmatpush.bf16.xpose.msra.mxu0 0
    %1225 = vmatpush.bf16.xpose.msra.mxu0 0
    %1226 = vmatpush.bf16.xpose.msra.mxu0 0
    %1227 = vmatpush.bf16.xpose.msra.mxu0 0
    %1228 = vmatpush.bf16.xpose.msra.mxu0 0
    %1229 = vmatpush.bf16.xpose.msra.mxu0 0
    %1230 = vmatpush.bf16.xpose.msra.mxu0 0
    %1231 = vmatpush.bf16.xpose.msra.mxu0 %v1222
    %1232 = vmatmul.bf16.gmra.mxu0 %v1219
    %v1233 = vpop.f32.mrf.mxu0
    %v1234 = vadd.f32 %v1208, %v1233
    %v1235 = vpop.f32.mrf.mxu0
    %v1236 = vadd.f32 %v1215, %v1235
    %1237 = vdwg.mxu0
    %v1238 = vmul.f32 %v1234, 0.35355338
    %v1239 = vmul.f32 %v1236, 0.35355338
    %v1240 = vsel %vm116, %v1238, -inf
    %1241 = vmax.xlane.f32.xlu0 %v1240
    %v1242 = vpop.xlane.xlu0 %1241
    %v1243 = vsel %vm116, %v1239, -inf
    %1244 = vmax.xlane.f32.xlu0 %v1243
    %v1245 = vpop.xlane.xlu0 %1244
    %v1246 = vsub.f32 %v1238, %v1242
    %v1247 = vsub.f32 %v1239, %v1245
    %v1248 = vmul.f32 %v1246, 1.442695
    %v1249 = vpow.pop %v1248
    %v1250 = vmul.f32 %v1247, 1.442695
    %v1251 = vpow.pop %v1250
    %v1252 = vsel %vm116, %v1249, 0.0
    %1253 = vadd.xlane.f32.xlu0 %v1252
    %v1254 = vpop.xlane.xlu0 %1253
    %v1255 = vsel %vm116, %v1251, 0.0
    %1256 = vadd.xlane.f32.xlu0 %v1255
    %v1257 = vpop.xlane.xlu0 %1256
    %v1258 = vrcp.pop %v1254
    %v1259 = vrcp.pop %v1257
    %v1260 = vmul.f32 %v1249, %v1258
    %v1261 = vmul.f32 %v1251, %v1259
    %v1262 = vpack.c.bf16 %v1261, %v1260
    %v1263 = vpack.c.bf16 %v894, %v892
    %v1265 = vsel %vm116, %v1262, 0
    %1267 = vmatpush.bf16.msra.mxu0 0
    %1268 = vmatpush.bf16.msra.mxu0 0
    %1269 = vmatpush.bf16.msra.mxu0 0
    %1270 = vmatpush.bf16.msra.mxu0 0
    %1271 = vmatpush.bf16.msra.mxu0 0
    %1272 = vmatpush.bf16.msra.mxu0 0
    %1273 = vmatpush.bf16.msra.mxu0 0
    %1274 = vmatpush.bf16.msra.mxu0 %v1263
    %1275 = vmatmul.bf16.gmra.mxu0 %v1265
    %v1276 = vpop.f32.mrf.mxu0
    %v1277 = vadd.f32 0.0, %v1276
    %v1278 = vpop.f32.mrf.mxu0
    %v1279 = vadd.f32 0.0, %v1278
    %1280 = vdwg.mxu0
    %v1281 = vpack.c.bf16 %v1279, %v1277
    %v1282 = vpack.c.bf16 %v1008, %v1008
    %1315 = vrot.lane.b32.xlu0 %v976, 120
    %v1316 = vpop.permute.xlu0 %1315
    %1317 = vrot.lane.b32.xlu0 %v977, 120
    %v1318 = vpop.permute.xlu0 %1317
    %1319 = vrot.lane.b32.xlu0 %v978, 120
    %v1320 = vpop.permute.xlu0 %1319
    %1321 = vrot.lane.b32.xlu0 %v979, 120
    %v1322 = vpop.permute.xlu0 %1321
    %1323 = vrot.lane.b32.xlu0 %v980, 120
    %v1324 = vpop.permute.xlu0 %1323
    %1325 = vrot.lane.b32.xlu0 %v981, 120
    %v1326 = vpop.permute.xlu0 %1325
    %1327 = vrot.lane.b32.xlu0 %v982, 120
    %v1328 = vpop.permute.xlu0 %1327
    %1329 = vrot.lane.b32.xlu0 %v983, 120
    %v1330 = vpop.permute.xlu0 %1329
    %1331 = vrot.lane.b32.xlu0 %v984, 120
    %v1332 = vpop.permute.xlu0 %1331
    %1333 = vrot.lane.b32.xlu0 %v985, 120
    %v1334 = vpop.permute.xlu0 %1333
    %1335 = vrot.lane.b32.xlu0 %v986, 120
    %v1336 = vpop.permute.xlu0 %1335
    %1337 = vrot.lane.b32.xlu0 %v987, 120
    %v1338 = vpop.permute.xlu0 %1337
    %1339 = vrot.lane.b32.xlu0 %v988, 120
    %v1340 = vpop.permute.xlu0 %1339
    %1341 = vrot.lane.b32.xlu0 %v989, 120
    %v1342 = vpop.permute.xlu0 %1341
    %1343 = vrot.lane.b32.xlu0 %v990, 120
    %v1344 = vpop.permute.xlu0 %1343
    %1345 = vrot.lane.b32.xlu0 %v991, 120
    %v1346 = vpop.permute.xlu0 %1345
    %1347 = vrot.lane.b32.xlu0 %v992, 120
    %v1348 = vpop.permute.xlu0 %1347
    %1349 = vrot.lane.b32.xlu0 %v993, 120
    %v1350 = vpop.permute.xlu0 %1349
    %1351 = vrot.lane.b32.xlu0 %v994, 120
    %v1352 = vpop.permute.xlu0 %1351
    %1353 = vrot.lane.b32.xlu0 %v995, 120
    %v1354 = vpop.permute.xlu0 %1353
    %1355 = vrot.lane.b32.xlu0 %v996, 120
    %v1356 = vpop.permute.xlu0 %1355
    %1357 = vrot.lane.b32.xlu0 %v997, 120
    %v1358 = vpop.permute.xlu0 %1357
    %1359 = vrot.lane.b32.xlu0 %v998, 120
    %v1360 = vpop.permute.xlu0 %1359
    %1361 = vrot.lane.b32.xlu0 %v999, 120
    %v1362 = vpop.permute.xlu0 %1361
    %1363 = vrot.lane.b32.xlu0 %v1000, 120
    %v1364 = vpop.permute.xlu0 %1363
    %1365 = vrot.lane.b32.xlu0 %v1001, 120
    %v1366 = vpop.permute.xlu0 %1365
    %1367 = vrot.lane.b32.xlu0 %v1002, 120
    %v1368 = vpop.permute.xlu0 %1367
    %1369 = vrot.lane.b32.xlu0 %v1003, 120
    %v1370 = vpop.permute.xlu0 %1369
    %1371 = vrot.lane.b32.xlu0 %v1004, 120
    %v1372 = vpop.permute.xlu0 %1371
    %1373 = vrot.lane.b32.xlu0 %v1005, 120
    %v1374 = vpop.permute.xlu0 %1373
    %1375 = vrot.lane.b32.xlu0 %v1006, 120
    %v1376 = vpop.permute.xlu0 %1375
    %1377 = vrot.lane.b32.xlu0 %v1007, 120
    %v1378 = vpop.permute.xlu0 %1377
    %v1411 = vsel %vm1014, %v1316, 0.0
    %1412 = vadd.xlane.f32.xlu0 %v1411
    %v1413 = vpop.xlane.xlu0 %1412
    %v1414 = vsel %vm1014, %v1318, 0.0
    %1415 = vadd.xlane.f32.xlu0 %v1414
    %v1416 = vpop.xlane.xlu0 %1415
    %v1417 = vsel %vm1014, %v1320, 0.0
    %1418 = vadd.xlane.f32.xlu0 %v1417
    %v1419 = vpop.xlane.xlu0 %1418
    %v1420 = vsel %vm1014, %v1322, 0.0
    %1421 = vadd.xlane.f32.xlu0 %v1420
    %v1422 = vpop.xlane.xlu0 %1421
    %v1423 = vsel %vm1014, %v1324, 0.0
    %1424 = vadd.xlane.f32.xlu0 %v1423
    %v1425 = vpop.xlane.xlu0 %1424
    %v1426 = vsel %vm1014, %v1326, 0.0
    %1427 = vadd.xlane.f32.xlu0 %v1426
    %v1428 = vpop.xlane.xlu0 %1427
    %v1429 = vsel %vm1014, %v1328, 0.0
    %1430 = vadd.xlane.f32.xlu0 %v1429
    %v1431 = vpop.xlane.xlu0 %1430
    %v1432 = vsel %vm1014, %v1330, 0.0
    %1433 = vadd.xlane.f32.xlu0 %v1432
    %v1434 = vpop.xlane.xlu0 %1433
    %v1435 = vsel %vm1014, %v1332, 0.0
    %1436 = vadd.xlane.f32.xlu0 %v1435
    %v1437 = vpop.xlane.xlu0 %1436
    %v1438 = vsel %vm1014, %v1334, 0.0
    %1439 = vadd.xlane.f32.xlu0 %v1438
    %v1440 = vpop.xlane.xlu0 %1439
    %v1441 = vsel %vm1014, %v1336, 0.0
    %1442 = vadd.xlane.f32.xlu0 %v1441
    %v1443 = vpop.xlane.xlu0 %1442
    %v1444 = vsel %vm1014, %v1338, 0.0
    %1445 = vadd.xlane.f32.xlu0 %v1444
    %v1446 = vpop.xlane.xlu0 %1445
    %v1447 = vsel %vm1014, %v1340, 0.0
    %1448 = vadd.xlane.f32.xlu0 %v1447
    %v1449 = vpop.xlane.xlu0 %1448
    %v1450 = vsel %vm1014, %v1342, 0.0
    %1451 = vadd.xlane.f32.xlu0 %v1450
    %v1452 = vpop.xlane.xlu0 %1451
    %v1453 = vsel %vm1014, %v1344, 0.0
    %1454 = vadd.xlane.f32.xlu0 %v1453
    %v1455 = vpop.xlane.xlu0 %1454
    %v1456 = vsel %vm1014, %v1346, 0.0
    %1457 = vadd.xlane.f32.xlu0 %v1456
    %v1458 = vpop.xlane.xlu0 %1457
    %v1459 = vsel %vm1014, %v1348, 0.0
    %1460 = vadd.xlane.f32.xlu0 %v1459
    %v1461 = vpop.xlane.xlu0 %1460
    %v1462 = vsel %vm1014, %v1350, 0.0
    %1463 = vadd.xlane.f32.xlu0 %v1462
    %v1464 = vpop.xlane.xlu0 %1463
    %v1465 = vsel %vm1014, %v1352, 0.0
    %1466 = vadd.xlane.f32.xlu0 %v1465
    %v1467 = vpop.xlane.xlu0 %1466
    %v1468 = vsel %vm1014, %v1354, 0.0
    %1469 = vadd.xlane.f32.xlu0 %v1468
    %v1470 = vpop.xlane.xlu0 %1469
    %v1471 = vsel %vm1014, %v1356, 0.0
    %1472 = vadd.xlane.f32.xlu0 %v1471
    %v1473 = vpop.xlane.xlu0 %1472
    %v1474 = vsel %vm1014, %v1358, 0.0
    %1475 = vadd.xlane.f32.xlu0 %v1474
    %v1476 = vpop.xlane.xlu0 %1475
    %v1477 = vsel %vm1014, %v1360, 0.0
    %1478 = vadd.xlane.f32.xlu0 %v1477
    %v1479 = vpop.xlane.xlu0 %1478
    %v1480 = vsel %vm1014, %v1362, 0.0
    %1481 = vadd.xlane.f32.xlu0 %v1480
    %v1482 = vpop.xlane.xlu0 %1481
    %v1483 = vsel %vm1014, %v1364, 0.0
    %1484 = vadd.xlane.f32.xlu0 %v1483
    %v1485 = vpop.xlane.xlu0 %1484
    %v1486 = vsel %vm1014, %v1366, 0.0
    %1487 = vadd.xlane.f32.xlu0 %v1486
    %v1488 = vpop.xlane.xlu0 %1487
    %v1489 = vsel %vm1014, %v1368, 0.0
    %1490 = vadd.xlane.f32.xlu0 %v1489
    %v1491 = vpop.xlane.xlu0 %1490
    %v1492 = vsel %vm1014, %v1370, 0.0
    %1493 = vadd.xlane.f32.xlu0 %v1492
    %v1494 = vpop.xlane.xlu0 %1493
    %v1495 = vsel %vm1014, %v1372, 0.0
    %1496 = vadd.xlane.f32.xlu0 %v1495
    %v1497 = vpop.xlane.xlu0 %1496
    %v1498 = vsel %vm1014, %v1374, 0.0
    %1499 = vadd.xlane.f32.xlu0 %v1498
    %v1500 = vpop.xlane.xlu0 %1499
    %v1501 = vsel %vm1014, %v1376, 0.0
    %1502 = vadd.xlane.f32.xlu0 %v1501
    %v1503 = vpop.xlane.xlu0 %1502
    %v1504 = vsel %vm1014, %v1378, 0.0
    %1505 = vadd.xlane.f32.xlu0 %v1504
    %v1506 = vpop.xlane.xlu0 %1505
    %1508 = vrot.lane.b32.xlu0 %v1012, 120
    %v1509 = vpop.permute.xlu0 %1508
    %1511 = vrot.lane.b32.xlu0 %v1013, 120
    %v1512 = vpop.permute.xlu0 %1511
    %v1545 = vperm.slane %v1413, %v1144
    %v1546 = vperm.slane %v1416, %v1146
    %v1547 = vsel %vm1148, %v1546, %v1545
    %v1548 = vperm.slane %v1419, %v1144
    %v1549 = vperm.slane %v1422, %v1146
    %v1550 = vsel %vm1148, %v1549, %v1548
    %v1551 = vperm.slane %v1425, %v1144
    %v1552 = vperm.slane %v1428, %v1146
    %v1553 = vsel %vm1148, %v1552, %v1551
    %v1554 = vperm.slane %v1431, %v1144
    %v1555 = vperm.slane %v1434, %v1146
    %v1556 = vsel %vm1148, %v1555, %v1554
    %v1557 = vperm.slane %v1437, %v1144
    %v1558 = vperm.slane %v1440, %v1146
    %v1559 = vsel %vm1148, %v1558, %v1557
    %v1560 = vperm.slane %v1443, %v1144
    %v1561 = vperm.slane %v1446, %v1146
    %v1562 = vsel %vm1148, %v1561, %v1560
    %v1563 = vperm.slane %v1449, %v1144
    %v1564 = vperm.slane %v1452, %v1146
    %v1565 = vsel %vm1148, %v1564, %v1563
    %v1566 = vperm.slane %v1455, %v1144
    %v1567 = vperm.slane %v1458, %v1146
    %v1568 = vsel %vm1148, %v1567, %v1566
    %v1569 = vperm.slane %v1461, %v1144
    %v1570 = vperm.slane %v1464, %v1146
    %v1571 = vsel %vm1148, %v1570, %v1569
    %v1572 = vperm.slane %v1467, %v1144
    %v1573 = vperm.slane %v1470, %v1146
    %v1574 = vsel %vm1148, %v1573, %v1572
    %v1575 = vperm.slane %v1473, %v1144
    %v1576 = vperm.slane %v1476, %v1146
    %v1577 = vsel %vm1148, %v1576, %v1575
    %v1578 = vperm.slane %v1479, %v1144
    %v1579 = vperm.slane %v1482, %v1146
    %v1580 = vsel %vm1148, %v1579, %v1578
    %v1581 = vperm.slane %v1485, %v1144
    %v1582 = vperm.slane %v1488, %v1146
    %v1583 = vsel %vm1148, %v1582, %v1581
    %v1584 = vperm.slane %v1491, %v1144
    %v1585 = vperm.slane %v1494, %v1146
    %v1586 = vsel %vm1148, %v1585, %v1584
    %v1587 = vperm.slane %v1497, %v1144
    %v1588 = vperm.slane %v1500, %v1146
    %v1589 = vsel %vm1148, %v1588, %v1587
    %v1590 = vperm.slane %v1503, %v1144
    %v1591 = vperm.slane %v1506, %v1146
    %v1592 = vsel %vm1148, %v1591, %v1590
    %v1593 = vsel %vm1195, %v1550, %v1547
    %v1594 = vsel %vm1197, %v1553, %v1593
    %v1595 = vsel %vm1199, %v1556, %v1594
    %v1596 = vsel %vm1201, %v1559, %v1595
    %v1597 = vsel %vm1203, %v1562, %v1596
    %v1598 = vsel %vm1205, %v1565, %v1597
    %v1599 = vsel %vm1207, %v1568, %v1598
    %v1600 = vsel %vm1195, %v1574, %v1571
    %v1601 = vsel %vm1197, %v1577, %v1600
    %v1602 = vsel %vm1199, %v1580, %v1601
    %v1603 = vsel %vm1201, %v1583, %v1602
    %v1604 = vsel %vm1203, %v1586, %v1603
    %v1605 = vsel %vm1205, %v1589, %v1604
    %v1606 = vsel %vm1207, %v1592, %v1605
    %v1610 = vsel %vm1014, %v1509, 0
    %v1613 = vsel %vm1014, %v1512, 0
    %1615 = vmatpush.bf16.xpose.msra.mxu0 0
    %1616 = vmatpush.bf16.xpose.msra.mxu0 0
    %1617 = vmatpush.bf16.xpose.msra.mxu0 0
    %1618 = vmatpush.bf16.xpose.msra.mxu0 0
    %1619 = vmatpush.bf16.xpose.msra.mxu0 0
    %1620 = vmatpush.bf16.xpose.msra.mxu0 0
    %1621 = vmatpush.bf16.xpose.msra.mxu0 0
    %1622 = vmatpush.bf16.xpose.msra.mxu0 %v1613
    %1623 = vmatmul.bf16.gmra.mxu0 %v1610
    %v1624 = vpop.f32.mrf.mxu0
    %v1625 = vadd.f32 %v1599, %v1624
    %v1626 = vpop.f32.mrf.mxu0
    %v1627 = vadd.f32 %v1606, %v1626
    %1628 = vdwg.mxu0
    %v1629 = vmul.f32 %v1625, 0.35355338
    %v1630 = vmul.f32 %v1627, 0.35355338
    %v1631 = vsel %vm116, %v1629, -inf
    %1632 = vmax.xlane.f32.xlu0 %v1631
    %v1633 = vpop.xlane.xlu0 %1632
    %v1634 = vsel %vm116, %v1630, -inf
    %1635 = vmax.xlane.f32.xlu0 %v1634
    %v1636 = vpop.xlane.xlu0 %1635
    %v1637 = vsub.f32 %v1629, %v1633
    %v1638 = vsub.f32 %v1630, %v1636
    %v1639 = vmul.f32 %v1637, 1.442695
    %v1640 = vpow.pop %v1639
    %v1641 = vmul.f32 %v1638, 1.442695
    %v1642 = vpow.pop %v1641
    %v1643 = vsel %vm116, %v1640, 0.0
    %1644 = vadd.xlane.f32.xlu0 %v1643
    %v1645 = vpop.xlane.xlu0 %1644
    %v1646 = vsel %vm116, %v1642, 0.0
    %1647 = vadd.xlane.f32.xlu0 %v1646
    %v1648 = vpop.xlane.xlu0 %1647
    %v1649 = vrcp.pop %v1645
    %v1650 = vrcp.pop %v1648
    %v1651 = vmul.f32 %v1640, %v1649
    %v1652 = vmul.f32 %v1642, %v1650
    %v1653 = vpack.c.bf16 %v1652, %v1651
    %1655 = vrot.lane.b32.xlu0 %v1263, 120
    %v1656 = vpop.permute.xlu0 %1655
    %v1659 = vsel %vm116, %v1653, 0
    %1661 = vmatpush.bf16.msra.mxu0 0
    %1662 = vmatpush.bf16.msra.mxu0 0
    %1663 = vmatpush.bf16.msra.mxu0 0
    %1664 = vmatpush.bf16.msra.mxu0 0
    %1665 = vmatpush.bf16.msra.mxu0 0
    %1666 = vmatpush.bf16.msra.mxu0 0
    %1667 = vmatpush.bf16.msra.mxu0 0
    %1668 = vmatpush.bf16.msra.mxu0 %v1656
    %1669 = vmatmul.bf16.gmra.mxu0 %v1659
    %v1670 = vpop.f32.mrf.mxu0
    %v1671 = vadd.f32 0.0, %v1670
    %v1672 = vpop.f32.mrf.mxu0
    %v1673 = vadd.f32 0.0, %v1672
    %1674 = vdwg.mxu0
    %v1675 = vpack.c.bf16 %v1673, %v1671
    %v1676 = vpack.c.bf16 %v1009, %v1009
    %v1678 = vsel %vm1014, %v1675, 0
    %vm1680 = vcmask 1043456
    %v1682 = vsel %vm1680, %v1676, 0
    %1684 = vmatpush.bf16.msra.mxu0 0
    %1685 = vmatpush.bf16.msra.mxu0 0
    %1686 = vmatpush.bf16.msra.mxu0 0
    %1687 = vmatpush.bf16.msra.mxu0 0
    %1688 = vmatpush.bf16.msra.mxu0 0
    %1689 = vmatpush.bf16.msra.mxu0 0
    %1690 = vmatpush.bf16.msra.mxu0 0
    %1691 = vmatpush.bf16.msra.mxu0 %v1682
    %1692 = vmatmul.bf16.gmra.mxu0 %v1678
    %v1693 = vpop.f32.mrf.mxu0
    %v1694 = vadd.f32 0.0, %v1693
    %v1695 = vpop.f32.mrf.mxu0
    %v1696 = vadd.f32 0.0, %v1695
    %1697 = vdwg.mxu0
    %v1699 = vsel %vm1014, %v1281, 0
    %v1702 = vsel %vm1680, %v1282, 0
    %1704 = vmatpush.bf16.msra.mxu0 0
    %1705 = vmatpush.bf16.msra.mxu0 0
    %1706 = vmatpush.bf16.msra.mxu0 0
    %1707 = vmatpush.bf16.msra.mxu0 0
    %1708 = vmatpush.bf16.msra.mxu0 0
    %1709 = vmatpush.bf16.msra.mxu0 0
    %1710 = vmatpush.bf16.msra.mxu0 0
    %1711 = vmatpush.bf16.msra.mxu0 %v1702
    %1712 = vmatmul.bf16.gmra.mxu0 %v1699
    %v1713 = vpop.f32.mrf.mxu0
    %v1714 = vadd.f32 %v1694, %v1713
    %v1715 = vpop.f32.mrf.mxu0
    %v1716 = vadd.f32 %v1696, %v1715
    %1717 = vdwg.mxu0
    %1718 = vrot.lane.b32.xlu0 %v976, 112
    %v1719 = vpop.permute.xlu0 %1718
    %1720 = vrot.lane.b32.xlu0 %v977, 112
    %v1721 = vpop.permute.xlu0 %1720
    %1722 = vrot.lane.b32.xlu0 %v978, 112
    %v1723 = vpop.permute.xlu0 %1722
    %1724 = vrot.lane.b32.xlu0 %v979, 112
    %v1725 = vpop.permute.xlu0 %1724
    %1726 = vrot.lane.b32.xlu0 %v980, 112
    %v1727 = vpop.permute.xlu0 %1726
    %1728 = vrot.lane.b32.xlu0 %v981, 112
    %v1729 = vpop.permute.xlu0 %1728
    %1730 = vrot.lane.b32.xlu0 %v982, 112
    %v1731 = vpop.permute.xlu0 %1730
    %1732 = vrot.lane.b32.xlu0 %v983, 112
    %v1733 = vpop.permute.xlu0 %1732
    %1734 = vrot.lane.b32.xlu0 %v984, 112
    %v1735 = vpop.permute.xlu0 %1734
    %1736 = vrot.lane.b32.xlu0 %v985, 112
    %v1737 = vpop.permute.xlu0 %1736
    %1738 = vrot.lane.b32.xlu0 %v986, 112
    %v1739 = vpop.permute.xlu0 %1738
    %1740 = vrot.lane.b32.xlu0 %v987, 112
    %v1741 = vpop.permute.xlu0 %1740
    %1742 = vrot.lane.b32.xlu0 %v988, 112
    %v1743 = vpop.permute.xlu0 %1742
    %1744 = vrot.lane.b32.xlu0 %v989, 112
    %v1745 = vpop.permute.xlu0 %1744
    %1746 = vrot.lane.b32.xlu0 %v990, 112
    %v1747 = vpop.permute.xlu0 %1746
    %1748 = vrot.lane.b32.xlu0 %v991, 112
    %v1749 = vpop.permute.xlu0 %1748
    %1750 = vrot.lane.b32.xlu0 %v992, 112
    %v1751 = vpop.permute.xlu0 %1750
    %1752 = vrot.lane.b32.xlu0 %v993, 112
    %v1753 = vpop.permute.xlu0 %1752
    %1754 = vrot.lane.b32.xlu0 %v994, 112
    %v1755 = vpop.permute.xlu0 %1754
    %1756 = vrot.lane.b32.xlu0 %v995, 112
    %v1757 = vpop.permute.xlu0 %1756
    %1758 = vrot.lane.b32.xlu0 %v996, 112
    %v1759 = vpop.permute.xlu0 %1758
    %1760 = vrot.lane.b32.xlu0 %v997, 112
    %v1761 = vpop.permute.xlu0 %1760
    %1762 = vrot.lane.b32.xlu0 %v998, 112
    %v1763 = vpop.permute.xlu0 %1762
    %1764 = vrot.lane.b32.xlu0 %v999, 112
    %v1765 = vpop.permute.xlu0 %1764
    %1766 = vrot.lane.b32.xlu0 %v1000, 112
    %v1767 = vpop.permute.xlu0 %1766
    %1768 = vrot.lane.b32.xlu0 %v1001, 112
    %v1769 = vpop.permute.xlu0 %1768
    %1770 = vrot.lane.b32.xlu0 %v1002, 112
    %v1771 = vpop.permute.xlu0 %1770
    %1772 = vrot.lane.b32.xlu0 %v1003, 112
    %v1773 = vpop.permute.xlu0 %1772
    %1774 = vrot.lane.b32.xlu0 %v1004, 112
    %v1775 = vpop.permute.xlu0 %1774
    %1776 = vrot.lane.b32.xlu0 %v1005, 112
    %v1777 = vpop.permute.xlu0 %1776
    %1778 = vrot.lane.b32.xlu0 %v1006, 112
    %v1779 = vpop.permute.xlu0 %1778
    %1780 = vrot.lane.b32.xlu0 %v1007, 112
    %v1781 = vpop.permute.xlu0 %1780
    %v1814 = vsel %vm1014, %v1719, 0.0
    %1815 = vadd.xlane.f32.xlu0 %v1814
    %v1816 = vpop.xlane.xlu0 %1815
    %v1817 = vsel %vm1014, %v1721, 0.0
    %1818 = vadd.xlane.f32.xlu0 %v1817
    %v1819 = vpop.xlane.xlu0 %1818
    %v1820 = vsel %vm1014, %v1723, 0.0
    %1821 = vadd.xlane.f32.xlu0 %v1820
    %v1822 = vpop.xlane.xlu0 %1821
    %v1823 = vsel %vm1014, %v1725, 0.0
    %1824 = vadd.xlane.f32.xlu0 %v1823
    %v1825 = vpop.xlane.xlu0 %1824
    %v1826 = vsel %vm1014, %v1727, 0.0
    %1827 = vadd.xlane.f32.xlu0 %v1826
    %v1828 = vpop.xlane.xlu0 %1827
    %v1829 = vsel %vm1014, %v1729, 0.0
    %1830 = vadd.xlane.f32.xlu0 %v1829
    %v1831 = vpop.xlane.xlu0 %1830
    %v1832 = vsel %vm1014, %v1731, 0.0
    %1833 = vadd.xlane.f32.xlu0 %v1832
    %v1834 = vpop.xlane.xlu0 %1833
    %v1835 = vsel %vm1014, %v1733, 0.0
    %1836 = vadd.xlane.f32.xlu0 %v1835
    %v1837 = vpop.xlane.xlu0 %1836
    %v1838 = vsel %vm1014, %v1735, 0.0
    %1839 = vadd.xlane.f32.xlu0 %v1838
    %v1840 = vpop.xlane.xlu0 %1839
    %v1841 = vsel %vm1014, %v1737, 0.0
    %1842 = vadd.xlane.f32.xlu0 %v1841
    %v1843 = vpop.xlane.xlu0 %1842
    %v1844 = vsel %vm1014, %v1739, 0.0
    %1845 = vadd.xlane.f32.xlu0 %v1844
    %v1846 = vpop.xlane.xlu0 %1845
    %v1847 = vsel %vm1014, %v1741, 0.0
    %1848 = vadd.xlane.f32.xlu0 %v1847
    %v1849 = vpop.xlane.xlu0 %1848
    %v1850 = vsel %vm1014, %v1743, 0.0
    %1851 = vadd.xlane.f32.xlu0 %v1850
    %v1852 = vpop.xlane.xlu0 %1851
    %v1853 = vsel %vm1014, %v1745, 0.0
    %1854 = vadd.xlane.f32.xlu0 %v1853
    %v1855 = vpop.xlane.xlu0 %1854
    %v1856 = vsel %vm1014, %v1747, 0.0
    %1857 = vadd.xlane.f32.xlu0 %v1856
    %v1858 = vpop.xlane.xlu0 %1857
    %v1859 = vsel %vm1014, %v1749, 0.0
    %1860 = vadd.xlane.f32.xlu0 %v1859
    %v1861 = vpop.xlane.xlu0 %1860
    %v1862 = vsel %vm1014, %v1751, 0.0
    %1863 = vadd.xlane.f32.xlu0 %v1862
    %v1864 = vpop.xlane.xlu0 %1863
    %v1865 = vsel %vm1014, %v1753, 0.0
    %1866 = vadd.xlane.f32.xlu0 %v1865
    %v1867 = vpop.xlane.xlu0 %1866
    %v1868 = vsel %vm1014, %v1755, 0.0
    %1869 = vadd.xlane.f32.xlu0 %v1868
    %v1870 = vpop.xlane.xlu0 %1869
    %v1871 = vsel %vm1014, %v1757, 0.0
    %1872 = vadd.xlane.f32.xlu0 %v1871
    %v1873 = vpop.xlane.xlu0 %1872
    %v1874 = vsel %vm1014, %v1759, 0.0
    %1875 = vadd.xlane.f32.xlu0 %v1874
    %v1876 = vpop.xlane.xlu0 %1875
    %v1877 = vsel %vm1014, %v1761, 0.0
    %1878 = vadd.xlane.f32.xlu0 %v1877
    %v1879 = vpop.xlane.xlu0 %1878
    %v1880 = vsel %vm1014, %v1763, 0.0
    %1881 = vadd.xlane.f32.xlu0 %v1880
    %v1882 = vpop.xlane.xlu0 %1881
    %v1883 = vsel %vm1014, %v1765, 0.0
    %1884 = vadd.xlane.f32.xlu0 %v1883
    %v1885 = vpop.xlane.xlu0 %1884
    %v1886 = vsel %vm1014, %v1767, 0.0
    %1887 = vadd.xlane.f32.xlu0 %v1886
    %v1888 = vpop.xlane.xlu0 %1887
    %v1889 = vsel %vm1014, %v1769, 0.0
    %1890 = vadd.xlane.f32.xlu0 %v1889
    %v1891 = vpop.xlane.xlu0 %1890
    %v1892 = vsel %vm1014, %v1771, 0.0
    %1893 = vadd.xlane.f32.xlu0 %v1892
    %v1894 = vpop.xlane.xlu0 %1893
    %v1895 = vsel %vm1014, %v1773, 0.0
    %1896 = vadd.xlane.f32.xlu0 %v1895
    %v1897 = vpop.xlane.xlu0 %1896
    %v1898 = vsel %vm1014, %v1775, 0.0
    %1899 = vadd.xlane.f32.xlu0 %v1898
    %v1900 = vpop.xlane.xlu0 %1899
    %v1901 = vsel %vm1014, %v1777, 0.0
    %1902 = vadd.xlane.f32.xlu0 %v1901
    %v1903 = vpop.xlane.xlu0 %1902
    %v1904 = vsel %vm1014, %v1779, 0.0
    %1905 = vadd.xlane.f32.xlu0 %v1904
    %v1906 = vpop.xlane.xlu0 %1905
    %v1907 = vsel %vm1014, %v1781, 0.0
    %1908 = vadd.xlane.f32.xlu0 %v1907
    %v1909 = vpop.xlane.xlu0 %1908
    %1910 = vrot.lane.b32.xlu0 %v1012, 112
    %v1911 = vpop.permute.xlu0 %1910
    %1912 = vrot.lane.b32.xlu0 %v1013, 112
    %v1913 = vpop.permute.xlu0 %1912
    %v1946 = vperm.slane %v1816, %v1144
    %v1947 = vperm.slane %v1819, %v1146
    %v1948 = vsel %vm1148, %v1947, %v1946
    %v1949 = vperm.slane %v1822, %v1144
    %v1950 = vperm.slane %v1825, %v1146
    %v1951 = vsel %vm1148, %v1950, %v1949
    %v1952 = vperm.slane %v1828, %v1144
    %v1953 = vperm.slane %v1831, %v1146
    %v1954 = vsel %vm1148, %v1953, %v1952
    %v1955 = vperm.slane %v1834, %v1144
    %v1956 = vperm.slane %v1837, %v1146
    %v1957 = vsel %vm1148, %v1956, %v1955
    %v1958 = vperm.slane %v1840, %v1144
    %v1959 = vperm.slane %v1843, %v1146
    %v1960 = vsel %vm1148, %v1959, %v1958
    %v1961 = vperm.slane %v1846, %v1144
    %v1962 = vperm.slane %v1849, %v1146
    %v1963 = vsel %vm1148, %v1962, %v1961
    %v1964 = vperm.slane %v1852, %v1144
    %v1965 = vperm.slane %v1855, %v1146
    %v1966 = vsel %vm1148, %v1965, %v1964
    %v1967 = vperm.slane %v1858, %v1144
    %v1968 = vperm.slane %v1861, %v1146
    %v1969 = vsel %vm1148, %v1968, %v1967
    %v1970 = vperm.slane %v1864, %v1144
    %v1971 = vperm.slane %v1867, %v1146
    %v1972 = vsel %vm1148, %v1971, %v1970
    %v1973 = vperm.slane %v1870, %v1144
    %v1974 = vperm.slane %v1873, %v1146
    %v1975 = vsel %vm1148, %v1974, %v1973
    %v1976 = vperm.slane %v1876, %v1144
    %v1977 = vperm.slane %v1879, %v1146
    %v1978 = vsel %vm1148, %v1977, %v1976
    %v1979 = vperm.slane %v1882, %v1144
    %v1980 = vperm.slane %v1885, %v1146
    %v1981 = vsel %vm1148, %v1980, %v1979
    %v1982 = vperm.slane %v1888, %v1144
    %v1983 = vperm.slane %v1891, %v1146
    %v1984 = vsel %vm1148, %v1983, %v1982
    %v1985 = vperm.slane %v1894, %v1144
    %v1986 = vperm.slane %v1897, %v1146
    %v1987 = vsel %vm1148, %v1986, %v1985
    %v1988 = vperm.slane %v1900, %v1144
    %v1989 = vperm.slane %v1903, %v1146
    %v1990 = vsel %vm1148, %v1989, %v1988
    %v1991 = vperm.slane %v1906, %v1144
    %v1992 = vperm.slane %v1909, %v1146
    %v1993 = vsel %vm1148, %v1992, %v1991
    %v1994 = vsel %vm1195, %v1951, %v1948
    %v1995 = vsel %vm1197, %v1954, %v1994
    %v1996 = vsel %vm1199, %v1957, %v1995
    %v1997 = vsel %vm1201, %v1960, %v1996
    %v1998 = vsel %vm1203, %v1963, %v1997
    %v1999 = vsel %vm1205, %v1966, %v1998
    %v2000 = vsel %vm1207, %v1969, %v1999
    %v2001 = vsel %vm1195, %v1975, %v1972
    %v2002 = vsel %vm1197, %v1978, %v2001
    %v2003 = vsel %vm1199, %v1981, %v2002
    %v2004 = vsel %vm1201, %v1984, %v2003
    %v2005 = vsel %vm1203, %v1987, %v2004
    %v2006 = vsel %vm1205, %v1990, %v2005
    %v2007 = vsel %vm1207, %v1993, %v2006
    %v2011 = vsel %vm1014, %v1911, 0
    %v2014 = vsel %vm1014, %v1913, 0
    %2016 = vmatpush.bf16.xpose.msra.mxu0 0
    %2017 = vmatpush.bf16.xpose.msra.mxu0 0
    %2018 = vmatpush.bf16.xpose.msra.mxu0 0
    %2019 = vmatpush.bf16.xpose.msra.mxu0 0
    %2020 = vmatpush.bf16.xpose.msra.mxu0 0
    %2021 = vmatpush.bf16.xpose.msra.mxu0 0
    %2022 = vmatpush.bf16.xpose.msra.mxu0 0
    %2023 = vmatpush.bf16.xpose.msra.mxu0 %v2014
    %2024 = vmatmul.bf16.gmra.mxu0 %v2011
    %v2025 = vpop.f32.mrf.mxu0
    %v2026 = vadd.f32 %v2000, %v2025
    %v2027 = vpop.f32.mrf.mxu0
    %v2028 = vadd.f32 %v2007, %v2027
    %2029 = vdwg.mxu0
    %v2030 = vmul.f32 %v2026, 0.35355338
    %v2031 = vmul.f32 %v2028, 0.35355338
    %v2032 = vsel %vm116, %v2030, -inf
    %2033 = vmax.xlane.f32.xlu0 %v2032
    %v2034 = vpop.xlane.xlu0 %2033
    %v2035 = vsel %vm116, %v2031, -inf
    %2036 = vmax.xlane.f32.xlu0 %v2035
    %v2037 = vpop.xlane.xlu0 %2036
    %v2038 = vsub.f32 %v2030, %v2034
    %v2039 = vsub.f32 %v2031, %v2037
    %v2040 = vmul.f32 %v2038, 1.442695
    %v2041 = vpow.pop %v2040
    %v2042 = vmul.f32 %v2039, 1.442695
    %v2043 = vpow.pop %v2042
    %v2044 = vsel %vm116, %v2041, 0.0
    %2045 = vadd.xlane.f32.xlu0 %v2044
    %v2046 = vpop.xlane.xlu0 %2045
    %v2047 = vsel %vm116, %v2043, 0.0
    %2048 = vadd.xlane.f32.xlu0 %v2047
    %v2049 = vpop.xlane.xlu0 %2048
    %v2050 = vrcp.pop %v2046
    %v2051 = vrcp.pop %v2049
    %v2052 = vmul.f32 %v2041, %v2050
    %v2053 = vmul.f32 %v2043, %v2051
    %v2054 = vpack.c.bf16 %v2053, %v2052
    %2055 = vrot.lane.b32.xlu0 %v1263, 112
    %v2056 = vpop.permute.xlu0 %2055
    %v2059 = vsel %vm116, %v2054, 0
    %2061 = vmatpush.bf16.msra.mxu0 0
    %2062 = vmatpush.bf16.msra.mxu0 0
    %2063 = vmatpush.bf16.msra.mxu0 0
    %2064 = vmatpush.bf16.msra.mxu0 0
    %2065 = vmatpush.bf16.msra.mxu0 0
    %2066 = vmatpush.bf16.msra.mxu0 0
    %2067 = vmatpush.bf16.msra.mxu0 0
    %2068 = vmatpush.bf16.msra.mxu0 %v2056
    %2069 = vmatmul.bf16.gmra.mxu0 %v2059
    %v2070 = vpop.f32.mrf.mxu0
    %v2071 = vadd.f32 0.0, %v2070
    %v2072 = vpop.f32.mrf.mxu0
    %v2073 = vadd.f32 0.0, %v2072
    %2074 = vdwg.mxu0
    %v2075 = vpack.c.bf16 %v2073, %v2071
    %v2076 = vpack.c.bf16 %v1010, %v1010
    %v2078 = vsel %vm1014, %v2075, 0
    %v2081 = vsel %vm1680, %v2076, 0
    %2083 = vmatpush.bf16.msra.mxu0 0
    %2084 = vmatpush.bf16.msra.mxu0 0
    %2085 = vmatpush.bf16.msra.mxu0 0
    %2086 = vmatpush.bf16.msra.mxu0 0
    %2087 = vmatpush.bf16.msra.mxu0 0
    %2088 = vmatpush.bf16.msra.mxu0 0
    %2089 = vmatpush.bf16.msra.mxu0 0
    %2090 = vmatpush.bf16.msra.mxu0 %v2081
    %2091 = vmatmul.bf16.gmra.mxu0 %v2078
    %v2092 = vpop.f32.mrf.mxu0
    %v2093 = vadd.f32 0.0, %v2092
    %v2094 = vpop.f32.mrf.mxu0
    %v2095 = vadd.f32 0.0, %v2094
    %2096 = vdwg.mxu0
    %v2097 = vadd.f32 %v1714, %v2093
    %v2098 = vadd.f32 %v1716, %v2095
    %2099 = vrot.lane.b32.xlu0 %v976, 104
    %v2100 = vpop.permute.xlu0 %2099
    %2101 = vrot.lane.b32.xlu0 %v977, 104
    %v2102 = vpop.permute.xlu0 %2101
    %2103 = vrot.lane.b32.xlu0 %v978, 104
    %v2104 = vpop.permute.xlu0 %2103
    %2105 = vrot.lane.b32.xlu0 %v979, 104
    %v2106 = vpop.permute.xlu0 %2105
    %2107 = vrot.lane.b32.xlu0 %v980, 104
    %v2108 = vpop.permute.xlu0 %2107
    %2109 = vrot.lane.b32.xlu0 %v981, 104
    %v2110 = vpop.permute.xlu0 %2109
    %2111 = vrot.lane.b32.xlu0 %v982, 104
    %v2112 = vpop.permute.xlu0 %2111
    %2113 = vrot.lane.b32.xlu0 %v983, 104
    %v2114 = vpop.permute.xlu0 %2113
    %2115 = vrot.lane.b32.xlu0 %v984, 104
    %v2116 = vpop.permute.xlu0 %2115
    %2117 = vrot.lane.b32.xlu0 %v985, 104
    %v2118 = vpop.permute.xlu0 %2117
    %2119 = vrot.lane.b32.xlu0 %v986, 104
    %v2120 = vpop.permute.xlu0 %2119
    %2121 = vrot.lane.b32.xlu0 %v987, 104
    %v2122 = vpop.permute.xlu0 %2121
    %2123 = vrot.lane.b32.xlu0 %v988, 104
    %v2124 = vpop.permute.xlu0 %2123
    %2125 = vrot.lane.b32.xlu0 %v989, 104
    %v2126 = vpop.permute.xlu0 %2125
    %2127 = vrot.lane.b32.xlu0 %v990, 104
    %v2128 = vpop.permute.xlu0 %2127
    %2129 = vrot.lane.b32.xlu0 %v991, 104
    %v2130 = vpop.permute.xlu0 %2129
    %2131 = vrot.lane.b32.xlu0 %v992, 104
    %v2132 = vpop.permute.xlu0 %2131
    %2133 = vrot.lane.b32.xlu0 %v993, 104
    %v2134 = vpop.permute.xlu0 %2133
    %2135 = vrot.lane.b32.xlu0 %v994, 104
    %v2136 = vpop.permute.xlu0 %2135
    %2137 = vrot.lane.b32.xlu0 %v995, 104
    %v2138 = vpop.permute.xlu0 %2137
    %2139 = vrot.lane.b32.xlu0 %v996, 104
    %v2140 = vpop.permute.xlu0 %2139
    %2141 = vrot.lane.b32.xlu0 %v997, 104
    %v2142 = vpop.permute.xlu0 %2141
    %2143 = vrot.lane.b32.xlu0 %v998, 104
    %v2144 = vpop.permute.xlu0 %2143
    %2145 = vrot.lane.b32.xlu0 %v999, 104
    %v2146 = vpop.permute.xlu0 %2145
    %2147 = vrot.lane.b32.xlu0 %v1000, 104
    %v2148 = vpop.permute.xlu0 %2147
    %2149 = vrot.lane.b32.xlu0 %v1001, 104
    %v2150 = vpop.permute.xlu0 %2149
    %2151 = vrot.lane.b32.xlu0 %v1002, 104
    %v2152 = vpop.permute.xlu0 %2151
    %2153 = vrot.lane.b32.xlu0 %v1003, 104
    %v2154 = vpop.permute.xlu0 %2153
    %2155 = vrot.lane.b32.xlu0 %v1004, 104
    %v2156 = vpop.permute.xlu0 %2155
    %2157 = vrot.lane.b32.xlu0 %v1005, 104
    %v2158 = vpop.permute.xlu0 %2157
    %2159 = vrot.lane.b32.xlu0 %v1006, 104
    %v2160 = vpop.permute.xlu0 %2159
    %2161 = vrot.lane.b32.xlu0 %v1007, 104
    %v2162 = vpop.permute.xlu0 %2161
    %v2195 = vsel %vm1014, %v2100, 0.0
    %2196 = vadd.xlane.f32.xlu0 %v2195
    %v2197 = vpop.xlane.xlu0 %2196
    %v2198 = vsel %vm1014, %v2102, 0.0
    %2199 = vadd.xlane.f32.xlu0 %v2198
    %v2200 = vpop.xlane.xlu0 %2199
    %v2201 = vsel %vm1014, %v2104, 0.0
    %2202 = vadd.xlane.f32.xlu0 %v2201
    %v2203 = vpop.xlane.xlu0 %2202
    %v2204 = vsel %vm1014, %v2106, 0.0
    %2205 = vadd.xlane.f32.xlu0 %v2204
    %v2206 = vpop.xlane.xlu0 %2205
    %v2207 = vsel %vm1014, %v2108, 0.0
    %2208 = vadd.xlane.f32.xlu0 %v2207
    %v2209 = vpop.xlane.xlu0 %2208
    %v2210 = vsel %vm1014, %v2110, 0.0
    %2211 = vadd.xlane.f32.xlu0 %v2210
    %v2212 = vpop.xlane.xlu0 %2211
    %v2213 = vsel %vm1014, %v2112, 0.0
    %2214 = vadd.xlane.f32.xlu0 %v2213
    %v2215 = vpop.xlane.xlu0 %2214
    %v2216 = vsel %vm1014, %v2114, 0.0
    %2217 = vadd.xlane.f32.xlu0 %v2216
    %v2218 = vpop.xlane.xlu0 %2217
    %v2219 = vsel %vm1014, %v2116, 0.0
    %2220 = vadd.xlane.f32.xlu0 %v2219
    %v2221 = vpop.xlane.xlu0 %2220
    %v2222 = vsel %vm1014, %v2118, 0.0
    %2223 = vadd.xlane.f32.xlu0 %v2222
    %v2224 = vpop.xlane.xlu0 %2223
    %v2225 = vsel %vm1014, %v2120, 0.0
    %2226 = vadd.xlane.f32.xlu0 %v2225
    %v2227 = vpop.xlane.xlu0 %2226
    %v2228 = vsel %vm1014, %v2122, 0.0
    %2229 = vadd.xlane.f32.xlu0 %v2228
    %v2230 = vpop.xlane.xlu0 %2229
    %v2231 = vsel %vm1014, %v2124, 0.0
    %2232 = vadd.xlane.f32.xlu0 %v2231
    %v2233 = vpop.xlane.xlu0 %2232
    %v2234 = vsel %vm1014, %v2126, 0.0
    %2235 = vadd.xlane.f32.xlu0 %v2234
    %v2236 = vpop.xlane.xlu0 %2235
    %v2237 = vsel %vm1014, %v2128, 0.0
    %2238 = vadd.xlane.f32.xlu0 %v2237
    %v2239 = vpop.xlane.xlu0 %2238
    %v2240 = vsel %vm1014, %v2130, 0.0
    %2241 = vadd.xlane.f32.xlu0 %v2240
    %v2242 = vpop.xlane.xlu0 %2241
    %v2243 = vsel %vm1014, %v2132, 0.0
    %2244 = vadd.xlane.f32.xlu0 %v2243
    %v2245 = vpop.xlane.xlu0 %2244
    %v2246 = vsel %vm1014, %v2134, 0.0
    %2247 = vadd.xlane.f32.xlu0 %v2246
    %v2248 = vpop.xlane.xlu0 %2247
    %v2249 = vsel %vm1014, %v2136, 0.0
    %2250 = vadd.xlane.f32.xlu0 %v2249
    %v2251 = vpop.xlane.xlu0 %2250
    %v2252 = vsel %vm1014, %v2138, 0.0
    %2253 = vadd.xlane.f32.xlu0 %v2252
    %v2254 = vpop.xlane.xlu0 %2253
    %v2255 = vsel %vm1014, %v2140, 0.0
    %2256 = vadd.xlane.f32.xlu0 %v2255
    %v2257 = vpop.xlane.xlu0 %2256
    %v2258 = vsel %vm1014, %v2142, 0.0
    %2259 = vadd.xlane.f32.xlu0 %v2258
    %v2260 = vpop.xlane.xlu0 %2259
    %v2261 = vsel %vm1014, %v2144, 0.0
    %2262 = vadd.xlane.f32.xlu0 %v2261
    %v2263 = vpop.xlane.xlu0 %2262
    %v2264 = vsel %vm1014, %v2146, 0.0
    %2265 = vadd.xlane.f32.xlu0 %v2264
    %v2266 = vpop.xlane.xlu0 %2265
    %v2267 = vsel %vm1014, %v2148, 0.0
    %2268 = vadd.xlane.f32.xlu0 %v2267
    %v2269 = vpop.xlane.xlu0 %2268
    %v2270 = vsel %vm1014, %v2150, 0.0
    %2271 = vadd.xlane.f32.xlu0 %v2270
    %v2272 = vpop.xlane.xlu0 %2271
    %v2273 = vsel %vm1014, %v2152, 0.0
    %2274 = vadd.xlane.f32.xlu0 %v2273
    %v2275 = vpop.xlane.xlu0 %2274
    %v2276 = vsel %vm1014, %v2154, 0.0
    %2277 = vadd.xlane.f32.xlu0 %v2276
    %v2278 = vpop.xlane.xlu0 %2277
    %v2279 = vsel %vm1014, %v2156, 0.0
    %2280 = vadd.xlane.f32.xlu0 %v2279
    %v2281 = vpop.xlane.xlu0 %2280
    %v2282 = vsel %vm1014, %v2158, 0.0
    %2283 = vadd.xlane.f32.xlu0 %v2282
    %v2284 = vpop.xlane.xlu0 %2283
    %v2285 = vsel %vm1014, %v2160, 0.0
    %2286 = vadd.xlane.f32.xlu0 %v2285
    %v2287 = vpop.xlane.xlu0 %2286
    %v2288 = vsel %vm1014, %v2162, 0.0
    %2289 = vadd.xlane.f32.xlu0 %v2288
    %v2290 = vpop.xlane.xlu0 %2289
    %2291 = vrot.lane.b32.xlu0 %v1012, 104
    %v2292 = vpop.permute.xlu0 %2291
    %2293 = vrot.lane.b32.xlu0 %v1013, 104
    %v2294 = vpop.permute.xlu0 %2293
    %v2327 = vperm.slane %v2197, %v1144
    %v2328 = vperm.slane %v2200, %v1146
    %v2329 = vsel %vm1148, %v2328, %v2327
    %v2330 = vperm.slane %v2203, %v1144
    %v2331 = vperm.slane %v2206, %v1146
    %v2332 = vsel %vm1148, %v2331, %v2330
    %v2333 = vperm.slane %v2209, %v1144
    %v2334 = vperm.slane %v2212, %v1146
    %v2335 = vsel %vm1148, %v2334, %v2333
    %v2336 = vperm.slane %v2215, %v1144
    %v2337 = vperm.slane %v2218, %v1146
    %v2338 = vsel %vm1148, %v2337, %v2336
    %v2339 = vperm.slane %v2221, %v1144
    %v2340 = vperm.slane %v2224, %v1146
    %v2341 = vsel %vm1148, %v2340, %v2339
    %v2342 = vperm.slane %v2227, %v1144
    %v2343 = vperm.slane %v2230, %v1146
    %v2344 = vsel %vm1148, %v2343, %v2342
    %v2345 = vperm.slane %v2233, %v1144
    %v2346 = vperm.slane %v2236, %v1146
    %v2347 = vsel %vm1148, %v2346, %v2345
    %v2348 = vperm.slane %v2239, %v1144
    %v2349 = vperm.slane %v2242, %v1146
    %v2350 = vsel %vm1148, %v2349, %v2348
    %v2351 = vperm.slane %v2245, %v1144
    %v2352 = vperm.slane %v2248, %v1146
    %v2353 = vsel %vm1148, %v2352, %v2351
    %v2354 = vperm.slane %v2251, %v1144
    %v2355 = vperm.slane %v2254, %v1146
    %v2356 = vsel %vm1148, %v2355, %v2354
    %v2357 = vperm.slane %v2257, %v1144
    %v2358 = vperm.slane %v2260, %v1146
    %v2359 = vsel %vm1148, %v2358, %v2357
    %v2360 = vperm.slane %v2263, %v1144
    %v2361 = vperm.slane %v2266, %v1146
    %v2362 = vsel %vm1148, %v2361, %v2360
    %v2363 = vperm.slane %v2269, %v1144
    %v2364 = vperm.slane %v2272, %v1146
    %v2365 = vsel %vm1148, %v2364, %v2363
    %v2366 = vperm.slane %v2275, %v1144
    %v2367 = vperm.slane %v2278, %v1146
    %v2368 = vsel %vm1148, %v2367, %v2366
    %v2369 = vperm.slane %v2281, %v1144
    %v2370 = vperm.slane %v2284, %v1146
    %v2371 = vsel %vm1148, %v2370, %v2369
    %v2372 = vperm.slane %v2287, %v1144
    %v2373 = vperm.slane %v2290, %v1146
    %v2374 = vsel %vm1148, %v2373, %v2372
    %v2375 = vsel %vm1195, %v2332, %v2329
    %v2376 = vsel %vm1197, %v2335, %v2375
    %v2377 = vsel %vm1199, %v2338, %v2376
    %v2378 = vsel %vm1201, %v2341, %v2377
    %v2379 = vsel %vm1203, %v2344, %v2378
    %v2380 = vsel %vm1205, %v2347, %v2379
    %v2381 = vsel %vm1207, %v2350, %v2380
    %v2382 = vsel %vm1195, %v2356, %v2353
    %v2383 = vsel %vm1197, %v2359, %v2382
    %v2384 = vsel %vm1199, %v2362, %v2383
    %v2385 = vsel %vm1201, %v2365, %v2384
    %v2386 = vsel %vm1203, %v2368, %v2385
    %v2387 = vsel %vm1205, %v2371, %v2386
    %v2388 = vsel %vm1207, %v2374, %v2387
    %v2392 = vsel %vm1014, %v2292, 0
    %v2395 = vsel %vm1014, %v2294, 0
    %2397 = vmatpush.bf16.xpose.msra.mxu0 0
    %2398 = vmatpush.bf16.xpose.msra.mxu0 0
    %2399 = vmatpush.bf16.xpose.msra.mxu0 0
    %2400 = vmatpush.bf16.xpose.msra.mxu0 0
    %2401 = vmatpush.bf16.xpose.msra.mxu0 0
    %2402 = vmatpush.bf16.xpose.msra.mxu0 0
    %2403 = vmatpush.bf16.xpose.msra.mxu0 0
    %2404 = vmatpush.bf16.xpose.msra.mxu0 %v2395
    %2405 = vmatmul.bf16.gmra.mxu0 %v2392
    %v2406 = vpop.f32.mrf.mxu0
    %v2407 = vadd.f32 %v2381, %v2406
    %v2408 = vpop.f32.mrf.mxu0
    %v2409 = vadd.f32 %v2388, %v2408
    %2410 = vdwg.mxu0
    %v2411 = vmul.f32 %v2407, 0.35355338
    %v2412 = vmul.f32 %v2409, 0.35355338
    %v2413 = vsel %vm116, %v2411, -inf
    %2414 = vmax.xlane.f32.xlu0 %v2413
    %v2415 = vpop.xlane.xlu0 %2414
    %v2416 = vsel %vm116, %v2412, -inf
    %2417 = vmax.xlane.f32.xlu0 %v2416
    %v2418 = vpop.xlane.xlu0 %2417
    %v2419 = vsub.f32 %v2411, %v2415
    %v2420 = vsub.f32 %v2412, %v2418
    %v2421 = vmul.f32 %v2419, 1.442695
    %v2422 = vpow.pop %v2421
    %v2423 = vmul.f32 %v2420, 1.442695
    %v2424 = vpow.pop %v2423
    %v2425 = vsel %vm116, %v2422, 0.0
    %2426 = vadd.xlane.f32.xlu0 %v2425
    %v2427 = vpop.xlane.xlu0 %2426
    %v2428 = vsel %vm116, %v2424, 0.0
    %2429 = vadd.xlane.f32.xlu0 %v2428
    %v2430 = vpop.xlane.xlu0 %2429
    %v2431 = vrcp.pop %v2427
    %v2432 = vrcp.pop %v2430
    %v2433 = vmul.f32 %v2422, %v2431
    %v2434 = vmul.f32 %v2424, %v2432
    %v2435 = vpack.c.bf16 %v2434, %v2433
    %2436 = vrot.lane.b32.xlu0 %v1263, 104
    %v2437 = vpop.permute.xlu0 %2436
    %v2440 = vsel %vm116, %v2435, 0
    %2442 = vmatpush.bf16.msra.mxu0 0
    %2443 = vmatpush.bf16.msra.mxu0 0
    %2444 = vmatpush.bf16.msra.mxu0 0
    %2445 = vmatpush.bf16.msra.mxu0 0
    %2446 = vmatpush.bf16.msra.mxu0 0
    %2447 = vmatpush.bf16.msra.mxu0 0
    %2448 = vmatpush.bf16.msra.mxu0 0
    %2449 = vmatpush.bf16.msra.mxu0 %v2437
    %2450 = vmatmul.bf16.gmra.mxu0 %v2440
    %v2451 = vpop.f32.mrf.mxu0
    %v2452 = vadd.f32 0.0, %v2451
    %v2453 = vpop.f32.mrf.mxu0
    %v2454 = vadd.f32 0.0, %v2453
    %2455 = vdwg.mxu0
    %v2456 = vpack.c.bf16 %v2454, %v2452
    %v2457 = vpack.c.bf16 %v1011, %v1011
    %v2459 = vsel %vm1014, %v2456, 0
    %v2462 = vsel %vm1680, %v2457, 0
    %2464 = vmatpush.bf16.msra.mxu0 0
    %2465 = vmatpush.bf16.msra.mxu0 0
    %2466 = vmatpush.bf16.msra.mxu0 0
    %2467 = vmatpush.bf16.msra.mxu0 0
    %2468 = vmatpush.bf16.msra.mxu0 0
    %2469 = vmatpush.bf16.msra.mxu0 0
    %2470 = vmatpush.bf16.msra.mxu0 0
    %2471 = vmatpush.bf16.msra.mxu0 %v2462
    %2472 = vmatmul.bf16.gmra.mxu0 %v2459
    %v2473 = vpop.f32.mrf.mxu0
    %v2474 = vadd.f32 0.0, %v2473
    %v2475 = vpop.f32.mrf.mxu0
    %v2476 = vadd.f32 0.0, %v2475
    %2477 = vdwg.mxu0
    %v2478 = vadd.f32 %v2097, %v2474
    %v2479 = vadd.f32 %v2098, %v2476
    %v2480 = vld [vmem:[%s17] sm:$0x1]
    %v2482 = vperm.slane %v2480, 0
    %v2484 = vadd.f32 %v2478, %v2482
    %v2485 = vadd.f32 %v2479, %v2482
    %v2486 = vadd.f32 %v818, %v2484
    %v2487 = vadd.f32 %v819, %v2485
    %v2488 = vsel %vm76, %v2486, 0.0
    %2489 = vadd.xlane.f32.xlu0 %v2488
    %v2490 = vpop.xlane.xlu0 %2489
    %v2491 = vsel %vm76, %v2487, 0.0
    %2492 = vadd.xlane.f32.xlu0 %v2491
    %v2493 = vpop.xlane.xlu0 %2492
    %v2494 = vrcp.pop 32.0
    %v2495 = vmul.f32 32.0, %v2494
    %v2496 = vsub.f32 1.0, %v2495
    %v2497 = vmul.f32 %v2494, %v2496
    %v2498 = vadd.f32 %v2494, %v2497
    %vm2499 = vweird.f32 %v2494
    %v2500 = vsel %vm2499, %v2494, %v2498
    %v2501 = vmul.f32 %v2490, %v2500
    %v2502 = vmul.f32 %v2493, %v2500
    %v2503 = vsub.f32 %v2486, %v2501
    %v2504 = vsub.f32 %v2487, %v2502
    %v2505 = vmul.f32 %v2503, %v2503
    %v2506 = vmul.f32 %v2504, %v2504
    %v2507 = vsel %vm76, %v2505, 0.0
    %2508 = vadd.xlane.f32.xlu0 %v2507
    %v2509 = vpop.xlane.xlu0 %2508
    %v2510 = vsel %vm76, %v2506, 0.0
    %2511 = vadd.xlane.f32.xlu0 %v2510
    %v2512 = vpop.xlane.xlu0 %2511
    %v2513 = vmul.f32 %v2509, %v2500
    %v2514 = vmul.f32 %v2512, %v2500
    %v2515 = vadd.f32 %v2513, 1e-05
    %v2516 = vadd.f32 %v2514, 1e-05
    %v2517 = vrsqrt.pop %v2515
    %v2518 = vmul.f32 %v2517, %v2515
    %v2519 = vmul.f32 %v2518, %v2517
    %v2520 = vmul.f32 0.5, %v2519
    %v2521 = vsub.f32 1.5, %v2520
    %v2522 = vmul.f32 %v2517, %v2521
    %vm2523 = vweird.f32 %v2515
    %vm2524 = vweird.f32 %v2517
    %vm2525 = vmor %vm2523, %vm2524
    %v2526 = vsel %vm2525, %v2517, %v2522
    %v2527 = vrsqrt.pop %v2516
    %v2528 = vmul.f32 %v2527, %v2516
    %v2529 = vmul.f32 %v2528, %v2527
    %v2530 = vmul.f32 0.5, %v2529
    %v2531 = vsub.f32 1.5, %v2530
    %v2532 = vmul.f32 %v2527, %v2531
    %vm2533 = vweird.f32 %v2516
    %vm2534 = vweird.f32 %v2527
    %vm2535 = vmor %vm2533, %vm2534
    %v2536 = vsel %vm2535, %v2527, %v2532
    %v2537 = vmul.f32 %v2503, %v2526
    %v2538 = vmul.f32 %v2504, %v2536
    %v2539 = vld [vmem:[%s18] sm:$0x1]
    %v2541 = vperm.slane %v2539, 0
    %v2543 = vmul.f32 %v2537, %v2541
    %v2544 = vmul.f32 %v2538, %v2541
    %v2545 = vld [vmem:[%s19] sm:$0x1]
    %v2547 = vperm.slane %v2545, 0
    %v2549 = vadd.f32 %v2543, %v2547
    %v2550 = vadd.f32 %v2544, %v2547
    %2551 = vst.msk [vmem:[#allocation2] sm:$0xff] %vm76, %v2549
    %2552 = vst.msk [vmem:[#allocation2 + $0x8] sm:$0xff] %vm76, %v2550
    // Predicated region
    $region82: #{coarse_gcn_encoding_forward.5} parent=1 // pred_check
      _
    $region83: #{coarse_gcn_encoding_forward.5} parent=1 // pred_check_branch
      %2554 = sbr.rel (0) target = $region85
    $region84: #{coarse_gcn_encoding_forward.5} parent=1 // pred_region
      %2556 = vsyncadd [#allocation3], 0
      %s2557 = sshll.u32 [#allocation2], 4
      %s2558 = int_to_ptr.vmem [resolvable:$true] %s2557
      %s2559 = sshll.u32 %s20, 4
      %s2560 = int_to_ptr.hbm [resolvable:$true] %s2559
      %2565 = dma.vmem_to_hbm [thread:$0]  %s2558, 256, %s2560, [#allocation3], 128, 128, 8
    $region85: #{coarse_gcn_encoding_forward.5} parent=1 // pred_fallthru
      _
    // Predicated region
    $region86: #{coarse_gcn_encoding_forward.5} parent=1 // pred_check
      _
    $region87: #{coarse_gcn_encoding_forward.5} parent=1 // pred_check_branch
      %2567 = sbr.rel (0) target = $region89
    $region88: #{coarse_gcn_encoding_forward.5} parent=1 // pred_region
      %2569 = dma.done [#allocation3], 256
    $region89: #{coarse_gcn_encoding_forward.5} parent=1 // pred_fallthru
      _
    %2570 = vsyncpa [#allocation3], 1

</llo_original>
